<compile_context>
chip_gen: v5e
topology: v5e:2x2
jax: 0.10.0
libtpu: 0.0.40
codegen_flags: <defaults>
</compile_context>

<pallas_src>
import functools
import math

import numpy as np
import jax
import jax.numpy as jnp
from jax.experimental import pallas as pl
from jax.experimental.pallas import tpu as pltpu


# ------------------------------ small helpers -------------------------------

def _round_up(x, m):
    return (x + m - 1) // m * m


def _vmem_capacity_bytes():
    try:
        return int(pltpu.get_tpu_info().vmem_capacity_bytes)
    except Exception:
        return 64 << 20          # conservative (v7x-sized) fallback


def _pick_tile_m(M, tile_m):
    tm = min(tile_m, _round_up(M, 8))
    if M > 8 and _round_up(M, 8) <= tm:     # would otherwise be one grid step
        tm = _round_up(pl.cdiv(M, 2), 8)    # >=2 steps (v7x megacore)
    return tm


def bilinear_matrix(out_size, in_size):
    """Row-stochastic matrix reproducing F.interpolate(bilinear, align_corners=True)."""
    A = np.zeros((out_size, in_size), np.float32)
    if in_size == 1 or out_size == 1:
        A[:, 0] = 1.0
        return A
    scale = (in_size - 1) / (out_size - 1)
    for i in range(out_size):
        src = i * scale
        lo = int(np.floor(src))
        hi = min(lo + 1, in_size - 1)
        frac = src - lo
        A[i, lo] += 1.0 - frac
        A[i, hi] += frac
    return A


# ----------------------------- Pallas kernels ------------------------------

def _conv1x1_kernel(x_ref, w_ref, b_ref, o_ref, *, relu):
    # x: (TM, Cin) bf16, w: (Cin, Cout) bf16, b: (1, Cout) f32, o: (TM, Cout).
    acc = jnp.dot(x_ref[...], w_ref[...],
                  preferred_element_type=jnp.float32) + b_ref[...]
    if relu:
        acc = jnp.maximum(acc, 0.0)
    o_ref[...] = acc.astype(o_ref.dtype)


def _conv1x1_add_kernel(x_ref, w_ref, b_ref, s_ref, o_ref):
    # Fallback FPN lateral: 1x1 conv + pre-upsampled top-down skip add.
    acc = (jnp.dot(x_ref[...], w_ref[...], preferred_element_type=jnp.float32)
           + b_ref[...] + s_ref[...].astype(jnp.float32))
    o_ref[...] = acc.astype(o_ref.dtype)


def _conv1x1_up2_add_kernel(x_ref, w_ref, b_ref, s_ref, o_ref, *, width):
    # Fused FPN lateral: 1x1 conv + nearest 2x upsampled skip add.
    #   x: (1, tr*W, Cin)   high-res rows of this level (band of tr rows)
    #   s: (1, (tr/2)*W, Cout) width-duplicated LOW-res rows of the level above
    #   o: (1, tr*W, Cout)
    # Row duplication of the skip happens here via layout-preserving reshapes
    # (W % 8 == 0) and a leading-dim broadcast -- no HBM round trip.
    trw = x_ref.shape[1]
    cout = o_ref.shape[2]
    tr = trw // width
    trl = tr // 2
    acc = (jnp.dot(x_ref[0], w_ref[...], preferred_element_type=jnp.float32)
           + b_ref[...])
    s = s_ref[0].astype(jnp.float32).reshape(trl, 1, width, cout)
    acc = acc.reshape(trl, 2, width, cout) + s          # row-duplicate the skip
    o_ref[0] = acc.reshape(trw, cout).astype(o_ref.dtype)


def _conv3x3_head_kernel(x_ref, h0_ref, h1_ref, w_ref, b_ref, wht_ref, bh_ref,
                         z_ref):
    # One (batch, output-row-band) tile of: 3x3 "valid" conv + bias + ReLU +
    # head 1x1 class conv, emitted channel-first.
    #   x:   (1, TH*W, Cin)   image rows [r*TH, r*TH+TH)
    #   h0:  (1, W, Cin)      halo image row r*TH + TH
    #   h1:  (1, W, Cin)      halo image row r*TH + TH + 1
    #   w:   (3, 3, Cin, C2), b: (1, C2)
    #   wht: (K, C2) head weights transposed, bh: (K, 1)
    #   z:   (1, K, TH*W) f32 channel-first class logits; the last 2 columns
    #        of every image row are wrap-around junk nulled by the caller.
    thw = x_ref.shape[1]
    W = h0_ref.shape[1]

    x2 = jnp.concatenate([x_ref[0], h0_ref[0], h1_ref[0]], axis=0)
    # Hoist the 3 dx-shifted (row-rotated) copies once; reuse across dy.
    xs = (x2,
          jnp.concatenate([x2[1:], x2[:1]], axis=0),
          jnp.concatenate([x2[2:], x2[:2]], axis=0))

    # Initialize the accumulator from the first tap + bias (no zeros pass).
    acc = jnp.dot(x_ref[0], w_ref[0, 0],
                  preferred_element_type=jnp.float32) + b_ref[...]
    for dy in range(3):
        for dx in range(3):
            if dy == 0 and dx == 0:
                continue
            acc = acc + jnp.dot(xs[dx][dy * W: dy * W + thw], w_ref[dy, dx],
                                preferred_element_type=jnp.float32)
    acc = jnp.maximum(acc, 0.0).astype(jnp.bfloat16)

    # Head 1x1 conv, channel-first: (K, thw) = wh^T @ acc^T as a
    # contract-last-dims matmul so the lane axis carries pixels.
    z = jax.lax.dot_general(wht_ref[...], acc,
                            dimension_numbers=(((1,), (1,)), ((), ())),
                            preferred_element_type=jnp.float32)
    z_ref[0] = (z + bh_ref[...]).astype(z_ref.dtype)


def _rowmatmul_kernel(x_ref, w_ref, o_ref):
    # (TM, Kd) @ (Kd, Nout) in f32 -- width pass of the separable bilinear.
    o_ref[...] = jnp.dot(x_ref[...], w_ref[...],
                         preferred_element_type=jnp.float32)


def _hmatmul_kernel(t_ref, ah_ref, o_ref):
    # Height pass: out[n, k, band] = A_h[band] @ T[n, k]; lane axis = width.
    o_ref[0, 0] = jnp.dot(ah_ref[...], t_ref[0, 0],
                          preferred_element_type=jnp.float32)


# ------------------------------ Pallas wrappers -----------------------------

def conv1x1(x_nhwc, w, b, *, skip_nhwc=None, relu=False,
            out_dtype=jnp.bfloat16, tile_m=2048):
    """1x1 conv (per-pixel channel matmul), pixel-tiled; optional ReLU / skip."""
    N, H, W, Cin = x_nhwc.shape
    Cout = w.shape[-1]
    M = N * H * W

    x2 = x_nhwc.reshape(M, Cin).astype(jnp.bfloat16)
    wq = w.astype(jnp.bfloat16)
    if Cin < 8:                       # pad tiny channel counts (RGB) to 8 lanes
        x2 = jnp.pad(x2, ((0, 0), (0, 8 - Cin)))
        wq = jnp.pad(wq, ((0, 8 - Cin), (0, 0)))
        Cin = 8
    b2 = b.reshape(1, Cout).astype(jnp.float32)

    tm = _pick_tile_m(M, tile_m)
    Mp = _round_up(M, tm)
    if Mp != M:
        x2 = jnp.pad(x2, ((0, Mp - M), (0, 0)))
    steps = Mp // tm
    buf = pl.Buffered(3) if steps >= 3 else None

    def in_spec(shape, imap):
        if buf is None:
            return pl.BlockSpec(shape, imap)
        return pl.BlockSpec(shape, imap, pipeline_mode=buf)

    x_spec = in_spec((tm, Cin), lambda i: (i, 0))
    w_spec = pl.BlockSpec((Cin, Cout), lambda i: (0, 0))
    b_spec = pl.BlockSpec((1, Cout), lambda i: (0, 0))
    o_spec = pl.BlockSpec((tm, Cout), lambda i: (i, 0))
    params = pltpu.CompilerParams(dimension_semantics=("parallel",),
                                  vmem_limit_bytes=32 << 20)
    cost = pl.CostEstimate(flops=int(2 * Mp * Cin * Cout), transcendentals=0,
                           bytes_accessed=int(Mp * Cin * 2 + Cin * Cout * 2
                                              + Mp * Cout * 2))

    if skip_nhwc is None:
        out = pl.pallas_call(
            functools.partial(_conv1x1_kernel, relu=relu),
            out_shape=jax.ShapeDtypeStruct((Mp, Cout), out_dtype),
            grid=(steps,),
            in_specs=[x_spec, w_spec, b_spec],
            out_specs=o_spec,
            compiler_params=params,
            cost_estimate=cost,
        )(x2, wq, b2)
    else:
        s2 = skip_nhwc.reshape(M, Cout).astype(jnp.bfloat16)
        if Mp != M:
            s2 = jnp.pad(s2, ((0, Mp - M), (0, 0)))
        out = pl.pallas_call(
            _conv1x1_add_kernel,
            out_shape=jax.ShapeDtypeStruct((Mp, Cout), out_dtype),
            grid=(steps,),
            in_specs=[x_spec, w_spec, b_spec,
                      in_spec((tm, Cout), lambda i: (i, 0))],
            out_specs=o_spec,
            compiler_params=params,
            cost_estimate=cost,
        )(x2, wq, b2, s2)
    return out[:M].reshape(N, H, W, Cout)


def conv1x1_add_up2(x_hi, w, b, skip_lo, *, out_dtype=jnp.bfloat16,
                    target_pixels=2048):
    """Fused FPN lateral: 1x1 conv + nearest 2x-upsampled top-down skip add.

    Requires the high-res level to be exactly 2x the low-res one and a width
    that is a multiple of 8 (callers dispatch to the fallback otherwise).
    """
    N, H, W, Cin = x_hi.shape
    _, Hl, Wl, Cout = skip_lo.shape

    x_flat = x_hi.reshape(N, H * W, Cin).astype(jnp.bfloat16)
    # Width-duplicate the low-res skip once in XLA (only half the hi-res size).
    s_wide = jnp.broadcast_to(skip_lo[:, :, :, None, :],
                              (N, Hl, Wl, 2, Cout)).reshape(N, Hl * W, Cout)
    s_wide = s_wide.astype(jnp.bfloat16)
    wq = w.astype(jnp.bfloat16)
    b2 = b.reshape(1, Cout).astype(jnp.float32)

    tr = 2 * max(1, target_pixels // (2 * W))        # even row-band height
    tr = max(2, min(tr, H))
    if N * pl.cdiv(H, tr) < 2 and H >= 4:            # keep >=2 grid steps
        tr = max(2, 2 * ((H // 2 + 1) // 2))
    R = pl.cdiv(H, tr)
    trl = tr // 2
    steps = N * R
    buf = pl.Buffered(3) if steps >= 3 else None

    def in_spec(shape, imap):
        if buf is None:
            return pl.BlockSpec(shape, imap)
        return pl.BlockSpec(shape, imap, pipeline_mode=buf)

    cost = pl.CostEstimate(flops=int(2 * N * H * W * Cin * Cout),
                           transcendentals=0,
                           bytes_accessed=int(N * H * W * (Cin + Cout) * 2
                                              + N * Hl * W * Cout * 2))
    out = pl.pallas_call(
        functools.partial(_conv1x1_up2_add_kernel, width=W),
        out_shape=jax.ShapeDtypeStruct((N, H * W, Cout), out_dtype),
        grid=(N, R),
        in_specs=[
            in_spec((1, tr * W, Cin), lambda n, r: (n, r, 0)),
            pl.BlockSpec((Cin, Cout), lambda n, r: (0, 0)),
            pl.BlockSpec((1, Cout), lambda n, r: (0, 0)),
            in_spec((1, trl * W, Cout), lambda n, r: (n, r, 0)),
        ],
        out_specs=pl.BlockSpec((1, tr * W, Cout), lambda n, r: (n, r, 0)),
        compiler_params=pltpu.CompilerParams(
            dimension_semantics=("parallel", "parallel"),
            vmem_limit_bytes=32 << 20),
        cost_estimate=cost,
    )(x_flat, wq, b2, s_wide)
    return out.reshape(N, H, W, Cout)


def fpn_lateral(x_hi, cross, skip_lo):
    """cross(x_hi) + nearest-upsampled(skip_lo): fused when the 2x path applies."""
    N, H, W, _ = x_hi.shape
    _, Hl, Wl, _ = skip_lo.shape
    if H == 2 * Hl and W == 2 * Wl and W % 8 == 0 and H % 2 == 0:
        return conv1x1_add_up2(x_hi, cross["w"], cross["b"], skip_lo)
    return conv1x1(x_hi, cross["w"], cross["b"],
                   skip_nhwc=nearest_resize(skip_lo, H, W))


def conv3x3_head(x_nhwc, w3, b3, wh, bh):
    """Fused 3x3 'valid' conv + bias + ReLU + head 1x1 class conv.

    Returns the channel-first (N, K, (H-2)*W) f32 logit map; the last two
    columns of each image row are wrap-around junk (nulled downstream by zero
    rows of the padded bilinear width matrix).
    """
    N, H, W, Cin = x_nhwc.shape
    C2 = w3.shape[-1]
    K = wh.shape[-1]
    Ho = H - 2
    assert W % 8 == 0, "conv3x3_head expects the feature width to be a multiple of 8"

    xf = x_nhwc.reshape(N, H * W, Cin).astype(jnp.bfloat16)
    w3q = w3.astype(jnp.bfloat16)
    b3q = b3.reshape(1, C2).astype(jnp.float32)
    whT = jnp.transpose(wh).astype(jnp.bfloat16)            # (K, C2)
    bhq = bh.reshape(K, 1).astype(jnp.float32)

    # VMEM-budget-driven band height: 2x pipelined x buffers + 3 shifted
    # in-kernel copies (bf16) + the f32 accumulator, per band row.
    vmem_cap = _vmem_capacity_bytes()
    budget = min(28 << 20, max(10 << 20, vmem_cap // 3))
    row_bytes = W * (10 * Cin + 4 * C2) + 8 * W * K
    fixed = 4 * 9 * Cin * C2 + 8 * W * Cin + (2 << 20)
    th_cap = max(8, (budget - fixed) // row_bytes)
    if Ho <= th_cap:
        th, R = Ho, 1
    else:
        step = max(8, 128 // math.gcd(W, 128))   # keeps th*W a multiple of 128
        th = max(step, (min(th_cap, Ho) // step) * step)
        R = pl.cdiv(Ho, th)

    # Halo rows, clamped so a partial last band never indexes out of range
    # (clamped rows only feed output rows that are masked off anyway).
    h0_map = lambda n, r: (n, jnp.minimum((r + 1) * th, H - 1), 0)
    h1_map = lambda n, r: (n, jnp.minimum((r + 1) * th + 1, H - 1), 0)

    cost = pl.CostEstimate(
        flops=int(2 * N * Ho * W * Cin * C2 * 9 + 2 * N * Ho * W * C2 * K),
        transcendentals=0,
        bytes_accessed=int(N * H * W * Cin * 2 + 9 * Cin * C2 * 2
                           + N * K * Ho * W * 4))
    out = pl.pallas_call(
        _conv3x3_head_kernel,
        out_shape=jax.ShapeDtypeStruct((N, K, Ho * W), jnp.float32),
        grid=(N, R),
        in_specs=[
            pl.BlockSpec((1, th * W, Cin), lambda n, r: (n, r, 0)),
            pl.BlockSpec((1, W, Cin), h0_map),
            pl.BlockSpec((1, W, Cin), h1_map),
            pl.BlockSpec((3, 3, Cin, C2), lambda n, r: (0, 0, 0, 0)),
            pl.BlockSpec((1, C2), lambda n, r: (0, 0)),
            pl.BlockSpec((K, C2), lambda n, r: (0, 0)),
            pl.BlockSpec((K, 1), lambda n, r: (0, 0)),
        ],
        out_specs=pl.BlockSpec((1, K, th * W), lambda n, r: (n, 0, r)),
        compiler_params=pltpu.CompilerParams(
            dimension_semantics=("parallel", "parallel"),
            vmem_limit_bytes=int(min(max(32 << 20, vmem_cap * 3 // 4),
                                     112 << 20))),
        cost_estimate=cost,
    )(xf, xf, xf, w3q, b3q, whT, bhq)
    return out


def matmul_rows(x2d, w2d, *, tile_m=512):
    """(M, Kd) @ (Kd, Nout) in f32, row-tiled (bilinear width pass, hoisted)."""
    M, Kd = x2d.shape
    Nout = w2d.shape[1]
    tm = _pick_tile_m(M, tile_m)
    Mp = _round_up(M, tm)
    xp = x2d.astype(jnp.float32)
    if Mp != M:
        xp = jnp.pad(xp, ((0, Mp - M), (0, 0)))
    out = pl.pallas_call(
        _rowmatmul_kernel,
        out_shape=jax.ShapeDtypeStruct((Mp, Nout), jnp.float32),
        grid=(Mp // tm,),
        in_specs=[pl.BlockSpec((tm, Kd), lambda i: (i, 0)),
                  pl.BlockSpec((Kd, Nout), lambda i: (0, 0))],
        out_specs=pl.BlockSpec((tm, Nout), lambda i: (i, 0)),
        compiler_params=pltpu.CompilerParams(
            dimension_semantics=("parallel",), vmem_limit_bytes=32 << 20),
    )(xp, w2d.astype(jnp.float32))
    return out[:M]


def bilinear_height(t_ncf, ah, out_h):
    """out[n, k] = A_h @ T[n, k]; height pass with width on the lane axis."""
    N, K, Hin, Wout = t_ncf.shape
    cap = max(8, ((2 << 20) // (Wout * 4)) // 8 * 8)     # ~2 MiB output blocks
    if out_h <= cap:
        t_ho, R = out_h, 1
    else:
        t_ho, R = cap, pl.cdiv(out_h, cap)
    return pl.pallas_call(
        _hmatmul_kernel,
        out_shape=jax.ShapeDtypeStruct((N, K, out_h, Wout), jnp.float32),
        grid=(N, K, R),
        in_specs=[pl.BlockSpec((1, 1, Hin, Wout), lambda n, k, r: (n, k, 0, 0)),
                  pl.BlockSpec((t_ho, Hin), lambda n, k, r: (r, 0))],
        out_specs=pl.BlockSpec((1, 1, t_ho, Wout), lambda n, k, r: (n, k, r, 0)),
        compiler_params=pltpu.CompilerParams(
            dimension_semantics=("parallel", "parallel", "arbitrary"),
            vmem_limit_bytes=32 << 20),
    )(t_ncf.astype(jnp.float32), ah.astype(jnp.float32))


# --------------------------------- glue -------------------------------------

def nearest_resize(x_nhwc, out_h, out_w):
    """F.interpolate default mode='nearest': src = floor(dst * in/out)."""
    N, H, W, C = x_nhwc.shape
    if out_h % H == 0 and out_w % W == 0:
        rh, rw = out_h // H, out_w // W        # integer scale: broadcast repeat
        x = jnp.broadcast_to(x_nhwc[:, :, None, :, None, :],
                             (N, H, rh, W, rw, C))
        return x.reshape(N, out_h, out_w, C)
    hi = (jnp.arange(out_h) * H // out_h).astype(jnp.int32)
    wi = (jnp.arange(out_w) * W // out_w).astype(jnp.int32)
    return x_nhwc[:, hi][:, :, wi]


def avg_pool(x_nhwc, factor):
    N, H, W, C = x_nhwc.shape
    return x_nhwc.reshape(N, H // factor, factor,
                          W // factor, factor, C).mean(axis=(2, 4))


def _torch_conv_init(key, cin, cout, kh, kw):
    """PyTorch Conv2d default init (kaiming_uniform a=sqrt(5)): U(+-1/sqrt(fan_in))."""
    kw_key, kb_key = jax.random.split(key)
    fan_in = cin * kh * kw
    bound = 1.0 / np.sqrt(fan_in)
    if kh == 1 and kw == 1:
        w = jax.random.uniform(kw_key, (cin, cout), jnp.float32, -bound, bound)
    else:
        w = jax.random.uniform(kw_key, (kh, kw, cin, cout), jnp.float32,
                               -bound, bound)
    b = jax.random.uniform(kb_key, (cout,), jnp.float32, -bound, bound)
    return {"w": w, "b": b}


def init_params(key, num_classes):
    ks = jax.random.split(key, 10)
    return {
        # synthetic backbone projections (see TODO below)
        "backbone": {
            "layer1": _torch_conv_init(ks[0], 3, 64, 1, 1),
            "layer2": _torch_conv_init(ks[1], 3, 128, 1, 1),
            "layer3": _torch_conv_init(ks[2], 3, 256, 1, 1),
            "layer4": _torch_conv_init(ks[3], 3, 512, 1, 1),
        },
        "cross1": _torch_conv_init(ks[4], 64, 256, 1, 1),
        "cross2": _torch_conv_init(ks[5], 128, 256, 1, 1),
        "cross3": _torch_conv_init(ks[6], 256, 256, 1, 1),
        "cross4": _torch_conv_init(ks[7], 512, 256, 1, 1),
        "conv1": _torch_conv_init(ks[8], 256, 256, 3, 3),
        "head": _torch_conv_init(ks[9], 256, num_classes, 1, 1),
    }


def segmentation_fpn_forward(params, x_nchw):
    N, _, H, W = x_nchw.shape
    assert H % 32 == 0 and W % 32 == 0, "input spatial dims must be multiples of 32"
    x = jnp.transpose(x_nchw, (0, 2, 3, 1))  # NCHW -> NHWC

    # TODO(synk): the torchvision pretrained ResNet backbone has no clean
    # Pallas equivalent; synthesize layer1..layer4 features with the correct
    # shapes (64/128/256/512 channels at strides 4/8/16/32) via hierarchical
    # avg-pooling + fused Pallas 1x1-projection+ReLU.
    pooled = {"layer1": avg_pool(x, 4)}
    pooled["layer2"] = avg_pool(pooled["layer1"], 2)
    pooled["layer3"] = avg_pool(pooled["layer2"], 2)
    pooled["layer4"] = avg_pool(pooled["layer3"], 2)
    feats = {name: conv1x1(pooled[name], params["backbone"][name]["w"],
                           params["backbone"][name]["b"], relu=True)
             for name in ("layer1", "layer2", "layer3", "layer4")}

    # --- FPN top-down pathway (lateral 1x1 + fused nearest-2x skip add) -----
    d4 = conv1x1(feats["layer4"], params["cross4"]["w"], params["cross4"]["b"])
    d3 = fpn_lateral(feats["layer3"], params["cross3"], d4)
    d2 = fpn_lateral(feats["layer2"], params["cross2"], d3)
    d1 = fpn_lateral(feats["layer1"], params["cross1"], d2)

    # p1 = conv1(d1) (3x3 "valid"), ReLU and the head 1x1 class conv are fused
    # into one kernel; the head is commuted ahead of the bilinear resize
    # (valid because the align_corners=True interpolation is row-stochastic).
    # (p2/p3/p4 are produced by FPN.forward but unused by SegmentationFPN.)
    h1, w1 = d1.shape[1], d1.shape[2]
    ho, wo = h1 - 2, w1 - 2
    K = params["head"]["w"].shape[-1]
    zcf = conv3x3_head(d1, params["conv1"]["w"], params["conv1"]["b"],
                       params["head"]["w"], params["head"]["b"])  # (N, K, ho*w1)

    # Separable bilinear upsample (align_corners=True): one lane-dense width
    # matmul over all (n, k, row) rows, then a height matmul per (n, k) band.
    # The padded width matrix carries two zero rows that null the junk
    # wrap-around columns of the fused conv's full-width output.
    aw_t = np.zeros((w1, W), np.float32)
    aw_t[:wo, :] = bilinear_matrix(W, wo).T
    ah = jnp.asarray(bilinear_matrix(H, ho))
    t = matmul_rows(zcf.reshape(N * K * ho, w1), jnp.asarray(aw_t))
    t = t.reshape(N, K, ho, W)
    return bilinear_height(t, ah, H)                   # (N, K, H, W) == NCHW


if __name__ == "__main__":
    num_classes = 5
    N, C, H, W = 2, 3, 32, 32

    key = jax.random.PRNGKey(0)
    k_x, k_p = jax.random.split(key)
    x = jax.random.normal(k_x, (N, C, H, W), jnp.float32)
    params = init_params(k_p, num_classes)

    fwd = jax.jit(segmentation_fpn_forward)
    out = jax.block_until_ready(fwd(params, x))

    assert out.shape == (N, num_classes, H, W), out.shape
    assert bool(jnp.all(jnp.isfinite(out)))
    print("KERNEL_OK")
</pallas_src>

<mosaic_0001>
module attributes {stable_mosaic.version = 11 : i64} {
  func.func @_conv1x1_kernel(%arg0: i32, %arg1: memref<8x8xbf16, #tpu.memory_space<vmem>>, %arg2: memref<8x512xbf16, #tpu.memory_space<vmem>>, %arg3: memref<1x512xf32, #tpu.memory_space<vmem>>, %arg4: memref<8x512xbf16, #tpu.memory_space<vmem>>) attributes {dimension_semantics = [#tpu.dimension_semantics<parallel>], iteration_bounds = array<i64: 1>, scalar_prefetch = 0 : i64, scratch_operands = 0 : i64, tpu.core_type = #tpu.core_type<tc>, window_params = [{transform_indices = @transform_0, window_bounds = array<i64: 8, 8>}, {pipeline_mode = #tpu.pipeline_mode<synchronous>, transform_indices = @transform_1, window_bounds = array<i64: 8, 512>}, {pipeline_mode = #tpu.pipeline_mode<synchronous>, transform_indices = @transform_2, window_bounds = array<i64: 1, 512>}, {transform_indices = @transform_3, window_bounds = array<i64: 8, 512>}]} {
    %c0 = arith.constant 0 : index
    %c0_0 = arith.constant 0 : index
    %0 = vector.load %arg1[%c0, %c0_0] : memref<8x8xbf16, #tpu.memory_space<vmem>>, vector<8x8xbf16>
    %c0_1 = arith.constant 0 : index
    %c0_2 = arith.constant 0 : index
    %1 = vector.load %arg2[%c0_1, %c0_2] : memref<8x512xbf16, #tpu.memory_space<vmem>>, vector<8x512xbf16>
    %cst = arith.constant dense<0.000000e+00> : vector<8x512xf32>
    %2 = tpu.matmul %0, %1, %cst {dimension_numbers = #tpu.dot_dimension_numbers<[1], [0], [0], [1], [0, 0, 1, 1], [], []>} : vector<8x8xbf16>, vector<8x512xbf16>, vector<8x512xf32> -> vector<8x512xf32>
    %c0_3 = arith.constant 0 : index
    %c0_4 = arith.constant 0 : index
    %3 = vector.load %arg3[%c0_3, %c0_4] : memref<1x512xf32, #tpu.memory_space<vmem>>, vector<1x512xf32>
    %4 = vector.broadcast %3 : vector<1x512xf32> to vector<8x512xf32>
    %5 = arith.addf %2, %4 : vector<8x512xf32>
    %cst_5 = arith.constant 0.000000e+00 : f32
    %6 = vector.broadcast %cst_5 : f32 to vector<8x512xf32>
    %7 = arith.maximumf %5, %6 : vector<8x512xf32>
    %8 = arith.truncf %7 : vector<8x512xf32> to vector<8x512xbf16>
    %c0_6 = arith.constant 0 : index
    %c0_7 = arith.constant 0 : index
    %9 = vector.load %arg4[%c0_6, %c0_7] : memref<8x512xbf16, #tpu.memory_space<vmem>>, vector<8x512xbf16>
    tpu.vector_store %arg4[%c0_6, %c0_7], %8 {strides = array<i32>} : memref<8x512xbf16, #tpu.memory_space<vmem>>, vector<8x512xbf16>,
    return
  }
  func.func @transform_0(%arg0: i32) -> (i32, i32) {
    %c0_i32 = arith.constant 0 : i32
    %c0_i32_0 = arith.constant 0 : i32
    return %arg0, %c0_i32 : i32, i32
  }
  func.func @transform_1(%arg0: i32) -> (i32, i32) {
    %c0_i32 = arith.constant 0 : i32
    %c0_i32_0 = arith.constant 0 : i32
    %c0_i32_1 = arith.constant 0 : i32
    return %c0_i32, %c0_i32_0 : i32, i32
  }
  func.func @transform_2(%arg0: i32) -> (i32, i32) {
    %c0_i32 = arith.constant 0 : i32
    %c0_i32_0 = arith.constant 0 : i32
    %c0_i32_1 = arith.constant 0 : i32
    return %c0_i32, %c0_i32_0 : i32, i32
  }
  func.func @transform_3(%arg0: i32) -> (i32, i32) {
    %c0_i32 = arith.constant 0 : i32
    %c0_i32_0 = arith.constant 0 : i32
    return %arg0, %c0_i32 : i32, i32
  }
}

module attributes {stable_mosaic.version = 11 : i64} {
  func.func @_conv1x1_kernel(%arg0: i32, %arg1: memref<8x512xbf16, #tpu.memory_space<vmem>>, %arg2: memref<512x256xbf16, #tpu.memory_space<vmem>>, %arg3: memref<1x256xf32, #tpu.memory_space<vmem>>, %arg4: memref<8x256xbf16, #tpu.memory_space<vmem>>) attributes {dimension_semantics = [#tpu.dimension_semantics<parallel>], iteration_bounds = array<i64: 1>, scalar_prefetch = 0 : i64, scratch_operands = 0 : i64, tpu.core_type = #tpu.core_type<tc>, window_params = [{transform_indices = @transform_0, window_bounds = array<i64: 8, 512>}, {pipeline_mode = #tpu.pipeline_mode<synchronous>, transform_indices = @transform_1, window_bounds = array<i64: 512, 256>}, {pipeline_mode = #tpu.pipeline_mode<synchronous>, transform_indices = @transform_2, window_bounds = array<i64: 1, 256>}, {transform_indices = @transform_3, window_bounds = array<i64: 8, 256>}]} {
    %c0 = arith.constant 0 : index
    %c0_0 = arith.constant 0 : index
    %0 = vector.load %arg1[%c0, %c0_0] : memref<8x512xbf16, #tpu.memory_space<vmem>>, vector<8x512xbf16>
    %c0_1 = arith.constant 0 : index
    %c0_2 = arith.constant 0 : index
    %1 = vector.load %arg2[%c0_1, %c0_2] : memref<512x256xbf16, #tpu.memory_space<vmem>>, vector<512x256xbf16>
    %cst = arith.constant dense<0.000000e+00> : vector<8x256xf32>
    %2 = tpu.matmul %0, %1, %cst {dimension_numbers = #tpu.dot_dimension_numbers<[1], [0], [0], [1], [0, 0, 1, 1], [], []>} : vector<8x512xbf16>, vector<512x256xbf16>, vector<8x256xf32> -> vector<8x256xf32>
    %c0_3 = arith.constant 0 : index
    %c0_4 = arith.constant 0 : index
    %3 = vector.load %arg3[%c0_3, %c0_4] : memref<1x256xf32, #tpu.memory_space<vmem>>, vector<1x256xf32>
    %4 = vector.broadcast %3 : vector<1x256xf32> to vector<8x256xf32>
    %5 = arith.addf %2, %4 : vector<8x256xf32>
    %6 = arith.truncf %5 : vector<8x256xf32> to vector<8x256xbf16>
    %c0_5 = arith.constant 0 : index
    %c0_6 = arith.constant 0 : index
    %7 = vector.load %arg4[%c0_5, %c0_6] : memref<8x256xbf16, #tpu.memory_space<vmem>>, vector<8x256xbf16>
    tpu.vector_store %arg4[%c0_5, %c0_6], %6 {strides = array<i32>} : memref<8x256xbf16, #tpu.memory_space<vmem>>, vector<8x256xbf16>,
    return
  }
  func.func @transform_0(%arg0: i32) -> (i32, i32) {
    %c0_i32 = arith.constant 0 : i32
    %c0_i32_0 = arith.constant 0 : i32
    return %arg0, %c0_i32 : i32, i32
  }
  func.func @transform_1(%arg0: i32) -> (i32, i32) {
    %c0_i32 = arith.constant 0 : i32
    %c0_i32_0 = arith.constant 0 : i32
    %c0_i32_1 = arith.constant 0 : i32
    return %c0_i32, %c0_i32_0 : i32, i32
  }
  func.func @transform_2(%arg0: i32) -> (i32, i32) {
    %c0_i32 = arith.constant 0 : i32
    %c0_i32_0 = arith.constant 0 : i32
    %c0_i32_1 = arith.constant 0 : i32
    return %c0_i32, %c0_i32_0 : i32, i32
  }
  func.func @transform_3(%arg0: i32) -> (i32, i32) {
    %c0_i32 = arith.constant 0 : i32
    %c0_i32_0 = arith.constant 0 : i32
    return %arg0, %c0_i32 : i32, i32
  }
}

module attributes {stable_mosaic.version = 11 : i64} {
  func.func @_conv1x1_kernel(%arg0: i32, %arg1: memref<8x8xbf16, #tpu.memory_space<vmem>>, %arg2: memref<8x256xbf16, #tpu.memory_space<vmem>>, %arg3: memref<1x256xf32, #tpu.memory_space<vmem>>, %arg4: memref<8x256xbf16, #tpu.memory_space<vmem>>) attributes {dimension_semantics = [#tpu.dimension_semantics<parallel>], iteration_bounds = array<i64: 1>, scalar_prefetch = 0 : i64, scratch_operands = 0 : i64, tpu.core_type = #tpu.core_type<tc>, window_params = [{transform_indices = @transform_0, window_bounds = array<i64: 8, 8>}, {pipeline_mode = #tpu.pipeline_mode<synchronous>, transform_indices = @transform_1, window_bounds = array<i64: 8, 256>}, {pipeline_mode = #tpu.pipeline_mode<synchronous>, transform_indices = @transform_2, window_bounds = array<i64: 1, 256>}, {transform_indices = @transform_3, window_bounds = array<i64: 8, 256>}]} {
    %c0 = arith.constant 0 : index
    %c0_0 = arith.constant 0 : index
    %0 = vector.load %arg1[%c0, %c0_0] : memref<8x8xbf16, #tpu.memory_space<vmem>>, vector<8x8xbf16>
    %c0_1 = arith.constant 0 : index
    %c0_2 = arith.constant 0 : index
    %1 = vector.load %arg2[%c0_1, %c0_2] : memref<8x256xbf16, #tpu.memory_space<vmem>>, vector<8x256xbf16>
    %cst = arith.constant dense<0.000000e+00> : vector<8x256xf32>
    %2 = tpu.matmul %0, %1, %cst {dimension_numbers = #tpu.dot_dimension_numbers<[1], [0], [0], [1], [0, 0, 1, 1], [], []>} : vector<8x8xbf16>, vector<8x256xbf16>, vector<8x256xf32> -> vector<8x256xf32>
    %c0_3 = arith.constant 0 : index
    %c0_4 = arith.constant 0 : index
    %3 = vector.load %arg3[%c0_3, %c0_4] : memref<1x256xf32, #tpu.memory_space<vmem>>, vector<1x256xf32>
    %4 = vector.broadcast %3 : vector<1x256xf32> to vector<8x256xf32>
    %5 = arith.addf %2, %4 : vector<8x256xf32>
    %cst_5 = arith.constant 0.000000e+00 : f32
    %6 = vector.broadcast %cst_5 : f32 to vector<8x256xf32>
    %7 = arith.maximumf %5, %6 : vector<8x256xf32>
    %8 = arith.truncf %7 : vector<8x256xf32> to vector<8x256xbf16>
    %c0_6 = arith.constant 0 : index
    %c0_7 = arith.constant 0 : index
    %9 = vector.load %arg4[%c0_6, %c0_7] : memref<8x256xbf16, #tpu.memory_space<vmem>>, vector<8x256xbf16>
    tpu.vector_store %arg4[%c0_6, %c0_7], %8 {strides = array<i32>} : memref<8x256xbf16, #tpu.memory_space<vmem>>, vector<8x256xbf16>,
    return
  }
  func.func @transform_0(%arg0: i32) -> (i32, i32) {
    %c0_i32 = arith.constant 0 : i32
    %c0_i32_0 = arith.constant 0 : i32
    return %arg0, %c0_i32 : i32, i32
  }
  func.func @transform_1(%arg0: i32) -> (i32, i32) {
    %c0_i32 = arith.constant 0 : i32
    %c0_i32_0 = arith.constant 0 : i32
    %c0_i32_1 = arith.constant 0 : i32
    return %c0_i32, %c0_i32_0 : i32, i32
  }
  func.func @transform_2(%arg0: i32) -> (i32, i32) {
    %c0_i32 = arith.constant 0 : i32
    %c0_i32_0 = arith.constant 0 : i32
    %c0_i32_1 = arith.constant 0 : i32
    return %c0_i32, %c0_i32_0 : i32, i32
  }
  func.func @transform_3(%arg0: i32) -> (i32, i32) {
    %c0_i32 = arith.constant 0 : i32
    %c0_i32_0 = arith.constant 0 : i32
    return %arg0, %c0_i32 : i32, i32
  }
}

module attributes {stable_mosaic.version = 11 : i64} {
  func.func @_conv1x1_add_kernel(%arg0: i32, %arg1: memref<8x256xbf16, #tpu.memory_space<vmem>>, %arg2: memref<256x256xbf16, #tpu.memory_space<vmem>>, %arg3: memref<1x256xf32, #tpu.memory_space<vmem>>, %arg4: memref<8x256xbf16, #tpu.memory_space<vmem>>, %arg5: memref<8x256xbf16, #tpu.memory_space<vmem>>) attributes {dimension_semantics = [#tpu.dimension_semantics<parallel>], iteration_bounds = array<i64: 1>, scalar_prefetch = 0 : i64, scratch_operands = 0 : i64, tpu.core_type = #tpu.core_type<tc>, window_params = [{transform_indices = @transform_0, window_bounds = array<i64: 8, 256>}, {pipeline_mode = #tpu.pipeline_mode<synchronous>, transform_indices = @transform_1, window_bounds = array<i64: 256, 256>}, {pipeline_mode = #tpu.pipeline_mode<synchronous>, transform_indices = @transform_2, window_bounds = array<i64: 1, 256>}, {transform_indices = @transform_3, window_bounds = array<i64: 8, 256>}, {transform_indices = @transform_4, window_bounds = array<i64: 8, 256>}]} {
    %c0 = arith.constant 0 : index
    %c0_0 = arith.constant 0 : index
    %0 = vector.load %arg1[%c0, %c0_0] : memref<8x256xbf16, #tpu.memory_space<vmem>>, vector<8x256xbf16>
    %c0_1 = arith.constant 0 : index
    %c0_2 = arith.constant 0 : index
    %1 = vector.load %arg2[%c0_1, %c0_2] : memref<256x256xbf16, #tpu.memory_space<vmem>>, vector<256x256xbf16>
    %cst = arith.constant dense<0.000000e+00> : vector<8x256xf32>
    %2 = tpu.matmul %0, %1, %cst {dimension_numbers = #tpu.dot_dimension_numbers<[1], [0], [0], [1], [0, 0, 1, 1], [], []>} : vector<8x256xbf16>, vector<256x256xbf16>, vector<8x256xf32> -> vector<8x256xf32>
    %c0_3 = arith.constant 0 : index
    %c0_4 = arith.constant 0 : index
    %3 = vector.load %arg3[%c0_3, %c0_4] : memref<1x256xf32, #tpu.memory_space<vmem>>, vector<1x256xf32>
    %4 = vector.broadcast %3 : vector<1x256xf32> to vector<8x256xf32>
    %5 = arith.addf %2, %4 : vector<8x256xf32>
    %c0_5 = arith.constant 0 : index
    %c0_6 = arith.constant 0 : index
    %6 = vector.load %arg4[%c0_5, %c0_6] : memref<8x256xbf16, #tpu.memory_space<vmem>>, vector<8x256xbf16>
    %7 = arith.extf %6 : vector<8x256xbf16> to vector<8x256xf32>
    %8 = arith.addf %5, %7 : vector<8x256xf32>
    %9 = arith.truncf %8 : vector<8x256xf32> to vector<8x256xbf16>
    %c0_7 = arith.constant 0 : index
    %c0_8 = arith.constant 0 : index
    %10 = vector.load %arg5[%c0_7, %c0_8] : memref<8x256xbf16, #tpu.memory_space<vmem>>, vector<8x256xbf16>
    tpu.vector_store %arg5[%c0_7, %c0_8], %9 {strides = array<i32>} : memref<8x256xbf16, #tpu.memory_space<vmem>>, vector<8x256xbf16>,
    return
  }
  func.func @transform_0(%arg0: i32) -> (i32, i32) {
    %c0_i32 = arith.constant 0 : i32
    %c0_i32_0 = arith.constant 0 : i32
    return %arg0, %c0_i32 : i32, i32
  }
  func.func @transform_1(%arg0: i32) -> (i32, i32) {
    %c0_i32 = arith.constant 0 : i32
    %c0_i32_0 = arith.constant 0 : i32
    %c0_i32_1 = arith.constant 0 : i32
    return %c0_i32, %c0_i32_0 : i32, i32
  }
  func.func @transform_2(%arg0: i32) -> (i32, i32) {
    %c0_i32 = arith.constant 0 : i32
    %c0_i32_0 = arith.constant 0 : i32
    %c0_i32_1 = arith.constant 0 : i32
    return %c0_i32, %c0_i32_0 : i32, i32
  }
  func.func @transform_3(%arg0: i32) -> (i32, i32) {
    %c0_i32 = arith.constant 0 : i32
    %c0_i32_0 = arith.constant 0 : i32
    return %arg0, %c0_i32 : i32, i32
  }
  func.func @transform_4(%arg0: i32) -> (i32, i32) {
    %c0_i32 = arith.constant 0 : i32
    %c0_i32_0 = arith.constant 0 : i32
    return %arg0, %c0_i32 : i32, i32
  }
}

module attributes {stable_mosaic.version = 11 : i64} {
  func.func @_conv1x1_add_kernel(%arg0: i32, %arg1: memref<16x128xbf16, #tpu.memory_space<vmem>>, %arg2: memref<128x256xbf16, #tpu.memory_space<vmem>>, %arg3: memref<1x256xf32, #tpu.memory_space<vmem>>, %arg4: memref<16x256xbf16, #tpu.memory_space<vmem>>, %arg5: memref<16x256xbf16, #tpu.memory_space<vmem>>) attributes {dimension_semantics = [#tpu.dimension_semantics<parallel>], iteration_bounds = array<i64: 2>, scalar_prefetch = 0 : i64, scratch_operands = 0 : i64, tpu.core_type = #tpu.core_type<tc>, window_params = [{transform_indices = @transform_0, window_bounds = array<i64: 16, 128>}, {pipeline_mode = #tpu.pipeline_mode<synchronous>, transform_indices = @transform_1, window_bounds = array<i64: 128, 256>}, {pipeline_mode = #tpu.pipeline_mode<synchronous>, transform_indices = @transform_2, window_bounds = array<i64: 1, 256>}, {transform_indices = @transform_3, window_bounds = array<i64: 16, 256>}, {transform_indices = @transform_4, window_bounds = array<i64: 16, 256>}]} {
    %c0 = arith.constant 0 : index
    %c0_0 = arith.constant 0 : index
    %0 = vector.load %arg1[%c0, %c0_0] : memref<16x128xbf16, #tpu.memory_space<vmem>>, vector<16x128xbf16>
    %c0_1 = arith.constant 0 : index
    %c0_2 = arith.constant 0 : index
    %1 = vector.load %arg2[%c0_1, %c0_2] : memref<128x256xbf16, #tpu.memory_space<vmem>>, vector<128x256xbf16>
    %cst = arith.constant dense<0.000000e+00> : vector<16x256xf32>
    %2 = tpu.matmul %0, %1, %cst {dimension_numbers = #tpu.dot_dimension_numbers<[1], [0], [0], [1], [0, 0, 1, 1], [], []>} : vector<16x128xbf16>, vector<128x256xbf16>, vector<16x256xf32> -> vector<16x256xf32>
    %c0_3 = arith.constant 0 : index
    %c0_4 = arith.constant 0 : index
    %3 = vector.load %arg3[%c0_3, %c0_4] : memref<1x256xf32, #tpu.memory_space<vmem>>, vector<1x256xf32>
    %4 = vector.broadcast %3 : vector<1x256xf32> to vector<16x256xf32>
    %5 = arith.addf %2, %4 : vector<16x256xf32>
    %c0_5 = arith.constant 0 : index
    %c0_6 = arith.constant 0 : index
    %6 = vector.load %arg4[%c0_5, %c0_6] : memref<16x256xbf16, #tpu.memory_space<vmem>>, vector<16x256xbf16>
    %7 = arith.extf %6 : vector<16x256xbf16> to vector<16x256xf32>
    %8 = arith.addf %5, %7 : vector<16x256xf32>
    %9 = arith.truncf %8 : vector<16x256xf32> to vector<16x256xbf16>
    %c0_7 = arith.constant 0 : index
    %c0_8 = arith.constant 0 : index
    %10 = vector.load %arg5[%c0_7, %c0_8] : memref<16x256xbf16, #tpu.memory_space<vmem>>, vector<16x256xbf16>
    tpu.vector_store %arg5[%c0_7, %c0_8], %9 {strides = array<i32>} : memref<16x256xbf16, #tpu.memory_space<vmem>>, vector<16x256xbf16>,
    return
  }
  func.func @transform_0(%arg0: i32) -> (i32, i32) {
    %c0_i32 = arith.constant 0 : i32
    %c0_i32_0 = arith.constant 0 : i32
    return %arg0, %c0_i32 : i32, i32
  }
  func.func @transform_1(%arg0: i32) -> (i32, i32) {
    %c0_i32 = arith.constant 0 : i32
    %c0_i32_0 = arith.constant 0 : i32
    %c0_i32_1 = arith.constant 0 : i32
    return %c0_i32, %c0_i32_0 : i32, i32
  }
  func.func @transform_2(%arg0: i32) -> (i32, i32) {
    %c0_i32 = arith.constant 0 : i32
    %c0_i32_0 = arith.constant 0 : i32
    %c0_i32_1 = arith.constant 0 : i32
    return %c0_i32, %c0_i32_0 : i32, i32
  }
  func.func @transform_3(%arg0: i32) -> (i32, i32) {
    %c0_i32 = arith.constant 0 : i32
    %c0_i32_0 = arith.constant 0 : i32
    return %arg0, %c0_i32 : i32, i32
  }
  func.func @transform_4(%arg0: i32) -> (i32, i32) {
    %c0_i32 = arith.constant 0 : i32
    %c0_i32_0 = arith.constant 0 : i32
    return %arg0, %c0_i32 : i32, i32
  }
}

module attributes {stable_mosaic.version = 11 : i64} {
  func.func @_conv1x1_kernel(%arg0: i32, %arg1: memref<16x8xbf16, #tpu.memory_space<vmem>>, %arg2: memref<8x128xbf16, #tpu.memory_space<vmem>>, %arg3: memref<1x128xf32, #tpu.memory_space<vmem>>, %arg4: memref<16x128xbf16, #tpu.memory_space<vmem>>) attributes {dimension_semantics = [#tpu.dimension_semantics<parallel>], iteration_bounds = array<i64: 2>, scalar_prefetch = 0 : i64, scratch_operands = 0 : i64, tpu.core_type = #tpu.core_type<tc>, window_params = [{transform_indices = @transform_0, window_bounds = array<i64: 16, 8>}, {pipeline_mode = #tpu.pipeline_mode<synchronous>, transform_indices = @transform_1, window_bounds = array<i64: 8, 128>}, {pipeline_mode = #tpu.pipeline_mode<synchronous>, transform_indices = @transform_2, window_bounds = array<i64: 1, 128>}, {transform_indices = @transform_3, window_bounds = array<i64: 16, 128>}]} {
    %c0 = arith.constant 0 : index
    %c0_0 = arith.constant 0 : index
    %0 = vector.load %arg1[%c0, %c0_0] : memref<16x8xbf16, #tpu.memory_space<vmem>>, vector<16x8xbf16>
    %c0_1 = arith.constant 0 : index
    %c0_2 = arith.constant 0 : index
    %1 = vector.load %arg2[%c0_1, %c0_2] : memref<8x128xbf16, #tpu.memory_space<vmem>>, vector<8x128xbf16>
    %cst = arith.constant dense<0.000000e+00> : vector<16x128xf32>
    %2 = tpu.matmul %0, %1, %cst {dimension_numbers = #tpu.dot_dimension_numbers<[1], [0], [0], [1], [0, 0, 1, 1], [], []>} : vector<16x8xbf16>, vector<8x128xbf16>, vector<16x128xf32> -> vector<16x128xf32>
    %c0_3 = arith.constant 0 : index
    %c0_4 = arith.constant 0 : index
    %3 = vector.load %arg3[%c0_3, %c0_4] : memref<1x128xf32, #tpu.memory_space<vmem>>, vector<1x128xf32>
    %4 = vector.broadcast %3 : vector<1x128xf32> to vector<16x128xf32>
    %5 = arith.addf %2, %4 : vector<16x128xf32>
    %cst_5 = arith.constant 0.000000e+00 : f32
    %6 = vector.broadcast %cst_5 : f32 to vector<16x128xf32>
    %7 = arith.maximumf %5, %6 : vector<16x128xf32>
    %8 = arith.truncf %7 : vector<16x128xf32> to vector<16x128xbf16>
    %c0_6 = arith.constant 0 : index
    %c0_7 = arith.constant 0 : index
    %9 = vector.load %arg4[%c0_6, %c0_7] : memref<16x128xbf16, #tpu.memory_space<vmem>>, vector<16x128xbf16>
    tpu.vector_store %arg4[%c0_6, %c0_7], %8 {strides = array<i32>} : memref<16x128xbf16, #tpu.memory_space<vmem>>, vector<16x128xbf16>,
    return
  }
  func.func @transform_0(%arg0: i32) -> (i32, i32) {
    %c0_i32 = arith.constant 0 : i32
    %c0_i32_0 = arith.constant 0 : i32
    return %arg0, %c0_i32 : i32, i32
  }
  func.func @transform_1(%arg0: i32) -> (i32, i32) {
    %c0_i32 = arith.constant 0 : i32
    %c0_i32_0 = arith.constant 0 : i32
    %c0_i32_1 = arith.constant 0 : i32
    return %c0_i32, %c0_i32_0 : i32, i32
  }
  func.func @transform_2(%arg0: i32) -> (i32, i32) {
    %c0_i32 = arith.constant 0 : i32
    %c0_i32_0 = arith.constant 0 : i32
    %c0_i32_1 = arith.constant 0 : i32
    return %c0_i32, %c0_i32_0 : i32, i32
  }
  func.func @transform_3(%arg0: i32) -> (i32, i32) {
    %c0_i32 = arith.constant 0 : i32
    %c0_i32_0 = arith.constant 0 : i32
    return %arg0, %c0_i32 : i32, i32
  }
}

module attributes {stable_mosaic.version = 11 : i64} {
  func.func @_conv1x1_up2_add_kernel(%arg0: i32, %arg1: i32, %arg2: memref<1x64x64xbf16, #tpu.memory_space<vmem>>, %arg3: memref<64x256xbf16, #tpu.memory_space<vmem>>, %arg4: memref<1x256xf32, #tpu.memory_space<vmem>>, %arg5: memref<1x32x256xbf16, #tpu.memory_space<vmem>>, %arg6: memref<1x64x256xbf16, #tpu.memory_space<vmem>>) attributes {dimension_semantics = [#tpu.dimension_semantics<parallel>, #tpu.dimension_semantics<parallel>], iteration_bounds = array<i64: 2, 1>, scalar_prefetch = 0 : i64, scratch_operands = 0 : i64, tpu.core_type = #tpu.core_type<tc>, window_params = [{transform_indices = @transform_0, window_bounds = array<i64: 1, 64, 64>}, {pipeline_mode = #tpu.pipeline_mode<synchronous>, transform_indices = @transform_1, window_bounds = array<i64: 64, 256>}, {pipeline_mode = #tpu.pipeline_mode<synchronous>, transform_indices = @transform_2, window_bounds = array<i64: 1, 256>}, {transform_indices = @transform_3, window_bounds = array<i64: 1, 32, 256>}, {transform_indices = @transform_4, window_bounds = array<i64: 1, 64, 256>}]} {
    %c0 = arith.constant 0 : index
    %c0_0 = arith.constant 0 : index
    %c0_1 = arith.constant 0 : index
    %0 = vector.load %arg2[%c0, %c0_0, %c0_1] : memref<1x64x64xbf16, #tpu.memory_space<vmem>>, vector<1x64x64xbf16>
    %1 = vector.shape_cast %0 : vector<1x64x64xbf16> to vector<64x64xbf16>
    %c0_2 = arith.constant 0 : index
    %c0_3 = arith.constant 0 : index
    %2 = vector.load %arg3[%c0_2, %c0_3] : memref<64x256xbf16, #tpu.memory_space<vmem>>, vector<64x256xbf16>
    %cst = arith.constant dense<0.000000e+00> : vector<64x256xf32>
    %3 = tpu.matmul %1, %2, %cst {dimension_numbers = #tpu.dot_dimension_numbers<[1], [0], [0], [1], [0, 0, 1, 1], [], []>} : vector<64x64xbf16>, vector<64x256xbf16>, vector<64x256xf32> -> vector<64x256xf32>
    %c0_4 = arith.constant 0 : index
    %c0_5 = arith.constant 0 : index
    %4 = vector.load %arg4[%c0_4, %c0_5] : memref<1x256xf32, #tpu.memory_space<vmem>>, vector<1x256xf32>
    %5 = vector.broadcast %4 : vector<1x256xf32> to vector<64x256xf32>
    %6 = arith.addf %3, %5 : vector<64x256xf32>
    %c0_6 = arith.constant 0 : index
    %c0_7 = arith.constant 0 : index
    %c0_8 = arith.constant 0 : index
    %7 = vector.load %arg5[%c0_6, %c0_7, %c0_8] : memref<1x32x256xbf16, #tpu.memory_space<vmem>>, vector<1x32x256xbf16>
    %8 = vector.shape_cast %7 : vector<1x32x256xbf16> to vector<32x256xbf16>
    %9 = arith.extf %8 : vector<32x256xbf16> to vector<32x256xf32>
    %10 = vector.shape_cast %9 : vector<32x256xf32> to vector<4x1x8x256xf32>
    %11 = vector.shape_cast %6 : vector<64x256xf32> to vector<4x2x8x256xf32>
    %12 = vector.broadcast %10 : vector<4x1x8x256xf32> to vector<4x2x8x256xf32>
    %13 = arith.addf %11, %12 : vector<4x2x8x256xf32>
    %14 = vector.shape_cast %13 : vector<4x2x8x256xf32> to vector<64x256xf32>
    %15 = arith.truncf %14 : vector<64x256xf32> to vector<64x256xbf16>
    %c0_9 = arith.constant 0 : index
    %c0_10 = arith.constant 0 : index
    %c0_11 = arith.constant 0 : index
    %16 = vector.load %arg6[%c0_9, %c0_10, %c0_11] : memref<1x64x256xbf16, #tpu.memory_space<vmem>>, vector<1x64x256xbf16>
    %17 = vector.shape_cast %16 : vector<1x64x256xbf16> to vector<64x256xbf16>
    %18 = vector.shape_cast %15 : vector<64x256xbf16> to vector<1x64x256xbf16>
    tpu.vector_store %arg6[%c0_9, %c0_10, %c0_11], %18 {strides = array<i32>} : memref<1x64x256xbf16, #tpu.memory_space<vmem>>, vector<1x64x256xbf16>,
    return
  }
  func.func @transform_0(%arg0: i32, %arg1: i32) -> (i32, i32, i32) {
    %c0_i32 = arith.constant 0 : i32
    %c0_i32_0 = arith.constant 0 : i32
    return %arg0, %arg1, %c0_i32 : i32, i32, i32
  }
  func.func @transform_1(%arg0: i32, %arg1: i32) -> (i32, i32) {
    %c0_i32 = arith.constant 0 : i32
    %c0_i32_0 = arith.constant 0 : i32
    %c0_i32_1 = arith.constant 0 : i32
    return %c0_i32, %c0_i32_0 : i32, i32
  }
  func.func @transform_2(%arg0: i32, %arg1: i32) -> (i32, i32) {
    %c0_i32 = arith.constant 0 : i32
    %c0_i32_0 = arith.constant 0 : i32
    %c0_i32_1 = arith.constant 0 : i32
    return %c0_i32, %c0_i32_0 : i32, i32
  }
  func.func @transform_3(%arg0: i32, %arg1: i32) -> (i32, i32, i32) {
    %c0_i32 = arith.constant 0 : i32
    %c0_i32_0 = arith.constant 0 : i32
    return %arg0, %arg1, %c0_i32 : i32, i32, i32
  }
  func.func @transform_4(%arg0: i32, %arg1: i32) -> (i32, i32, i32) {
    %c0_i32 = arith.constant 0 : i32
    %c0_i32_0 = arith.constant 0 : i32
    return %arg0, %arg1, %c0_i32 : i32, i32, i32
  }
}

module attributes {stable_mosaic.version = 11 : i64} {
  func.func @_conv1x1_kernel(%arg0: i32, %arg1: memref<64x8xbf16, #tpu.memory_space<vmem>>, %arg2: memref<8x64xbf16, #tpu.memory_space<vmem>>, %arg3: memref<1x64xf32, #tpu.memory_space<vmem>>, %arg4: memref<64x64xbf16, #tpu.memory_space<vmem>>) attributes {dimension_semantics = [#tpu.dimension_semantics<parallel>], iteration_bounds = array<i64: 2>, scalar_prefetch = 0 : i64, scratch_operands = 0 : i64, tpu.core_type = #tpu.core_type<tc>, window_params = [{transform_indices = @transform_0, window_bounds = array<i64: 64, 8>}, {pipeline_mode = #tpu.pipeline_mode<synchronous>, transform_indices = @transform_1, window_bounds = array<i64: 8, 64>}, {pipeline_mode = #tpu.pipeline_mode<synchronous>, transform_indices = @transform_2, window_bounds = array<i64: 1, 64>}, {transform_indices = @transform_3, window_bounds = array<i64: 64, 64>}]} {
    %c0 = arith.constant 0 : index
    %c0_0 = arith.constant 0 : index
    %0 = vector.load %arg1[%c0, %c0_0] : memref<64x8xbf16, #tpu.memory_space<vmem>>, vector<64x8xbf16>
    %c0_1 = arith.constant 0 : index
    %c0_2 = arith.constant 0 : index
    %1 = vector.load %arg2[%c0_1, %c0_2] : memref<8x64xbf16, #tpu.memory_space<vmem>>, vector<8x64xbf16>
    %cst = arith.constant dense<0.000000e+00> : vector<64x64xf32>
    %2 = tpu.matmul %0, %1, %cst {dimension_numbers = #tpu.dot_dimension_numbers<[1], [0], [0], [1], [0, 0, 1, 1], [], []>} : vector<64x8xbf16>, vector<8x64xbf16>, vector<64x64xf32> -> vector<64x64xf32>
    %c0_3 = arith.constant 0 : index
    %c0_4 = arith.constant 0 : index
    %3 = vector.load %arg3[%c0_3, %c0_4] : memref<1x64xf32, #tpu.memory_space<vmem>>, vector<1x64xf32>
    %4 = vector.broadcast %3 : vector<1x64xf32> to vector<64x64xf32>
    %5 = arith.addf %2, %4 : vector<64x64xf32>
    %cst_5 = arith.constant 0.000000e+00 : f32
    %6 = vector.broadcast %cst_5 : f32 to vector<64x64xf32>
    %7 = arith.maximumf %5, %6 : vector<64x64xf32>
    %8 = arith.truncf %7 : vector<64x64xf32> to vector<64x64xbf16>
    %c0_6 = arith.constant 0 : index
    %c0_7 = arith.constant 0 : index
    %9 = vector.load %arg4[%c0_6, %c0_7] : memref<64x64xbf16, #tpu.memory_space<vmem>>, vector<64x64xbf16>
    tpu.vector_store %arg4[%c0_6, %c0_7], %8 {strides = array<i32>} : memref<64x64xbf16, #tpu.memory_space<vmem>>, vector<64x64xbf16>,
    return
  }
  func.func @transform_0(%arg0: i32) -> (i32, i32) {
    %c0_i32 = arith.constant 0 : i32
    %c0_i32_0 = arith.constant 0 : i32
    return %arg0, %c0_i32 : i32, i32
  }
  func.func @transform_1(%arg0: i32) -> (i32, i32) {
    %c0_i32 = arith.constant 0 : i32
    %c0_i32_0 = arith.constant 0 : i32
    %c0_i32_1 = arith.constant 0 : i32
    return %c0_i32, %c0_i32_0 : i32, i32
  }
  func.func @transform_2(%arg0: i32) -> (i32, i32) {
    %c0_i32 = arith.constant 0 : i32
    %c0_i32_0 = arith.constant 0 : i32
    %c0_i32_1 = arith.constant 0 : i32
    return %c0_i32, %c0_i32_0 : i32, i32
  }
  func.func @transform_3(%arg0: i32) -> (i32, i32) {
    %c0_i32 = arith.constant 0 : i32
    %c0_i32_0 = arith.constant 0 : i32
    return %arg0, %c0_i32 : i32, i32
  }
}

module attributes {stable_mosaic.version = 11 : i64} {
  func.func @_conv3x3_head_kernel(%arg0: i32, %arg1: i32, %arg2: memref<1x48x256xbf16, #tpu.memory_space<vmem>>, %arg3: memref<1x8x256xbf16, #tpu.memory_space<vmem>>, %arg4: memref<1x8x256xbf16, #tpu.memory_space<vmem>>, %arg5: memref<3x3x256x256xbf16, #tpu.memory_space<vmem>>, %arg6: memref<1x256xf32, #tpu.memory_space<vmem>>, %arg7: memref<5x256xbf16, #tpu.memory_space<vmem>>, %arg8: memref<5x1xf32, #tpu.memory_space<vmem>>, %arg9: memref<1x5x48xf32, #tpu.memory_space<vmem>>) attributes {dimension_semantics = [#tpu.dimension_semantics<parallel>, #tpu.dimension_semantics<parallel>], iteration_bounds = array<i64: 2, 1>, scalar_prefetch = 0 : i64, scratch_operands = 0 : i64, tpu.core_type = #tpu.core_type<tc>, window_params = [{transform_indices = @transform_0, window_bounds = array<i64: 1, 48, 256>}, {transform_indices = @transform_1, window_bounds = array<i64: 1, 8, 256>}, {transform_indices = @transform_2, window_bounds = array<i64: 1, 8, 256>}, {pipeline_mode = #tpu.pipeline_mode<synchronous>, transform_indices = @transform_3, window_bounds = array<i64: 3, 3, 256, 256>}, {pipeline_mode = #tpu.pipeline_mode<synchronous>, transform_indices = @transform_4, window_bounds = array<i64: 1, 256>}, {pipeline_mode = #tpu.pipeline_mode<synchronous>, transform_indices = @transform_5, window_bounds = array<i64: 5, 256>}, {pipeline_mode = #tpu.pipeline_mode<synchronous>, transform_indices = @transform_6, window_bounds = array<i64: 5, 1>}, {transform_indices = @transform_7, window_bounds = array<i64: 1, 5, 48>}]} {
    %c0 = arith.constant 0 : index
    %c0_0 = arith.constant 0 : index
    %c0_1 = arith.constant 0 : index
    %0 = vector.load %arg2[%c0, %c0_0, %c0_1] : memref<1x48x256xbf16, #tpu.memory_space<vmem>>, vector<1x48x256xbf16>
    %1 = vector.shape_cast %0 : vector<1x48x256xbf16> to vector<48x256xbf16>
    %c0_2 = arith.constant 0 : index
    %c0_3 = arith.constant 0 : index
    %c0_4 = arith.constant 0 : index
    %2 = vector.load %arg3[%c0_2, %c0_3, %c0_4] : memref<1x8x256xbf16, #tpu.memory_space<vmem>>, vector<1x8x256xbf16>
    %3 = vector.shape_cast %2 : vector<1x8x256xbf16> to vector<8x256xbf16>
    %c0_5 = arith.constant 0 : index
    %c0_6 = arith.constant 0 : index
    %c0_7 = arith.constant 0 : index
    %4 = vector.load %arg4[%c0_5, %c0_6, %c0_7] : memref<1x8x256xbf16, #tpu.memory_space<vmem>>, vector<1x8x256xbf16>
    %5 = vector.shape_cast %4 : vector<1x8x256xbf16> to vector<8x256xbf16>
    %6 = tpu.concatenate %1, %3, %5 in 0 : vector<48x256xbf16>, vector<8x256xbf16>, vector<8x256xbf16> -> vector<64x256xbf16>
    %7 = vector.extract_strided_slice %6 {offsets = [1, 0], sizes = [63, 256], strides = [1, 1]} : vector<64x256xbf16> to vector<63x256xbf16>
    %8 = vector.extract_strided_slice %6 {offsets = [0, 0], sizes = [1, 256], strides = [1, 1]} : vector<64x256xbf16> to vector<1x256xbf16>
    %9 = tpu.concatenate %7, %8 in 0 : vector<63x256xbf16>, vector<1x256xbf16> -> vector<64x256xbf16>
    %10 = vector.extract_strided_slice %6 {offsets = [2, 0], sizes = [62, 256], strides = [1, 1]} : vector<64x256xbf16> to vector<62x256xbf16>
    %11 = vector.extract_strided_slice %6 {offsets = [0, 0], sizes = [2, 256], strides = [1, 1]} : vector<64x256xbf16> to vector<2x256xbf16>
    %12 = tpu.concatenate %10, %11 in 0 : vector<62x256xbf16>, vector<2x256xbf16> -> vector<64x256xbf16>
    %c0_8 = arith.constant 0 : index
    %c0_9 = arith.constant 0 : index
    %c0_10 = arith.constant 0 : index
    %13 = vector.load %arg2[%c0_8, %c0_9, %c0_10] : memref<1x48x256xbf16, #tpu.memory_space<vmem>>, vector<1x48x256xbf16>
    %14 = vector.shape_cast %13 : vector<1x48x256xbf16> to vector<48x256xbf16>
    %c0_11 = arith.constant 0 : index
    %c0_12 = arith.constant 0 : index
    %c0_13 = arith.constant 0 : index
    %c0_14 = arith.constant 0 : index
    %15 = vector.load %arg5[%c0_11, %c0_12, %c0_13, %c0_14] : memref<3x3x256x256xbf16, #tpu.memory_space<vmem>>, vector<1x1x256x256xbf16>
    %16 = vector.shape_cast %15 : vector<1x1x256x256xbf16> to vector<256x256xbf16>
    %cst = arith.constant dense<0.000000e+00> : vector<48x256xf32>
    %17 = tpu.matmul %14, %16, %cst {dimension_numbers = #tpu.dot_dimension_numbers<[1], [0], [0], [1], [0, 0, 1, 1], [], []>} : vector<48x256xbf16>, vector<256x256xbf16>, vector<48x256xf32> -> vector<48x256xf32>
    %c0_15 = arith.constant 0 : index
    %c0_16 = arith.constant 0 : index
    %18 = vector.load %arg6[%c0_15, %c0_16] : memref<1x256xf32, #tpu.memory_space<vmem>>, vector<1x256xf32>
    %19 = vector.broadcast %18 : vector<1x256xf32> to vector<48x256xf32>
    %20 = arith.addf %17, %19 : vector<48x256xf32>
    %21 = vector.extract_strided_slice %9 {offsets = [0, 0], sizes = [48, 256], strides = [1, 1]} : vector<64x256xbf16> to vector<48x256xbf16>
    %c0_17 = arith.constant 0 : index
    %c1 = arith.constant 1 : index
    %c0_18 = arith.constant 0 : index
    %c0_19 = arith.constant 0 : index
    %22 = vector.load %arg5[%c0_17, %c1, %c0_18, %c0_19] : memref<3x3x256x256xbf16, #tpu.memory_space<vmem>>, vector<1x1x256x256xbf16>
    %23 = vector.shape_cast %22 : vector<1x1x256x256xbf16> to vector<256x256xbf16>
    %cst_20 = arith.constant dense<0.000000e+00> : vector<48x256xf32>
    %24 = tpu.matmul %21, %23, %cst_20 {dimension_numbers = #tpu.dot_dimension_numbers<[1], [0], [0], [1], [0, 0, 1, 1], [], []>} : vector<48x256xbf16>, vector<256x256xbf16>, vector<48x256xf32> -> vector<48x256xf32>
    %25 = arith.addf %20, %24 : vector<48x256xf32>
    %26 = vector.extract_strided_slice %12 {offsets = [0, 0], sizes = [48, 256], strides = [1, 1]} : vector<64x256xbf16> to vector<48x256xbf16>
    %c0_21 = arith.constant 0 : index
    %c2 = arith.constant 2 : index
    %c0_22 = arith.constant 0 : index
    %c0_23 = arith.constant 0 : index
    %27 = vector.load %arg5[%c0_21, %c2, %c0_22, %c0_23] : memref<3x3x256x256xbf16, #tpu.memory_space<vmem>>, vector<1x1x256x256xbf16>
    %28 = vector.shape_cast %27 : vector<1x1x256x256xbf16> to vector<256x256xbf16>
    %cst_24 = arith.constant dense<0.000000e+00> : vector<48x256xf32>
    %29 = tpu.matmul %26, %28, %cst_24 {dimension_numbers = #tpu.dot_dimension_numbers<[1], [0], [0], [1], [0, 0, 1, 1], [], []>} : vector<48x256xbf16>, vector<256x256xbf16>, vector<48x256xf32> -> vector<48x256xf32>
    %30 = arith.addf %25, %29 : vector<48x256xf32>
    %31 = vector.extract_strided_slice %6 {offsets = [8, 0], sizes = [48, 256], strides = [1, 1]} : vector<64x256xbf16> to vector<48x256xbf16>
    %c1_25 = arith.constant 1 : index
    %c0_26 = arith.constant 0 : index
    %c0_27 = arith.constant 0 : index
    %c0_28 = arith.constant 0 : index
    %32 = vector.load %arg5[%c1_25, %c0_26, %c0_27, %c0_28] : memref<3x3x256x256xbf16, #tpu.memory_space<vmem>>, vector<1x1x256x256xbf16>
    %33 = vector.shape_cast %32 : vector<1x1x256x256xbf16> to vector<256x256xbf16>
    %cst_29 = arith.constant dense<0.000000e+00> : vector<48x256xf32>
    %34 = tpu.matmul %31, %33, %cst_29 {dimension_numbers = #tpu.dot_dimension_numbers<[1], [0], [0], [1], [0, 0, 1, 1], [], []>} : vector<48x256xbf16>, vector<256x256xbf16>, vector<48x256xf32> -> vector<48x256xf32>
    %35 = arith.addf %30, %34 : vector<48x256xf32>
    %36 = vector.extract_strided_slice %9 {offsets = [8, 0], sizes = [48, 256], strides = [1, 1]} : vector<64x256xbf16> to vector<48x256xbf16>
    %c1_30 = arith.constant 1 : index
    %c1_31 = arith.constant 1 : index
    %c0_32 = arith.constant 0 : index
    %c0_33 = arith.constant 0 : index
    %37 = vector.load %arg5[%c1_30, %c1_31, %c0_32, %c0_33] : memref<3x3x256x256xbf16, #tpu.memory_space<vmem>>, vector<1x1x256x256xbf16>
    %38 = vector.shape_cast %37 : vector<1x1x256x256xbf16> to vector<256x256xbf16>
    %cst_34 = arith.constant dense<0.000000e+00> : vector<48x256xf32>
    %39 = tpu.matmul %36, %38, %cst_34 {dimension_numbers = #tpu.dot_dimension_numbers<[1], [0], [0], [1], [0, 0, 1, 1], [], []>} : vector<48x256xbf16>, vector<256x256xbf16>, vector<48x256xf32> -> vector<48x256xf32>
    %40 = arith.addf %35, %39 : vector<48x256xf32>
    %41 = vector.extract_strided_slice %12 {offsets = [8, 0], sizes = [48, 256], strides = [1, 1]} : vector<64x256xbf16> to vector<48x256xbf16>
    %c1_35 = arith.constant 1 : index
    %c2_36 = arith.constant 2 : index
    %c0_37 = arith.constant 0 : index
    %c0_38 = arith.constant 0 : index
    %42 = vector.load %arg5[%c1_35, %c2_36, %c0_37, %c0_38] : memref<3x3x256x256xbf16, #tpu.memory_space<vmem>>, vector<1x1x256x256xbf16>
    %43 = vector.shape_cast %42 : vector<1x1x256x256xbf16> to vector<256x256xbf16>
    %cst_39 = arith.constant dense<0.000000e+00> : vector<48x256xf32>
    %44 = tpu.matmul %41, %43, %cst_39 {dimension_numbers = #tpu.dot_dimension_numbers<[1], [0], [0], [1], [0, 0, 1, 1], [], []>} : vector<48x256xbf16>, vector<256x256xbf16>, vector<48x256xf32> -> vector<48x256xf32>
    %45 = arith.addf %40, %44 : vector<48x256xf32>
    %46 = vector.extract_strided_slice %6 {offsets = [16, 0], sizes = [48, 256], strides = [1, 1]} : vector<64x256xbf16> to vector<48x256xbf16>
    %c2_40 = arith.constant 2 : index
    %c0_41 = arith.constant 0 : index
    %c0_42 = arith.constant 0 : index
    %c0_43 = arith.constant 0 : index
    %47 = vector.load %arg5[%c2_40, %c0_41, %c0_42, %c0_43] : memref<3x3x256x256xbf16, #tpu.memory_space<vmem>>, vector<1x1x256x256xbf16>
    %48 = vector.shape_cast %47 : vector<1x1x256x256xbf16> to vector<256x256xbf16>
    %cst_44 = arith.constant dense<0.000000e+00> : vector<48x256xf32>
    %49 = tpu.matmul %46, %48, %cst_44 {dimension_numbers = #tpu.dot_dimension_numbers<[1], [0], [0], [1], [0, 0, 1, 1], [], []>} : vector<48x256xbf16>, vector<256x256xbf16>, vector<48x256xf32> -> vector<48x256xf32>
    %50 = arith.addf %45, %49 : vector<48x256xf32>
    %51 = vector.extract_strided_slice %9 {offsets = [16, 0], sizes = [48, 256], strides = [1, 1]} : vector<64x256xbf16> to vector<48x256xbf16>
    %c2_45 = arith.constant 2 : index
    %c1_46 = arith.constant 1 : index
    %c0_47 = arith.constant 0 : index
    %c0_48 = arith.constant 0 : index
    %52 = vector.load %arg5[%c2_45, %c1_46, %c0_47, %c0_48] : memref<3x3x256x256xbf16, #tpu.memory_space<vmem>>, vector<1x1x256x256xbf16>
    %53 = vector.shape_cast %52 : vector<1x1x256x256xbf16> to vector<256x256xbf16>
    %cst_49 = arith.constant dense<0.000000e+00> : vector<48x256xf32>
    %54 = tpu.matmul %51, %53, %cst_49 {dimension_numbers = #tpu.dot_dimension_numbers<[1], [0], [0], [1], [0, 0, 1, 1], [], []>} : vector<48x256xbf16>, vector<256x256xbf16>, vector<48x256xf32> -> vector<48x256xf32>
    %55 = arith.addf %50, %54 : vector<48x256xf32>
    %56 = vector.extract_strided_slice %12 {offsets = [16, 0], sizes = [48, 256], strides = [1, 1]} : vector<64x256xbf16> to vector<48x256xbf16>
    %c2_50 = arith.constant 2 : index
    %c2_51 = arith.constant 2 : index
    %c0_52 = arith.constant 0 : index
    %c0_53 = arith.constant 0 : index
    %57 = vector.load %arg5[%c2_50, %c2_51, %c0_52, %c0_53] : memref<3x3x256x256xbf16, #tpu.memory_space<vmem>>, vector<1x1x256x256xbf16>
    %58 = vector.shape_cast %57 : vector<1x1x256x256xbf16> to vector<256x256xbf16>
    %cst_54 = arith.constant dense<0.000000e+00> : vector<48x256xf32>
    %59 = tpu.matmul %56, %58, %cst_54 {dimension_numbers = #tpu.dot_dimension_numbers<[1], [0], [0], [1], [0, 0, 1, 1], [], []>} : vector<48x256xbf16>, vector<256x256xbf16>, vector<48x256xf32> -> vector<48x256xf32>
    %60 = arith.addf %55, %59 : vector<48x256xf32>
    %cst_55 = arith.constant 0.000000e+00 : f32
    %61 = vector.broadcast %cst_55 : f32 to vector<48x256xf32>
    %62 = arith.maximumf %60, %61 : vector<48x256xf32>
    %63 = arith.truncf %62 : vector<48x256xf32> to vector<48x256xbf16>
    %c0_56 = arith.constant 0 : index
    %c0_57 = arith.constant 0 : index
    %64 = vector.load %arg7[%c0_56, %c0_57] : memref<5x256xbf16, #tpu.memory_space<vmem>>, vector<5x256xbf16>
    %cst_58 = arith.constant dense<0.000000e+00> : vector<5x48xf32>
    %65 = tpu.matmul %64, %63, %cst_58 {dimension_numbers = #tpu.dot_dimension_numbers<[1], [1], [0], [0], [0, 0, 1, 0], [], []>} : vector<5x256xbf16>, vector<48x256xbf16>, vector<5x48xf32> -> vector<5x48xf32>
    %c0_59 = arith.constant 0 : index
    %c0_60 = arith.constant 0 : index
    %66 = vector.load %arg8[%c0_59, %c0_60] : memref<5x1xf32, #tpu.memory_space<vmem>>, vector<5x1xf32>
    %67 = vector.broadcast %66 : vector<5x1xf32> to vector<5x48xf32>
    %68 = arith.addf %65, %67 : vector<5x48xf32>
    %c0_61 = arith.constant 0 : index
    %c0_62 = arith.constant 0 : index
    %c0_63 = arith.constant 0 : index
    %69 = vector.load %arg9[%c0_61, %c0_62, %c0_63] : memref<1x5x48xf32, #tpu.memory_space<vmem>>, vector<1x5x48xf32>
    %70 = vector.shape_cast %69 : vector<1x5x48xf32> to vector<5x48xf32>
    %71 = vector.shape_cast %68 : vector<5x48xf32> to vector<1x5x48xf32>
    tpu.vector_store %arg9[%c0_61, %c0_62, %c0_63], %71 {strides = array<i32>} : memref<1x5x48xf32, #tpu.memory_space<vmem>>, vector<1x5x48xf32>,
    return
  }
  func.func @transform_0(%arg0: i32, %arg1: i32) -> (i32, i32, i32) {
    %c0_i32 = arith.constant 0 : i32
    %c0_i32_0 = arith.constant 0 : i32
    return %arg0, %arg1, %c0_i32 : i32, i32, i32
  }
  func.func @transform_1(%arg0: i32, %arg1: i32) -> (i32, i32, i32) {
    %c1_i32 = arith.constant 1 : i32
    %0 = arith.addi %arg1, %c1_i32 : i32
    %c6_i32 = arith.constant 6 : i32
    %1 = arith.muli %0, %c6_i32 : i32
    %c7_i32 = arith.constant 7 : i32
    %2 = arith.minsi %1, %c7_i32 : i32
    %c0_i32 = arith.constant 0 : i32
    %c0_i32_0 = arith.constant 0 : i32
    return %arg0, %2, %c0_i32 : i32, i32, i32
  }
  func.func @transform_2(%arg0: i32, %arg1: i32) -> (i32, i32, i32) {
    %c1_i32 = arith.constant 1 : i32
    %0 = arith.addi %arg1, %c1_i32 : i32
    %c6_i32 = arith.constant 6 : i32
    %1 = arith.muli %0, %c6_i32 : i32
    %c1_i32_0 = arith.constant 1 : i32
    %2 = arith.addi %1, %c1_i32_0 : i32
    %c7_i32 = arith.constant 7 : i32
    %3 = arith.minsi %2, %c7_i32 : i32
    %c0_i32 = arith.constant 0 : i32
    %c0_i32_1 = arith.constant 0 : i32
    return %arg0, %3, %c0_i32 : i32, i32, i32
  }
  func.func @transform_3(%arg0: i32, %arg1: i32) -> (i32, i32, i32, i32) {
    %c0_i32 = arith.constant 0 : i32
    %c0_i32_0 = arith.constant 0 : i32
    %c0_i32_1 = arith.constant 0 : i32
    %c0_i32_2 = arith.constant 0 : i32
    %c0_i32_3 = arith.constant 0 : i32
    return %c0_i32, %c0_i32_0, %c0_i32_1, %c0_i32_2 : i32, i32, i32, i32
  }
  func.func @transform_4(%arg0: i32, %arg1: i32) -> (i32, i32) {
    %c0_i32 = arith.constant 0 : i32
    %c0_i32_0 = arith.constant 0 : i32
    %c0_i32_1 = arith.constant 0 : i32
    return %c0_i32, %c0_i32_0 : i32, i32
  }
  func.func @transform_5(%arg0: i32, %arg1: i32) -> (i32, i32) {
    %c0_i32 = arith.constant 0 : i32
    %c0_i32_0 = arith.constant 0 : i32
    %c0_i32_1 = arith.constant 0 : i32
    return %c0_i32, %c0_i32_0 : i32, i32
  }
  func.func @transform_6(%arg0: i32, %arg1: i32) -> (i32, i32) {
    %c0_i32 = arith.constant 0 : i32
    %c0_i32_0 = arith.constant 0 : i32
    %c0_i32_1 = arith.constant 0 : i32
    return %c0_i32, %c0_i32_0 : i32, i32
  }
  func.func @transform_7(%arg0: i32, %arg1: i32) -> (i32, i32, i32) {
    %c0_i32 = arith.constant 0 : i32
    %c0_i32_0 = arith.constant 0 : i32
    return %arg0, %c0_i32, %arg1 : i32, i32, i32
  }
}

module attributes {stable_mosaic.version = 11 : i64} {
  func.func @_rowmatmul_kernel(%arg0: i32, %arg1: memref<32x8xf32, #tpu.memory_space<vmem>>, %arg2: memref<8x32xf32, #tpu.memory_space<vmem>>, %arg3: memref<32x32xf32, #tpu.memory_space<vmem>>) attributes {dimension_semantics = [#tpu.dimension_semantics<parallel>], iteration_bounds = array<i64: 2>, scalar_prefetch = 0 : i64, scratch_operands = 0 : i64, tpu.core_type = #tpu.core_type<tc>, window_params = [{transform_indices = @transform_0, window_bounds = array<i64: 32, 8>}, {pipeline_mode = #tpu.pipeline_mode<synchronous>, transform_indices = @transform_1, window_bounds = array<i64: 8, 32>}, {transform_indices = @transform_2, window_bounds = array<i64: 32, 32>}]} {
    %c0 = arith.constant 0 : index
    %c0_0 = arith.constant 0 : index
    %0 = vector.load %arg1[%c0, %c0_0] : memref<32x8xf32, #tpu.memory_space<vmem>>, vector<32x8xf32>
    %c0_1 = arith.constant 0 : index
    %c0_2 = arith.constant 0 : index
    %1 = vector.load %arg2[%c0_1, %c0_2] : memref<8x32xf32, #tpu.memory_space<vmem>>, vector<8x32xf32>
    %cst = arith.constant dense<0.000000e+00> : vector<32x32xf32>
    %2 = tpu.matmul %0, %1, %cst {dimension_numbers = #tpu.dot_dimension_numbers<[1], [0], [0], [1], [0, 0, 1, 1], [], []>} : vector<32x8xf32>, vector<8x32xf32>, vector<32x32xf32> -> vector<32x32xf32>
    %c0_3 = arith.constant 0 : index
    %c0_4 = arith.constant 0 : index
    %3 = vector.load %arg3[%c0_3, %c0_4] : memref<32x32xf32, #tpu.memory_space<vmem>>, vector<32x32xf32>
    tpu.vector_store %arg3[%c0_3, %c0_4], %2 {strides = array<i32>} : memref<32x32xf32, #tpu.memory_space<vmem>>, vector<32x32xf32>,
    return
  }
  func.func @transform_0(%arg0: i32) -> (i32, i32) {
    %c0_i32 = arith.constant 0 : i32
    %c0_i32_0 = arith.constant 0 : i32
    return %arg0, %c0_i32 : i32, i32
  }
  func.func @transform_1(%arg0: i32) -> (i32, i32) {
    %c0_i32 = arith.constant 0 : i32
    %c0_i32_0 = arith.constant 0 : i32
    %c0_i32_1 = arith.constant 0 : i32
    return %c0_i32, %c0_i32_0 : i32, i32
  }
  func.func @transform_2(%arg0: i32) -> (i32, i32) {
    %c0_i32 = arith.constant 0 : i32
    %c0_i32_0 = arith.constant 0 : i32
    return %arg0, %c0_i32 : i32, i32
  }
}

module attributes {stable_mosaic.version = 11 : i64} {
  func.func @_hmatmul_kernel(%arg0: i32, %arg1: i32, %arg2: i32, %arg3: memref<1x1x6x32xf32, #tpu.memory_space<vmem>>, %arg4: memref<32x6xf32, #tpu.memory_space<vmem>>, %arg5: memref<1x1x32x32xf32, #tpu.memory_space<vmem>>) attributes {dimension_semantics = [#tpu.dimension_semantics<parallel>, #tpu.dimension_semantics<parallel>, #tpu.dimension_semantics<arbitrary>], iteration_bounds = array<i64: 2, 5, 1>, scalar_prefetch = 0 : i64, scratch_operands = 0 : i64, tpu.core_type = #tpu.core_type<tc>, window_params = [{transform_indices = @transform_0, window_bounds = array<i64: 1, 1, 6, 32>}, {transform_indices = @transform_1, window_bounds = array<i64: 32, 6>}, {transform_indices = @transform_2, window_bounds = array<i64: 1, 1, 32, 32>}]} {
    %c0 = arith.constant 0 : index
    %c0_0 = arith.constant 0 : index
    %0 = vector.load %arg4[%c0, %c0_0] : memref<32x6xf32, #tpu.memory_space<vmem>>, vector<32x6xf32>
    %c0_1 = arith.constant 0 : index
    %c0_2 = arith.constant 0 : index
    %c0_3 = arith.constant 0 : index
    %c0_4 = arith.constant 0 : index
    %1 = vector.load %arg3[%c0_1, %c0_2, %c0_3, %c0_4] : memref<1x1x6x32xf32, #tpu.memory_space<vmem>>, vector<1x1x6x32xf32>
    %2 = vector.shape_cast %1 : vector<1x1x6x32xf32> to vector<6x32xf32>
    %cst = arith.constant dense<0.000000e+00> : vector<32x32xf32>
    %3 = tpu.matmul %0, %2, %cst {dimension_numbers = #tpu.dot_dimension_numbers<[1], [0], [0], [1], [0, 0, 1, 1], [], []>} : vector<32x6xf32>, vector<6x32xf32>, vector<32x32xf32> -> vector<32x32xf32>
    %c0_5 = arith.constant 0 : index
    %c0_6 = arith.constant 0 : index
    %c0_7 = arith.constant 0 : index
    %c0_8 = arith.constant 0 : index
    %4 = vector.load %arg5[%c0_5, %c0_6, %c0_7, %c0_8] : memref<1x1x32x32xf32, #tpu.memory_space<vmem>>, vector<1x1x32x32xf32>
    %5 = vector.shape_cast %4 : vector<1x1x32x32xf32> to vector<32x32xf32>
    %6 = vector.shape_cast %3 : vector<32x32xf32> to vector<1x1x32x32xf32>
    tpu.vector_store %arg5[%c0_5, %c0_6, %c0_7, %c0_8], %6 {strides = array<i32>} : memref<1x1x32x32xf32, #tpu.memory_space<vmem>>, vector<1x1x32x32xf32>,
    return
  }
  func.func @transform_0(%arg0: i32, %arg1: i32, %arg2: i32) -> (i32, i32, i32, i32) {
    %c0_i32 = arith.constant 0 : i32
    %c0_i32_0 = arith.constant 0 : i32
    %c0_i32_1 = arith.constant 0 : i32
    return %arg0, %arg1, %c0_i32, %c0_i32_0 : i32, i32, i32, i32
  }
  func.func @transform_1(%arg0: i32, %arg1: i32, %arg2: i32) -> (i32, i32) {
    %c0_i32 = arith.constant 0 : i32
    %c0_i32_0 = arith.constant 0 : i32
    return %arg2, %c0_i32 : i32, i32
  }
  func.func @transform_2(%arg0: i32, %arg1: i32, %arg2: i32) -> (i32, i32, i32, i32) {
    %c0_i32 = arith.constant 0 : i32
    %c0_i32_0 = arith.constant 0 : i32
    return %arg0, %arg1, %arg2, %c0_i32 : i32, i32, i32, i32
  }
}

</mosaic_0001>

<llo_original>
// kernel: segmentation_fpn_forward.14
$region0: #{segmentation_fpn_forward.14}
  #allocation0 [shape = 'u32[]', space=smem, size = 0x4, offset = 0x4, fixed_abs, tag = 'smem constant byte address 0x4 - core index']
  #allocation1 [shape = 'u32[72,128]{1,0:T(1,128)}', space=vmem, size = 0x9000, scoped, tag = 'internal scratch']
  %s0 = inlined_call_operand.vmem [shape: bf16[8,8], index: 0, kind: input, shape index: {}]
  %s1 = inlined_call_operand.vmem [shape: bf16[8,512], index: 1, kind: input, shape index: {}]
  %s2 = inlined_call_operand.hbm [shape: f32[1,512], index: 2, kind: input, shape index: {}]
  %s3 = inlined_call_operand.vmem [shape: bf16[8,512], index: 3, kind: output, shape index: {}]
  %s4 = sld [smem:[#allocation0]]
  $region26: #{segmentation_fpn_forward.14} parent=0
    _
  %s6 = ssub.s32 1, %s4
  %s7 = scalar_select 0, %s6, %s4
  $region1: #{segmentation_fpn_forward.14} parent=0
    #allocation2 [shape = 'u8[2048]{0}', space=vmem, size = 0x800, scoped, tag = 'input window, operand 2, single buffered']
    #allocation3 [shape = 's32[1]{0}', space=sflag, size = 0x4, scoped, tag = 'scoped memory for segmentation_fpn_forward.14']
    %8 = vsyncpa [#allocation3], 0
    // Predicated region
    $region2: #{segmentation_fpn_forward.14} parent=1 // pred_check
      _
    $region3: #{segmentation_fpn_forward.14} parent=1 // pred_check_branch
      %10 = sbr.rel (0) target = $region5
    $region4: #{segmentation_fpn_forward.14} parent=1 // pred_region
      _
    $region5: #{segmentation_fpn_forward.14} parent=1 // pred_fallthru
      _
    // Predicated region
    $region6: #{segmentation_fpn_forward.14} parent=1 // pred_check
      _
    $region7: #{segmentation_fpn_forward.14} parent=1 // pred_check_branch
      %12 = sbr.rel (0) target = $region9
    $region8: #{segmentation_fpn_forward.14} parent=1 // pred_region
      _
    $region9: #{segmentation_fpn_forward.14} parent=1 // pred_fallthru
      _
    // Predicated region
    $region10: #{segmentation_fpn_forward.14} parent=1 // pred_check
      _
    $region11: #{segmentation_fpn_forward.14} parent=1 // pred_check_branch
      %14 = sbr.rel (0) target = $region13
    $region12: #{segmentation_fpn_forward.14} parent=1 // pred_region
      %16 = vsyncadd [#allocation3], 0
      %s18 = sshll.u32 %s2, 4
      %s19 = int_to_ptr.hbm [resolvable:$true] %s18
      %s20 = sshll.u32 [#allocation2], 4
      %s21 = int_to_ptr.vmem [resolvable:$true] %s20
      %23 = dma.hbm_to_vmem [thread:$0]  %s19, 64, %s21, [#allocation3]
    $region13: #{segmentation_fpn_forward.14} parent=1 // pred_fallthru
      _
    // Predicated region
    $region14: #{segmentation_fpn_forward.14} parent=1 // pred_check
      _
    $region15: #{segmentation_fpn_forward.14} parent=1 // pred_check_branch
      %25 = sbr.rel (0) target = $region17
    $region16: #{segmentation_fpn_forward.14} parent=1 // pred_region
      %27 = dma.done [#allocation3], 64
    $region17: #{segmentation_fpn_forward.14} parent=1 // pred_fallthru
      _
    %v29 = vld [vmem:[%s0] sm:$0xf]
    %v30 = vld [vmem:[%s1] sm:$0xff]
    %v31 = vld [vmem:[%s1 + $0x8] sm:$0xff]
    %v32 = vld [vmem:[#allocation2] sm:$0xf]
    %v34 = vperm.slane %v32, 0
    %v35 = vperm.slane %v32, 1
    %v36 = vperm.slane %v32, 2
    %v37 = vperm.slane %v32, 3
    %v44 = vunpack.c.l.b16 %v30
    %v45 = vunpack.c.h.b16 %v30
    %v46 = vunpack.c.l.b16 %v31
    %v47 = vunpack.c.h.b16 %v31
    %v48 = vpack.c.b16 %v44, %v44
    %v49 = vpack.c.b16 %v45, %v45
    %v50 = vpack.c.b16 %v46, %v46
    %v51 = vpack.c.b16 %v47, %v47
    %vm52 = vcmask 64512
    %v54 = vsel %vm52, %v29, 0
    %vm56 = vcmask 1043456
    %v58 = vsel %vm56, %v48, 0
    %v61 = vsel %vm56, %v49, 0
    %v64 = vsel %vm56, %v50, 0
    %v67 = vsel %vm56, %v51, 0
    %69 = vmatpush.bf16.msra.mxu0 0
    %70 = vmatpush.bf16.msra.mxu0 0
    %71 = vmatpush.bf16.msra.mxu0 0
    %72 = vmatpush.bf16.msra.mxu0 0
    %73 = vmatpush.bf16.msra.mxu0 0
    %74 = vmatpush.bf16.msra.mxu0 0
    %75 = vmatpush.bf16.msra.mxu0 0
    %76 = vmatpush.bf16.msra.mxu0 %v58
    %77 = vmatmul.bf16.gmra.mxu0 %v54
    %v78 = vpop.f32.mrf.mxu0
    %v79 = vadd.f32 %v34, %v78
    %v80 = vpop.f32.mrf.mxu0
    %81 = vdwg.mxu0
    %82 = vmatpush.bf16.msra.mxu0 0
    %83 = vmatpush.bf16.msra.mxu0 0
    %84 = vmatpush.bf16.msra.mxu0 0
    %85 = vmatpush.bf16.msra.mxu0 0
    %86 = vmatpush.bf16.msra.mxu0 0
    %87 = vmatpush.bf16.msra.mxu0 0
    %88 = vmatpush.bf16.msra.mxu0 0
    %89 = vmatpush.bf16.msra.mxu0 %v61
    %90 = vmatmul.bf16.gmra.mxu0 %v54
    %v91 = vpop.f32.mrf.mxu0
    %v92 = vadd.f32 %v35, %v91
    %v93 = vpop.f32.mrf.mxu0
    %94 = vdwg.mxu0
    %95 = vmatpush.bf16.msra.mxu0 0
    %96 = vmatpush.bf16.msra.mxu0 0
    %97 = vmatpush.bf16.msra.mxu0 0
    %98 = vmatpush.bf16.msra.mxu0 0
    %99 = vmatpush.bf16.msra.mxu0 0
    %100 = vmatpush.bf16.msra.mxu0 0
    %101 = vmatpush.bf16.msra.mxu0 0
    %102 = vmatpush.bf16.msra.mxu0 %v64
    %103 = vmatmul.bf16.gmra.mxu0 %v54
    %v104 = vpop.f32.mrf.mxu0
    %v105 = vadd.f32 %v36, %v104
    %v106 = vpop.f32.mrf.mxu0
    %107 = vdwg.mxu0
    %108 = vmatpush.bf16.msra.mxu0 0
    %109 = vmatpush.bf16.msra.mxu0 0
    %110 = vmatpush.bf16.msra.mxu0 0
    %111 = vmatpush.bf16.msra.mxu0 0
    %112 = vmatpush.bf16.msra.mxu0 0
    %113 = vmatpush.bf16.msra.mxu0 0
    %114 = vmatpush.bf16.msra.mxu0 0
    %115 = vmatpush.bf16.msra.mxu0 %v67
    %116 = vmatmul.bf16.gmra.mxu0 %v54
    %v117 = vpop.f32.mrf.mxu0
    %v118 = vadd.f32 %v37, %v117
    %v119 = vpop.f32.mrf.mxu0
    %120 = vdwg.mxu0
    %v121 = vmax.f32 %v79, 0.0
    %v122 = vmax.f32 %v92, 0.0
    %v123 = vmax.f32 %v105, 0.0
    %v124 = vmax.f32 %v118, 0.0
    %v125 = vpack.c.bf16 %v122, %v121
    %v126 = vpack.c.bf16 %v124, %v123
    %127 = vst [vmem:[%s3] sm:$0xff] %v125
    %128 = vst [vmem:[%s3 + $0x8] sm:$0xff] %v126
    // Predicated region
    $region18: #{segmentation_fpn_forward.14} parent=1 // pred_check
      _
    $region19: #{segmentation_fpn_forward.14} parent=1 // pred_check_branch
      %130 = sbr.rel (0) target = $region21
    $region20: #{segmentation_fpn_forward.14} parent=1 // pred_region
      _
    $region21: #{segmentation_fpn_forward.14} parent=1 // pred_fallthru
      _
    // Predicated region
    $region22: #{segmentation_fpn_forward.14} parent=1 // pred_check
      _
    $region23: #{segmentation_fpn_forward.14} parent=1 // pred_check_branch
      %132 = sbr.rel (0) target = $region25
    $region24: #{segmentation_fpn_forward.14} parent=1 // pred_region
      _
    $region25: #{segmentation_fpn_forward.14} parent=1 // pred_fallthru
      _
    %133 = vsyncpa [#allocation3], 1

// kernel: segmentation_fpn_forward.13
$region0: #{segmentation_fpn_forward.13}
  #allocation0 [shape = 'u32[]', space=smem, size = 0x4, offset = 0x4, fixed_abs, tag = 'smem constant byte address 0x4 - core index']
  #allocation1 [shape = 'u32[72,128]{1,0:T(1,128)}', space=vmem, size = 0x9000, scoped, tag = 'internal scratch']
  %s0 = inlined_call_operand.vmem [shape: bf16[8,8], index: 0, kind: input, shape index: {}]
  %s1 = inlined_call_operand.vmem [shape: bf16[8,256], index: 1, kind: input, shape index: {}]
  %s2 = inlined_call_operand.vmem [shape: f32[1,256], index: 2, kind: input, shape index: {}]
  %s3 = inlined_call_operand.vmem [shape: bf16[8,256], index: 3, kind: output, shape index: {}]
  %s4 = sld [smem:[#allocation0]]
  $region22: #{segmentation_fpn_forward.13} parent=0
    _
  %s6 = ssub.s32 1, %s4
  %s7 = scalar_select 0, %s6, %s4
  // Predicated region
  $region2: #{segmentation_fpn_forward.13} parent=0 // pred_check
    _
  $region3: #{segmentation_fpn_forward.13} parent=0 // pred_check_branch
    %9 = sbr.rel (0) target = $region5
  $region4: #{segmentation_fpn_forward.13} parent=0 // pred_region
    _
  $region5: #{segmentation_fpn_forward.13} parent=0 // pred_fallthru
    _
  // Predicated region
  $region6: #{segmentation_fpn_forward.13} parent=0 // pred_check
    _
  $region7: #{segmentation_fpn_forward.13} parent=0 // pred_check_branch
    %11 = sbr.rel (0) target = $region9
  $region8: #{segmentation_fpn_forward.13} parent=0 // pred_region
    _
  $region9: #{segmentation_fpn_forward.13} parent=0 // pred_fallthru
    _
  // Predicated region
  $region10: #{segmentation_fpn_forward.13} parent=0 // pred_check
    _
  $region11: #{segmentation_fpn_forward.13} parent=0 // pred_check_branch
    %13 = sbr.rel (0) target = $region13
  $region12: #{segmentation_fpn_forward.13} parent=0 // pred_region
    _
  $region13: #{segmentation_fpn_forward.13} parent=0 // pred_fallthru
    _
  %v15 = vld [vmem:[%s0] sm:$0xf]
  %v16 = vld [vmem:[%s1] sm:$0xff]
  %v17 = vld [vmem:[%s2] sm:$0x3]
  %v19 = vperm.slane %v17, 0
  %v20 = vperm.slane %v17, 1
  %v24 = vunpack.c.l.b16 %v16
  %v25 = vunpack.c.h.b16 %v16
  %v26 = vpack.c.b16 %v24, %v24
  %v27 = vpack.c.b16 %v25, %v25
  %vm28 = vcmask 64512
  %v30 = vsel %vm28, %v15, 0
  %vm32 = vcmask 1043456
  %v34 = vsel %vm32, %v26, 0
  %v37 = vsel %vm32, %v27, 0
  %39 = vmatpush.bf16.msra.mxu0 0
  %40 = vmatpush.bf16.msra.mxu0 0
  %41 = vmatpush.bf16.msra.mxu0 0
  %42 = vmatpush.bf16.msra.mxu0 0
  %43 = vmatpush.bf16.msra.mxu0 0
  %44 = vmatpush.bf16.msra.mxu0 0
  %45 = vmatpush.bf16.msra.mxu0 0
  %46 = vmatpush.bf16.msra.mxu0 %v34
  %47 = vmatmul.bf16.gmra.mxu0 %v30
  %v48 = vpop.f32.mrf.mxu0
  %v49 = vadd.f32 %v19, %v48
  %v50 = vpop.f32.mrf.mxu0
  %51 = vdwg.mxu0
  %52 = vmatpush.bf16.msra.mxu0 0
  %53 = vmatpush.bf16.msra.mxu0 0
  %54 = vmatpush.bf16.msra.mxu0 0
  %55 = vmatpush.bf16.msra.mxu0 0
  %56 = vmatpush.bf16.msra.mxu0 0
  %57 = vmatpush.bf16.msra.mxu0 0
  %58 = vmatpush.bf16.msra.mxu0 0
  %59 = vmatpush.bf16.msra.mxu0 %v37
  %60 = vmatmul.bf16.gmra.mxu0 %v30
  %v61 = vpop.f32.mrf.mxu0
  %v62 = vadd.f32 %v20, %v61
  %v63 = vpop.f32.mrf.mxu0
  %64 = vdwg.mxu0
  %v65 = vmax.f32 %v49, 0.0
  %v66 = vmax.f32 %v62, 0.0
  %v67 = vpack.c.bf16 %v66, %v65
  %68 = vst [vmem:[%s3] sm:$0xff] %v67
  // Predicated region
  $region14: #{segmentation_fpn_forward.13} parent=0 // pred_check
    _
  $region15: #{segmentation_fpn_forward.13} parent=0 // pred_check_branch
    %70 = sbr.rel (0) target = $region17
  $region16: #{segmentation_fpn_forward.13} parent=0 // pred_region
    _
  $region17: #{segmentation_fpn_forward.13} parent=0 // pred_fallthru
    _
  // Predicated region
  $region18: #{segmentation_fpn_forward.13} parent=0 // pred_check
    _
  $region19: #{segmentation_fpn_forward.13} parent=0 // pred_check_branch
    %72 = sbr.rel (0) target = $region21
  $region20: #{segmentation_fpn_forward.13} parent=0 // pred_region
    _
  $region21: #{segmentation_fpn_forward.13} parent=0 // pred_fallthru
    _

// kernel: segmentation_fpn_forward.15
$region0: #{segmentation_fpn_forward.15}
  #allocation0 [shape = 'u32[]', space=smem, size = 0x4, offset = 0x4, fixed_abs, tag = 'smem constant byte address 0x4 - core index']
  #allocation1 [shape = 'u32[72,128]{1,0:T(1,128)}', space=vmem, size = 0x9000, scoped, tag = 'internal scratch']
  %s0 = inlined_call_operand.vmem [shape: bf16[8,512], index: 0, kind: input, shape index: {}]
  %s1 = inlined_call_operand.vmem [shape: bf16[512,256], index: 1, kind: input, shape index: {}]
  %s2 = inlined_call_operand.vmem [shape: f32[1,256], index: 2, kind: input, shape index: {}]
  %s3 = inlined_call_operand.vmem [shape: bf16[8,256], index: 3, kind: output, shape index: {}]
  %s4 = sld [smem:[#allocation0]]
  $region22: #{segmentation_fpn_forward.15} parent=0
    _
  %s6 = ssub.s32 1, %s4
  %s7 = scalar_select 0, %s6, %s4
  // Predicated region
  $region2: #{segmentation_fpn_forward.15} parent=0 // pred_check
    _
  $region3: #{segmentation_fpn_forward.15} parent=0 // pred_check_branch
    %9 = sbr.rel (0) target = $region5
  $region4: #{segmentation_fpn_forward.15} parent=0 // pred_region
    _
  $region5: #{segmentation_fpn_forward.15} parent=0 // pred_fallthru
    _
  // Predicated region
  $region6: #{segmentation_fpn_forward.15} parent=0 // pred_check
    _
  $region7: #{segmentation_fpn_forward.15} parent=0 // pred_check_branch
    %11 = sbr.rel (0) target = $region9
  $region8: #{segmentation_fpn_forward.15} parent=0 // pred_region
    _
  $region9: #{segmentation_fpn_forward.15} parent=0 // pred_fallthru
    _
  // Predicated region
  $region10: #{segmentation_fpn_forward.15} parent=0 // pred_check
    _
  $region11: #{segmentation_fpn_forward.15} parent=0 // pred_check_branch
    %13 = sbr.rel (0) target = $region13
  $region12: #{segmentation_fpn_forward.15} parent=0 // pred_region
    _
  $region13: #{segmentation_fpn_forward.15} parent=0 // pred_fallthru
    _
  %v14 = vld [vmem:[%s0] sm:$0xff]
  %v15 = vld [vmem:[%s0 + $0x8] sm:$0xff]
  %v16 = vld [vmem:[%s1] sm:$0xff]
  %v17 = vld [vmem:[%s1 + $0x8] sm:$0xff]
  %v18 = vld [vmem:[%s1 + $0x10] sm:$0xff]
  %v19 = vld [vmem:[%s1 + $0x18] sm:$0xff]
  %v20 = vld [vmem:[%s1 + $0x20] sm:$0xff]
  %v21 = vld [vmem:[%s1 + $0x28] sm:$0xff]
  %v22 = vld [vmem:[%s1 + $0x30] sm:$0xff]
  %v23 = vld [vmem:[%s1 + $0x38] sm:$0xff]
  %v24 = vld [vmem:[%s1 + $0x40] sm:$0xff]
  %v25 = vld [vmem:[%s1 + $0x48] sm:$0xff]
  %v26 = vld [vmem:[%s1 + $0x50] sm:$0xff]
  %v27 = vld [vmem:[%s1 + $0x58] sm:$0xff]
  %v28 = vld [vmem:[%s1 + $0x60] sm:$0xff]
  %v29 = vld [vmem:[%s1 + $0x68] sm:$0xff]
  %v30 = vld [vmem:[%s1 + $0x70] sm:$0xff]
  %v31 = vld [vmem:[%s1 + $0x78] sm:$0xff]
  %v32 = vld [vmem:[%s1 + $0x80] sm:$0xff]
  %v33 = vld [vmem:[%s1 + $0x88] sm:$0xff]
  %v34 = vld [vmem:[%s1 + $0x90] sm:$0xff]
  %v35 = vld [vmem:[%s1 + $0x98] sm:$0xff]
  %v36 = vld [vmem:[%s1 + $0xa0] sm:$0xff]
  %v37 = vld [vmem:[%s1 + $0xa8] sm:$0xff]
  %v38 = vld [vmem:[%s1 + $0xb0] sm:$0xff]
  %v39 = vld [vmem:[%s1 + $0xb8] sm:$0xff]
  %v40 = vld [vmem:[%s1 + $0xc0] sm:$0xff]
  %v41 = vld [vmem:[%s1 + $0xc8] sm:$0xff]
  %v42 = vld [vmem:[%s1 + $0xd0] sm:$0xff]
  %v43 = vld [vmem:[%s1 + $0xd8] sm:$0xff]
  %v44 = vld [vmem:[%s1 + $0xe0] sm:$0xff]
  %v45 = vld [vmem:[%s1 + $0xe8] sm:$0xff]
  %v46 = vld [vmem:[%s1 + $0xf0] sm:$0xff]
  %v47 = vld [vmem:[%s1 + $0xf8] sm:$0xff]
  %v48 = vld [vmem:[%s1 + $0x100] sm:$0xff]
  %v49 = vld [vmem:[%s1 + $0x108] sm:$0xff]
  %v50 = vld [vmem:[%s1 + $0x110] sm:$0xff]
  %v51 = vld [vmem:[%s1 + $0x118] sm:$0xff]
  %v52 = vld [vmem:[%s1 + $0x120] sm:$0xff]
  %v53 = vld [vmem:[%s1 + $0x128] sm:$0xff]
  %v54 = vld [vmem:[%s1 + $0x130] sm:$0xff]
  %v55 = vld [vmem:[%s1 + $0x138] sm:$0xff]
  %v56 = vld [vmem:[%s1 + $0x140] sm:$0xff]
  %v57 = vld [vmem:[%s1 + $0x148] sm:$0xff]
  %v58 = vld [vmem:[%s1 + $0x150] sm:$0xff]
  %v59 = vld [vmem:[%s1 + $0x158] sm:$0xff]
  %v60 = vld [vmem:[%s1 + $0x160] sm:$0xff]
  %v61 = vld [vmem:[%s1 + $0x168] sm:$0xff]
  %v62 = vld [vmem:[%s1 + $0x170] sm:$0xff]
  %v63 = vld [vmem:[%s1 + $0x178] sm:$0xff]
  %v64 = vld [vmem:[%s1 + $0x180] sm:$0xff]
  %v65 = vld [vmem:[%s1 + $0x188] sm:$0xff]
  %v66 = vld [vmem:[%s1 + $0x190] sm:$0xff]
  %v67 = vld [vmem:[%s1 + $0x198] sm:$0xff]
  %v68 = vld [vmem:[%s1 + $0x1a0] sm:$0xff]
  %v69 = vld [vmem:[%s1 + $0x1a8] sm:$0xff]
  %v70 = vld [vmem:[%s1 + $0x1b0] sm:$0xff]
  %v71 = vld [vmem:[%s1 + $0x1b8] sm:$0xff]
  %v72 = vld [vmem:[%s1 + $0x1c0] sm:$0xff]
  %v73 = vld [vmem:[%s1 + $0x1c8] sm:$0xff]
  %v74 = vld [vmem:[%s1 + $0x1d0] sm:$0xff]
  %v75 = vld [vmem:[%s1 + $0x1d8] sm:$0xff]
  %v76 = vld [vmem:[%s1 + $0x1e0] sm:$0xff]
  %v77 = vld [vmem:[%s1 + $0x1e8] sm:$0xff]
  %v78 = vld [vmem:[%s1 + $0x1f0] sm:$0xff]
  %v79 = vld [vmem:[%s1 + $0x1f8] sm:$0xff]
  %v80 = vld [vmem:[%s2] sm:$0x3]
  %v82 = vperm.slane %v80, 0
  %v83 = vperm.slane %v80, 1
  %v88 = vunpack.c.l.b16 %v14
  %v89 = vunpack.c.h.b16 %v14
  %v90 = vunpack.c.l.b16 %v15
  %v91 = vunpack.c.h.b16 %v15
  %v92 = vpack.c.b16 %v88, %v88
  %v93 = vpack.c.b16 %v89, %v89
  %v94 = vpack.c.b16 %v90, %v90
  %v95 = vpack.c.b16 %v91, %v91
  %v164 = vunpack.c.l.b16 %v16
  %v165 = vunpack.c.h.b16 %v16
  %v166 = vunpack.c.l.b16 %v17
  %v167 = vunpack.c.h.b16 %v17
  %v168 = vunpack.c.l.b16 %v18
  %v169 = vunpack.c.h.b16 %v18
  %v170 = vunpack.c.l.b16 %v19
  %v171 = vunpack.c.h.b16 %v19
  %v172 = vunpack.c.l.b16 %v20
  %v173 = vunpack.c.h.b16 %v20
  %v174 = vunpack.c.l.b16 %v21
  %v175 = vunpack.c.h.b16 %v21
  %v176 = vunpack.c.l.b16 %v22
  %v177 = vunpack.c.h.b16 %v22
  %v178 = vunpack.c.l.b16 %v23
  %v179 = vunpack.c.h.b16 %v23
  %v180 = vunpack.c.l.b16 %v24
  %v181 = vunpack.c.h.b16 %v24
  %v182 = vunpack.c.l.b16 %v25
  %v183 = vunpack.c.h.b16 %v25
  %v184 = vunpack.c.l.b16 %v26
  %v185 = vunpack.c.h.b16 %v26
  %v186 = vunpack.c.l.b16 %v27
  %v187 = vunpack.c.h.b16 %v27
  %v188 = vunpack.c.l.b16 %v28
  %v189 = vunpack.c.h.b16 %v28
  %v190 = vunpack.c.l.b16 %v29
  %v191 = vunpack.c.h.b16 %v29
  %v192 = vunpack.c.l.b16 %v30
  %v193 = vunpack.c.h.b16 %v30
  %v194 = vunpack.c.l.b16 %v31
  %v195 = vunpack.c.h.b16 %v31
  %v196 = vunpack.c.l.b16 %v32
  %v197 = vunpack.c.h.b16 %v32
  %v198 = vunpack.c.l.b16 %v33
  %v199 = vunpack.c.h.b16 %v33
  %v200 = vunpack.c.l.b16 %v34
  %v201 = vunpack.c.h.b16 %v34
  %v202 = vunpack.c.l.b16 %v35
  %v203 = vunpack.c.h.b16 %v35
  %v204 = vunpack.c.l.b16 %v36
  %v205 = vunpack.c.h.b16 %v36
  %v206 = vunpack.c.l.b16 %v37
  %v207 = vunpack.c.h.b16 %v37
  %v208 = vunpack.c.l.b16 %v38
  %v209 = vunpack.c.h.b16 %v38
  %v210 = vunpack.c.l.b16 %v39
  %v211 = vunpack.c.h.b16 %v39
  %v212 = vunpack.c.l.b16 %v40
  %v213 = vunpack.c.h.b16 %v40
  %v214 = vunpack.c.l.b16 %v41
  %v215 = vunpack.c.h.b16 %v41
  %v216 = vunpack.c.l.b16 %v42
  %v217 = vunpack.c.h.b16 %v42
  %v218 = vunpack.c.l.b16 %v43
  %v219 = vunpack.c.h.b16 %v43
  %v220 = vunpack.c.l.b16 %v44
  %v221 = vunpack.c.h.b16 %v44
  %v222 = vunpack.c.l.b16 %v45
  %v223 = vunpack.c.h.b16 %v45
  %v224 = vunpack.c.l.b16 %v46
  %v225 = vunpack.c.h.b16 %v46
  %v226 = vunpack.c.l.b16 %v47
  %v227 = vunpack.c.h.b16 %v47
  %v228 = vunpack.c.l.b16 %v48
  %v229 = vunpack.c.h.b16 %v48
  %v230 = vunpack.c.l.b16 %v49
  %v231 = vunpack.c.h.b16 %v49
  %v232 = vunpack.c.l.b16 %v50
  %v233 = vunpack.c.h.b16 %v50
  %v234 = vunpack.c.l.b16 %v51
  %v235 = vunpack.c.h.b16 %v51
  %v236 = vunpack.c.l.b16 %v52
  %v237 = vunpack.c.h.b16 %v52
  %v238 = vunpack.c.l.b16 %v53
  %v239 = vunpack.c.h.b16 %v53
  %v240 = vunpack.c.l.b16 %v54
  %v241 = vunpack.c.h.b16 %v54
  %v242 = vunpack.c.l.b16 %v55
  %v243 = vunpack.c.h.b16 %v55
  %v244 = vunpack.c.l.b16 %v56
  %v245 = vunpack.c.h.b16 %v56
  %v246 = vunpack.c.l.b16 %v57
  %v247 = vunpack.c.h.b16 %v57
  %v248 = vunpack.c.l.b16 %v58
  %v249 = vunpack.c.h.b16 %v58
  %v250 = vunpack.c.l.b16 %v59
  %v251 = vunpack.c.h.b16 %v59
  %v252 = vunpack.c.l.b16 %v60
  %v253 = vunpack.c.h.b16 %v60
  %v254 = vunpack.c.l.b16 %v61
  %v255 = vunpack.c.h.b16 %v61
  %v256 = vunpack.c.l.b16 %v62
  %v257 = vunpack.c.h.b16 %v62
  %v258 = vunpack.c.l.b16 %v63
  %v259 = vunpack.c.h.b16 %v63
  %v260 = vunpack.c.l.b16 %v64
  %v261 = vunpack.c.h.b16 %v64
  %v262 = vunpack.c.l.b16 %v65
  %v263 = vunpack.c.h.b16 %v65
  %v264 = vunpack.c.l.b16 %v66
  %v265 = vunpack.c.h.b16 %v66
  %v266 = vunpack.c.l.b16 %v67
  %v267 = vunpack.c.h.b16 %v67
  %v268 = vunpack.c.l.b16 %v68
  %v269 = vunpack.c.h.b16 %v68
  %v270 = vunpack.c.l.b16 %v69
  %v271 = vunpack.c.h.b16 %v69
  %v272 = vunpack.c.l.b16 %v70
  %v273 = vunpack.c.h.b16 %v70
  %v274 = vunpack.c.l.b16 %v71
  %v275 = vunpack.c.h.b16 %v71
  %v276 = vunpack.c.l.b16 %v72
  %v277 = vunpack.c.h.b16 %v72
  %v278 = vunpack.c.l.b16 %v73
  %v279 = vunpack.c.h.b16 %v73
  %v280 = vunpack.c.l.b16 %v74
  %v281 = vunpack.c.h.b16 %v74
  %v282 = vunpack.c.l.b16 %v75
  %v283 = vunpack.c.h.b16 %v75
  %v284 = vunpack.c.l.b16 %v76
  %v285 = vunpack.c.h.b16 %v76
  %v286 = vunpack.c.l.b16 %v77
  %v287 = vunpack.c.h.b16 %v77
  %v288 = vunpack.c.l.b16 %v78
  %v289 = vunpack.c.h.b16 %v78
  %v290 = vunpack.c.l.b16 %v79
  %v291 = vunpack.c.h.b16 %v79
  %v292 = vpack.c.b16 %v166, %v164
  %v293 = vpack.c.b16 %v167, %v165
  %v294 = vpack.c.b16 %v170, %v168
  %v295 = vpack.c.b16 %v171, %v169
  %v296 = vpack.c.b16 %v174, %v172
  %v297 = vpack.c.b16 %v175, %v173
  %v298 = vpack.c.b16 %v178, %v176
  %v299 = vpack.c.b16 %v179, %v177
  %v300 = vpack.c.b16 %v182, %v180
  %v301 = vpack.c.b16 %v183, %v181
  %v302 = vpack.c.b16 %v186, %v184
  %v303 = vpack.c.b16 %v187, %v185
  %v304 = vpack.c.b16 %v190, %v188
  %v305 = vpack.c.b16 %v191, %v189
  %v306 = vpack.c.b16 %v194, %v192
  %v307 = vpack.c.b16 %v195, %v193
  %v308 = vpack.c.b16 %v198, %v196
  %v309 = vpack.c.b16 %v199, %v197
  %v310 = vpack.c.b16 %v202, %v200
  %v311 = vpack.c.b16 %v203, %v201
  %v312 = vpack.c.b16 %v206, %v204
  %v313 = vpack.c.b16 %v207, %v205
  %v314 = vpack.c.b16 %v210, %v208
  %v315 = vpack.c.b16 %v211, %v209
  %v316 = vpack.c.b16 %v214, %v212
  %v317 = vpack.c.b16 %v215, %v213
  %v318 = vpack.c.b16 %v218, %v216
  %v319 = vpack.c.b16 %v219, %v217
  %v320 = vpack.c.b16 %v222, %v220
  %v321 = vpack.c.b16 %v223, %v221
  %v322 = vpack.c.b16 %v226, %v224
  %v323 = vpack.c.b16 %v227, %v225
  %v324 = vpack.c.b16 %v230, %v228
  %v325 = vpack.c.b16 %v231, %v229
  %v326 = vpack.c.b16 %v234, %v232
  %v327 = vpack.c.b16 %v235, %v233
  %v328 = vpack.c.b16 %v238, %v236
  %v329 = vpack.c.b16 %v239, %v237
  %v330 = vpack.c.b16 %v242, %v240
  %v331 = vpack.c.b16 %v243, %v241
  %v332 = vpack.c.b16 %v246, %v244
  %v333 = vpack.c.b16 %v247, %v245
  %v334 = vpack.c.b16 %v250, %v248
  %v335 = vpack.c.b16 %v251, %v249
  %v336 = vpack.c.b16 %v254, %v252
  %v337 = vpack.c.b16 %v255, %v253
  %v338 = vpack.c.b16 %v258, %v256
  %v339 = vpack.c.b16 %v259, %v257
  %v340 = vpack.c.b16 %v262, %v260
  %v341 = vpack.c.b16 %v263, %v261
  %v342 = vpack.c.b16 %v266, %v264
  %v343 = vpack.c.b16 %v267, %v265
  %v344 = vpack.c.b16 %v270, %v268
  %v345 = vpack.c.b16 %v271, %v269
  %v346 = vpack.c.b16 %v274, %v272
  %v347 = vpack.c.b16 %v275, %v273
  %v348 = vpack.c.b16 %v278, %v276
  %v349 = vpack.c.b16 %v279, %v277
  %v350 = vpack.c.b16 %v282, %v280
  %v351 = vpack.c.b16 %v283, %v281
  %v352 = vpack.c.b16 %v286, %v284
  %v353 = vpack.c.b16 %v287, %v285
  %v354 = vpack.c.b16 %v290, %v288
  %v355 = vpack.c.b16 %v291, %v289
  %420 = vmatpush.bf16.msra.mxu0 %v306
  %421 = vmatpush.bf16.msra.mxu0 %v304
  %422 = vmatpush.bf16.msra.mxu0 %v302
  %423 = vmatpush.bf16.msra.mxu0 %v300
  %424 = vmatpush.bf16.msra.mxu0 %v298
  %425 = vmatpush.bf16.msra.mxu0 %v296
  %426 = vmatpush.bf16.msra.mxu0 %v294
  %427 = vmatpush.bf16.msra.mxu0 %v292
  %428 = vmatmul.bf16.gmra.mxu0 %v92
  %v429 = vpop.f32.mrf.mxu0
  %v430 = vadd.f32 %v82, %v429
  %v431 = vpop.f32.mrf.mxu0
  %432 = vdwg.mxu0
  %433 = vmatpush.bf16.msra.mxu0 %v322
  %434 = vmatpush.bf16.msra.mxu0 %v320
  %435 = vmatpush.bf16.msra.mxu0 %v318
  %436 = vmatpush.bf16.msra.mxu0 %v316
  %437 = vmatpush.bf16.msra.mxu0 %v314
  %438 = vmatpush.bf16.msra.mxu0 %v312
  %439 = vmatpush.bf16.msra.mxu0 %v310
  %440 = vmatpush.bf16.msra.mxu0 %v308
  %441 = vmatmul.bf16.gmra.mxu0 %v93
  %v442 = vpop.f32.mrf.mxu0
  %v443 = vadd.f32 %v430, %v442
  %v444 = vpop.f32.mrf.mxu0
  %445 = vdwg.mxu0
  %446 = vmatpush.bf16.msra.mxu0 %v338
  %447 = vmatpush.bf16.msra.mxu0 %v336
  %448 = vmatpush.bf16.msra.mxu0 %v334
  %449 = vmatpush.bf16.msra.mxu0 %v332
  %450 = vmatpush.bf16.msra.mxu0 %v330
  %451 = vmatpush.bf16.msra.mxu0 %v328
  %452 = vmatpush.bf16.msra.mxu0 %v326
  %453 = vmatpush.bf16.msra.mxu0 %v324
  %454 = vmatmul.bf16.gmra.mxu0 %v94
  %v455 = vpop.f32.mrf.mxu0
  %v456 = vadd.f32 %v443, %v455
  %v457 = vpop.f32.mrf.mxu0
  %458 = vdwg.mxu0
  %459 = vmatpush.bf16.msra.mxu0 %v354
  %460 = vmatpush.bf16.msra.mxu0 %v352
  %461 = vmatpush.bf16.msra.mxu0 %v350
  %462 = vmatpush.bf16.msra.mxu0 %v348
  %463 = vmatpush.bf16.msra.mxu0 %v346
  %464 = vmatpush.bf16.msra.mxu0 %v344
  %465 = vmatpush.bf16.msra.mxu0 %v342
  %466 = vmatpush.bf16.msra.mxu0 %v340
  %467 = vmatmul.bf16.gmra.mxu0 %v95
  %v468 = vpop.f32.mrf.mxu0
  %v469 = vadd.f32 %v456, %v468
  %v470 = vpop.f32.mrf.mxu0
  %471 = vdwg.mxu0
  %472 = vmatpush.bf16.msra.mxu0 %v307
  %473 = vmatpush.bf16.msra.mxu0 %v305
  %474 = vmatpush.bf16.msra.mxu0 %v303
  %475 = vmatpush.bf16.msra.mxu0 %v301
  %476 = vmatpush.bf16.msra.mxu0 %v299
  %477 = vmatpush.bf16.msra.mxu0 %v297
  %478 = vmatpush.bf16.msra.mxu0 %v295
  %479 = vmatpush.bf16.msra.mxu0 %v293
  %480 = vmatmul.bf16.gmra.mxu0 %v92
  %v481 = vpop.f32.mrf.mxu0
  %v482 = vadd.f32 %v83, %v481
  %v483 = vpop.f32.mrf.mxu0
  %484 = vdwg.mxu0
  %485 = vmatpush.bf16.msra.mxu0 %v323
  %486 = vmatpush.bf16.msra.mxu0 %v321
  %487 = vmatpush.bf16.msra.mxu0 %v319
  %488 = vmatpush.bf16.msra.mxu0 %v317
  %489 = vmatpush.bf16.msra.mxu0 %v315
  %490 = vmatpush.bf16.msra.mxu0 %v313
  %491 = vmatpush.bf16.msra.mxu0 %v311
  %492 = vmatpush.bf16.msra.mxu0 %v309
  %493 = vmatmul.bf16.gmra.mxu0 %v93
  %v494 = vpop.f32.mrf.mxu0
  %v495 = vadd.f32 %v482, %v494
  %v496 = vpop.f32.mrf.mxu0
  %497 = vdwg.mxu0
  %498 = vmatpush.bf16.msra.mxu0 %v339
  %499 = vmatpush.bf16.msra.mxu0 %v337
  %500 = vmatpush.bf16.msra.mxu0 %v335
  %501 = vmatpush.bf16.msra.mxu0 %v333
  %502 = vmatpush.bf16.msra.mxu0 %v331
  %503 = vmatpush.bf16.msra.mxu0 %v329
  %504 = vmatpush.bf16.msra.mxu0 %v327
  %505 = vmatpush.bf16.msra.mxu0 %v325
  %506 = vmatmul.bf16.gmra.mxu0 %v94
  %v507 = vpop.f32.mrf.mxu0
  %v508 = vadd.f32 %v495, %v507
  %v509 = vpop.f32.mrf.mxu0
  %510 = vdwg.mxu0
  %511 = vmatpush.bf16.msra.mxu0 %v355
  %512 = vmatpush.bf16.msra.mxu0 %v353
  %513 = vmatpush.bf16.msra.mxu0 %v351
  %514 = vmatpush.bf16.msra.mxu0 %v349
  %515 = vmatpush.bf16.msra.mxu0 %v347
  %516 = vmatpush.bf16.msra.mxu0 %v345
  %517 = vmatpush.bf16.msra.mxu0 %v343
  %518 = vmatpush.bf16.msra.mxu0 %v341
  %519 = vmatmul.bf16.gmra.mxu0 %v95
  %v520 = vpop.f32.mrf.mxu0
  %v521 = vadd.f32 %v508, %v520
  %v522 = vpop.f32.mrf.mxu0
  %523 = vdwg.mxu0
  %v524 = vpack.c.bf16 %v521, %v469
  %525 = vst [vmem:[%s3] sm:$0xff] %v524
  // Predicated region
  $region14: #{segmentation_fpn_forward.15} parent=0 // pred_check
    _
  $region15: #{segmentation_fpn_forward.15} parent=0 // pred_check_branch
    %527 = sbr.rel (0) target = $region17
  $region16: #{segmentation_fpn_forward.15} parent=0 // pred_region
    _
  $region17: #{segmentation_fpn_forward.15} parent=0 // pred_fallthru
    _
  // Predicated region
  $region18: #{segmentation_fpn_forward.15} parent=0 // pred_check
    _
  $region19: #{segmentation_fpn_forward.15} parent=0 // pred_check_branch
    %529 = sbr.rel (0) target = $region21
  $region20: #{segmentation_fpn_forward.15} parent=0 // pred_region
    _
  $region21: #{segmentation_fpn_forward.15} parent=0 // pred_fallthru
    _

// kernel: segmentation_fpn_forward.16
$region0: #{segmentation_fpn_forward.16}
  #allocation0 [shape = 'u32[]', space=smem, size = 0x4, offset = 0x4, fixed_abs, tag = 'smem constant byte address 0x4 - core index']
  #allocation1 [shape = 'u32[72,128]{1,0:T(1,128)}', space=vmem, size = 0x9000, scoped, tag = 'internal scratch']
  %s0 = inlined_call_operand.vmem [shape: bf16[8,256], index: 0, kind: input, shape index: {}]
  %s1 = inlined_call_operand.vmem [shape: bf16[256,256], index: 1, kind: input, shape index: {}]
  %s2 = inlined_call_operand.vmem [shape: f32[1,256], index: 2, kind: input, shape index: {}]
  %s3 = inlined_call_operand.vmem [shape: bf16[8,256], index: 3, kind: input, shape index: {}]
  %s4 = inlined_call_operand.vmem [shape: bf16[8,256], index: 4, kind: output, shape index: {}]
  %s5 = sld [smem:[#allocation0]]
  $region26: #{segmentation_fpn_forward.16} parent=0
    _
  %s7 = ssub.s32 1, %s5
  %s8 = scalar_select 0, %s7, %s5
  // Predicated region
  $region2: #{segmentation_fpn_forward.16} parent=0 // pred_check
    _
  $region3: #{segmentation_fpn_forward.16} parent=0 // pred_check_branch
    %10 = sbr.rel (0) target = $region5
  $region4: #{segmentation_fpn_forward.16} parent=0 // pred_region
    _
  $region5: #{segmentation_fpn_forward.16} parent=0 // pred_fallthru
    _
  // Predicated region
  $region6: #{segmentation_fpn_forward.16} parent=0 // pred_check
    _
  $region7: #{segmentation_fpn_forward.16} parent=0 // pred_check_branch
    %12 = sbr.rel (0) target = $region9
  $region8: #{segmentation_fpn_forward.16} parent=0 // pred_region
    _
  $region9: #{segmentation_fpn_forward.16} parent=0 // pred_fallthru
    _
  // Predicated region
  $region10: #{segmentation_fpn_forward.16} parent=0 // pred_check
    _
  $region11: #{segmentation_fpn_forward.16} parent=0 // pred_check_branch
    %14 = sbr.rel (0) target = $region13
  $region12: #{segmentation_fpn_forward.16} parent=0 // pred_region
    _
  $region13: #{segmentation_fpn_forward.16} parent=0 // pred_fallthru
    _
  // Predicated region
  $region14: #{segmentation_fpn_forward.16} parent=0 // pred_check
    _
  $region15: #{segmentation_fpn_forward.16} parent=0 // pred_check_branch
    %16 = sbr.rel (0) target = $region17
  $region16: #{segmentation_fpn_forward.16} parent=0 // pred_region
    _
  $region17: #{segmentation_fpn_forward.16} parent=0 // pred_fallthru
    _
  %v17 = vld [vmem:[%s0] sm:$0xff]
  %v18 = vld [vmem:[%s1] sm:$0xff]
  %v19 = vld [vmem:[%s1 + $0x8] sm:$0xff]
  %v20 = vld [vmem:[%s1 + $0x10] sm:$0xff]
  %v21 = vld [vmem:[%s1 + $0x18] sm:$0xff]
  %v22 = vld [vmem:[%s1 + $0x20] sm:$0xff]
  %v23 = vld [vmem:[%s1 + $0x28] sm:$0xff]
  %v24 = vld [vmem:[%s1 + $0x30] sm:$0xff]
  %v25 = vld [vmem:[%s1 + $0x38] sm:$0xff]
  %v26 = vld [vmem:[%s1 + $0x40] sm:$0xff]
  %v27 = vld [vmem:[%s1 + $0x48] sm:$0xff]
  %v28 = vld [vmem:[%s1 + $0x50] sm:$0xff]
  %v29 = vld [vmem:[%s1 + $0x58] sm:$0xff]
  %v30 = vld [vmem:[%s1 + $0x60] sm:$0xff]
  %v31 = vld [vmem:[%s1 + $0x68] sm:$0xff]
  %v32 = vld [vmem:[%s1 + $0x70] sm:$0xff]
  %v33 = vld [vmem:[%s1 + $0x78] sm:$0xff]
  %v34 = vld [vmem:[%s1 + $0x80] sm:$0xff]
  %v35 = vld [vmem:[%s1 + $0x88] sm:$0xff]
  %v36 = vld [vmem:[%s1 + $0x90] sm:$0xff]
  %v37 = vld [vmem:[%s1 + $0x98] sm:$0xff]
  %v38 = vld [vmem:[%s1 + $0xa0] sm:$0xff]
  %v39 = vld [vmem:[%s1 + $0xa8] sm:$0xff]
  %v40 = vld [vmem:[%s1 + $0xb0] sm:$0xff]
  %v41 = vld [vmem:[%s1 + $0xb8] sm:$0xff]
  %v42 = vld [vmem:[%s1 + $0xc0] sm:$0xff]
  %v43 = vld [vmem:[%s1 + $0xc8] sm:$0xff]
  %v44 = vld [vmem:[%s1 + $0xd0] sm:$0xff]
  %v45 = vld [vmem:[%s1 + $0xd8] sm:$0xff]
  %v46 = vld [vmem:[%s1 + $0xe0] sm:$0xff]
  %v47 = vld [vmem:[%s1 + $0xe8] sm:$0xff]
  %v48 = vld [vmem:[%s1 + $0xf0] sm:$0xff]
  %v49 = vld [vmem:[%s1 + $0xf8] sm:$0xff]
  %v50 = vld [vmem:[%s2] sm:$0x3]
  %v52 = vperm.slane %v50, 0
  %v53 = vperm.slane %v50, 1
  %v57 = vunpack.c.l.b16 %v17
  %v58 = vunpack.c.h.b16 %v17
  %v59 = vpack.c.b16 %v57, %v57
  %v60 = vpack.c.b16 %v58, %v58
  %v95 = vunpack.c.l.b16 %v18
  %v96 = vunpack.c.h.b16 %v18
  %v97 = vunpack.c.l.b16 %v19
  %v98 = vunpack.c.h.b16 %v19
  %v99 = vunpack.c.l.b16 %v20
  %v100 = vunpack.c.h.b16 %v20
  %v101 = vunpack.c.l.b16 %v21
  %v102 = vunpack.c.h.b16 %v21
  %v103 = vunpack.c.l.b16 %v22
  %v104 = vunpack.c.h.b16 %v22
  %v105 = vunpack.c.l.b16 %v23
  %v106 = vunpack.c.h.b16 %v23
  %v107 = vunpack.c.l.b16 %v24
  %v108 = vunpack.c.h.b16 %v24
  %v109 = vunpack.c.l.b16 %v25
  %v110 = vunpack.c.h.b16 %v25
  %v111 = vunpack.c.l.b16 %v26
  %v112 = vunpack.c.h.b16 %v26
  %v113 = vunpack.c.l.b16 %v27
  %v114 = vunpack.c.h.b16 %v27
  %v115 = vunpack.c.l.b16 %v28
  %v116 = vunpack.c.h.b16 %v28
  %v117 = vunpack.c.l.b16 %v29
  %v118 = vunpack.c.h.b16 %v29
  %v119 = vunpack.c.l.b16 %v30
  %v120 = vunpack.c.h.b16 %v30
  %v121 = vunpack.c.l.b16 %v31
  %v122 = vunpack.c.h.b16 %v31
  %v123 = vunpack.c.l.b16 %v32
  %v124 = vunpack.c.h.b16 %v32
  %v125 = vunpack.c.l.b16 %v33
  %v126 = vunpack.c.h.b16 %v33
  %v127 = vunpack.c.l.b16 %v34
  %v128 = vunpack.c.h.b16 %v34
  %v129 = vunpack.c.l.b16 %v35
  %v130 = vunpack.c.h.b16 %v35
  %v131 = vunpack.c.l.b16 %v36
  %v132 = vunpack.c.h.b16 %v36
  %v133 = vunpack.c.l.b16 %v37
  %v134 = vunpack.c.h.b16 %v37
  %v135 = vunpack.c.l.b16 %v38
  %v136 = vunpack.c.h.b16 %v38
  %v137 = vunpack.c.l.b16 %v39
  %v138 = vunpack.c.h.b16 %v39
  %v139 = vunpack.c.l.b16 %v40
  %v140 = vunpack.c.h.b16 %v40
  %v141 = vunpack.c.l.b16 %v41
  %v142 = vunpack.c.h.b16 %v41
  %v143 = vunpack.c.l.b16 %v42
  %v144 = vunpack.c.h.b16 %v42
  %v145 = vunpack.c.l.b16 %v43
  %v146 = vunpack.c.h.b16 %v43
  %v147 = vunpack.c.l.b16 %v44
  %v148 = vunpack.c.h.b16 %v44
  %v149 = vunpack.c.l.b16 %v45
  %v150 = vunpack.c.h.b16 %v45
  %v151 = vunpack.c.l.b16 %v46
  %v152 = vunpack.c.h.b16 %v46
  %v153 = vunpack.c.l.b16 %v47
  %v154 = vunpack.c.h.b16 %v47
  %v155 = vunpack.c.l.b16 %v48
  %v156 = vunpack.c.h.b16 %v48
  %v157 = vunpack.c.l.b16 %v49
  %v158 = vunpack.c.h.b16 %v49
  %v159 = vpack.c.b16 %v97, %v95
  %v160 = vpack.c.b16 %v98, %v96
  %v161 = vpack.c.b16 %v101, %v99
  %v162 = vpack.c.b16 %v102, %v100
  %v163 = vpack.c.b16 %v105, %v103
  %v164 = vpack.c.b16 %v106, %v104
  %v165 = vpack.c.b16 %v109, %v107
  %v166 = vpack.c.b16 %v110, %v108
  %v167 = vpack.c.b16 %v113, %v111
  %v168 = vpack.c.b16 %v114, %v112
  %v169 = vpack.c.b16 %v117, %v115
  %v170 = vpack.c.b16 %v118, %v116
  %v171 = vpack.c.b16 %v121, %v119
  %v172 = vpack.c.b16 %v122, %v120
  %v173 = vpack.c.b16 %v125, %v123
  %v174 = vpack.c.b16 %v126, %v124
  %v175 = vpack.c.b16 %v129, %v127
  %v176 = vpack.c.b16 %v130, %v128
  %v177 = vpack.c.b16 %v133, %v131
  %v178 = vpack.c.b16 %v134, %v132
  %v179 = vpack.c.b16 %v137, %v135
  %v180 = vpack.c.b16 %v138, %v136
  %v181 = vpack.c.b16 %v141, %v139
  %v182 = vpack.c.b16 %v142, %v140
  %v183 = vpack.c.b16 %v145, %v143
  %v184 = vpack.c.b16 %v146, %v144
  %v185 = vpack.c.b16 %v149, %v147
  %v186 = vpack.c.b16 %v150, %v148
  %v187 = vpack.c.b16 %v153, %v151
  %v188 = vpack.c.b16 %v154, %v152
  %v189 = vpack.c.b16 %v157, %v155
  %v190 = vpack.c.b16 %v158, %v156
  %223 = vmatpush.bf16.msra.mxu0 %v173
  %224 = vmatpush.bf16.msra.mxu0 %v171
  %225 = vmatpush.bf16.msra.mxu0 %v169
  %226 = vmatpush.bf16.msra.mxu0 %v167
  %227 = vmatpush.bf16.msra.mxu0 %v165
  %228 = vmatpush.bf16.msra.mxu0 %v163
  %229 = vmatpush.bf16.msra.mxu0 %v161
  %230 = vmatpush.bf16.msra.mxu0 %v159
  %231 = vmatmul.bf16.gmra.mxu0 %v59
  %v232 = vpop.f32.mrf.mxu0
  %v233 = vadd.f32 %v52, %v232
  %v234 = vpop.f32.mrf.mxu0
  %235 = vdwg.mxu0
  %236 = vmatpush.bf16.msra.mxu0 %v189
  %237 = vmatpush.bf16.msra.mxu0 %v187
  %238 = vmatpush.bf16.msra.mxu0 %v185
  %239 = vmatpush.bf16.msra.mxu0 %v183
  %240 = vmatpush.bf16.msra.mxu0 %v181
  %241 = vmatpush.bf16.msra.mxu0 %v179
  %242 = vmatpush.bf16.msra.mxu0 %v177
  %243 = vmatpush.bf16.msra.mxu0 %v175
  %244 = vmatmul.bf16.gmra.mxu0 %v60
  %v245 = vpop.f32.mrf.mxu0
  %v246 = vadd.f32 %v233, %v245
  %v247 = vpop.f32.mrf.mxu0
  %248 = vdwg.mxu0
  %249 = vmatpush.bf16.msra.mxu0 %v174
  %250 = vmatpush.bf16.msra.mxu0 %v172
  %251 = vmatpush.bf16.msra.mxu0 %v170
  %252 = vmatpush.bf16.msra.mxu0 %v168
  %253 = vmatpush.bf16.msra.mxu0 %v166
  %254 = vmatpush.bf16.msra.mxu0 %v164
  %255 = vmatpush.bf16.msra.mxu0 %v162
  %256 = vmatpush.bf16.msra.mxu0 %v160
  %257 = vmatmul.bf16.gmra.mxu0 %v59
  %v258 = vpop.f32.mrf.mxu0
  %v259 = vadd.f32 %v53, %v258
  %v260 = vpop.f32.mrf.mxu0
  %261 = vdwg.mxu0
  %262 = vmatpush.bf16.msra.mxu0 %v190
  %263 = vmatpush.bf16.msra.mxu0 %v188
  %264 = vmatpush.bf16.msra.mxu0 %v186
  %265 = vmatpush.bf16.msra.mxu0 %v184
  %266 = vmatpush.bf16.msra.mxu0 %v182
  %267 = vmatpush.bf16.msra.mxu0 %v180
  %268 = vmatpush.bf16.msra.mxu0 %v178
  %269 = vmatpush.bf16.msra.mxu0 %v176
  %270 = vmatmul.bf16.gmra.mxu0 %v60
  %v271 = vpop.f32.mrf.mxu0
  %v272 = vadd.f32 %v259, %v271
  %v273 = vpop.f32.mrf.mxu0
  %274 = vdwg.mxu0
  %v275 = vld [vmem:[%s3] sm:$0xff]
  %v276 = vunpack.c.l.bf16 %v275
  %v277 = vunpack.c.h.bf16 %v275
  %v278 = vadd.f32 %v246, %v276
  %v279 = vadd.f32 %v272, %v277
  %v280 = vpack.c.bf16 %v279, %v278
  %281 = vst [vmem:[%s4] sm:$0xff] %v280
  // Predicated region
  $region18: #{segmentation_fpn_forward.16} parent=0 // pred_check
    _
  $region19: #{segmentation_fpn_forward.16} parent=0 // pred_check_branch
    %283 = sbr.rel (0) target = $region21
  $region20: #{segmentation_fpn_forward.16} parent=0 // pred_region
    _
  $region21: #{segmentation_fpn_forward.16} parent=0 // pred_fallthru
    _
  // Predicated region
  $region22: #{segmentation_fpn_forward.16} parent=0 // pred_check
    _
  $region23: #{segmentation_fpn_forward.16} parent=0 // pred_check_branch
    %285 = sbr.rel (0) target = $region25
  $region24: #{segmentation_fpn_forward.16} parent=0 // pred_region
    _
  $region25: #{segmentation_fpn_forward.16} parent=0 // pred_fallthru
    _

// kernel: segmentation_fpn_forward.17
$region0: #{segmentation_fpn_forward.17}
  #allocation0 [shape = 'u32[]', space=smem, size = 0x4, offset = 0x4, fixed_abs, tag = 'smem constant byte address 0x4 - core index']
  #allocation1 [shape = 'u32[72,128]{1,0:T(1,128)}', space=vmem, size = 0x9000, scoped, tag = 'internal scratch']
  %s0 = inlined_call_operand.vmem [shape: bf16[32,128], index: 0, kind: input, shape index: {}]
  %s1 = inlined_call_operand.vmem [shape: bf16[128,256], index: 1, kind: input, shape index: {}]
  %s2 = inlined_call_operand.vmem [shape: f32[1,256], index: 2, kind: input, shape index: {}]
  %s3 = inlined_call_operand.vmem [shape: bf16[32,256], index: 3, kind: input, shape index: {}]
  %s4 = inlined_call_operand.vmem [shape: bf16[32,256], index: 4, kind: output, shape index: {}]
  %s5 = sld [smem:[#allocation0]]
  $region49: #{segmentation_fpn_forward.17} parent=0
    _
  %s7 = ssub.s32 1, %s5
  %s8 = scalar_select 0, %s7, %s5
  loop: start=0, step=1, limit=4
  $region2: #{segmentation_fpn_forward.17} parent=0 // loop_pre_header
    _
  $region3: #{segmentation_fpn_forward.17} parent=0 // loop_header
    %s10 = sphi 0, %s14
    %p11 = scmp.ge.s32.totalorder %s10, 4
    %s20 = sphi 0, %s22
    %s23 = sphi 0, %s20
    %s24 = sphi 0, %s23
    %s40 = sphi 0, %s24
    %s44 = sphi 0, %s44
    %s46 = sphi 0, %s44
    %s47 = sphi 0, %s46
    %s61 = sphi 0, %s47
    %s65 = sphi 0, %s65
    %s67 = sphi 0, %s65
    %s68 = sphi 0, %s67
    %s82 = sphi 0, %s68
    %s88 = sphi 0, %s90
    %s91 = sphi 0, %s88
    %s92 = sphi 0, %s91
    %s108 = sphi 0, %s92
    %s114 = sphi 0, %s116
    %s117 = sphi 0, %s114
    %s118 = sphi 0, %s117
    %s134 = sphi 0, %s118
  $region4: #{segmentation_fpn_forward.17} parent=0 // loop_header_branch
    %13 = sbr.rel (%p11) target = $region8
  $region5: #{segmentation_fpn_forward.17} parent=0 // loop_body
    %s15 = ssub.s32 %s10, 1
    %s16 = ssub.s32 %s10, 2
    %s17 = sadd.s32 %s10, 1
    %s18 = ssub.s32 %s10, %s17
    %p19 = scmp.eq.s32.totalorder %s18, 0
    %s21 = sadd.s32 %s20, 1
    %s22 = scalar_select %p19, %s20, %s21
    %p25 = pneg %p19
    %p26 = scmp.eq.s32.totalorder %s10, 1
    %p27 = por %p25, %p26
    %p28 = scmp.ne.s32.totalorder %s20, %s23
    %p29 = scmp.eq.s32.totalorder %s10, 0
    %p30 = por %p28, %p29
    %p31 = scmp.ne.s32.totalorder %s20, %s23
    %p32 = scmp.eq.s32.totalorder %s15, 1
    %p33 = por %p31, %p32
    %p34 = scmp.ne.s32.totalorder %s23, %s24
    %p35 = scmp.eq.s32.totalorder %s15, 0
    %p36 = por %p34, %p35
    %p37 = scmp.ne.s32.totalorder %s23, %s24
    %p38 = scmp.eq.s32.totalorder %s16, 1
    %p39 = por %p37, %p38
    %p41 = scmp.ne.s32.totalorder %s24, %s40
    %p42 = scmp.eq.s32.totalorder %s16, 0
    %p43 = por %p41, %p42
    %s45 = sadd.s32 %s44, 1
    %p48 = scmp.eq.s32.totalorder %s10, 1
    %p49 = scmp.ne.s32.totalorder %s44, %s46
    %p50 = scmp.eq.s32.totalorder %s10, 0
    %p51 = por %p49, %p50
    %p52 = scmp.ne.s32.totalorder %s44, %s46
    %p53 = scmp.eq.s32.totalorder %s15, 1
    %p54 = por %p52, %p53
    %p55 = scmp.ne.s32.totalorder %s46, %s47
    %p56 = scmp.eq.s32.totalorder %s15, 0
    %p57 = por %p55, %p56
    %p58 = scmp.ne.s32.totalorder %s46, %s47
    %p59 = scmp.eq.s32.totalorder %s16, 1
    %p60 = por %p58, %p59
    %p62 = scmp.ne.s32.totalorder %s47, %s61
    %p63 = scmp.eq.s32.totalorder %s16, 0
    %p64 = por %p62, %p63
    %s66 = sadd.s32 %s65, 1
    %p69 = scmp.eq.s32.totalorder %s10, 1
    %p70 = scmp.ne.s32.totalorder %s65, %s67
    %p71 = scmp.eq.s32.totalorder %s10, 0
    %p72 = por %p70, %p71
    %p73 = scmp.ne.s32.totalorder %s65, %s67
    %p74 = scmp.eq.s32.totalorder %s15, 1
    %p75 = por %p73, %p74
    %p76 = scmp.ne.s32.totalorder %s67, %s68
    %p77 = scmp.eq.s32.totalorder %s15, 0
    %p78 = por %p76, %p77
    %p79 = scmp.ne.s32.totalorder %s67, %s68
    %p80 = scmp.eq.s32.totalorder %s16, 1
    %p81 = por %p79, %p80
    %p83 = scmp.ne.s32.totalorder %s68, %s82
    %p84 = scmp.eq.s32.totalorder %s16, 0
    %p85 = por %p83, %p84
    %s86 = ssub.s32 %s10, %s17
    %p87 = scmp.eq.s32.totalorder %s86, 0
    %s89 = sadd.s32 %s88, 1
    %s90 = scalar_select %p87, %s88, %s89
    %p93 = pneg %p87
    %p94 = scmp.eq.s32.totalorder %s10, 1
    %p95 = por %p93, %p94
    %p96 = scmp.ne.s32.totalorder %s88, %s91
    %p97 = scmp.eq.s32.totalorder %s10, 0
    %p98 = por %p96, %p97
    %p99 = scmp.ne.s32.totalorder %s88, %s91
    %p100 = scmp.eq.s32.totalorder %s15, 1
    %p101 = por %p99, %p100
    %p102 = scmp.ne.s32.totalorder %s91, %s92
    %p103 = scmp.eq.s32.totalorder %s15, 0
    %p104 = por %p102, %p103
    %p105 = scmp.ne.s32.totalorder %s91, %s92
    %p106 = scmp.eq.s32.totalorder %s16, 1
    %p107 = por %p105, %p106
    %p109 = scmp.ne.s32.totalorder %s92, %s108
    %p110 = scmp.eq.s32.totalorder %s16, 0
    %p111 = por %p109, %p110
    %s112 = ssub.s32 %s10, %s17
    %p113 = scmp.eq.s32.totalorder %s112, 0
    %s115 = sadd.s32 %s114, 1
    %s116 = scalar_select %p113, %s114, %s115
    %p119 = pneg %p113
    %p120 = scmp.eq.s32.totalorder %s10, 1
    %p121 = por %p119, %p120
    %p122 = scmp.ne.s32.totalorder %s114, %s117
    %p123 = scmp.eq.s32.totalorder %s10, 0
    %p124 = por %p122, %p123
    %p125 = scmp.ne.s32.totalorder %s114, %s117
    %p126 = scmp.eq.s32.totalorder %s15, 1
    %p127 = por %p125, %p126
    %p128 = scmp.ne.s32.totalorder %s117, %s118
    %p129 = scmp.eq.s32.totalorder %s15, 0
    %p130 = por %p128, %p129
    %p131 = scmp.ne.s32.totalorder %s117, %s118
    %p132 = scmp.eq.s32.totalorder %s16, 1
    %p133 = por %p131, %p132
    %p135 = scmp.ne.s32.totalorder %s118, %s134
    %p136 = scmp.eq.s32.totalorder %s16, 0
    %p137 = por %p135, %p136
    %p138 = scmp.le.s32.totalorder 1, %s10
    %p139 = scmp.lt.s32.totalorder %s10, 3
    %p140 = pnand %p138, %p139
    %p141 = pneg %p140
    // Predicated region
    $region9: #{segmentation_fpn_forward.17} parent=5 // pred_check
      _
    $region10: #{segmentation_fpn_forward.17} parent=5 // pred_check_branch
      %143 = sbr.rel (%p140) target = $region12
    $region11: #{segmentation_fpn_forward.17} parent=5 // pred_region
      %s144 = ssub.s32 %s10, 1
      // Predicated region
      $region13: #{segmentation_fpn_forward.17} parent=11 // pred_check
        %p145 = pneg %p57
      $region14: #{segmentation_fpn_forward.17} parent=11 // pred_check_branch
        %147 = sbr.rel (%p145) target = $region16
      $region15: #{segmentation_fpn_forward.17} parent=11 // pred_region
        _
      $region16: #{segmentation_fpn_forward.17} parent=11 // pred_fallthru
        _
      // Predicated region
      $region17: #{segmentation_fpn_forward.17} parent=11 // pred_check
        %p148 = pneg %p78
      $region18: #{segmentation_fpn_forward.17} parent=11 // pred_check_branch
        %150 = sbr.rel (%p148) target = $region20
      $region19: #{segmentation_fpn_forward.17} parent=11 // pred_region
        _
      $region20: #{segmentation_fpn_forward.17} parent=11 // pred_fallthru
        _
    $region12: #{segmentation_fpn_forward.17} parent=5 // pred_fallthru
      _
    %p151 = scmp.lt.s32.totalorder %s10, 2
    // Predicated region
    $region21: #{segmentation_fpn_forward.17} parent=5 // pred_check
      %p152 = pneg %p151
    $region22: #{segmentation_fpn_forward.17} parent=5 // pred_check_branch
      %154 = sbr.rel (%p152) target = $region24
    $region23: #{segmentation_fpn_forward.17} parent=5 // pred_region
      // Predicated region
      $region25: #{segmentation_fpn_forward.17} parent=23 // pred_check
        %p155 = pneg %p30
      $region26: #{segmentation_fpn_forward.17} parent=23 // pred_check_branch
        %157 = sbr.rel (%p155) target = $region28
      $region27: #{segmentation_fpn_forward.17} parent=23 // pred_region
        %s158 = smul.u32 2, %s10
        %p159 = scmp.lt.s32.totalorder %s158, 3
        %s160 = scalar_select %p159, %s158, 3
        %s161 = smul.addr %s160, 4
        %s162 = scalar_lea.vmem %s0, %s161
        %s163 = smul.u32 2, %s10
      $region28: #{segmentation_fpn_forward.17} parent=23 // pred_fallthru
        _
      // Predicated region
      $region29: #{segmentation_fpn_forward.17} parent=23 // pred_check
        %p164 = pneg %p98
      $region30: #{segmentation_fpn_forward.17} parent=23 // pred_check_branch
        %166 = sbr.rel (%p164) target = $region32
      $region31: #{segmentation_fpn_forward.17} parent=23 // pred_region
        %s167 = smul.u32 2, %s10
        %p168 = scmp.lt.s32.totalorder %s167, 3
        %s169 = scalar_select %p168, %s167, 3
        %s170 = smul.addr %s169, 2
        %s171 = smul.addr %s170, 4
        %s172 = scalar_lea.vmem %s3, %s171
        %s173 = smul.u32 2, %s10
      $region32: #{segmentation_fpn_forward.17} parent=23 // pred_fallthru
        _
    $region24: #{segmentation_fpn_forward.17} parent=5 // pred_fallthru
      _
    %p174 = scmp.le.s32.totalorder 1, %s10
    %p175 = scmp.lt.s32.totalorder %s10, 3
    %p176 = pnand %p174, %p175
    %p177 = pneg %p176
    // Predicated region
    $region33: #{segmentation_fpn_forward.17} parent=5 // pred_check
      _
    $region34: #{segmentation_fpn_forward.17} parent=5 // pred_check_branch
      %179 = sbr.rel (%p176) target = $region36
    $region35: #{segmentation_fpn_forward.17} parent=5 // pred_region
      %s180 = ssub.s32 %s10, 1
      %s181 = smul.u32 2, %s15
      %p182 = scmp.lt.s32.totalorder %s181, 3
      %s183 = scalar_select %p182, %s181, 3
      %s184 = smul.addr %s183, 4
      %s185 = scalar_lea.vmem %s0, %s184
      %p186 = pneg %p36
      %p187 = pneg %p33
      %p188 = pneg %p57
      %p189 = pneg %p54
      %p190 = pneg %p78
      %p191 = pneg %p75
      %s192 = smul.u32 2, %s15
      %p193 = scmp.lt.s32.totalorder %s192, 3
      %s194 = scalar_select %p193, %s192, 3
      %s195 = smul.addr %s194, 2
      %s196 = smul.addr %s195, 4
      %s197 = scalar_lea.vmem %s3, %s196
      %p198 = pneg %p104
      %p199 = pneg %p101
      %p200 = pneg %p130
      %p201 = pneg %p127
      %s202 = smul.u32 2, %s15
      %p203 = scmp.lt.s32.totalorder %s202, 3
      %s204 = scalar_select %p203, %s202, 3
      %s205 = smul.addr %s204, 2
      %s206 = smul.addr %s205, 4
      %s207 = scalar_lea.vmem %s4, %s206
      %s208 = smul.u32 2, %s15
      %p209 = scmp.lt.s32.totalorder %s208, 3
      %s210 = scalar_select %p209, %s208, 3
      %s211 = smul.addr %s210, 4
      %s212 = scalar_lea.vmem %s0, %s211
      %s213 = smul.u32 2, %s15
      %s214 = smul.u32 2, %s15
      %p215 = scmp.lt.s32.totalorder %s214, 3
      %s216 = scalar_select %p215, %s214, 3
      %s217 = smul.addr %s216, 2
      %s218 = smul.addr %s217, 4
      %s219 = scalar_lea.vmem %s3, %s218
      %s220 = smul.u32 2, %s15
      %s221 = smul.u32 2, %s15
      %p222 = scmp.lt.s32.totalorder %s221, 3
      %s223 = scalar_select %p222, %s221, 3
      %s224 = smul.addr %s223, 2
      %s225 = smul.addr %s224, 4
      %s226 = scalar_lea.vmem %s4, %s225
      %s227 = smul.u32 2, %s15
      %v228 = vld [vmem:[%s212] sm:$0xf]
      %v229 = vld [vmem:[%s212 + $0x4] sm:$0xf]
      %v230 = vld [vmem:[%s1] sm:$0xff]
      %v231 = vld [vmem:[%s1 + $0x8] sm:$0xff]
      %v232 = vld [vmem:[%s1 + $0x10] sm:$0xff]
      %v233 = vld [vmem:[%s1 + $0x18] sm:$0xff]
      %v234 = vld [vmem:[%s1 + $0x20] sm:$0xff]
      %v235 = vld [vmem:[%s1 + $0x28] sm:$0xff]
      %v236 = vld [vmem:[%s1 + $0x30] sm:$0xff]
      %v237 = vld [vmem:[%s1 + $0x38] sm:$0xff]
      %v238 = vld [vmem:[%s1 + $0x40] sm:$0xff]
      %v239 = vld [vmem:[%s1 + $0x48] sm:$0xff]
      %v240 = vld [vmem:[%s1 + $0x50] sm:$0xff]
      %v241 = vld [vmem:[%s1 + $0x58] sm:$0xff]
      %v242 = vld [vmem:[%s1 + $0x60] sm:$0xff]
      %v243 = vld [vmem:[%s1 + $0x68] sm:$0xff]
      %v244 = vld [vmem:[%s1 + $0x70] sm:$0xff]
      %v245 = vld [vmem:[%s1 + $0x78] sm:$0xff]
      %v246 = vld [vmem:[%s2] sm:$0x3]
      %v248 = vperm.slane %v246, 0
      %v249 = vperm.slane %v246, 1
      %v254 = vunpack.c.l.b16 %v228
      %v255 = vunpack.c.l.b16 %v229
      %v256 = vpack.c.b16 %v255, %v254
      %v274 = vunpack.c.l.b16 %v230
      %v275 = vunpack.c.h.b16 %v230
      %v276 = vunpack.c.l.b16 %v231
      %v277 = vunpack.c.h.b16 %v231
      %v278 = vunpack.c.l.b16 %v232
      %v279 = vunpack.c.h.b16 %v232
      %v280 = vunpack.c.l.b16 %v233
      %v281 = vunpack.c.h.b16 %v233
      %v282 = vunpack.c.l.b16 %v234
      %v283 = vunpack.c.h.b16 %v234
      %v284 = vunpack.c.l.b16 %v235
      %v285 = vunpack.c.h.b16 %v235
      %v286 = vunpack.c.l.b16 %v236
      %v287 = vunpack.c.h.b16 %v236
      %v288 = vunpack.c.l.b16 %v237
      %v289 = vunpack.c.h.b16 %v237
      %v290 = vunpack.c.l.b16 %v238
      %v291 = vunpack.c.h.b16 %v238
      %v292 = vunpack.c.l.b16 %v239
      %v293 = vunpack.c.h.b16 %v239
      %v294 = vunpack.c.l.b16 %v240
      %v295 = vunpack.c.h.b16 %v240
      %v296 = vunpack.c.l.b16 %v241
      %v297 = vunpack.c.h.b16 %v241
      %v298 = vunpack.c.l.b16 %v242
      %v299 = vunpack.c.h.b16 %v242
      %v300 = vunpack.c.l.b16 %v243
      %v301 = vunpack.c.h.b16 %v243
      %v302 = vunpack.c.l.b16 %v244
      %v303 = vunpack.c.h.b16 %v244
      %v304 = vunpack.c.l.b16 %v245
      %v305 = vunpack.c.h.b16 %v245
      %v306 = vpack.c.b16 %v276, %v274
      %v307 = vpack.c.b16 %v277, %v275
      %v308 = vpack.c.b16 %v280, %v278
      %v309 = vpack.c.b16 %v281, %v279
      %v310 = vpack.c.b16 %v284, %v282
      %v311 = vpack.c.b16 %v285, %v283
      %v312 = vpack.c.b16 %v288, %v286
      %v313 = vpack.c.b16 %v289, %v287
      %v314 = vpack.c.b16 %v292, %v290
      %v315 = vpack.c.b16 %v293, %v291
      %v316 = vpack.c.b16 %v296, %v294
      %v317 = vpack.c.b16 %v297, %v295
      %v318 = vpack.c.b16 %v300, %v298
      %v319 = vpack.c.b16 %v301, %v299
      %v320 = vpack.c.b16 %v304, %v302
      %v321 = vpack.c.b16 %v305, %v303
      %338 = vmatpush.bf16.msra.mxu0 %v320
      %339 = vmatpush.bf16.msra.mxu0 %v318
      %340 = vmatpush.bf16.msra.mxu0 %v316
      %341 = vmatpush.bf16.msra.mxu0 %v314
      %342 = vmatpush.bf16.msra.mxu0 %v312
      %343 = vmatpush.bf16.msra.mxu0 %v310
      %344 = vmatpush.bf16.msra.mxu0 %v308
      %345 = vmatpush.bf16.msra.mxu0 %v306
      %346 = vmatmul.bf16.gmra.mxu0 %v256
      %v347 = vpop.f32.mrf.mxu0
      %v348 = vadd.f32 %v248, %v347
      %v349 = vpop.f32.mrf.mxu0
      %v350 = vadd.f32 %v248, %v349
      %351 = vdwg.mxu0
      %352 = vmatpush.bf16.msra.mxu0 %v321
      %353 = vmatpush.bf16.msra.mxu0 %v319
      %354 = vmatpush.bf16.msra.mxu0 %v317
      %355 = vmatpush.bf16.msra.mxu0 %v315
      %356 = vmatpush.bf16.msra.mxu0 %v313
      %357 = vmatpush.bf16.msra.mxu0 %v311
      %358 = vmatpush.bf16.msra.mxu0 %v309
      %359 = vmatpush.bf16.msra.mxu0 %v307
      %360 = vmatmul.bf16.gmra.mxu0 %v256
      %v361 = vpop.f32.mrf.mxu0
      %v362 = vadd.f32 %v249, %v361
      %v363 = vpop.f32.mrf.mxu0
      %v364 = vadd.f32 %v249, %v363
      %365 = vdwg.mxu0
      %v366 = vld [vmem:[%s219] sm:$0xff]
      %v367 = vld [vmem:[%s219 + $0x8] sm:$0xff]
      %v368 = vunpack.c.l.bf16 %v366
      %v369 = vunpack.c.h.bf16 %v366
      %v370 = vunpack.c.l.bf16 %v367
      %v371 = vunpack.c.h.bf16 %v367
      %v372 = vadd.f32 %v348, %v368
      %v373 = vadd.f32 %v362, %v369
      %v374 = vadd.f32 %v350, %v370
      %v375 = vadd.f32 %v364, %v371
      %v376 = vpack.c.bf16 %v373, %v372
      %v377 = vpack.c.bf16 %v375, %v374
      %378 = vst [vmem:[%s226] sm:$0xff] %v376
      %379 = vst [vmem:[%s226 + $0x8] sm:$0xff] %v377
      %s380 = smul.u32 2, %s15
      %p381 = scmp.lt.s32.totalorder %s380, 3
      %s382 = scalar_select %p381, %s380, 3
      %s383 = smul.addr %s382, 2
      %s384 = smul.addr %s383, 4
      %s385 = scalar_lea.vmem %s4, %s384
      // Predicated region
      $region37: #{segmentation_fpn_forward.17} parent=35 // pred_check
        %p386 = pneg %p127
      $region38: #{segmentation_fpn_forward.17} parent=35 // pred_check_branch
        %388 = sbr.rel (%p386) target = $region40
      $region39: #{segmentation_fpn_forward.17} parent=35 // pred_region
        %s389 = smul.u32 2, %s15
      $region40: #{segmentation_fpn_forward.17} parent=35 // pred_fallthru
        _
    $region36: #{segmentation_fpn_forward.17} parent=5 // pred_fallthru
      _
    %p390 = scmp.le.s32.totalorder 2, %s10
    // Predicated region
    $region41: #{segmentation_fpn_forward.17} parent=5 // pred_check
      %p391 = pneg %p390
    $region42: #{segmentation_fpn_forward.17} parent=5 // pred_check_branch
      %393 = sbr.rel (%p391) target = $region44
    $region43: #{segmentation_fpn_forward.17} parent=5 // pred_region
      %s394 = ssub.s32 %s10, 2
      // Predicated region
      $region45: #{segmentation_fpn_forward.17} parent=43 // pred_check
        %p395 = pneg %p133
      $region46: #{segmentation_fpn_forward.17} parent=43 // pred_check_branch
        %397 = sbr.rel (%p395) target = $region48
      $region47: #{segmentation_fpn_forward.17} parent=43 // pred_region
        %s398 = smul.u32 2, %s16
        %p399 = scmp.lt.s32.totalorder %s398, 3
        %s400 = scalar_select %p399, %s398, 3
        %s401 = smul.addr %s400, 2
        %s402 = smul.addr %s401, 4
        %s403 = scalar_lea.vmem %s4, %s402
      $region48: #{segmentation_fpn_forward.17} parent=43 // pred_fallthru
        _
    $region44: #{segmentation_fpn_forward.17} parent=5 // pred_fallthru
      _
  $region6: #{segmentation_fpn_forward.17} parent=0 // loop_footer
    %s14 = sadd.s32 1, %s10
  $region7: #{segmentation_fpn_forward.17} parent=0 // loop_footer_branch
    %9 = sbr.rel target = $region3
  $region8: #{segmentation_fpn_forward.17} parent=0 // loop_exit
    _

// kernel: segmentation_fpn_forward.12
$region0: #{segmentation_fpn_forward.12}
  #allocation0 [shape = 'u32[]', space=smem, size = 0x4, offset = 0x4, fixed_abs, tag = 'smem constant byte address 0x4 - core index']
  #allocation1 [shape = 'u32[72,128]{1,0:T(1,128)}', space=vmem, size = 0x9000, scoped, tag = 'internal scratch']
  %s0 = inlined_call_operand.vmem [shape: bf16[32,8], index: 0, kind: input, shape index: {}]
  %s1 = inlined_call_operand.vmem [shape: bf16[8,128], index: 1, kind: input, shape index: {}]
  %s2 = inlined_call_operand.vmem [shape: f32[1,128], index: 2, kind: input, shape index: {}]
  %s3 = inlined_call_operand.vmem [shape: bf16[32,128], index: 3, kind: output, shape index: {}]
  %s4 = sld [smem:[#allocation0]]
  $region45: #{segmentation_fpn_forward.12} parent=0
    _
  %s6 = ssub.s32 1, %s4
  %s7 = scalar_select 0, %s6, %s4
  loop: start=0, step=1, limit=4
  $region2: #{segmentation_fpn_forward.12} parent=0 // loop_pre_header
    _
  $region3: #{segmentation_fpn_forward.12} parent=0 // loop_header
    %s9 = sphi 0, %s13
    %p10 = scmp.ge.s32.totalorder %s9, 4
    %s19 = sphi 0, %s21
    %s22 = sphi 0, %s19
    %s23 = sphi 0, %s22
    %s39 = sphi 0, %s23
    %s43 = sphi 0, %s43
    %s45 = sphi 0, %s43
    %s46 = sphi 0, %s45
    %s60 = sphi 0, %s46
    %s64 = sphi 0, %s64
    %s66 = sphi 0, %s64
    %s67 = sphi 0, %s66
    %s81 = sphi 0, %s67
    %s87 = sphi 0, %s89
    %s90 = sphi 0, %s87
    %s91 = sphi 0, %s90
    %s107 = sphi 0, %s91
  $region4: #{segmentation_fpn_forward.12} parent=0 // loop_header_branch
    %12 = sbr.rel (%p10) target = $region8
  $region5: #{segmentation_fpn_forward.12} parent=0 // loop_body
    %s14 = ssub.s32 %s9, 1
    %s15 = ssub.s32 %s9, 2
    %s16 = sadd.s32 %s9, 1
    %s17 = ssub.s32 %s9, %s16
    %p18 = scmp.eq.s32.totalorder %s17, 0
    %s20 = sadd.s32 %s19, 1
    %s21 = scalar_select %p18, %s19, %s20
    %p24 = pneg %p18
    %p25 = scmp.eq.s32.totalorder %s9, 1
    %p26 = por %p24, %p25
    %p27 = scmp.ne.s32.totalorder %s19, %s22
    %p28 = scmp.eq.s32.totalorder %s9, 0
    %p29 = por %p27, %p28
    %p30 = scmp.ne.s32.totalorder %s19, %s22
    %p31 = scmp.eq.s32.totalorder %s14, 1
    %p32 = por %p30, %p31
    %p33 = scmp.ne.s32.totalorder %s22, %s23
    %p34 = scmp.eq.s32.totalorder %s14, 0
    %p35 = por %p33, %p34
    %p36 = scmp.ne.s32.totalorder %s22, %s23
    %p37 = scmp.eq.s32.totalorder %s15, 1
    %p38 = por %p36, %p37
    %p40 = scmp.ne.s32.totalorder %s23, %s39
    %p41 = scmp.eq.s32.totalorder %s15, 0
    %p42 = por %p40, %p41
    %s44 = sadd.s32 %s43, 1
    %p47 = scmp.eq.s32.totalorder %s9, 1
    %p48 = scmp.ne.s32.totalorder %s43, %s45
    %p49 = scmp.eq.s32.totalorder %s9, 0
    %p50 = por %p48, %p49
    %p51 = scmp.ne.s32.totalorder %s43, %s45
    %p52 = scmp.eq.s32.totalorder %s14, 1
    %p53 = por %p51, %p52
    %p54 = scmp.ne.s32.totalorder %s45, %s46
    %p55 = scmp.eq.s32.totalorder %s14, 0
    %p56 = por %p54, %p55
    %p57 = scmp.ne.s32.totalorder %s45, %s46
    %p58 = scmp.eq.s32.totalorder %s15, 1
    %p59 = por %p57, %p58
    %p61 = scmp.ne.s32.totalorder %s46, %s60
    %p62 = scmp.eq.s32.totalorder %s15, 0
    %p63 = por %p61, %p62
    %s65 = sadd.s32 %s64, 1
    %p68 = scmp.eq.s32.totalorder %s9, 1
    %p69 = scmp.ne.s32.totalorder %s64, %s66
    %p70 = scmp.eq.s32.totalorder %s9, 0
    %p71 = por %p69, %p70
    %p72 = scmp.ne.s32.totalorder %s64, %s66
    %p73 = scmp.eq.s32.totalorder %s14, 1
    %p74 = por %p72, %p73
    %p75 = scmp.ne.s32.totalorder %s66, %s67
    %p76 = scmp.eq.s32.totalorder %s14, 0
    %p77 = por %p75, %p76
    %p78 = scmp.ne.s32.totalorder %s66, %s67
    %p79 = scmp.eq.s32.totalorder %s15, 1
    %p80 = por %p78, %p79
    %p82 = scmp.ne.s32.totalorder %s67, %s81
    %p83 = scmp.eq.s32.totalorder %s15, 0
    %p84 = por %p82, %p83
    %s85 = ssub.s32 %s9, %s16
    %p86 = scmp.eq.s32.totalorder %s85, 0
    %s88 = sadd.s32 %s87, 1
    %s89 = scalar_select %p86, %s87, %s88
    %p92 = pneg %p86
    %p93 = scmp.eq.s32.totalorder %s9, 1
    %p94 = por %p92, %p93
    %p95 = scmp.ne.s32.totalorder %s87, %s90
    %p96 = scmp.eq.s32.totalorder %s9, 0
    %p97 = por %p95, %p96
    %p98 = scmp.ne.s32.totalorder %s87, %s90
    %p99 = scmp.eq.s32.totalorder %s14, 1
    %p100 = por %p98, %p99
    %p101 = scmp.ne.s32.totalorder %s90, %s91
    %p102 = scmp.eq.s32.totalorder %s14, 0
    %p103 = por %p101, %p102
    %p104 = scmp.ne.s32.totalorder %s90, %s91
    %p105 = scmp.eq.s32.totalorder %s15, 1
    %p106 = por %p104, %p105
    %p108 = scmp.ne.s32.totalorder %s91, %s107
    %p109 = scmp.eq.s32.totalorder %s15, 0
    %p110 = por %p108, %p109
    %p111 = scmp.le.s32.totalorder 1, %s9
    %p112 = scmp.lt.s32.totalorder %s9, 3
    %p113 = pnand %p111, %p112
    %p114 = pneg %p113
    // Predicated region
    $region9: #{segmentation_fpn_forward.12} parent=5 // pred_check
      _
    $region10: #{segmentation_fpn_forward.12} parent=5 // pred_check_branch
      %116 = sbr.rel (%p113) target = $region12
    $region11: #{segmentation_fpn_forward.12} parent=5 // pred_region
      %s117 = ssub.s32 %s9, 1
      // Predicated region
      $region13: #{segmentation_fpn_forward.12} parent=11 // pred_check
        %p118 = pneg %p56
      $region14: #{segmentation_fpn_forward.12} parent=11 // pred_check_branch
        %120 = sbr.rel (%p118) target = $region16
      $region15: #{segmentation_fpn_forward.12} parent=11 // pred_region
        _
      $region16: #{segmentation_fpn_forward.12} parent=11 // pred_fallthru
        _
      // Predicated region
      $region17: #{segmentation_fpn_forward.12} parent=11 // pred_check
        %p121 = pneg %p77
      $region18: #{segmentation_fpn_forward.12} parent=11 // pred_check_branch
        %123 = sbr.rel (%p121) target = $region20
      $region19: #{segmentation_fpn_forward.12} parent=11 // pred_region
        _
      $region20: #{segmentation_fpn_forward.12} parent=11 // pred_fallthru
        _
    $region12: #{segmentation_fpn_forward.12} parent=5 // pred_fallthru
      _
    %p124 = scmp.lt.s32.totalorder %s9, 2
    // Predicated region
    $region21: #{segmentation_fpn_forward.12} parent=5 // pred_check
      %p125 = pneg %p124
    $region22: #{segmentation_fpn_forward.12} parent=5 // pred_check_branch
      %127 = sbr.rel (%p125) target = $region24
    $region23: #{segmentation_fpn_forward.12} parent=5 // pred_region
      // Predicated region
      $region25: #{segmentation_fpn_forward.12} parent=23 // pred_check
        %p128 = pneg %p29
      $region26: #{segmentation_fpn_forward.12} parent=23 // pred_check_branch
        %130 = sbr.rel (%p128) target = $region28
      $region27: #{segmentation_fpn_forward.12} parent=23 // pred_region
        %s131 = smul.u32 2, %s9
        %p132 = scmp.lt.s32.totalorder %s131, 3
        %s133 = scalar_select %p132, %s131, 3
        %s134 = smul.addr %s133, 4
        %s135 = scalar_lea.vmem %s0, %s134
        %s136 = smul.u32 2, %s9
      $region28: #{segmentation_fpn_forward.12} parent=23 // pred_fallthru
        _
    $region24: #{segmentation_fpn_forward.12} parent=5 // pred_fallthru
      _
    %p137 = scmp.le.s32.totalorder 1, %s9
    %p138 = scmp.lt.s32.totalorder %s9, 3
    %p139 = pnand %p137, %p138
    %p140 = pneg %p139
    // Predicated region
    $region29: #{segmentation_fpn_forward.12} parent=5 // pred_check
      _
    $region30: #{segmentation_fpn_forward.12} parent=5 // pred_check_branch
      %142 = sbr.rel (%p139) target = $region32
    $region31: #{segmentation_fpn_forward.12} parent=5 // pred_region
      %s143 = ssub.s32 %s9, 1
      %s144 = smul.u32 2, %s14
      %p145 = scmp.lt.s32.totalorder %s144, 3
      %s146 = scalar_select %p145, %s144, 3
      %s147 = smul.addr %s146, 4
      %s148 = scalar_lea.vmem %s0, %s147
      %p149 = pneg %p35
      %p150 = pneg %p32
      %p151 = pneg %p56
      %p152 = pneg %p53
      %p153 = pneg %p77
      %p154 = pneg %p74
      %p155 = pneg %p103
      %p156 = pneg %p100
      %s157 = smul.u32 2, %s14
      %p158 = scmp.lt.s32.totalorder %s157, 3
      %s159 = scalar_select %p158, %s157, 3
      %s160 = smul.addr %s159, 4
      %s161 = scalar_lea.vmem %s3, %s160
      %s162 = smul.u32 2, %s14
      %p163 = scmp.lt.s32.totalorder %s162, 3
      %s164 = scalar_select %p163, %s162, 3
      %s165 = smul.addr %s164, 4
      %s166 = scalar_lea.vmem %s0, %s165
      %s167 = smul.u32 2, %s14
      %s168 = smul.u32 2, %s14
      %p169 = scmp.lt.s32.totalorder %s168, 3
      %s170 = scalar_select %p169, %s168, 3
      %s171 = smul.addr %s170, 4
      %s172 = scalar_lea.vmem %s3, %s171
      %s173 = smul.u32 2, %s14
      %v175 = vld [vmem:[%s166] sm:$0xf]
      %v176 = vld [vmem:[%s166 + $0x4] sm:$0xf]
      %v177 = vld [vmem:[%s1] sm:$0xf]
      %v178 = vld [vmem:[%s2] sm:$0x1]
      %v180 = vperm.slane %v178, 0
      %v184 = vunpack.c.l.b16 %v175
      %v185 = vunpack.c.l.b16 %v176
      %v186 = vpack.c.b16 %v185, %v184
      %vm187 = vcmask 64512
      %v189 = vsel %vm187, %v186, 0
      %vm191 = vcmask 1043456
      %v193 = vsel %vm191, %v177, 0
      %195 = vmatpush.bf16.msra.mxu0 0
      %196 = vmatpush.bf16.msra.mxu0 0
      %197 = vmatpush.bf16.msra.mxu0 0
      %198 = vmatpush.bf16.msra.mxu0 0
      %199 = vmatpush.bf16.msra.mxu0 0
      %200 = vmatpush.bf16.msra.mxu0 0
      %201 = vmatpush.bf16.msra.mxu0 0
      %202 = vmatpush.bf16.msra.mxu0 %v193
      %203 = vmatmul.bf16.gmra.mxu0 %v189
      %v204 = vpop.f32.mrf.mxu0
      %v205 = vadd.f32 %v180, %v204
      %v206 = vpop.f32.mrf.mxu0
      %v207 = vadd.f32 %v180, %v206
      %208 = vdwg.mxu0
      %v209 = vmax.f32 %v205, 0.0
      %v210 = vmax.f32 %v207, 0.0
      %v211 = vpack.c.bf16 %v209, %v209
      %v212 = vpack.c.bf16 %v210, %v210
      %213 = vst [vmem:[%s172] sm:$0xf] %v211
      %214 = vst [vmem:[%s172 + $0x4] sm:$0xf] %v212
      %s215 = smul.u32 2, %s14
      %p216 = scmp.lt.s32.totalorder %s215, 3
      %s217 = scalar_select %p216, %s215, 3
      %s218 = smul.addr %s217, 4
      %s219 = scalar_lea.vmem %s3, %s218
      // Predicated region
      $region33: #{segmentation_fpn_forward.12} parent=31 // pred_check
        %p220 = pneg %p100
      $region34: #{segmentation_fpn_forward.12} parent=31 // pred_check_branch
        %222 = sbr.rel (%p220) target = $region36
      $region35: #{segmentation_fpn_forward.12} parent=31 // pred_region
        %s223 = smul.u32 2, %s14
      $region36: #{segmentation_fpn_forward.12} parent=31 // pred_fallthru
        _
    $region32: #{segmentation_fpn_forward.12} parent=5 // pred_fallthru
      _
    %p224 = scmp.le.s32.totalorder 2, %s9
    // Predicated region
    $region37: #{segmentation_fpn_forward.12} parent=5 // pred_check
      %p225 = pneg %p224
    $region38: #{segmentation_fpn_forward.12} parent=5 // pred_check_branch
      %227 = sbr.rel (%p225) target = $region40
    $region39: #{segmentation_fpn_forward.12} parent=5 // pred_region
      %s228 = ssub.s32 %s9, 2
      // Predicated region
      $region41: #{segmentation_fpn_forward.12} parent=39 // pred_check
        %p229 = pneg %p106
      $region42: #{segmentation_fpn_forward.12} parent=39 // pred_check_branch
        %231 = sbr.rel (%p229) target = $region44
      $region43: #{segmentation_fpn_forward.12} parent=39 // pred_region
        %s232 = smul.u32 2, %s15
        %p233 = scmp.lt.s32.totalorder %s232, 3
        %s234 = scalar_select %p233, %s232, 3
        %s235 = smul.addr %s234, 4
        %s236 = scalar_lea.vmem %s3, %s235
      $region44: #{segmentation_fpn_forward.12} parent=39 // pred_fallthru
        _
    $region40: #{segmentation_fpn_forward.12} parent=5 // pred_fallthru
      _
  $region6: #{segmentation_fpn_forward.12} parent=0 // loop_footer
    %s13 = sadd.s32 1, %s9
  $region7: #{segmentation_fpn_forward.12} parent=0 // loop_footer_branch
    %8 = sbr.rel target = $region3
  $region8: #{segmentation_fpn_forward.12} parent=0 // loop_exit
    _

// kernel: segmentation_fpn_forward.18
$region0: #{segmentation_fpn_forward.18}
  #allocation0 [shape = 'u32[]', space=smem, size = 0x4, offset = 0x4, fixed_abs, tag = 'smem constant byte address 0x4 - core index']
  #allocation1 [shape = 'u32[72,128]{1,0:T(1,128)}', space=vmem, size = 0x9000, scoped, tag = 'internal scratch']
  %s0 = inlined_call_operand.vmem [shape: bf16[2,64,64], index: 0, kind: input, shape index: {}]
  %s1 = inlined_call_operand.vmem [shape: bf16[64,256], index: 1, kind: input, shape index: {}]
  %s2 = inlined_call_operand.vmem [shape: f32[1,256], index: 2, kind: input, shape index: {}]
  %s3 = inlined_call_operand.vmem [shape: bf16[2,32,256], index: 3, kind: input, shape index: {}]
  %s4 = inlined_call_operand.vmem [shape: bf16[2,64,256], index: 4, kind: output, shape index: {}]
  %s5 = sld [smem:[#allocation0]]
  $region49: #{segmentation_fpn_forward.18} parent=0
    _
  %s7 = ssub.s32 1, %s5
  %s8 = scalar_select 0, %s7, %s5
  loop: start=0, step=1, limit=4
  $region2: #{segmentation_fpn_forward.18} parent=0 // loop_pre_header
    _
  $region3: #{segmentation_fpn_forward.18} parent=0 // loop_header
    %s10 = sphi 0, %s14
    %p11 = scmp.ge.s32.totalorder %s10, 4
    %s17 = sphi 0, %s29
    %s18 = sphi 0, %s25
    %s19 = sphi 0, %s17
    %s20 = sphi 0, %s18
    %s21 = sphi 0, %s19
    %s22 = sphi 0, %s20
    %s34 = sphi 0, %s36
    %s37 = sphi 0, %s34
    %s38 = sphi 0, %s37
    %s54 = sphi 0, %s38
    %s58 = sphi 0, %s58
    %s60 = sphi 0, %s58
    %s61 = sphi 0, %s60
    %s75 = sphi 0, %s61
    %s79 = sphi 0, %s79
    %s81 = sphi 0, %s79
    %s82 = sphi 0, %s81
    %s96 = sphi 0, %s82
    %s104 = sphi 0, %s106
    %s107 = sphi 0, %s104
    %s108 = sphi 0, %s107
    %s124 = sphi 0, %s108
    %s132 = sphi 0, %s134
    %s135 = sphi 0, %s132
    %s136 = sphi 0, %s135
    %s152 = sphi 0, %s136
  $region4: #{segmentation_fpn_forward.18} parent=0 // loop_header_branch
    %13 = sbr.rel (%p11) target = $region8
  $region5: #{segmentation_fpn_forward.18} parent=0 // loop_body
    %s15 = ssub.s32 %s10, 1
    %s16 = ssub.s32 %s10, 2
    %s23 = sadd.s32 1, %s18
    %p24 = scmp.ge.s32.totalorder %s23, 1
    %s25 = scalar_select %p24, 0, %s23
    %s26 = sadd.s32 1, %s17
    %s27 = scalar_select %p24, %s26, %s17
    %p28 = scmp.ge.s32.totalorder %s27, 2
    %s29 = scalar_select %p28, 0, %s27
    %s30 = ssub.s32 %s17, %s29
    %s31 = ssub.s32 %s18, %s25
    %s32 = sor.u32 %s30, %s31
    %p33 = scmp.eq.s32.totalorder %s32, 0
    %s35 = sadd.s32 %s34, 1
    %s36 = scalar_select %p33, %s34, %s35
    %p39 = pneg %p33
    %p40 = scmp.eq.s32.totalorder %s10, 1
    %p41 = por %p39, %p40
    %p42 = scmp.ne.s32.totalorder %s34, %s37
    %p43 = scmp.eq.s32.totalorder %s10, 0
    %p44 = por %p42, %p43
    %p45 = scmp.ne.s32.totalorder %s34, %s37
    %p46 = scmp.eq.s32.totalorder %s15, 1
    %p47 = por %p45, %p46
    %p48 = scmp.ne.s32.totalorder %s37, %s38
    %p49 = scmp.eq.s32.totalorder %s15, 0
    %p50 = por %p48, %p49
    %p51 = scmp.ne.s32.totalorder %s37, %s38
    %p52 = scmp.eq.s32.totalorder %s16, 1
    %p53 = por %p51, %p52
    %p55 = scmp.ne.s32.totalorder %s38, %s54
    %p56 = scmp.eq.s32.totalorder %s16, 0
    %p57 = por %p55, %p56
    %s59 = sadd.s32 %s58, 1
    %p62 = scmp.eq.s32.totalorder %s10, 1
    %p63 = scmp.ne.s32.totalorder %s58, %s60
    %p64 = scmp.eq.s32.totalorder %s10, 0
    %p65 = por %p63, %p64
    %p66 = scmp.ne.s32.totalorder %s58, %s60
    %p67 = scmp.eq.s32.totalorder %s15, 1
    %p68 = por %p66, %p67
    %p69 = scmp.ne.s32.totalorder %s60, %s61
    %p70 = scmp.eq.s32.totalorder %s15, 0
    %p71 = por %p69, %p70
    %p72 = scmp.ne.s32.totalorder %s60, %s61
    %p73 = scmp.eq.s32.totalorder %s16, 1
    %p74 = por %p72, %p73
    %p76 = scmp.ne.s32.totalorder %s61, %s75
    %p77 = scmp.eq.s32.totalorder %s16, 0
    %p78 = por %p76, %p77
    %s80 = sadd.s32 %s79, 1
    %p83 = scmp.eq.s32.totalorder %s10, 1
    %p84 = scmp.ne.s32.totalorder %s79, %s81
    %p85 = scmp.eq.s32.totalorder %s10, 0
    %p86 = por %p84, %p85
    %p87 = scmp.ne.s32.totalorder %s79, %s81
    %p88 = scmp.eq.s32.totalorder %s15, 1
    %p89 = por %p87, %p88
    %p90 = scmp.ne.s32.totalorder %s81, %s82
    %p91 = scmp.eq.s32.totalorder %s15, 0
    %p92 = por %p90, %p91
    %p93 = scmp.ne.s32.totalorder %s81, %s82
    %p94 = scmp.eq.s32.totalorder %s16, 1
    %p95 = por %p93, %p94
    %p97 = scmp.ne.s32.totalorder %s82, %s96
    %p98 = scmp.eq.s32.totalorder %s16, 0
    %p99 = por %p97, %p98
    %s100 = ssub.s32 %s17, %s29
    %s101 = ssub.s32 %s18, %s25
    %s102 = sor.u32 %s100, %s101
    %p103 = scmp.eq.s32.totalorder %s102, 0
    %s105 = sadd.s32 %s104, 1
    %s106 = scalar_select %p103, %s104, %s105
    %p109 = pneg %p103
    %p110 = scmp.eq.s32.totalorder %s10, 1
    %p111 = por %p109, %p110
    %p112 = scmp.ne.s32.totalorder %s104, %s107
    %p113 = scmp.eq.s32.totalorder %s10, 0
    %p114 = por %p112, %p113
    %p115 = scmp.ne.s32.totalorder %s104, %s107
    %p116 = scmp.eq.s32.totalorder %s15, 1
    %p117 = por %p115, %p116
    %p118 = scmp.ne.s32.totalorder %s107, %s108
    %p119 = scmp.eq.s32.totalorder %s15, 0
    %p120 = por %p118, %p119
    %p121 = scmp.ne.s32.totalorder %s107, %s108
    %p122 = scmp.eq.s32.totalorder %s16, 1
    %p123 = por %p121, %p122
    %p125 = scmp.ne.s32.totalorder %s108, %s124
    %p126 = scmp.eq.s32.totalorder %s16, 0
    %p127 = por %p125, %p126
    %s128 = ssub.s32 %s17, %s29
    %s129 = ssub.s32 %s18, %s25
    %s130 = sor.u32 %s128, %s129
    %p131 = scmp.eq.s32.totalorder %s130, 0
    %s133 = sadd.s32 %s132, 1
    %s134 = scalar_select %p131, %s132, %s133
    %p137 = pneg %p131
    %p138 = scmp.eq.s32.totalorder %s10, 1
    %p139 = por %p137, %p138
    %p140 = scmp.ne.s32.totalorder %s132, %s135
    %p141 = scmp.eq.s32.totalorder %s10, 0
    %p142 = por %p140, %p141
    %p143 = scmp.ne.s32.totalorder %s132, %s135
    %p144 = scmp.eq.s32.totalorder %s15, 1
    %p145 = por %p143, %p144
    %p146 = scmp.ne.s32.totalorder %s135, %s136
    %p147 = scmp.eq.s32.totalorder %s15, 0
    %p148 = por %p146, %p147
    %p149 = scmp.ne.s32.totalorder %s135, %s136
    %p150 = scmp.eq.s32.totalorder %s16, 1
    %p151 = por %p149, %p150
    %p153 = scmp.ne.s32.totalorder %s136, %s152
    %p154 = scmp.eq.s32.totalorder %s16, 0
    %p155 = por %p153, %p154
    %p156 = scmp.le.s32.totalorder 1, %s10
    %p157 = scmp.lt.s32.totalorder %s10, 3
    %p158 = pnand %p156, %p157
    %p159 = pneg %p158
    // Predicated region
    $region9: #{segmentation_fpn_forward.18} parent=5 // pred_check
      _
    $region10: #{segmentation_fpn_forward.18} parent=5 // pred_check_branch
      %161 = sbr.rel (%p158) target = $region12
    $region11: #{segmentation_fpn_forward.18} parent=5 // pred_region
      %s162 = ssub.s32 %s10, 1
      // Predicated region
      $region13: #{segmentation_fpn_forward.18} parent=11 // pred_check
        %p163 = pneg %p71
      $region14: #{segmentation_fpn_forward.18} parent=11 // pred_check_branch
        %165 = sbr.rel (%p163) target = $region16
      $region15: #{segmentation_fpn_forward.18} parent=11 // pred_region
        _
      $region16: #{segmentation_fpn_forward.18} parent=11 // pred_fallthru
        _
      // Predicated region
      $region17: #{segmentation_fpn_forward.18} parent=11 // pred_check
        %p166 = pneg %p92
      $region18: #{segmentation_fpn_forward.18} parent=11 // pred_check_branch
        %168 = sbr.rel (%p166) target = $region20
      $region19: #{segmentation_fpn_forward.18} parent=11 // pred_region
        _
      $region20: #{segmentation_fpn_forward.18} parent=11 // pred_fallthru
        _
    $region12: #{segmentation_fpn_forward.18} parent=5 // pred_fallthru
      _
    %p169 = scmp.lt.s32.totalorder %s10, 2
    // Predicated region
    $region21: #{segmentation_fpn_forward.18} parent=5 // pred_check
      %p170 = pneg %p169
    $region22: #{segmentation_fpn_forward.18} parent=5 // pred_check_branch
      %172 = sbr.rel (%p170) target = $region24
    $region23: #{segmentation_fpn_forward.18} parent=5 // pred_region
      // Predicated region
      $region25: #{segmentation_fpn_forward.18} parent=23 // pred_check
        %p173 = pneg %p44
      $region26: #{segmentation_fpn_forward.18} parent=23 // pred_check_branch
        %175 = sbr.rel (%p173) target = $region28
      $region27: #{segmentation_fpn_forward.18} parent=23 // pred_region
        %s176 = smul.u32 8, %s18
        %p177 = scmp.lt.s32.totalorder %s17, 1
        %s178 = scalar_select %p177, %s17, 1
        %p179 = scmp.lt.s32.totalorder %s176, 7
        %s180 = scalar_select %p179, %s176, 7
        %s181 = smul.addr %s178, 8
        %s182 = sadd.s32 %s180, %s181
        %s183 = smul.addr %s182, 4
        %s184 = scalar_lea.vmem %s0, %s183
        %s185 = smul.u32 8, %s18
      $region28: #{segmentation_fpn_forward.18} parent=23 // pred_fallthru
        _
      // Predicated region
      $region29: #{segmentation_fpn_forward.18} parent=23 // pred_check
        %p186 = pneg %p114
      $region30: #{segmentation_fpn_forward.18} parent=23 // pred_check_branch
        %188 = sbr.rel (%p186) target = $region32
      $region31: #{segmentation_fpn_forward.18} parent=23 // pred_region
        %s189 = smul.u32 4, %s18
        %p190 = scmp.lt.s32.totalorder %s17, 1
        %s191 = scalar_select %p190, %s17, 1
        %p192 = scmp.lt.s32.totalorder %s189, 3
        %s193 = scalar_select %p192, %s189, 3
        %s194 = smul.addr %s193, 2
        %s195 = smul.addr %s191, 8
        %s196 = sadd.s32 %s194, %s195
        %s197 = smul.addr %s196, 4
        %s198 = scalar_lea.vmem %s3, %s197
        %s199 = smul.u32 4, %s18
      $region32: #{segmentation_fpn_forward.18} parent=23 // pred_fallthru
        _
    $region24: #{segmentation_fpn_forward.18} parent=5 // pred_fallthru
      _
    %p200 = scmp.le.s32.totalorder 1, %s10
    %p201 = scmp.lt.s32.totalorder %s10, 3
    %p202 = pnand %p200, %p201
    %p203 = pneg %p202
    // Predicated region
    $region33: #{segmentation_fpn_forward.18} parent=5 // pred_check
      _
    $region34: #{segmentation_fpn_forward.18} parent=5 // pred_check_branch
      %205 = sbr.rel (%p202) target = $region36
    $region35: #{segmentation_fpn_forward.18} parent=5 // pred_region
      %s206 = ssub.s32 %s10, 1
      %s207 = smul.u32 8, %s20
      %p208 = scmp.lt.s32.totalorder %s19, 1
      %s209 = scalar_select %p208, %s19, 1
      %p210 = scmp.lt.s32.totalorder %s207, 7
      %s211 = scalar_select %p210, %s207, 7
      %s212 = smul.addr %s209, 8
      %s213 = sadd.s32 %s211, %s212
      %s214 = smul.addr %s213, 4
      %s215 = scalar_lea.vmem %s0, %s214
      %p216 = pneg %p50
      %p217 = pneg %p47
      %p218 = pneg %p71
      %p219 = pneg %p68
      %p220 = pneg %p92
      %p221 = pneg %p89
      %s222 = smul.u32 4, %s20
      %p223 = scmp.lt.s32.totalorder %s19, 1
      %s224 = scalar_select %p223, %s19, 1
      %p225 = scmp.lt.s32.totalorder %s222, 3
      %s226 = scalar_select %p225, %s222, 3
      %s227 = smul.addr %s226, 2
      %s228 = smul.addr %s224, 8
      %s229 = sadd.s32 %s227, %s228
      %s230 = smul.addr %s229, 4
      %s231 = scalar_lea.vmem %s3, %s230
      %p232 = pneg %p120
      %p233 = pneg %p117
      %p234 = pneg %p148
      %p235 = pneg %p145
      %s236 = smul.u32 8, %s20
      %p237 = scmp.lt.s32.totalorder %s19, 1
      %s238 = scalar_select %p237, %s19, 1
      %p239 = scmp.lt.s32.totalorder %s236, 7
      %s240 = scalar_select %p239, %s236, 7
      %s241 = smul.addr %s240, 2
      %s242 = smul.addr %s238, 16
      %s243 = sadd.s32 %s241, %s242
      %s244 = smul.addr %s243, 4
      %s245 = scalar_lea.vmem %s4, %s244
      %s246 = smul.u32 8, %s20
      %p247 = scmp.lt.s32.totalorder %s19, 1
      %s248 = scalar_select %p247, %s19, 1
      %p249 = scmp.lt.s32.totalorder %s246, 7
      %s250 = scalar_select %p249, %s246, 7
      %s251 = smul.addr %s248, 8
      %s252 = sadd.s32 %s250, %s251
      %s253 = smul.addr %s252, 4
      %s254 = scalar_lea.vmem %s0, %s253
      %s255 = smul.u32 8, %s20
      %s256 = smul.u32 4, %s20
      %p257 = scmp.lt.s32.totalorder %s19, 1
      %s258 = scalar_select %p257, %s19, 1
      %p259 = scmp.lt.s32.totalorder %s256, 3
      %s260 = scalar_select %p259, %s256, 3
      %s261 = smul.addr %s260, 2
      %s262 = smul.addr %s258, 8
      %s263 = sadd.s32 %s261, %s262
      %s264 = smul.addr %s263, 4
      %s265 = scalar_lea.vmem %s3, %s264
      %s266 = smul.u32 4, %s20
      %s267 = smul.u32 8, %s20
      %p268 = scmp.lt.s32.totalorder %s19, 1
      %s269 = scalar_select %p268, %s19, 1
      %p270 = scmp.lt.s32.totalorder %s267, 7
      %s271 = scalar_select %p270, %s267, 7
      %s272 = smul.addr %s271, 2
      %s273 = smul.addr %s269, 16
      %s274 = sadd.s32 %s272, %s273
      %s275 = smul.addr %s274, 4
      %s276 = scalar_lea.vmem %s4, %s275
      %s277 = smul.u32 8, %s20
      %v279 = vld [vmem:[%s254] sm:$0xf]
      %v280 = vld [vmem:[%s254 + $0x4] sm:$0xf]
      %v281 = vld [vmem:[%s254 + $0x8] sm:$0xf]
      %v282 = vld [vmem:[%s254 + $0xc] sm:$0xf]
      %v283 = vld [vmem:[%s254 + $0x10] sm:$0xf]
      %v284 = vld [vmem:[%s254 + $0x14] sm:$0xf]
      %v285 = vld [vmem:[%s254 + $0x18] sm:$0xf]
      %v286 = vld [vmem:[%s254 + $0x1c] sm:$0xf]
      %v287 = vld [vmem:[%s1] sm:$0xff]
      %v288 = vld [vmem:[%s1 + $0x8] sm:$0xff]
      %v289 = vld [vmem:[%s1 + $0x10] sm:$0xff]
      %v290 = vld [vmem:[%s1 + $0x18] sm:$0xff]
      %v291 = vld [vmem:[%s1 + $0x20] sm:$0xff]
      %v292 = vld [vmem:[%s1 + $0x28] sm:$0xff]
      %v293 = vld [vmem:[%s1 + $0x30] sm:$0xff]
      %v294 = vld [vmem:[%s1 + $0x38] sm:$0xff]
      %v295 = vld [vmem:[%s2] sm:$0x3]
      %v297 = vperm.slane %v295, 0
      %v298 = vperm.slane %v295, 1
      %v309 = vunpack.c.l.b16 %v279
      %v310 = vunpack.c.l.b16 %v280
      %v311 = vunpack.c.l.b16 %v281
      %v312 = vunpack.c.l.b16 %v282
      %v313 = vunpack.c.l.b16 %v283
      %v314 = vunpack.c.l.b16 %v284
      %v315 = vunpack.c.l.b16 %v285
      %v316 = vunpack.c.l.b16 %v286
      %v317 = vpack.c.b16 %v310, %v309
      %v318 = vpack.c.b16 %v312, %v311
      %v319 = vpack.c.b16 %v314, %v313
      %v320 = vpack.c.b16 %v316, %v315
      %v329 = vunpack.c.l.b16 %v287
      %v330 = vunpack.c.h.b16 %v287
      %v331 = vunpack.c.l.b16 %v288
      %v332 = vunpack.c.h.b16 %v288
      %v333 = vunpack.c.l.b16 %v289
      %v334 = vunpack.c.h.b16 %v289
      %v335 = vunpack.c.l.b16 %v290
      %v336 = vunpack.c.h.b16 %v290
      %v337 = vunpack.c.l.b16 %v291
      %v338 = vunpack.c.h.b16 %v291
      %v339 = vunpack.c.l.b16 %v292
      %v340 = vunpack.c.h.b16 %v292
      %v341 = vunpack.c.l.b16 %v293
      %v342 = vunpack.c.h.b16 %v293
      %v343 = vunpack.c.l.b16 %v294
      %v344 = vunpack.c.h.b16 %v294
      %v345 = vpack.c.b16 %v331, %v329
      %v346 = vpack.c.b16 %v332, %v330
      %v347 = vpack.c.b16 %v335, %v333
      %v348 = vpack.c.b16 %v336, %v334
      %v349 = vpack.c.b16 %v339, %v337
      %v350 = vpack.c.b16 %v340, %v338
      %v351 = vpack.c.b16 %v343, %v341
      %v352 = vpack.c.b16 %v344, %v342
      %vm361 = vcmask 523264
      %v363 = vsel %vm361, %v317, 0
      %v366 = vsel %vm361, %v318, 0
      %v369 = vsel %vm361, %v319, 0
      %v372 = vsel %vm361, %v320, 0
      %374 = vmatpush.bf16.msra.mxu0 0
      %375 = vmatpush.bf16.msra.mxu0 0
      %376 = vmatpush.bf16.msra.mxu0 0
      %377 = vmatpush.bf16.msra.mxu0 0
      %378 = vmatpush.bf16.msra.mxu0 %v351
      %379 = vmatpush.bf16.msra.mxu0 %v349
      %380 = vmatpush.bf16.msra.mxu0 %v347
      %381 = vmatpush.bf16.msra.mxu0 %v345
      %382 = vmatmul.bf16.gmra.mxu0 %v363
      %v383 = vpop.f32.mrf.mxu0
      %v384 = vadd.f32 %v297, %v383
      %v385 = vpop.f32.mrf.mxu0
      %v386 = vadd.f32 %v297, %v385
      %387 = vmatmul.bf16.gmra.mxu0 %v366
      %v388 = vpop.f32.mrf.mxu0
      %v389 = vadd.f32 %v297, %v388
      %v390 = vpop.f32.mrf.mxu0
      %v391 = vadd.f32 %v297, %v390
      %392 = vmatmul.bf16.gmra.mxu0 %v369
      %v393 = vpop.f32.mrf.mxu0
      %v394 = vadd.f32 %v297, %v393
      %v395 = vpop.f32.mrf.mxu0
      %v396 = vadd.f32 %v297, %v395
      %397 = vmatmul.bf16.gmra.mxu0 %v372
      %v398 = vpop.f32.mrf.mxu0
      %v399 = vadd.f32 %v297, %v398
      %v400 = vpop.f32.mrf.mxu0
      %v401 = vadd.f32 %v297, %v400
      %402 = vdwg.mxu0
      %403 = vmatpush.bf16.msra.mxu0 0
      %404 = vmatpush.bf16.msra.mxu0 0
      %405 = vmatpush.bf16.msra.mxu0 0
      %406 = vmatpush.bf16.msra.mxu0 0
      %407 = vmatpush.bf16.msra.mxu0 %v352
      %408 = vmatpush.bf16.msra.mxu0 %v350
      %409 = vmatpush.bf16.msra.mxu0 %v348
      %410 = vmatpush.bf16.msra.mxu0 %v346
      %411 = vmatmul.bf16.gmra.mxu0 %v363
      %v412 = vpop.f32.mrf.mxu0
      %v413 = vadd.f32 %v298, %v412
      %v414 = vpop.f32.mrf.mxu0
      %v415 = vadd.f32 %v298, %v414
      %416 = vmatmul.bf16.gmra.mxu0 %v366
      %v417 = vpop.f32.mrf.mxu0
      %v418 = vadd.f32 %v298, %v417
      %v419 = vpop.f32.mrf.mxu0
      %v420 = vadd.f32 %v298, %v419
      %421 = vmatmul.bf16.gmra.mxu0 %v369
      %v422 = vpop.f32.mrf.mxu0
      %v423 = vadd.f32 %v298, %v422
      %v424 = vpop.f32.mrf.mxu0
      %v425 = vadd.f32 %v298, %v424
      %426 = vmatmul.bf16.gmra.mxu0 %v372
      %v427 = vpop.f32.mrf.mxu0
      %v428 = vadd.f32 %v298, %v427
      %v429 = vpop.f32.mrf.mxu0
      %v430 = vadd.f32 %v298, %v429
      %431 = vdwg.mxu0
      %v432 = vld [vmem:[%s265] sm:$0xff]
      %v433 = vld [vmem:[%s265 + $0x8] sm:$0xff]
      %v434 = vld [vmem:[%s265 + $0x10] sm:$0xff]
      %v435 = vld [vmem:[%s265 + $0x18] sm:$0xff]
      %v436 = vunpack.c.l.bf16 %v432
      %v437 = vunpack.c.h.bf16 %v432
      %v438 = vunpack.c.l.bf16 %v433
      %v439 = vunpack.c.h.bf16 %v433
      %v440 = vunpack.c.l.bf16 %v434
      %v441 = vunpack.c.h.bf16 %v434
      %v442 = vunpack.c.l.bf16 %v435
      %v443 = vunpack.c.h.bf16 %v435
      %v444 = vadd.f32 %v384, %v436
      %v445 = vadd.f32 %v413, %v437
      %v446 = vadd.f32 %v386, %v436
      %v447 = vadd.f32 %v415, %v437
      %v448 = vadd.f32 %v389, %v438
      %v449 = vadd.f32 %v418, %v439
      %v450 = vadd.f32 %v391, %v438
      %v451 = vadd.f32 %v420, %v439
      %v452 = vadd.f32 %v394, %v440
      %v453 = vadd.f32 %v423, %v441
      %v454 = vadd.f32 %v396, %v440
      %v455 = vadd.f32 %v425, %v441
      %v456 = vadd.f32 %v399, %v442
      %v457 = vadd.f32 %v428, %v443
      %v458 = vadd.f32 %v401, %v442
      %v459 = vadd.f32 %v430, %v443
      %v460 = vpack.c.bf16 %v445, %v444
      %v461 = vpack.c.bf16 %v447, %v446
      %v462 = vpack.c.bf16 %v449, %v448
      %v463 = vpack.c.bf16 %v451, %v450
      %v464 = vpack.c.bf16 %v453, %v452
      %v465 = vpack.c.bf16 %v455, %v454
      %v466 = vpack.c.bf16 %v457, %v456
      %v467 = vpack.c.bf16 %v459, %v458
      %468 = vst [vmem:[%s276] sm:$0xff] %v460
      %469 = vst [vmem:[%s276 + $0x8] sm:$0xff] %v461
      %470 = vst [vmem:[%s276 + $0x10] sm:$0xff] %v462
      %471 = vst [vmem:[%s276 + $0x18] sm:$0xff] %v463
      %472 = vst [vmem:[%s276 + $0x20] sm:$0xff] %v464
      %473 = vst [vmem:[%s276 + $0x28] sm:$0xff] %v465
      %474 = vst [vmem:[%s276 + $0x30] sm:$0xff] %v466
      %475 = vst [vmem:[%s276 + $0x38] sm:$0xff] %v467
      %s476 = smul.u32 8, %s20
      %p477 = scmp.lt.s32.totalorder %s19, 1
      %s478 = scalar_select %p477, %s19, 1
      %p479 = scmp.lt.s32.totalorder %s476, 7
      %s480 = scalar_select %p479, %s476, 7
      %s481 = smul.addr %s480, 2
      %s482 = smul.addr %s478, 16
      %s483 = sadd.s32 %s481, %s482
      %s484 = smul.addr %s483, 4
      %s485 = scalar_lea.vmem %s4, %s484
      // Predicated region
      $region37: #{segmentation_fpn_forward.18} parent=35 // pred_check
        %p486 = pneg %p145
      $region38: #{segmentation_fpn_forward.18} parent=35 // pred_check_branch
        %488 = sbr.rel (%p486) target = $region40
      $region39: #{segmentation_fpn_forward.18} parent=35 // pred_region
        %s489 = smul.u32 8, %s20
      $region40: #{segmentation_fpn_forward.18} parent=35 // pred_fallthru
        _
    $region36: #{segmentation_fpn_forward.18} parent=5 // pred_fallthru
      _
    %p490 = scmp.le.s32.totalorder 2, %s10
    // Predicated region
    $region41: #{segmentation_fpn_forward.18} parent=5 // pred_check
      %p491 = pneg %p490
    $region42: #{segmentation_fpn_forward.18} parent=5 // pred_check_branch
      %493 = sbr.rel (%p491) target = $region44
    $region43: #{segmentation_fpn_forward.18} parent=5 // pred_region
      %s494 = ssub.s32 %s10, 2
      // Predicated region
      $region45: #{segmentation_fpn_forward.18} parent=43 // pred_check
        %p495 = pneg %p151
      $region46: #{segmentation_fpn_forward.18} parent=43 // pred_check_branch
        %497 = sbr.rel (%p495) target = $region48
      $region47: #{segmentation_fpn_forward.18} parent=43 // pred_region
        %s498 = smul.u32 8, %s22
        %p499 = scmp.lt.s32.totalorder %s21, 1
        %s500 = scalar_select %p499, %s21, 1
        %p501 = scmp.lt.s32.totalorder %s498, 7
        %s502 = scalar_select %p501, %s498, 7
        %s503 = smul.addr %s502, 2
        %s504 = smul.addr %s500, 16
        %s505 = sadd.s32 %s503, %s504
        %s506 = smul.addr %s505, 4
        %s507 = scalar_lea.vmem %s4, %s506
      $region48: #{segmentation_fpn_forward.18} parent=43 // pred_fallthru
        _
    $region44: #{segmentation_fpn_forward.18} parent=5 // pred_fallthru
      _
  $region6: #{segmentation_fpn_forward.18} parent=0 // loop_footer
    %s14 = sadd.s32 1, %s10
  $region7: #{segmentation_fpn_forward.18} parent=0 // loop_footer_branch
    %9 = sbr.rel target = $region3
  $region8: #{segmentation_fpn_forward.18} parent=0 // loop_exit
    _

// kernel: segmentation_fpn_forward.11
$region0: #{segmentation_fpn_forward.11}
  #allocation0 [shape = 'u32[]', space=smem, size = 0x4, offset = 0x4, fixed_abs, tag = 'smem constant byte address 0x4 - core index']
  #allocation1 [shape = 'u32[72,128]{1,0:T(1,128)}', space=vmem, size = 0x9000, scoped, tag = 'internal scratch']
  %s0 = inlined_call_operand.vmem [shape: bf16[128,8], index: 0, kind: input, shape index: {}]
  %s1 = inlined_call_operand.vmem [shape: bf16[8,64], index: 1, kind: input, shape index: {}]
  %s2 = inlined_call_operand.vmem [shape: f32[1,64], index: 2, kind: input, shape index: {}]
  %s3 = inlined_call_operand.vmem [shape: bf16[128,64], index: 3, kind: output, shape index: {}]
  %s4 = sld [smem:[#allocation0]]
  $region45: #{segmentation_fpn_forward.11} parent=0
    _
  %s6 = ssub.s32 1, %s4
  %s7 = scalar_select 0, %s6, %s4
  loop: start=0, step=1, limit=4
  $region2: #{segmentation_fpn_forward.11} parent=0 // loop_pre_header
    _
  $region3: #{segmentation_fpn_forward.11} parent=0 // loop_header
    %s9 = sphi 0, %s13
    %p10 = scmp.ge.s32.totalorder %s9, 4
    %s19 = sphi 0, %s21
    %s22 = sphi 0, %s19
    %s23 = sphi 0, %s22
    %s39 = sphi 0, %s23
    %s43 = sphi 0, %s43
    %s45 = sphi 0, %s43
    %s46 = sphi 0, %s45
    %s60 = sphi 0, %s46
    %s64 = sphi 0, %s64
    %s66 = sphi 0, %s64
    %s67 = sphi 0, %s66
    %s81 = sphi 0, %s67
    %s87 = sphi 0, %s89
    %s90 = sphi 0, %s87
    %s91 = sphi 0, %s90
    %s107 = sphi 0, %s91
  $region4: #{segmentation_fpn_forward.11} parent=0 // loop_header_branch
    %12 = sbr.rel (%p10) target = $region8
  $region5: #{segmentation_fpn_forward.11} parent=0 // loop_body
    %s14 = ssub.s32 %s9, 1
    %s15 = ssub.s32 %s9, 2
    %s16 = sadd.s32 %s9, 1
    %s17 = ssub.s32 %s9, %s16
    %p18 = scmp.eq.s32.totalorder %s17, 0
    %s20 = sadd.s32 %s19, 1
    %s21 = scalar_select %p18, %s19, %s20
    %p24 = pneg %p18
    %p25 = scmp.eq.s32.totalorder %s9, 1
    %p26 = por %p24, %p25
    %p27 = scmp.ne.s32.totalorder %s19, %s22
    %p28 = scmp.eq.s32.totalorder %s9, 0
    %p29 = por %p27, %p28
    %p30 = scmp.ne.s32.totalorder %s19, %s22
    %p31 = scmp.eq.s32.totalorder %s14, 1
    %p32 = por %p30, %p31
    %p33 = scmp.ne.s32.totalorder %s22, %s23
    %p34 = scmp.eq.s32.totalorder %s14, 0
    %p35 = por %p33, %p34
    %p36 = scmp.ne.s32.totalorder %s22, %s23
    %p37 = scmp.eq.s32.totalorder %s15, 1
    %p38 = por %p36, %p37
    %p40 = scmp.ne.s32.totalorder %s23, %s39
    %p41 = scmp.eq.s32.totalorder %s15, 0
    %p42 = por %p40, %p41
    %s44 = sadd.s32 %s43, 1
    %p47 = scmp.eq.s32.totalorder %s9, 1
    %p48 = scmp.ne.s32.totalorder %s43, %s45
    %p49 = scmp.eq.s32.totalorder %s9, 0
    %p50 = por %p48, %p49
    %p51 = scmp.ne.s32.totalorder %s43, %s45
    %p52 = scmp.eq.s32.totalorder %s14, 1
    %p53 = por %p51, %p52
    %p54 = scmp.ne.s32.totalorder %s45, %s46
    %p55 = scmp.eq.s32.totalorder %s14, 0
    %p56 = por %p54, %p55
    %p57 = scmp.ne.s32.totalorder %s45, %s46
    %p58 = scmp.eq.s32.totalorder %s15, 1
    %p59 = por %p57, %p58
    %p61 = scmp.ne.s32.totalorder %s46, %s60
    %p62 = scmp.eq.s32.totalorder %s15, 0
    %p63 = por %p61, %p62
    %s65 = sadd.s32 %s64, 1
    %p68 = scmp.eq.s32.totalorder %s9, 1
    %p69 = scmp.ne.s32.totalorder %s64, %s66
    %p70 = scmp.eq.s32.totalorder %s9, 0
    %p71 = por %p69, %p70
    %p72 = scmp.ne.s32.totalorder %s64, %s66
    %p73 = scmp.eq.s32.totalorder %s14, 1
    %p74 = por %p72, %p73
    %p75 = scmp.ne.s32.totalorder %s66, %s67
    %p76 = scmp.eq.s32.totalorder %s14, 0
    %p77 = por %p75, %p76
    %p78 = scmp.ne.s32.totalorder %s66, %s67
    %p79 = scmp.eq.s32.totalorder %s15, 1
    %p80 = por %p78, %p79
    %p82 = scmp.ne.s32.totalorder %s67, %s81
    %p83 = scmp.eq.s32.totalorder %s15, 0
    %p84 = por %p82, %p83
    %s85 = ssub.s32 %s9, %s16
    %p86 = scmp.eq.s32.totalorder %s85, 0
    %s88 = sadd.s32 %s87, 1
    %s89 = scalar_select %p86, %s87, %s88
    %p92 = pneg %p86
    %p93 = scmp.eq.s32.totalorder %s9, 1
    %p94 = por %p92, %p93
    %p95 = scmp.ne.s32.totalorder %s87, %s90
    %p96 = scmp.eq.s32.totalorder %s9, 0
    %p97 = por %p95, %p96
    %p98 = scmp.ne.s32.totalorder %s87, %s90
    %p99 = scmp.eq.s32.totalorder %s14, 1
    %p100 = por %p98, %p99
    %p101 = scmp.ne.s32.totalorder %s90, %s91
    %p102 = scmp.eq.s32.totalorder %s14, 0
    %p103 = por %p101, %p102
    %p104 = scmp.ne.s32.totalorder %s90, %s91
    %p105 = scmp.eq.s32.totalorder %s15, 1
    %p106 = por %p104, %p105
    %p108 = scmp.ne.s32.totalorder %s91, %s107
    %p109 = scmp.eq.s32.totalorder %s15, 0
    %p110 = por %p108, %p109
    %p111 = scmp.le.s32.totalorder 1, %s9
    %p112 = scmp.lt.s32.totalorder %s9, 3
    %p113 = pnand %p111, %p112
    %p114 = pneg %p113
    // Predicated region
    $region9: #{segmentation_fpn_forward.11} parent=5 // pred_check
      _
    $region10: #{segmentation_fpn_forward.11} parent=5 // pred_check_branch
      %116 = sbr.rel (%p113) target = $region12
    $region11: #{segmentation_fpn_forward.11} parent=5 // pred_region
      %s117 = ssub.s32 %s9, 1
      // Predicated region
      $region13: #{segmentation_fpn_forward.11} parent=11 // pred_check
        %p118 = pneg %p56
      $region14: #{segmentation_fpn_forward.11} parent=11 // pred_check_branch
        %120 = sbr.rel (%p118) target = $region16
      $region15: #{segmentation_fpn_forward.11} parent=11 // pred_region
        _
      $region16: #{segmentation_fpn_forward.11} parent=11 // pred_fallthru
        _
      // Predicated region
      $region17: #{segmentation_fpn_forward.11} parent=11 // pred_check
        %p121 = pneg %p77
      $region18: #{segmentation_fpn_forward.11} parent=11 // pred_check_branch
        %123 = sbr.rel (%p121) target = $region20
      $region19: #{segmentation_fpn_forward.11} parent=11 // pred_region
        _
      $region20: #{segmentation_fpn_forward.11} parent=11 // pred_fallthru
        _
    $region12: #{segmentation_fpn_forward.11} parent=5 // pred_fallthru
      _
    %p124 = scmp.lt.s32.totalorder %s9, 2
    // Predicated region
    $region21: #{segmentation_fpn_forward.11} parent=5 // pred_check
      %p125 = pneg %p124
    $region22: #{segmentation_fpn_forward.11} parent=5 // pred_check_branch
      %127 = sbr.rel (%p125) target = $region24
    $region23: #{segmentation_fpn_forward.11} parent=5 // pred_region
      // Predicated region
      $region25: #{segmentation_fpn_forward.11} parent=23 // pred_check
        %p128 = pneg %p29
      $region26: #{segmentation_fpn_forward.11} parent=23 // pred_check_branch
        %130 = sbr.rel (%p128) target = $region28
      $region27: #{segmentation_fpn_forward.11} parent=23 // pred_region
        %s131 = smul.u32 8, %s9
        %p132 = scmp.lt.s32.totalorder %s131, 15
        %s133 = scalar_select %p132, %s131, 15
        %s134 = smul.addr %s133, 4
        %s135 = scalar_lea.vmem %s0, %s134
        %s136 = smul.u32 8, %s9
      $region28: #{segmentation_fpn_forward.11} parent=23 // pred_fallthru
        _
    $region24: #{segmentation_fpn_forward.11} parent=5 // pred_fallthru
      _
    %p137 = scmp.le.s32.totalorder 1, %s9
    %p138 = scmp.lt.s32.totalorder %s9, 3
    %p139 = pnand %p137, %p138
    %p140 = pneg %p139
    // Predicated region
    $region29: #{segmentation_fpn_forward.11} parent=5 // pred_check
      _
    $region30: #{segmentation_fpn_forward.11} parent=5 // pred_check_branch
      %142 = sbr.rel (%p139) target = $region32
    $region31: #{segmentation_fpn_forward.11} parent=5 // pred_region
      %s143 = ssub.s32 %s9, 1
      %s144 = smul.u32 8, %s14
      %p145 = scmp.lt.s32.totalorder %s144, 15
      %s146 = scalar_select %p145, %s144, 15
      %s147 = smul.addr %s146, 4
      %s148 = scalar_lea.vmem %s0, %s147
      %p149 = pneg %p35
      %p150 = pneg %p32
      %p151 = pneg %p56
      %p152 = pneg %p53
      %p153 = pneg %p77
      %p154 = pneg %p74
      %p155 = pneg %p103
      %p156 = pneg %p100
      %s157 = smul.u32 8, %s14
      %p158 = scmp.lt.s32.totalorder %s157, 15
      %s159 = scalar_select %p158, %s157, 15
      %s160 = smul.addr %s159, 4
      %s161 = scalar_lea.vmem %s3, %s160
      %s162 = smul.u32 8, %s14
      %p163 = scmp.lt.s32.totalorder %s162, 15
      %s164 = scalar_select %p163, %s162, 15
      %s165 = smul.addr %s164, 4
      %s166 = scalar_lea.vmem %s0, %s165
      %s167 = smul.u32 8, %s14
      %s168 = smul.u32 8, %s14
      %p169 = scmp.lt.s32.totalorder %s168, 15
      %s170 = scalar_select %p169, %s168, 15
      %s171 = smul.addr %s170, 4
      %s172 = scalar_lea.vmem %s3, %s171
      %s173 = smul.u32 8, %s14
      %v175 = vld [vmem:[%s166] sm:$0xf]
      %v176 = vld [vmem:[%s166 + $0x4] sm:$0xf]
      %v177 = vld [vmem:[%s166 + $0x8] sm:$0xf]
      %v178 = vld [vmem:[%s166 + $0xc] sm:$0xf]
      %v179 = vld [vmem:[%s166 + $0x10] sm:$0xf]
      %v180 = vld [vmem:[%s166 + $0x14] sm:$0xf]
      %v181 = vld [vmem:[%s166 + $0x18] sm:$0xf]
      %v182 = vld [vmem:[%s166 + $0x1c] sm:$0xf]
      %v183 = vld [vmem:[%s1] sm:$0xf]
      %v184 = vld [vmem:[%s2] sm:$0x1]
      %v186 = vperm.slane %v184, 0
      %v196 = vunpack.c.l.b16 %v175
      %v197 = vunpack.c.l.b16 %v176
      %v198 = vunpack.c.l.b16 %v177
      %v199 = vunpack.c.l.b16 %v178
      %v200 = vunpack.c.l.b16 %v179
      %v201 = vunpack.c.l.b16 %v180
      %v202 = vunpack.c.l.b16 %v181
      %v203 = vunpack.c.l.b16 %v182
      %v204 = vpack.c.b16 %v197, %v196
      %v205 = vpack.c.b16 %v199, %v198
      %v206 = vpack.c.b16 %v201, %v200
      %v207 = vpack.c.b16 %v203, %v202
      %vm208 = vcmask 64512
      %v210 = vsel %vm208, %v204, 0
      %v213 = vsel %vm208, %v205, 0
      %v216 = vsel %vm208, %v206, 0
      %v219 = vsel %vm208, %v207, 0
      %vm221 = vcmask 1043456
      %v223 = vsel %vm221, %v183, 0
      %225 = vmatpush.bf16.msra.mxu0 0
      %226 = vmatpush.bf16.msra.mxu0 0
      %227 = vmatpush.bf16.msra.mxu0 0
      %228 = vmatpush.bf16.msra.mxu0 0
      %229 = vmatpush.bf16.msra.mxu0 0
      %230 = vmatpush.bf16.msra.mxu0 0
      %231 = vmatpush.bf16.msra.mxu0 0
      %232 = vmatpush.bf16.msra.mxu0 %v223
      %233 = vmatmul.bf16.gmra.mxu0 %v210
      %v234 = vpop.f32.mrf.mxu0
      %v235 = vadd.f32 %v186, %v234
      %v236 = vpop.f32.mrf.mxu0
      %v237 = vadd.f32 %v186, %v236
      %238 = vmatmul.bf16.gmra.mxu0 %v213
      %v239 = vpop.f32.mrf.mxu0
      %v240 = vadd.f32 %v186, %v239
      %v241 = vpop.f32.mrf.mxu0
      %v242 = vadd.f32 %v186, %v241
      %243 = vmatmul.bf16.gmra.mxu0 %v216
      %v244 = vpop.f32.mrf.mxu0
      %v245 = vadd.f32 %v186, %v244
      %v246 = vpop.f32.mrf.mxu0
      %v247 = vadd.f32 %v186, %v246
      %248 = vmatmul.bf16.gmra.mxu0 %v219
      %v249 = vpop.f32.mrf.mxu0
      %v250 = vadd.f32 %v186, %v249
      %v251 = vpop.f32.mrf.mxu0
      %v252 = vadd.f32 %v186, %v251
      %253 = vdwg.mxu0
      %v254 = vmax.f32 %v235, 0.0
      %v255 = vmax.f32 %v237, 0.0
      %v256 = vmax.f32 %v240, 0.0
      %v257 = vmax.f32 %v242, 0.0
      %v258 = vmax.f32 %v245, 0.0
      %v259 = vmax.f32 %v247, 0.0
      %v260 = vmax.f32 %v250, 0.0
      %v261 = vmax.f32 %v252, 0.0
      %v262 = vpack.c.bf16 %v254, %v254
      %v263 = vpack.c.bf16 %v255, %v255
      %v264 = vpack.c.bf16 %v256, %v256
      %v265 = vpack.c.bf16 %v257, %v257
      %v266 = vpack.c.bf16 %v258, %v258
      %v267 = vpack.c.bf16 %v259, %v259
      %v268 = vpack.c.bf16 %v260, %v260
      %v269 = vpack.c.bf16 %v261, %v261
      %vm270 = vcmask 519168
      %271 = vst.msk [vmem:[%s172] sm:$0xf] %vm270, %v262
      %272 = vst.msk [vmem:[%s172 + $0x4] sm:$0xf] %vm270, %v263
      %273 = vst.msk [vmem:[%s172 + $0x8] sm:$0xf] %vm270, %v264
      %274 = vst.msk [vmem:[%s172 + $0xc] sm:$0xf] %vm270, %v265
      %275 = vst.msk [vmem:[%s172 + $0x10] sm:$0xf] %vm270, %v266
      %276 = vst.msk [vmem:[%s172 + $0x14] sm:$0xf] %vm270, %v267
      %277 = vst.msk [vmem:[%s172 + $0x18] sm:$0xf] %vm270, %v268
      %278 = vst.msk [vmem:[%s172 + $0x1c] sm:$0xf] %vm270, %v269
      %s279 = smul.u32 8, %s14
      %p280 = scmp.lt.s32.totalorder %s279, 15
      %s281 = scalar_select %p280, %s279, 15
      %s282 = smul.addr %s281, 4
      %s283 = scalar_lea.vmem %s3, %s282
      // Predicated region
      $region33: #{segmentation_fpn_forward.11} parent=31 // pred_check
        %p284 = pneg %p100
      $region34: #{segmentation_fpn_forward.11} parent=31 // pred_check_branch
        %286 = sbr.rel (%p284) target = $region36
      $region35: #{segmentation_fpn_forward.11} parent=31 // pred_region
        %s287 = smul.u32 8, %s14
      $region36: #{segmentation_fpn_forward.11} parent=31 // pred_fallthru
        _
    $region32: #{segmentation_fpn_forward.11} parent=5 // pred_fallthru
      _
    %p288 = scmp.le.s32.totalorder 2, %s9
    // Predicated region
    $region37: #{segmentation_fpn_forward.11} parent=5 // pred_check
      %p289 = pneg %p288
    $region38: #{segmentation_fpn_forward.11} parent=5 // pred_check_branch
      %291 = sbr.rel (%p289) target = $region40
    $region39: #{segmentation_fpn_forward.11} parent=5 // pred_region
      %s292 = ssub.s32 %s9, 2
      // Predicated region
      $region41: #{segmentation_fpn_forward.11} parent=39 // pred_check
        %p293 = pneg %p106
      $region42: #{segmentation_fpn_forward.11} parent=39 // pred_check_branch
        %295 = sbr.rel (%p293) target = $region44
      $region43: #{segmentation_fpn_forward.11} parent=39 // pred_region
        %s296 = smul.u32 8, %s15
        %p297 = scmp.lt.s32.totalorder %s296, 15
        %s298 = scalar_select %p297, %s296, 15
        %s299 = smul.addr %s298, 4
        %s300 = scalar_lea.vmem %s3, %s299
      $region44: #{segmentation_fpn_forward.11} parent=39 // pred_fallthru
        _
    $region40: #{segmentation_fpn_forward.11} parent=5 // pred_fallthru
      _
  $region6: #{segmentation_fpn_forward.11} parent=0 // loop_footer
    %s13 = sadd.s32 1, %s9
  $region7: #{segmentation_fpn_forward.11} parent=0 // loop_footer_branch
    %8 = sbr.rel target = $region3
  $region8: #{segmentation_fpn_forward.11} parent=0 // loop_exit
    _

// kernel: segmentation_fpn_forward.20
$region0: #{segmentation_fpn_forward.20}
  #allocation0 [shape = 'u32[]', space=smem, size = 0x4, offset = 0x4, fixed_abs, tag = 'smem constant byte address 0x4 - core index']
  #allocation1 [shape = 'u32[72,128]{1,0:T(1,128)}', space=vmem, size = 0x9000, scoped, tag = 'internal scratch']
  %s0 = inlined_call_operand.vmem [shape: f32[64,8], index: 0, kind: input, shape index: {}]
  %s1 = inlined_call_operand.vmem [shape: f32[8,32], index: 1, kind: input, shape index: {}]
  %s2 = inlined_call_operand.vmem [shape: f32[64,32], index: 2, kind: output, shape index: {}]
  %s3 = sld [smem:[#allocation0]]
  $region41: #{segmentation_fpn_forward.20} parent=0
    _
  %s5 = ssub.s32 1, %s3
  %s6 = scalar_select 0, %s5, %s3
  loop: start=0, step=1, limit=4
  $region2: #{segmentation_fpn_forward.20} parent=0 // loop_pre_header
    _
  $region3: #{segmentation_fpn_forward.20} parent=0 // loop_header
    %s8 = sphi 0, %s12
    %p9 = scmp.ge.s32.totalorder %s8, 4
    %s18 = sphi 0, %s20
    %s21 = sphi 0, %s18
    %s22 = sphi 0, %s21
    %s38 = sphi 0, %s22
    %s42 = sphi 0, %s42
    %s44 = sphi 0, %s42
    %s45 = sphi 0, %s44
    %s59 = sphi 0, %s45
    %s65 = sphi 0, %s67
    %s68 = sphi 0, %s65
    %s69 = sphi 0, %s68
    %s85 = sphi 0, %s69
  $region4: #{segmentation_fpn_forward.20} parent=0 // loop_header_branch
    %11 = sbr.rel (%p9) target = $region8
  $region5: #{segmentation_fpn_forward.20} parent=0 // loop_body
    %s13 = ssub.s32 %s8, 1
    %s14 = ssub.s32 %s8, 2
    %s15 = sadd.s32 %s8, 1
    %s16 = ssub.s32 %s8, %s15
    %p17 = scmp.eq.s32.totalorder %s16, 0
    %s19 = sadd.s32 %s18, 1
    %s20 = scalar_select %p17, %s18, %s19
    %p23 = pneg %p17
    %p24 = scmp.eq.s32.totalorder %s8, 1
    %p25 = por %p23, %p24
    %p26 = scmp.ne.s32.totalorder %s18, %s21
    %p27 = scmp.eq.s32.totalorder %s8, 0
    %p28 = por %p26, %p27
    %p29 = scmp.ne.s32.totalorder %s18, %s21
    %p30 = scmp.eq.s32.totalorder %s13, 1
    %p31 = por %p29, %p30
    %p32 = scmp.ne.s32.totalorder %s21, %s22
    %p33 = scmp.eq.s32.totalorder %s13, 0
    %p34 = por %p32, %p33
    %p35 = scmp.ne.s32.totalorder %s21, %s22
    %p36 = scmp.eq.s32.totalorder %s14, 1
    %p37 = por %p35, %p36
    %p39 = scmp.ne.s32.totalorder %s22, %s38
    %p40 = scmp.eq.s32.totalorder %s14, 0
    %p41 = por %p39, %p40
    %s43 = sadd.s32 %s42, 1
    %p46 = scmp.eq.s32.totalorder %s8, 1
    %p47 = scmp.ne.s32.totalorder %s42, %s44
    %p48 = scmp.eq.s32.totalorder %s8, 0
    %p49 = por %p47, %p48
    %p50 = scmp.ne.s32.totalorder %s42, %s44
    %p51 = scmp.eq.s32.totalorder %s13, 1
    %p52 = por %p50, %p51
    %p53 = scmp.ne.s32.totalorder %s44, %s45
    %p54 = scmp.eq.s32.totalorder %s13, 0
    %p55 = por %p53, %p54
    %p56 = scmp.ne.s32.totalorder %s44, %s45
    %p57 = scmp.eq.s32.totalorder %s14, 1
    %p58 = por %p56, %p57
    %p60 = scmp.ne.s32.totalorder %s45, %s59
    %p61 = scmp.eq.s32.totalorder %s14, 0
    %p62 = por %p60, %p61
    %s63 = ssub.s32 %s8, %s15
    %p64 = scmp.eq.s32.totalorder %s63, 0
    %s66 = sadd.s32 %s65, 1
    %s67 = scalar_select %p64, %s65, %s66
    %p70 = pneg %p64
    %p71 = scmp.eq.s32.totalorder %s8, 1
    %p72 = por %p70, %p71
    %p73 = scmp.ne.s32.totalorder %s65, %s68
    %p74 = scmp.eq.s32.totalorder %s8, 0
    %p75 = por %p73, %p74
    %p76 = scmp.ne.s32.totalorder %s65, %s68
    %p77 = scmp.eq.s32.totalorder %s13, 1
    %p78 = por %p76, %p77
    %p79 = scmp.ne.s32.totalorder %s68, %s69
    %p80 = scmp.eq.s32.totalorder %s13, 0
    %p81 = por %p79, %p80
    %p82 = scmp.ne.s32.totalorder %s68, %s69
    %p83 = scmp.eq.s32.totalorder %s14, 1
    %p84 = por %p82, %p83
    %p86 = scmp.ne.s32.totalorder %s69, %s85
    %p87 = scmp.eq.s32.totalorder %s14, 0
    %p88 = por %p86, %p87
    %p89 = scmp.le.s32.totalorder 1, %s8
    %p90 = scmp.lt.s32.totalorder %s8, 3
    %p91 = pnand %p89, %p90
    %p92 = pneg %p91
    // Predicated region
    $region9: #{segmentation_fpn_forward.20} parent=5 // pred_check
      _
    $region10: #{segmentation_fpn_forward.20} parent=5 // pred_check_branch
      %94 = sbr.rel (%p91) target = $region12
    $region11: #{segmentation_fpn_forward.20} parent=5 // pred_region
      %s95 = ssub.s32 %s8, 1
      // Predicated region
      $region13: #{segmentation_fpn_forward.20} parent=11 // pred_check
        %p96 = pneg %p55
      $region14: #{segmentation_fpn_forward.20} parent=11 // pred_check_branch
        %98 = sbr.rel (%p96) target = $region16
      $region15: #{segmentation_fpn_forward.20} parent=11 // pred_region
        _
      $region16: #{segmentation_fpn_forward.20} parent=11 // pred_fallthru
        _
    $region12: #{segmentation_fpn_forward.20} parent=5 // pred_fallthru
      _
    %p99 = scmp.lt.s32.totalorder %s8, 2
    // Predicated region
    $region17: #{segmentation_fpn_forward.20} parent=5 // pred_check
      %p100 = pneg %p99
    $region18: #{segmentation_fpn_forward.20} parent=5 // pred_check_branch
      %102 = sbr.rel (%p100) target = $region20
    $region19: #{segmentation_fpn_forward.20} parent=5 // pred_region
      // Predicated region
      $region21: #{segmentation_fpn_forward.20} parent=19 // pred_check
        %p103 = pneg %p28
      $region22: #{segmentation_fpn_forward.20} parent=19 // pred_check_branch
        %105 = sbr.rel (%p103) target = $region24
      $region23: #{segmentation_fpn_forward.20} parent=19 // pred_region
        %s106 = smul.u32 4, %s8
        %p107 = scmp.lt.s32.totalorder %s106, 7
        %s108 = scalar_select %p107, %s106, 7
        %s109 = smul.addr %s108, 8
        %s110 = scalar_lea.vmem %s0, %s109
        %s111 = smul.u32 4, %s8
      $region24: #{segmentation_fpn_forward.20} parent=19 // pred_fallthru
        _
    $region20: #{segmentation_fpn_forward.20} parent=5 // pred_fallthru
      _
    %p112 = scmp.le.s32.totalorder 1, %s8
    %p113 = scmp.lt.s32.totalorder %s8, 3
    %p114 = pnand %p112, %p113
    %p115 = pneg %p114
    // Predicated region
    $region25: #{segmentation_fpn_forward.20} parent=5 // pred_check
      _
    $region26: #{segmentation_fpn_forward.20} parent=5 // pred_check_branch
      %117 = sbr.rel (%p114) target = $region28
    $region27: #{segmentation_fpn_forward.20} parent=5 // pred_region
      %s118 = ssub.s32 %s8, 1
      %s119 = smul.u32 4, %s13
      %p120 = scmp.lt.s32.totalorder %s119, 7
      %s121 = scalar_select %p120, %s119, 7
      %s122 = smul.addr %s121, 8
      %s123 = scalar_lea.vmem %s0, %s122
      %p124 = pneg %p34
      %p125 = pneg %p31
      %p126 = pneg %p55
      %p127 = pneg %p52
      %p128 = pneg %p81
      %p129 = pneg %p78
      %s130 = smul.u32 4, %s13
      %p131 = scmp.lt.s32.totalorder %s130, 7
      %s132 = scalar_select %p131, %s130, 7
      %s133 = smul.addr %s132, 8
      %s134 = scalar_lea.vmem %s2, %s133
      %s135 = smul.u32 4, %s13
      %p136 = scmp.lt.s32.totalorder %s135, 7
      %s137 = scalar_select %p136, %s135, 7
      %s138 = smul.addr %s137, 8
      %s139 = scalar_lea.vmem %s0, %s138
      %s140 = smul.u32 4, %s13
      %s141 = smul.u32 4, %s13
      %p142 = scmp.lt.s32.totalorder %s141, 7
      %s143 = scalar_select %p142, %s141, 7
      %s144 = smul.addr %s143, 8
      %s145 = scalar_lea.vmem %s2, %s144
      %s146 = smul.u32 4, %s13
      %v147 = vld [vmem:[%s139] sm:$0xff]
      %v148 = vld [vmem:[%s139 + $0x8] sm:$0xff]
      %v149 = vld [vmem:[%s139 + $0x10] sm:$0xff]
      %v150 = vld [vmem:[%s139 + $0x18] sm:$0xff]
      %v151 = vld [vmem:[%s1] sm:$0xff]
      %vm152 = vcmask 64512
      %v154 = vsel %vm152, %v147, 0
      %v157 = vsel %vm152, %v148, 0
      %v160 = vsel %vm152, %v149, 0
      %v163 = vsel %vm152, %v150, 0
      %165 = vmatpush.msra.mxu0 0.0
      %166 = vmatpush.msra.mxu0 0.0
      %167 = vmatpush.msra.mxu0 0.0
      %168 = vmatpush.msra.mxu0 0.0
      %169 = vmatpush.msra.mxu0 0.0
      %170 = vmatpush.msra.mxu0 0.0
      %171 = vmatpush.msra.mxu0 0.0
      %172 = vmatpush.msra.mxu0 0.0
      %173 = vmatpush.msra.mxu0 0.0
      %174 = vmatpush.msra.mxu0 0.0
      %175 = vmatpush.msra.mxu0 0.0
      %176 = vmatpush.msra.mxu0 0.0
      %177 = vmatpush.msra.mxu0 0.0
      %178 = vmatpush.msra.mxu0 0.0
      %179 = vmatpush.msra.mxu0 0.0
      %180 = vmatpush.msra.mxu0 %v151
      %181 = vmatmul.f32.gmra.mxu0 %v154
      %v182 = vpop.f32.mrf.mxu0
      %v183 = vadd.f32 0.0, %v182
      %184 = vmatmul.f32.gmra.mxu0 %v157
      %v185 = vpop.f32.mrf.mxu0
      %v186 = vadd.f32 0.0, %v185
      %187 = vmatmul.f32.gmra.mxu0 %v160
      %v188 = vpop.f32.mrf.mxu0
      %v189 = vadd.f32 0.0, %v188
      %190 = vmatmul.f32.gmra.mxu0 %v163
      %v191 = vpop.f32.mrf.mxu0
      %v192 = vadd.f32 0.0, %v191
      %193 = vdwg.mxu0
      %vm194 = vcmask 261120
      %195 = vst.msk [vmem:[%s145] sm:$0xff] %vm194, %v183
      %196 = vst.msk [vmem:[%s145 + $0x8] sm:$0xff] %vm194, %v186
      %197 = vst.msk [vmem:[%s145 + $0x10] sm:$0xff] %vm194, %v189
      %198 = vst.msk [vmem:[%s145 + $0x18] sm:$0xff] %vm194, %v192
      %s199 = smul.u32 4, %s13
      %p200 = scmp.lt.s32.totalorder %s199, 7
      %s201 = scalar_select %p200, %s199, 7
      %s202 = smul.addr %s201, 8
      %s203 = scalar_lea.vmem %s2, %s202
      // Predicated region
      $region29: #{segmentation_fpn_forward.20} parent=27 // pred_check
        %p204 = pneg %p78
      $region30: #{segmentation_fpn_forward.20} parent=27 // pred_check_branch
        %206 = sbr.rel (%p204) target = $region32
      $region31: #{segmentation_fpn_forward.20} parent=27 // pred_region
        %s207 = smul.u32 4, %s13
      $region32: #{segmentation_fpn_forward.20} parent=27 // pred_fallthru
        _
    $region28: #{segmentation_fpn_forward.20} parent=5 // pred_fallthru
      _
    %p208 = scmp.le.s32.totalorder 2, %s8
    // Predicated region
    $region33: #{segmentation_fpn_forward.20} parent=5 // pred_check
      %p209 = pneg %p208
    $region34: #{segmentation_fpn_forward.20} parent=5 // pred_check_branch
      %211 = sbr.rel (%p209) target = $region36
    $region35: #{segmentation_fpn_forward.20} parent=5 // pred_region
      %s212 = ssub.s32 %s8, 2
      // Predicated region
      $region37: #{segmentation_fpn_forward.20} parent=35 // pred_check
        %p213 = pneg %p84
      $region38: #{segmentation_fpn_forward.20} parent=35 // pred_check_branch
        %215 = sbr.rel (%p213) target = $region40
      $region39: #{segmentation_fpn_forward.20} parent=35 // pred_region
        %s216 = smul.u32 4, %s14
        %p217 = scmp.lt.s32.totalorder %s216, 7
        %s218 = scalar_select %p217, %s216, 7
        %s219 = smul.addr %s218, 8
        %s220 = scalar_lea.vmem %s2, %s219
      $region40: #{segmentation_fpn_forward.20} parent=35 // pred_fallthru
        _
    $region36: #{segmentation_fpn_forward.20} parent=5 // pred_fallthru
      _
  $region6: #{segmentation_fpn_forward.20} parent=0 // loop_footer
    %s12 = sadd.s32 1, %s8
  $region7: #{segmentation_fpn_forward.20} parent=0 // loop_footer_branch
    %7 = sbr.rel target = $region3
  $region8: #{segmentation_fpn_forward.20} parent=0 // loop_exit
    _

// kernel: segmentation_fpn_forward.21
$region0: #{segmentation_fpn_forward.21}
  #allocation0 [shape = 'u32[]', space=smem, size = 0x4, offset = 0x4, fixed_abs, tag = 'smem constant byte address 0x4 - core index']
  #allocation1 [shape = 'u32[72,128]{1,0:T(1,128)}', space=vmem, size = 0x9000, scoped, tag = 'internal scratch']
  %s0 = inlined_call_operand.vmem [shape: f32[2,5,6,32], index: 0, kind: input, shape index: {}]
  %s1 = inlined_call_operand.vmem [shape: f32[32,6], index: 1, kind: input, shape index: {}]
  %s2 = inlined_call_operand.hbm [shape: f32[2,5,32,32], index: 2, kind: output, shape index: {}]
  %s3 = sld [smem:[#allocation0]]
  $region41: #{segmentation_fpn_forward.21} parent=0
    _
  %s5 = ssub.s32 1, %s3
  %s6 = scalar_select 0, %s5, %s3
  $region1: #{segmentation_fpn_forward.21} parent=0
    #allocation2 [shape = 'u8[32768]{0}', space=vmem, size = 0x8000, scoped, tag = 'output window, operand 0']
    #allocation3 [shape = 's32[2]{0}', space=sflag, size = 0x8, scoped, tag = 'scoped memory for segmentation_fpn_forward.21']
    %7 = vsyncpa [#allocation3], 0
    %s8 = scalar_lea.sflag [#allocation3], 1
    %9 = vsyncpa %s8, 0
    loop: start=0, step=1, limit=12
    $region2: #{segmentation_fpn_forward.21} parent=1 // loop_pre_header
      _
    $region3: #{segmentation_fpn_forward.21} parent=1 // loop_header
      %s11 = sphi 0, %s15
      %p12 = scmp.ge.s32.totalorder %s11, 12
      %s18 = sphi 0, %s37
      %s19 = sphi 0, %s33
      %s20 = sphi 0, %s29
      %s21 = sphi 0, %s18
      %s22 = sphi 0, %s19
      %s23 = sphi 0, %s20
      %s24 = sphi 0, %s21
      %s25 = sphi 0, %s22
      %s26 = sphi 0, %s23
      %s42 = sphi 0, %s44
      %s45 = sphi 0, %s42
      %s46 = sphi 0, %s45
      %s62 = sphi 0, %s46
      %s68 = sphi 0, %s70
      %s71 = sphi 0, %s68
      %s72 = sphi 0, %s71
      %s88 = sphi 0, %s72
      %s98 = sphi 0, %s100
      %s101 = sphi 0, %s98
      %s102 = sphi 0, %s101
      %s118 = sphi 0, %s102
    $region4: #{segmentation_fpn_forward.21} parent=1 // loop_header_branch
      %14 = sbr.rel (%p12) target = $region8
    $region5: #{segmentation_fpn_forward.21} parent=1 // loop_body
      %s16 = ssub.s32 %s11, 1
      %s17 = ssub.s32 %s11, 2
      %s27 = sadd.s32 1, %s20
      %p28 = scmp.ge.s32.totalorder %s27, 1
      %s29 = scalar_select %p28, 0, %s27
      %s30 = sadd.s32 1, %s19
      %s31 = scalar_select %p28, %s30, %s19
      %p32 = scmp.ge.s32.totalorder %s31, 5
      %s33 = scalar_select %p32, 0, %s31
      %s34 = sadd.s32 1, %s18
      %s35 = scalar_select %p32, %s34, %s18
      %p36 = scmp.ge.s32.totalorder %s35, 2
      %s37 = scalar_select %p36, 0, %s35
      %s38 = ssub.s32 %s18, %s37
      %s39 = ssub.s32 %s19, %s33
      %s40 = sor.u32 %s38, %s39
      %p41 = scmp.eq.s32.totalorder %s40, 0
      %s43 = sadd.s32 %s42, 1
      %s44 = scalar_select %p41, %s42, %s43
      %p47 = pneg %p41
      %p48 = scmp.eq.s32.totalorder %s11, 9
      %p49 = por %p47, %p48
      %p50 = scmp.ne.s32.totalorder %s42, %s45
      %p51 = scmp.eq.s32.totalorder %s11, 0
      %p52 = por %p50, %p51
      %p53 = scmp.ne.s32.totalorder %s42, %s45
      %p54 = scmp.eq.s32.totalorder %s16, 9
      %p55 = por %p53, %p54
      %p56 = scmp.ne.s32.totalorder %s45, %s46
      %p57 = scmp.eq.s32.totalorder %s16, 0
      %p58 = por %p56, %p57
      %p59 = scmp.ne.s32.totalorder %s45, %s46
      %p60 = scmp.eq.s32.totalorder %s17, 9
      %p61 = por %p59, %p60
      %p63 = scmp.ne.s32.totalorder %s46, %s62
      %p64 = scmp.eq.s32.totalorder %s17, 0
      %p65 = por %p63, %p64
      %s66 = ssub.s32 %s20, %s29
      %p67 = scmp.eq.s32.totalorder %s66, 0
      %s69 = sadd.s32 %s68, 1
      %s70 = scalar_select %p67, %s68, %s69
      %p73 = pneg %p67
      %p74 = scmp.eq.s32.totalorder %s11, 9
      %p75 = por %p73, %p74
      %p76 = scmp.ne.s32.totalorder %s68, %s71
      %p77 = scmp.eq.s32.totalorder %s11, 0
      %p78 = por %p76, %p77
      %p79 = scmp.ne.s32.totalorder %s68, %s71
      %p80 = scmp.eq.s32.totalorder %s16, 9
      %p81 = por %p79, %p80
      %p82 = scmp.ne.s32.totalorder %s71, %s72
      %p83 = scmp.eq.s32.totalorder %s16, 0
      %p84 = por %p82, %p83
      %p85 = scmp.ne.s32.totalorder %s71, %s72
      %p86 = scmp.eq.s32.totalorder %s17, 9
      %p87 = por %p85, %p86
      %p89 = scmp.ne.s32.totalorder %s72, %s88
      %p90 = scmp.eq.s32.totalorder %s17, 0
      %p91 = por %p89, %p90
      %s92 = ssub.s32 %s18, %s37
      %s93 = ssub.s32 %s19, %s33
      %s94 = sor.u32 %s92, %s93
      %s95 = ssub.s32 %s20, %s29
      %s96 = sor.u32 %s94, %s95
      %p97 = scmp.eq.s32.totalorder %s96, 0
      %s99 = sadd.s32 %s98, 1
      %s100 = scalar_select %p97, %s98, %s99
      %p103 = pneg %p97
      %p104 = scmp.eq.s32.totalorder %s11, 9
      %p105 = por %p103, %p104
      %p106 = scmp.ne.s32.totalorder %s98, %s101
      %p107 = scmp.eq.s32.totalorder %s11, 0
      %p108 = por %p106, %p107
      %p109 = scmp.ne.s32.totalorder %s98, %s101
      %p110 = scmp.eq.s32.totalorder %s16, 9
      %p111 = por %p109, %p110
      %p112 = scmp.ne.s32.totalorder %s101, %s102
      %p113 = scmp.eq.s32.totalorder %s16, 0
      %p114 = por %p112, %p113
      %p115 = scmp.ne.s32.totalorder %s101, %s102
      %p116 = scmp.eq.s32.totalorder %s17, 9
      %p117 = por %p115, %p116
      %p119 = scmp.ne.s32.totalorder %s102, %s118
      %p120 = scmp.eq.s32.totalorder %s17, 0
      %p121 = por %p119, %p120
      %p122 = scmp.le.s32.totalorder 1, %s11
      %p123 = scmp.lt.s32.totalorder %s11, 11
      %p124 = pnand %p122, %p123
      %p125 = pneg %p124
      // Predicated region
      $region9: #{segmentation_fpn_forward.21} parent=5 // pred_check
        _
      $region10: #{segmentation_fpn_forward.21} parent=5 // pred_check_branch
        %127 = sbr.rel (%p124) target = $region12
      $region11: #{segmentation_fpn_forward.21} parent=5 // pred_region
        %s128 = ssub.s32 %s11, 1
        // Predicated region
        $region13: #{segmentation_fpn_forward.21} parent=11 // pred_check
          %p129 = pneg %p84
        $region14: #{segmentation_fpn_forward.21} parent=11 // pred_check_branch
          %131 = sbr.rel (%p129) target = $region16
        $region15: #{segmentation_fpn_forward.21} parent=11 // pred_region
          %s132 = smul.u32 4, %s23
          %p133 = scmp.lt.s32.totalorder %s132, 3
          %s134 = scalar_select %p133, %s132, 3
          %s135 = smul.addr %s134, 8
          %s136 = scalar_lea.vmem %s1, %s135
          %s137 = smul.u32 4, %s23
        $region16: #{segmentation_fpn_forward.21} parent=11 // pred_fallthru
          _
      $region12: #{segmentation_fpn_forward.21} parent=5 // pred_fallthru
        _
      %p138 = scmp.lt.s32.totalorder %s11, 10
      // Predicated region
      $region17: #{segmentation_fpn_forward.21} parent=5 // pred_check
        %p139 = pneg %p138
      $region18: #{segmentation_fpn_forward.21} parent=5 // pred_check_branch
        %141 = sbr.rel (%p139) target = $region20
      $region19: #{segmentation_fpn_forward.21} parent=5 // pred_region
        // Predicated region
        $region21: #{segmentation_fpn_forward.21} parent=19 // pred_check
          %p142 = pneg %p52
        $region22: #{segmentation_fpn_forward.21} parent=19 // pred_check_branch
          %144 = sbr.rel (%p142) target = $region24
        $region23: #{segmentation_fpn_forward.21} parent=19 // pred_region
          %p145 = scmp.lt.s32.totalorder %s18, 1
          %s146 = scalar_select %p145, %s18, 1
          %p147 = scmp.lt.s32.totalorder %s19, 4
          %s148 = scalar_select %p147, %s19, 4
          %s149 = smul.addr %s146, 5
          %s150 = sadd.s32 %s148, %s149
          %s151 = smul.addr %s150, 8
          %s152 = scalar_lea.vmem %s0, %s151
        $region24: #{segmentation_fpn_forward.21} parent=19 // pred_fallthru
          _
      $region20: #{segmentation_fpn_forward.21} parent=5 // pred_fallthru
        _
      %p153 = scmp.le.s32.totalorder 1, %s11
      %p154 = scmp.lt.s32.totalorder %s11, 11
      %p155 = pnand %p153, %p154
      %p156 = pneg %p155
      // Predicated region
      $region25: #{segmentation_fpn_forward.21} parent=5 // pred_check
        _
      $region26: #{segmentation_fpn_forward.21} parent=5 // pred_check_branch
        %158 = sbr.rel (%p155) target = $region28
      $region27: #{segmentation_fpn_forward.21} parent=5 // pred_region
        %s159 = ssub.s32 %s11, 1
        %p160 = scmp.lt.s32.totalorder %s21, 1
        %s161 = scalar_select %p160, %s21, 1
        %p162 = scmp.lt.s32.totalorder %s22, 4
        %s163 = scalar_select %p162, %s22, 4
        %s164 = smul.addr %s161, 5
        %s165 = sadd.s32 %s163, %s164
        %s166 = smul.addr %s165, 8
        %s167 = scalar_lea.vmem %s0, %s166
        %p168 = pneg %p58
        %p169 = pneg %p55
        %s170 = smul.u32 4, %s23
        %p171 = scmp.lt.s32.totalorder %s170, 3
        %s172 = scalar_select %p171, %s170, 3
        %s173 = smul.addr %s172, 8
        %s174 = scalar_lea.vmem %s1, %s173
        %p175 = pneg %p84
        %p176 = pneg %p81
        %p177 = pneg %p114
        %p178 = pneg %p111
        %s179 = sand.u32 %s101, 1
        %s180 = scalar_lea.sflag [#allocation3], %s179
        %s181 = sand.u32 %s101, 1
        %s182 = smul.addr %s181, 32
        %s183 = scalar_lea.vmem [#allocation2], %s182
        %p184 = scmp.lt.s32.totalorder %s21, 1
        %s185 = scalar_select %p184, %s21, 1
        %p186 = scmp.lt.s32.totalorder %s22, 4
        %s187 = scalar_select %p186, %s22, 4
        %s188 = smul.addr %s185, 5
        %s189 = sadd.s32 %s187, %s188
        %s190 = smul.addr %s189, 8
        %s191 = scalar_lea.vmem %s0, %s190
        %s192 = smul.u32 4, %s23
        %p193 = scmp.lt.s32.totalorder %s192, 3
        %s194 = scalar_select %p193, %s192, 3
        %s195 = smul.addr %s194, 8
        %s196 = scalar_lea.vmem %s1, %s195
        %s197 = smul.u32 4, %s23
        %s198 = smul.u32 4, %s23
        %v199 = vld [vmem:[%s196] sm:$0xff]
        %v200 = vld [vmem:[%s196 + $0x8] sm:$0xff]
        %v201 = vld [vmem:[%s196 + $0x10] sm:$0xff]
        %v202 = vld [vmem:[%s196 + $0x18] sm:$0xff]
        %v203 = vld [vmem:[%s191] sm:$0x3f]
        %vm204 = vcmask 48128
        %v206 = vsel %vm204, %v199, 0
        %v209 = vsel %vm204, %v200, 0
        %v212 = vsel %vm204, %v201, 0
        %v215 = vsel %vm204, %v202, 0
        %vm217 = vcmask 1045504
        %v219 = vsel %vm217, %v203, 0
        %221 = vmatpush.msra.mxu0 0.0
        %222 = vmatpush.msra.mxu0 0.0
        %223 = vmatpush.msra.mxu0 0.0
        %224 = vmatpush.msra.mxu0 0.0
        %225 = vmatpush.msra.mxu0 0.0
        %226 = vmatpush.msra.mxu0 0.0
        %227 = vmatpush.msra.mxu0 0.0
        %228 = vmatpush.msra.mxu0 0.0
        %229 = vmatpush.msra.mxu0 0.0
        %230 = vmatpush.msra.mxu0 0.0
        %231 = vmatpush.msra.mxu0 0.0
        %232 = vmatpush.msra.mxu0 0.0
        %233 = vmatpush.msra.mxu0 0.0
        %234 = vmatpush.msra.mxu0 0.0
        %235 = vmatpush.msra.mxu0 0.0
        %236 = vmatpush.msra.mxu0 %v219
        %237 = vmatmul.f32.gmra.mxu0 %v206
        %v238 = vpop.f32.mrf.mxu0
        %v239 = vadd.f32 0.0, %v238
        %240 = vmatmul.f32.gmra.mxu0 %v209
        %v241 = vpop.f32.mrf.mxu0
        %v242 = vadd.f32 0.0, %v241
        %243 = vmatmul.f32.gmra.mxu0 %v212
        %v244 = vpop.f32.mrf.mxu0
        %v245 = vadd.f32 0.0, %v244
        %246 = vmatmul.f32.gmra.mxu0 %v215
        %v247 = vpop.f32.mrf.mxu0
        %v248 = vadd.f32 0.0, %v247
        %249 = vdwg.mxu0
        %vm250 = vcmask 261120
        %251 = vst.msk [vmem:[%s183] sm:$0xff] %vm250, %v239
        %252 = vst.msk [vmem:[%s183 + $0x8] sm:$0xff] %vm250, %v242
        %253 = vst.msk [vmem:[%s183 + $0x10] sm:$0xff] %vm250, %v245
        %254 = vst.msk [vmem:[%s183 + $0x18] sm:$0xff] %vm250, %v248
        %s255 = sand.u32 %s101, 1
        %s256 = scalar_lea.sflag [#allocation3], %s255
        %s257 = sand.u32 %s101, 1
        %s258 = smul.addr %s257, 32
        %s259 = scalar_lea.vmem [#allocation2], %s258
        // Predicated region
        $region29: #{segmentation_fpn_forward.21} parent=27 // pred_check
          %p260 = pneg %p111
        $region30: #{segmentation_fpn_forward.21} parent=27 // pred_check_branch
          %262 = sbr.rel (%p260) target = $region32
        $region31: #{segmentation_fpn_forward.21} parent=27 // pred_region
          %s263 = smul.u32 4, %s23
          %265 = vsyncadd %s256, 0
          %s266 = smul.addr %s22, 4
          %s267 = sadd.s32 %s263, %s266
          %s268 = smul.addr %s21, 20
          %s269 = sadd.s32 %s267, %s268
          %s270 = smul.addr %s269, 8
          %s271 = scalar_lea.hbm %s2, %s270
          %s272 = sshll.u32 %s259, 4
          %s273 = int_to_ptr.vmem [resolvable:$true] %s272
          %s274 = sshll.u32 %s271, 4
          %s275 = int_to_ptr.hbm [resolvable:$true] %s274
          %280 = dma.vmem_to_hbm [thread:$0]  %s273, 512, %s275, %s256, 128, 128, 8
        $region32: #{segmentation_fpn_forward.21} parent=27 // pred_fallthru
          _
      $region28: #{segmentation_fpn_forward.21} parent=5 // pred_fallthru
        _
      %p281 = scmp.le.s32.totalorder 2, %s11
      // Predicated region
      $region33: #{segmentation_fpn_forward.21} parent=5 // pred_check
        %p282 = pneg %p281
      $region34: #{segmentation_fpn_forward.21} parent=5 // pred_check_branch
        %284 = sbr.rel (%p282) target = $region36
      $region35: #{segmentation_fpn_forward.21} parent=5 // pred_region
        %s285 = ssub.s32 %s11, 2
        // Predicated region
        $region37: #{segmentation_fpn_forward.21} parent=35 // pred_check
          %p286 = pneg %p117
        $region38: #{segmentation_fpn_forward.21} parent=35 // pred_check_branch
          %288 = sbr.rel (%p286) target = $region40
        $region39: #{segmentation_fpn_forward.21} parent=35 // pred_region
          %s289 = sand.u32 %s102, 1
          %s290 = scalar_lea.sflag [#allocation3], %s289
          %s291 = sand.u32 %s102, 1
          %s292 = smul.addr %s291, 32
          %s293 = scalar_lea.vmem [#allocation2], %s292
          %295 = dma.done %s290, 512
        $region40: #{segmentation_fpn_forward.21} parent=35 // pred_fallthru
          _
      $region36: #{segmentation_fpn_forward.21} parent=5 // pred_fallthru
        _
    $region6: #{segmentation_fpn_forward.21} parent=1 // loop_footer
      %s15 = sadd.s32 1, %s11
    $region7: #{segmentation_fpn_forward.21} parent=1 // loop_footer_branch
      %10 = sbr.rel target = $region3
    $region8: #{segmentation_fpn_forward.21} parent=1 // loop_exit
      _
    %296 = vsyncpa [#allocation3], 1
    %s297 = scalar_lea.sflag [#allocation3], 1
    %298 = vsyncpa %s297, 1

// kernel: segmentation_fpn_forward.19
$region0: #{segmentation_fpn_forward.19}
  #allocation0 [shape = 'u32[]', space=smem, size = 0x4, offset = 0x4, fixed_abs, tag = 'smem constant byte address 0x4 - core index']
  #allocation1 [shape = 'u32[72,128]{1,0:T(1,128)}', space=vmem, size = 0x9000, scoped, tag = 'internal scratch']
  %s0 = inlined_call_operand.vmem [shape: bf16[2,64,256], index: 0, kind: input, shape index: {}, may-alias: {0,1,2}]
  %s1 = inlined_call_operand.vmem [shape: bf16[2,64,256], index: 1, kind: input, shape index: {}, may-alias: {0,1,2}]
  %s2 = inlined_call_operand.vmem [shape: bf16[2,64,256], index: 2, kind: input, shape index: {}, may-alias: {0,1,2}]
  %s3 = inlined_call_operand.vmem [shape: bf16[3,3,256,256], index: 3, kind: input, shape index: {}]
  %s4 = inlined_call_operand.vmem [shape: f32[1,256], index: 4, kind: input, shape index: {}]
  %s5 = inlined_call_operand.vmem [shape: bf16[5,256], index: 5, kind: input, shape index: {}]
  %s6 = inlined_call_operand.vmem [shape: f32[5,1], index: 6, kind: input, shape index: {}]
  %s7 = inlined_call_operand.vmem [shape: f32[2,5,48], index: 7, kind: output, shape index: {}]
  %s8 = sld [smem:[#allocation0]]
  $region61: #{segmentation_fpn_forward.19} parent=0
    _
  %s10 = ssub.s32 1, %s8
  %s11 = scalar_select 0, %s10, %s8
  loop: start=0, step=1, limit=4
  $region2: #{segmentation_fpn_forward.19} parent=0 // loop_pre_header
    _
  $region3: #{segmentation_fpn_forward.19} parent=0 // loop_header
    %s13 = sphi 0, %s17
    %p14 = scmp.ge.s32.totalorder %s13, 4
    %s20 = sphi 0, %s32
    %s21 = sphi 0, %s28
    %s22 = sphi 0, %s20
    %s23 = sphi 0, %s21
    %s24 = sphi 0, %s22
    %s25 = sphi 0, %s23
    %s37 = sphi 0, %s39
    %s40 = sphi 0, %s37
    %s41 = sphi 0, %s40
    %s57 = sphi 0, %s41
    %s73 = sphi 0, %s75
    %s76 = sphi 0, %s73
    %s77 = sphi 0, %s76
    %s93 = sphi 0, %s77
    %s111 = sphi 0, %s113
    %s114 = sphi 0, %s111
    %s115 = sphi 0, %s114
    %s131 = sphi 0, %s115
    %s135 = sphi 0, %s135
    %s137 = sphi 0, %s135
    %s138 = sphi 0, %s137
    %s152 = sphi 0, %s138
    %s156 = sphi 0, %s156
    %s158 = sphi 0, %s156
    %s159 = sphi 0, %s158
    %s173 = sphi 0, %s159
    %s177 = sphi 0, %s177
    %s179 = sphi 0, %s177
    %s180 = sphi 0, %s179
    %s194 = sphi 0, %s180
    %s198 = sphi 0, %s198
    %s200 = sphi 0, %s198
    %s201 = sphi 0, %s200
    %s215 = sphi 0, %s201
    %s223 = sphi 0, %s225
    %s226 = sphi 0, %s223
    %s227 = sphi 0, %s226
    %s243 = sphi 0, %s227
  $region4: #{segmentation_fpn_forward.19} parent=0 // loop_header_branch
    %16 = sbr.rel (%p14) target = $region8
  $region5: #{segmentation_fpn_forward.19} parent=0 // loop_body
    %s18 = ssub.s32 %s13, 1
    %s19 = ssub.s32 %s13, 2
    %s26 = sadd.s32 1, %s21
    %p27 = scmp.ge.s32.totalorder %s26, 1
    %s28 = scalar_select %p27, 0, %s26
    %s29 = sadd.s32 1, %s20
    %s30 = scalar_select %p27, %s29, %s20
    %p31 = scmp.ge.s32.totalorder %s30, 2
    %s32 = scalar_select %p31, 0, %s30
    %s33 = ssub.s32 %s20, %s32
    %s34 = ssub.s32 %s21, %s28
    %s35 = sor.u32 %s33, %s34
    %p36 = scmp.eq.s32.totalorder %s35, 0
    %s38 = sadd.s32 %s37, 1
    %s39 = scalar_select %p36, %s37, %s38
    %p42 = pneg %p36
    %p43 = scmp.eq.s32.totalorder %s13, 1
    %p44 = por %p42, %p43
    %p45 = scmp.ne.s32.totalorder %s37, %s40
    %p46 = scmp.eq.s32.totalorder %s13, 0
    %p47 = por %p45, %p46
    %p48 = scmp.ne.s32.totalorder %s37, %s40
    %p49 = scmp.eq.s32.totalorder %s18, 1
    %p50 = por %p48, %p49
    %p51 = scmp.ne.s32.totalorder %s40, %s41
    %p52 = scmp.eq.s32.totalorder %s18, 0
    %p53 = por %p51, %p52
    %p54 = scmp.ne.s32.totalorder %s40, %s41
    %p55 = scmp.eq.s32.totalorder %s19, 1
    %p56 = por %p54, %p55
    %p58 = scmp.ne.s32.totalorder %s41, %s57
    %p59 = scmp.eq.s32.totalorder %s19, 0
    %p60 = por %p58, %p59
    %s61 = sadd.s32 %s21, 1
    %s62 = smul.u32 %s61, 6
    %p63 = scmp.lt.s32.totalorder %s62, 7
    %s64 = scalar_select %p63, %s62, 7
    %s65 = sadd.s32 %s28, 1
    %s66 = smul.u32 %s65, 6
    %p67 = scmp.lt.s32.totalorder %s66, 7
    %s68 = scalar_select %p67, %s66, 7
    %s69 = ssub.s32 %s20, %s32
    %s70 = ssub.s32 %s64, %s68
    %s71 = sor.u32 %s69, %s70
    %p72 = scmp.eq.s32.totalorder %s71, 0
    %s74 = sadd.s32 %s73, 1
    %s75 = scalar_select %p72, %s73, %s74
    %p78 = pneg %p72
    %p79 = scmp.eq.s32.totalorder %s13, 1
    %p80 = por %p78, %p79
    %p81 = scmp.ne.s32.totalorder %s73, %s76
    %p82 = scmp.eq.s32.totalorder %s13, 0
    %p83 = por %p81, %p82
    %p84 = scmp.ne.s32.totalorder %s73, %s76
    %p85 = scmp.eq.s32.totalorder %s18, 1
    %p86 = por %p84, %p85
    %p87 = scmp.ne.s32.totalorder %s76, %s77
    %p88 = scmp.eq.s32.totalorder %s18, 0
    %p89 = por %p87, %p88
    %p90 = scmp.ne.s32.totalorder %s76, %s77
    %p91 = scmp.eq.s32.totalorder %s19, 1
    %p92 = por %p90, %p91
    %p94 = scmp.ne.s32.totalorder %s77, %s93
    %p95 = scmp.eq.s32.totalorder %s19, 0
    %p96 = por %p94, %p95
    %s97 = sadd.s32 %s21, 1
    %s98 = smul.u32 %s97, 6
    %s99 = sadd.s32 %s98, 1
    %p100 = scmp.lt.s32.totalorder %s99, 7
    %s101 = scalar_select %p100, %s99, 7
    %s102 = sadd.s32 %s28, 1
    %s103 = smul.u32 %s102, 6
    %s104 = sadd.s32 %s103, 1
    %p105 = scmp.lt.s32.totalorder %s104, 7
    %s106 = scalar_select %p105, %s104, 7
    %s107 = ssub.s32 %s20, %s32
    %s108 = ssub.s32 %s101, %s106
    %s109 = sor.u32 %s107, %s108
    %p110 = scmp.eq.s32.totalorder %s109, 0
    %s112 = sadd.s32 %s111, 1
    %s113 = scalar_select %p110, %s111, %s112
    %p116 = pneg %p110
    %p117 = scmp.eq.s32.totalorder %s13, 1
    %p118 = por %p116, %p117
    %p119 = scmp.ne.s32.totalorder %s111, %s114
    %p120 = scmp.eq.s32.totalorder %s13, 0
    %p121 = por %p119, %p120
    %p122 = scmp.ne.s32.totalorder %s111, %s114
    %p123 = scmp.eq.s32.totalorder %s18, 1
    %p124 = por %p122, %p123
    %p125 = scmp.ne.s32.totalorder %s114, %s115
    %p126 = scmp.eq.s32.totalorder %s18, 0
    %p127 = por %p125, %p126
    %p128 = scmp.ne.s32.totalorder %s114, %s115
    %p129 = scmp.eq.s32.totalorder %s19, 1
    %p130 = por %p128, %p129
    %p132 = scmp.ne.s32.totalorder %s115, %s131
    %p133 = scmp.eq.s32.totalorder %s19, 0
    %p134 = por %p132, %p133
    %s136 = sadd.s32 %s135, 1
    %p139 = scmp.eq.s32.totalorder %s13, 1
    %p140 = scmp.ne.s32.totalorder %s135, %s137
    %p141 = scmp.eq.s32.totalorder %s13, 0
    %p142 = por %p140, %p141
    %p143 = scmp.ne.s32.totalorder %s135, %s137
    %p144 = scmp.eq.s32.totalorder %s18, 1
    %p145 = por %p143, %p144
    %p146 = scmp.ne.s32.totalorder %s137, %s138
    %p147 = scmp.eq.s32.totalorder %s18, 0
    %p148 = por %p146, %p147
    %p149 = scmp.ne.s32.totalorder %s137, %s138
    %p150 = scmp.eq.s32.totalorder %s19, 1
    %p151 = por %p149, %p150
    %p153 = scmp.ne.s32.totalorder %s138, %s152
    %p154 = scmp.eq.s32.totalorder %s19, 0
    %p155 = por %p153, %p154
    %s157 = sadd.s32 %s156, 1
    %p160 = scmp.eq.s32.totalorder %s13, 1
    %p161 = scmp.ne.s32.totalorder %s156, %s158
    %p162 = scmp.eq.s32.totalorder %s13, 0
    %p163 = por %p161, %p162
    %p164 = scmp.ne.s32.totalorder %s156, %s158
    %p165 = scmp.eq.s32.totalorder %s18, 1
    %p166 = por %p164, %p165
    %p167 = scmp.ne.s32.totalorder %s158, %s159
    %p168 = scmp.eq.s32.totalorder %s18, 0
    %p169 = por %p167, %p168
    %p170 = scmp.ne.s32.totalorder %s158, %s159
    %p171 = scmp.eq.s32.totalorder %s19, 1
    %p172 = por %p170, %p171
    %p174 = scmp.ne.s32.totalorder %s159, %s173
    %p175 = scmp.eq.s32.totalorder %s19, 0
    %p176 = por %p174, %p175
    %s178 = sadd.s32 %s177, 1
    %p181 = scmp.eq.s32.totalorder %s13, 1
    %p182 = scmp.ne.s32.totalorder %s177, %s179
    %p183 = scmp.eq.s32.totalorder %s13, 0
    %p184 = por %p182, %p183
    %p185 = scmp.ne.s32.totalorder %s177, %s179
    %p186 = scmp.eq.s32.totalorder %s18, 1
    %p187 = por %p185, %p186
    %p188 = scmp.ne.s32.totalorder %s179, %s180
    %p189 = scmp.eq.s32.totalorder %s18, 0
    %p190 = por %p188, %p189
    %p191 = scmp.ne.s32.totalorder %s179, %s180
    %p192 = scmp.eq.s32.totalorder %s19, 1
    %p193 = por %p191, %p192
    %p195 = scmp.ne.s32.totalorder %s180, %s194
    %p196 = scmp.eq.s32.totalorder %s19, 0
    %p197 = por %p195, %p196
    %s199 = sadd.s32 %s198, 1
    %p202 = scmp.eq.s32.totalorder %s13, 1
    %p203 = scmp.ne.s32.totalorder %s198, %s200
    %p204 = scmp.eq.s32.totalorder %s13, 0
    %p205 = por %p203, %p204
    %p206 = scmp.ne.s32.totalorder %s198, %s200
    %p207 = scmp.eq.s32.totalorder %s18, 1
    %p208 = por %p206, %p207
    %p209 = scmp.ne.s32.totalorder %s200, %s201
    %p210 = scmp.eq.s32.totalorder %s18, 0
    %p211 = por %p209, %p210
    %p212 = scmp.ne.s32.totalorder %s200, %s201
    %p213 = scmp.eq.s32.totalorder %s19, 1
    %p214 = por %p212, %p213
    %p216 = scmp.ne.s32.totalorder %s201, %s215
    %p217 = scmp.eq.s32.totalorder %s19, 0
    %p218 = por %p216, %p217
    %s219 = ssub.s32 %s20, %s32
    %s220 = ssub.s32 %s21, %s28
    %s221 = sor.u32 %s219, %s220
    %p222 = scmp.eq.s32.totalorder %s221, 0
    %s224 = sadd.s32 %s223, 1
    %s225 = scalar_select %p222, %s223, %s224
    %p228 = pneg %p222
    %p229 = scmp.eq.s32.totalorder %s13, 1
    %p230 = por %p228, %p229
    %p231 = scmp.ne.s32.totalorder %s223, %s226
    %p232 = scmp.eq.s32.totalorder %s13, 0
    %p233 = por %p231, %p232
    %p234 = scmp.ne.s32.totalorder %s223, %s226
    %p235 = scmp.eq.s32.totalorder %s18, 1
    %p236 = por %p234, %p235
    %p237 = scmp.ne.s32.totalorder %s226, %s227
    %p238 = scmp.eq.s32.totalorder %s18, 0
    %p239 = por %p237, %p238
    %p240 = scmp.ne.s32.totalorder %s226, %s227
    %p241 = scmp.eq.s32.totalorder %s19, 1
    %p242 = por %p240, %p241
    %p244 = scmp.ne.s32.totalorder %s227, %s243
    %p245 = scmp.eq.s32.totalorder %s19, 0
    %p246 = por %p244, %p245
    %p247 = scmp.le.s32.totalorder 1, %s13
    %p248 = scmp.lt.s32.totalorder %s13, 3
    %p249 = pnand %p247, %p248
    %p250 = pneg %p249
    // Predicated region
    $region9: #{segmentation_fpn_forward.19} parent=5 // pred_check
      _
    $region10: #{segmentation_fpn_forward.19} parent=5 // pred_check_branch
      %252 = sbr.rel (%p249) target = $region12
    $region11: #{segmentation_fpn_forward.19} parent=5 // pred_region
      %s253 = ssub.s32 %s13, 1
      // Predicated region
      $region13: #{segmentation_fpn_forward.19} parent=11 // pred_check
        %p254 = pneg %p148
      $region14: #{segmentation_fpn_forward.19} parent=11 // pred_check_branch
        %256 = sbr.rel (%p254) target = $region16
      $region15: #{segmentation_fpn_forward.19} parent=11 // pred_region
        _
      $region16: #{segmentation_fpn_forward.19} parent=11 // pred_fallthru
        _
      // Predicated region
      $region17: #{segmentation_fpn_forward.19} parent=11 // pred_check
        %p257 = pneg %p169
      $region18: #{segmentation_fpn_forward.19} parent=11 // pred_check_branch
        %259 = sbr.rel (%p257) target = $region20
      $region19: #{segmentation_fpn_forward.19} parent=11 // pred_region
        _
      $region20: #{segmentation_fpn_forward.19} parent=11 // pred_fallthru
        _
      // Predicated region
      $region21: #{segmentation_fpn_forward.19} parent=11 // pred_check
        %p260 = pneg %p190
      $region22: #{segmentation_fpn_forward.19} parent=11 // pred_check_branch
        %262 = sbr.rel (%p260) target = $region24
      $region23: #{segmentation_fpn_forward.19} parent=11 // pred_region
        _
      $region24: #{segmentation_fpn_forward.19} parent=11 // pred_fallthru
        _
      // Predicated region
      $region25: #{segmentation_fpn_forward.19} parent=11 // pred_check
        %p263 = pneg %p211
      $region26: #{segmentation_fpn_forward.19} parent=11 // pred_check_branch
        %265 = sbr.rel (%p263) target = $region28
      $region27: #{segmentation_fpn_forward.19} parent=11 // pred_region
        _
      $region28: #{segmentation_fpn_forward.19} parent=11 // pred_fallthru
        _
    $region12: #{segmentation_fpn_forward.19} parent=5 // pred_fallthru
      _
    %p266 = scmp.lt.s32.totalorder %s13, 2
    // Predicated region
    $region29: #{segmentation_fpn_forward.19} parent=5 // pred_check
      %p267 = pneg %p266
    $region30: #{segmentation_fpn_forward.19} parent=5 // pred_check_branch
      %269 = sbr.rel (%p267) target = $region32
    $region31: #{segmentation_fpn_forward.19} parent=5 // pred_region
      // Predicated region
      $region33: #{segmentation_fpn_forward.19} parent=31 // pred_check
        %p270 = pneg %p47
      $region34: #{segmentation_fpn_forward.19} parent=31 // pred_check_branch
        %272 = sbr.rel (%p270) target = $region36
      $region35: #{segmentation_fpn_forward.19} parent=31 // pred_region
        %s273 = smul.u32 6, %s21
        %s274 = ssub.s32 8, %s273
        %p275 = scmp.lt.s32.totalorder %s274, 6
        %s276 = scalar_select %p275, %s274, 6
        %s277 = smul.u32 4, %s276
        %s278 = smul.u32 %s277, 2
        %p279 = scmp.lt.s32.totalorder %s20, 1
        %s280 = scalar_select %p279, %s20, 1
        %p281 = scmp.lt.s32.totalorder %s273, 7
        %s282 = scalar_select %p281, %s273, 7
        %s283 = smul.addr %s282, 2
        %s284 = smul.addr %s280, 16
        %s285 = sadd.s32 %s283, %s284
        %s286 = smul.addr %s285, 4
        %s287 = scalar_lea.vmem %s0, %s286
        %s288 = smul.u32 6, %s21
        %s289 = ssub.s32 8, %s288
        %p290 = scmp.lt.s32.totalorder %s289, 6
        %s291 = scalar_select %p290, %s289, 6
        %s292 = smul.u32 4, %s291
        %s293 = smul.u32 %s292, 2
      $region36: #{segmentation_fpn_forward.19} parent=31 // pred_fallthru
        _
      // Predicated region
      $region37: #{segmentation_fpn_forward.19} parent=31 // pred_check
        %p294 = pneg %p83
      $region38: #{segmentation_fpn_forward.19} parent=31 // pred_check_branch
        %296 = sbr.rel (%p294) target = $region40
      $region39: #{segmentation_fpn_forward.19} parent=31 // pred_region
        %s297 = sadd.s32 %s21, 1
        %s298 = smul.u32 %s297, 6
        %p299 = scmp.lt.s32.totalorder %s298, 7
        %s300 = scalar_select %p299, %s298, 7
        %p301 = scmp.lt.s32.totalorder %s20, 1
        %s302 = scalar_select %p301, %s20, 1
        %p303 = scmp.lt.s32.totalorder %s300, 7
        %s304 = scalar_select %p303, %s300, 7
        %s305 = smul.addr %s304, 2
        %s306 = smul.addr %s302, 16
        %s307 = sadd.s32 %s305, %s306
        %s308 = smul.addr %s307, 4
        %s309 = scalar_lea.vmem %s1, %s308
        %s310 = sadd.s32 %s21, 1
        %s311 = smul.u32 %s310, 6
        %p312 = scmp.lt.s32.totalorder %s311, 7
        %s313 = scalar_select %p312, %s311, 7
      $region40: #{segmentation_fpn_forward.19} parent=31 // pred_fallthru
        _
      // Predicated region
      $region41: #{segmentation_fpn_forward.19} parent=31 // pred_check
        %p314 = pneg %p121
      $region42: #{segmentation_fpn_forward.19} parent=31 // pred_check_branch
        %316 = sbr.rel (%p314) target = $region44
      $region43: #{segmentation_fpn_forward.19} parent=31 // pred_region
        %s317 = sadd.s32 %s21, 1
        %s318 = smul.u32 %s317, 6
        %s319 = sadd.s32 %s318, 1
        %p320 = scmp.lt.s32.totalorder %s319, 7
        %s321 = scalar_select %p320, %s319, 7
        %p322 = scmp.lt.s32.totalorder %s20, 1
        %s323 = scalar_select %p322, %s20, 1
        %p324 = scmp.lt.s32.totalorder %s321, 7
        %s325 = scalar_select %p324, %s321, 7
        %s326 = smul.addr %s325, 2
        %s327 = smul.addr %s323, 16
        %s328 = sadd.s32 %s326, %s327
        %s329 = smul.addr %s328, 4
        %s330 = scalar_lea.vmem %s2, %s329
        %s331 = sadd.s32 %s21, 1
        %s332 = smul.u32 %s331, 6
        %s333 = sadd.s32 %s332, 1
        %p334 = scmp.lt.s32.totalorder %s333, 7
        %s335 = scalar_select %p334, %s333, 7
      $region44: #{segmentation_fpn_forward.19} parent=31 // pred_fallthru
        _
    $region32: #{segmentation_fpn_forward.19} parent=5 // pred_fallthru
      _
    %p336 = scmp.le.s32.totalorder 1, %s13
    %p337 = scmp.lt.s32.totalorder %s13, 3
    %p338 = pnand %p336, %p337
    %p339 = pneg %p338
    // Predicated region
    $region45: #{segmentation_fpn_forward.19} parent=5 // pred_check
      _
    $region46: #{segmentation_fpn_forward.19} parent=5 // pred_check_branch
      %341 = sbr.rel (%p338) target = $region48
    $region47: #{segmentation_fpn_forward.19} parent=5 // pred_region
      %s342 = ssub.s32 %s13, 1
      %s343 = smul.u32 6, %s23
      %s344 = ssub.s32 8, %s343
      %p345 = scmp.lt.s32.totalorder %s344, 6
      %s346 = scalar_select %p345, %s344, 6
      %s347 = smul.u32 4, %s346
      %s348 = smul.u32 %s347, 2
      %p349 = scmp.lt.s32.totalorder %s22, 1
      %s350 = scalar_select %p349, %s22, 1
      %p351 = scmp.lt.s32.totalorder %s343, 7
      %s352 = scalar_select %p351, %s343, 7
      %s353 = smul.addr %s352, 2
      %s354 = smul.addr %s350, 16
      %s355 = sadd.s32 %s353, %s354
      %s356 = smul.addr %s355, 4
      %s357 = scalar_lea.vmem %s0, %s356
      %p358 = pneg %p53
      %p359 = pneg %p50
      %s360 = sadd.s32 %s23, 1
      %s361 = smul.u32 %s360, 6
      %p362 = scmp.lt.s32.totalorder %s361, 7
      %s363 = scalar_select %p362, %s361, 7
      %p364 = scmp.lt.s32.totalorder %s22, 1
      %s365 = scalar_select %p364, %s22, 1
      %p366 = scmp.lt.s32.totalorder %s363, 7
      %s367 = scalar_select %p366, %s363, 7
      %s368 = smul.addr %s367, 2
      %s369 = smul.addr %s365, 16
      %s370 = sadd.s32 %s368, %s369
      %s371 = smul.addr %s370, 4
      %s372 = scalar_lea.vmem %s1, %s371
      %p373 = pneg %p89
      %p374 = pneg %p86
      %s375 = sadd.s32 %s23, 1
      %s376 = smul.u32 %s375, 6
      %s377 = sadd.s32 %s376, 1
      %p378 = scmp.lt.s32.totalorder %s377, 7
      %s379 = scalar_select %p378, %s377, 7
      %p380 = scmp.lt.s32.totalorder %s22, 1
      %s381 = scalar_select %p380, %s22, 1
      %p382 = scmp.lt.s32.totalorder %s379, 7
      %s383 = scalar_select %p382, %s379, 7
      %s384 = smul.addr %s383, 2
      %s385 = smul.addr %s381, 16
      %s386 = sadd.s32 %s384, %s385
      %s387 = smul.addr %s386, 4
      %s388 = scalar_lea.vmem %s2, %s387
      %p389 = pneg %p127
      %p390 = pneg %p124
      %p391 = pneg %p148
      %p392 = pneg %p145
      %p393 = pneg %p169
      %p394 = pneg %p166
      %p395 = pneg %p190
      %p396 = pneg %p187
      %p397 = pneg %p211
      %p398 = pneg %p208
      %p399 = pneg %p239
      %p400 = pneg %p236
      %p401 = scmp.lt.s32.totalorder %s22, 1
      %s402 = scalar_select %p401, %s22, 1
      %p403 = scmp.lt.s32.totalorder %s23, 0
      %s404 = scalar_select %p403, %s23, 0
      %s405 = sadd.s32 %s404, %s402
      %s406 = smul.addr %s405, 8
      %s407 = scalar_lea.vmem %s7, %s406
      %s408 = smul.u32 6, %s23
      %s409 = ssub.s32 8, %s408
      %p410 = scmp.lt.s32.totalorder %s409, 6
      %s411 = scalar_select %p410, %s409, 6
      %s412 = smul.u32 4, %s411
      %s413 = smul.u32 %s412, 2
      %p414 = scmp.lt.s32.totalorder %s22, 1
      %s415 = scalar_select %p414, %s22, 1
      %p416 = scmp.lt.s32.totalorder %s408, 7
      %s417 = scalar_select %p416, %s408, 7
      %s418 = smul.addr %s417, 2
      %s419 = smul.addr %s415, 16
      %s420 = sadd.s32 %s418, %s419
      %s421 = smul.addr %s420, 4
      %s422 = scalar_lea.vmem %s0, %s421
      %s423 = smul.u32 6, %s23
      %s424 = ssub.s32 8, %s423
      %p425 = scmp.lt.s32.totalorder %s424, 6
      %s426 = scalar_select %p425, %s424, 6
      %s427 = smul.u32 4, %s426
      %s428 = smul.u32 %s427, 2
      %s429 = sadd.s32 %s23, 1
      %s430 = smul.u32 %s429, 6
      %p431 = scmp.lt.s32.totalorder %s430, 7
      %s432 = scalar_select %p431, %s430, 7
      %p433 = scmp.lt.s32.totalorder %s22, 1
      %s434 = scalar_select %p433, %s22, 1
      %p435 = scmp.lt.s32.totalorder %s432, 7
      %s436 = scalar_select %p435, %s432, 7
      %s437 = smul.addr %s436, 2
      %s438 = smul.addr %s434, 16
      %s439 = sadd.s32 %s437, %s438
      %s440 = smul.addr %s439, 4
      %s441 = scalar_lea.vmem %s1, %s440
      %s442 = sadd.s32 %s23, 1
      %s443 = smul.u32 %s442, 6
      %p444 = scmp.lt.s32.totalorder %s443, 7
      %s445 = scalar_select %p444, %s443, 7
      %s446 = sadd.s32 %s23, 1
      %s447 = smul.u32 %s446, 6
      %s448 = sadd.s32 %s447, 1
      %p449 = scmp.lt.s32.totalorder %s448, 7
      %s450 = scalar_select %p449, %s448, 7
      %p451 = scmp.lt.s32.totalorder %s22, 1
      %s452 = scalar_select %p451, %s22, 1
      %p453 = scmp.lt.s32.totalorder %s450, 7
      %s454 = scalar_select %p453, %s450, 7
      %s455 = smul.addr %s454, 2
      %s456 = smul.addr %s452, 16
      %s457 = sadd.s32 %s455, %s456
      %s458 = smul.addr %s457, 4
      %s459 = scalar_lea.vmem %s2, %s458
      %s460 = sadd.s32 %s23, 1
      %s461 = smul.u32 %s460, 6
      %s462 = sadd.s32 %s461, 1
      %p463 = scmp.lt.s32.totalorder %s462, 7
      %s464 = scalar_select %p463, %s462, 7
      %p465 = scmp.lt.s32.totalorder %s22, 1
      %s466 = scalar_select %p465, %s22, 1
      %p467 = scmp.lt.s32.totalorder %s23, 0
      %s468 = scalar_select %p467, %s23, 0
      %s469 = sadd.s32 %s468, %s466
      %s470 = smul.addr %s469, 8
      %s471 = scalar_lea.vmem %s7, %s470
      %v473 = vld [vmem:[%s422] sm:$0xff]
      %v474 = vld [vmem:[%s422 + $0x8] sm:$0xff]
      %v475 = vld [vmem:[%s422 + $0x10] sm:$0xff]
      %v476 = vld [vmem:[%s422 + $0x18] sm:$0xff]
      %v477 = vld [vmem:[%s422 + $0x20] sm:$0xff]
      %v478 = vld [vmem:[%s422 + $0x28] sm:$0xff]
      %v479 = vld [vmem:[%s441] sm:$0xff]
      %v480 = vld [vmem:[%s459] sm:$0xff]
      %v487 = vunpack.c.l.b16 %v473
      %v488 = vunpack.c.h.b16 %v473
      %v489 = vunpack.c.l.b16 %v474
      %v490 = vunpack.c.h.b16 %v474
      %v491 = vunpack.c.l.b16 %v475
      %v492 = vunpack.c.h.b16 %v475
      %v493 = vunpack.c.l.b16 %v476
      %v494 = vunpack.c.h.b16 %v476
      %v495 = vunpack.c.l.b16 %v477
      %v496 = vunpack.c.h.b16 %v477
      %v497 = vunpack.c.l.b16 %v478
      %v498 = vunpack.c.h.b16 %v478
      %v499 = vpack.c.b16 %v489, %v487
      %v500 = vpack.c.b16 %v490, %v488
      %v501 = vpack.c.b16 %v493, %v491
      %v502 = vpack.c.b16 %v494, %v492
      %v503 = vpack.c.b16 %v497, %v495
      %v504 = vpack.c.b16 %v498, %v496
      %v510 = vunpack.c.l.b16 %v479
      %v511 = vunpack.c.h.b16 %v479
      %v512 = vpack.c.b16 %v510, %v510
      %v513 = vpack.c.b16 %v511, %v511
      %v515 = vunpack.c.l.b16 %v480
      %v516 = vunpack.c.h.b16 %v480
      %v517 = vpack.c.b16 %v515, %v515
      %v518 = vpack.c.b16 %v516, %v516
      %vm519 = vcmask 1043456
      %v522 = vsel %vm519, %v512, %v517
      %v526 = vsel %vm519, %v513, %v518
      %vm528 = vsmask.f32 7424
      %v530 = vshrl.u32 %v499, 16
      %v532 = vshll.u32 %v499, 16
      %v534 = vrot.slane %v532, 1
      %v535 = vor.u32 %v530, %v534
      %v537 = vshll.u32 %v501, 16
      %v539 = vrot.slane %v537, 1
      %v540 = vsel %vm528, %v535, %v539
      %v542 = vshrl.u32 %v500, 16
      %v544 = vshll.u32 %v500, 16
      %v546 = vrot.slane %v544, 1
      %v547 = vor.u32 %v542, %v546
      %v549 = vshll.u32 %v502, 16
      %v551 = vrot.slane %v549, 1
      %v552 = vsel %vm528, %v547, %v551
      %v553 = vshrl.u32 %v501, 16
      %v555 = vor.u32 %v553, %v539
      %v557 = vshll.u32 %v503, 16
      %v559 = vrot.slane %v557, 1
      %v560 = vsel %vm528, %v555, %v559
      %v561 = vshrl.u32 %v502, 16
      %v563 = vor.u32 %v561, %v551
      %v565 = vshll.u32 %v504, 16
      %v567 = vrot.slane %v565, 1
      %v568 = vsel %vm528, %v563, %v567
      %v569 = vshrl.u32 %v503, 16
      %v571 = vor.u32 %v569, %v559
      %v572 = vshll.u32 %v522, 16
      %v574 = vrot.slane %v572, 1
      %v575 = vsel %vm528, %v571, %v574
      %v576 = vshrl.u32 %v504, 16
      %v578 = vor.u32 %v576, %v567
      %v579 = vshll.u32 %v526, 16
      %v581 = vrot.slane %v579, 1
      %v582 = vsel %vm528, %v578, %v581
      %v583 = vshrl.u32 %v522, 16
      %v585 = vor.u32 %v583, %v574
      %v586 = vshrl.u32 %v526, 16
      %v588 = vor.u32 %v586, %v581
      %vm599 = vcmask 1047552
      %vm600 = vmand %vm599, %vm528
      %v601 = vsel %vm600, %v585, %v534
      %v602 = vsel %vm600, %v588, %v546
      %vm605 = vcmask 1046528
      %v606 = vrot.slane %v499, 1
      %v607 = vrot.slane %v501, 1
      %v608 = vsel %vm605, %v606, %v607
      %v609 = vrot.slane %v500, 1
      %v610 = vrot.slane %v502, 1
      %v611 = vsel %vm605, %v609, %v610
      %v612 = vrot.slane %v503, 1
      %v613 = vsel %vm605, %v607, %v612
      %v614 = vrot.slane %v504, 1
      %v615 = vsel %vm605, %v610, %v614
      %v616 = vrot.slane %v522, 1
      %v617 = vsel %vm605, %v612, %v616
      %v618 = vrot.slane %v526, 1
      %v619 = vsel %vm605, %v614, %v618
      %vm626 = vcmask 1046528
      %v629 = vsel %vm626, %v616, %v606
      %v633 = vsel %vm626, %v618, %v609
      %v635 = vld [vmem:[%s3] sm:$0xff]
      %v636 = vld [vmem:[%s3 + $0x8] sm:$0xff]
      %v637 = vld [vmem:[%s3 + $0x10] sm:$0xff]
      %v638 = vld [vmem:[%s3 + $0x18] sm:$0xff]
      %v639 = vld [vmem:[%s3 + $0x20] sm:$0xff]
      %v640 = vld [vmem:[%s3 + $0x28] sm:$0xff]
      %v641 = vld [vmem:[%s3 + $0x30] sm:$0xff]
      %v642 = vld [vmem:[%s3 + $0x38] sm:$0xff]
      %v643 = vld [vmem:[%s3 + $0x40] sm:$0xff]
      %v644 = vld [vmem:[%s3 + $0x48] sm:$0xff]
      %v645 = vld [vmem:[%s3 + $0x50] sm:$0xff]
      %v646 = vld [vmem:[%s3 + $0x58] sm:$0xff]
      %v647 = vld [vmem:[%s3 + $0x60] sm:$0xff]
      %v648 = vld [vmem:[%s3 + $0x68] sm:$0xff]
      %v649 = vld [vmem:[%s3 + $0x70] sm:$0xff]
      %v650 = vld [vmem:[%s3 + $0x78] sm:$0xff]
      %v651 = vld [vmem:[%s3 + $0x80] sm:$0xff]
      %v652 = vld [vmem:[%s3 + $0x88] sm:$0xff]
      %v653 = vld [vmem:[%s3 + $0x90] sm:$0xff]
      %v654 = vld [vmem:[%s3 + $0x98] sm:$0xff]
      %v655 = vld [vmem:[%s3 + $0xa0] sm:$0xff]
      %v656 = vld [vmem:[%s3 + $0xa8] sm:$0xff]
      %v657 = vld [vmem:[%s3 + $0xb0] sm:$0xff]
      %v658 = vld [vmem:[%s3 + $0xb8] sm:$0xff]
      %v659 = vld [vmem:[%s3 + $0xc0] sm:$0xff]
      %v660 = vld [vmem:[%s3 + $0xc8] sm:$0xff]
      %v661 = vld [vmem:[%s3 + $0xd0] sm:$0xff]
      %v662 = vld [vmem:[%s3 + $0xd8] sm:$0xff]
      %v663 = vld [vmem:[%s3 + $0xe0] sm:$0xff]
      %v664 = vld [vmem:[%s3 + $0xe8] sm:$0xff]
      %v665 = vld [vmem:[%s3 + $0xf0] sm:$0xff]
      %v666 = vld [vmem:[%s3 + $0xf8] sm:$0xff]
      %v667 = vld [vmem:[%s4] sm:$0x3]
      %v669 = vperm.slane %v667, 0
      %v670 = vperm.slane %v667, 1
      %v707 = vunpack.c.l.b16 %v635
      %v708 = vunpack.c.h.b16 %v635
      %v709 = vunpack.c.l.b16 %v636
      %v710 = vunpack.c.h.b16 %v636
      %v711 = vunpack.c.l.b16 %v637
      %v712 = vunpack.c.h.b16 %v637
      %v713 = vunpack.c.l.b16 %v638
      %v714 = vunpack.c.h.b16 %v638
      %v715 = vunpack.c.l.b16 %v639
      %v716 = vunpack.c.h.b16 %v639
      %v717 = vunpack.c.l.b16 %v640
      %v718 = vunpack.c.h.b16 %v640
      %v719 = vunpack.c.l.b16 %v641
      %v720 = vunpack.c.h.b16 %v641
      %v721 = vunpack.c.l.b16 %v642
      %v722 = vunpack.c.h.b16 %v642
      %v723 = vunpack.c.l.b16 %v643
      %v724 = vunpack.c.h.b16 %v643
      %v725 = vunpack.c.l.b16 %v644
      %v726 = vunpack.c.h.b16 %v644
      %v727 = vunpack.c.l.b16 %v645
      %v728 = vunpack.c.h.b16 %v645
      %v729 = vunpack.c.l.b16 %v646
      %v730 = vunpack.c.h.b16 %v646
      %v731 = vunpack.c.l.b16 %v647
      %v732 = vunpack.c.h.b16 %v647
      %v733 = vunpack.c.l.b16 %v648
      %v734 = vunpack.c.h.b16 %v648
      %v735 = vunpack.c.l.b16 %v649
      %v736 = vunpack.c.h.b16 %v649
      %v737 = vunpack.c.l.b16 %v650
      %v738 = vunpack.c.h.b16 %v650
      %v739 = vunpack.c.l.b16 %v651
      %v740 = vunpack.c.h.b16 %v651
      %v741 = vunpack.c.l.b16 %v652
      %v742 = vunpack.c.h.b16 %v652
      %v743 = vunpack.c.l.b16 %v653
      %v744 = vunpack.c.h.b16 %v653
      %v745 = vunpack.c.l.b16 %v654
      %v746 = vunpack.c.h.b16 %v654
      %v747 = vunpack.c.l.b16 %v655
      %v748 = vunpack.c.h.b16 %v655
      %v749 = vunpack.c.l.b16 %v656
      %v750 = vunpack.c.h.b16 %v656
      %v751 = vunpack.c.l.b16 %v657
      %v752 = vunpack.c.h.b16 %v657
      %v753 = vunpack.c.l.b16 %v658
      %v754 = vunpack.c.h.b16 %v658
      %v755 = vunpack.c.l.b16 %v659
      %v756 = vunpack.c.h.b16 %v659
      %v757 = vunpack.c.l.b16 %v660
      %v758 = vunpack.c.h.b16 %v660
      %v759 = vunpack.c.l.b16 %v661
      %v760 = vunpack.c.h.b16 %v661
      %v761 = vunpack.c.l.b16 %v662
      %v762 = vunpack.c.h.b16 %v662
      %v763 = vunpack.c.l.b16 %v663
      %v764 = vunpack.c.h.b16 %v663
      %v765 = vunpack.c.l.b16 %v664
      %v766 = vunpack.c.h.b16 %v664
      %v767 = vunpack.c.l.b16 %v665
      %v768 = vunpack.c.h.b16 %v665
      %v769 = vunpack.c.l.b16 %v666
      %v770 = vunpack.c.h.b16 %v666
      %v771 = vpack.c.b16 %v709, %v707
      %v772 = vpack.c.b16 %v710, %v708
      %v773 = vpack.c.b16 %v713, %v711
      %v774 = vpack.c.b16 %v714, %v712
      %v775 = vpack.c.b16 %v717, %v715
      %v776 = vpack.c.b16 %v718, %v716
      %v777 = vpack.c.b16 %v721, %v719
      %v778 = vpack.c.b16 %v722, %v720
      %v779 = vpack.c.b16 %v725, %v723
      %v780 = vpack.c.b16 %v726, %v724
      %v781 = vpack.c.b16 %v729, %v727
      %v782 = vpack.c.b16 %v730, %v728
      %v783 = vpack.c.b16 %v733, %v731
      %v784 = vpack.c.b16 %v734, %v732
      %v785 = vpack.c.b16 %v737, %v735
      %v786 = vpack.c.b16 %v738, %v736
      %v787 = vpack.c.b16 %v741, %v739
      %v788 = vpack.c.b16 %v742, %v740
      %v789 = vpack.c.b16 %v745, %v743
      %v790 = vpack.c.b16 %v746, %v744
      %v791 = vpack.c.b16 %v749, %v747
      %v792 = vpack.c.b16 %v750, %v748
      %v793 = vpack.c.b16 %v753, %v751
      %v794 = vpack.c.b16 %v754, %v752
      %v795 = vpack.c.b16 %v757, %v755
      %v796 = vpack.c.b16 %v758, %v756
      %v797 = vpack.c.b16 %v761, %v759
      %v798 = vpack.c.b16 %v762, %v760
      %v799 = vpack.c.b16 %v765, %v763
      %v800 = vpack.c.b16 %v766, %v764
      %v801 = vpack.c.b16 %v769, %v767
      %v802 = vpack.c.b16 %v770, %v768
      %835 = vmatpush.bf16.msra.mxu0 %v785
      %836 = vmatpush.bf16.msra.mxu0 %v783
      %837 = vmatpush.bf16.msra.mxu0 %v781
      %838 = vmatpush.bf16.msra.mxu0 %v779
      %839 = vmatpush.bf16.msra.mxu0 %v777
      %840 = vmatpush.bf16.msra.mxu0 %v775
      %841 = vmatpush.bf16.msra.mxu0 %v773
      %842 = vmatpush.bf16.msra.mxu0 %v771
      %843 = vmatmul.bf16.gmra.mxu0 %v499
      %v844 = vpop.f32.mrf.mxu0
      %v845 = vadd.f32 %v669, %v844
      %v846 = vpop.f32.mrf.mxu0
      %v847 = vadd.f32 %v669, %v846
      %848 = vmatmul.bf16.gmra.mxu0 %v501
      %v849 = vpop.f32.mrf.mxu0
      %v850 = vadd.f32 %v669, %v849
      %v851 = vpop.f32.mrf.mxu0
      %v852 = vadd.f32 %v669, %v851
      %853 = vmatmul.bf16.gmra.mxu0 %v503
      %v854 = vpop.f32.mrf.mxu0
      %v855 = vadd.f32 %v669, %v854
      %v856 = vpop.f32.mrf.mxu0
      %v857 = vadd.f32 %v669, %v856
      %858 = vdwg.mxu0
      %859 = vmatpush.bf16.msra.mxu0 %v801
      %860 = vmatpush.bf16.msra.mxu0 %v799
      %861 = vmatpush.bf16.msra.mxu0 %v797
      %862 = vmatpush.bf16.msra.mxu0 %v795
      %863 = vmatpush.bf16.msra.mxu0 %v793
      %864 = vmatpush.bf16.msra.mxu0 %v791
      %865 = vmatpush.bf16.msra.mxu0 %v789
      %866 = vmatpush.bf16.msra.mxu0 %v787
      %867 = vmatmul.bf16.gmra.mxu0 %v500
      %v868 = vpop.f32.mrf.mxu0
      %v869 = vadd.f32 %v845, %v868
      %v870 = vpop.f32.mrf.mxu0
      %v871 = vadd.f32 %v847, %v870
      %872 = vmatmul.bf16.gmra.mxu0 %v502
      %v873 = vpop.f32.mrf.mxu0
      %v874 = vadd.f32 %v850, %v873
      %v875 = vpop.f32.mrf.mxu0
      %v876 = vadd.f32 %v852, %v875
      %877 = vmatmul.bf16.gmra.mxu0 %v504
      %v878 = vpop.f32.mrf.mxu0
      %v879 = vadd.f32 %v855, %v878
      %v880 = vpop.f32.mrf.mxu0
      %v881 = vadd.f32 %v857, %v880
      %882 = vdwg.mxu0
      %883 = vmatpush.bf16.msra.mxu0 %v786
      %884 = vmatpush.bf16.msra.mxu0 %v784
      %885 = vmatpush.bf16.msra.mxu0 %v782
      %886 = vmatpush.bf16.msra.mxu0 %v780
      %887 = vmatpush.bf16.msra.mxu0 %v778
      %888 = vmatpush.bf16.msra.mxu0 %v776
      %889 = vmatpush.bf16.msra.mxu0 %v774
      %890 = vmatpush.bf16.msra.mxu0 %v772
      %891 = vmatmul.bf16.gmra.mxu0 %v499
      %v892 = vpop.f32.mrf.mxu0
      %v893 = vadd.f32 %v670, %v892
      %v894 = vpop.f32.mrf.mxu0
      %v895 = vadd.f32 %v670, %v894
      %896 = vmatmul.bf16.gmra.mxu0 %v501
      %v897 = vpop.f32.mrf.mxu0
      %v898 = vadd.f32 %v670, %v897
      %v899 = vpop.f32.mrf.mxu0
      %v900 = vadd.f32 %v670, %v899
      %901 = vmatmul.bf16.gmra.mxu0 %v503
      %v902 = vpop.f32.mrf.mxu0
      %v903 = vadd.f32 %v670, %v902
      %v904 = vpop.f32.mrf.mxu0
      %v905 = vadd.f32 %v670, %v904
      %906 = vdwg.mxu0
      %907 = vmatpush.bf16.msra.mxu0 %v802
      %908 = vmatpush.bf16.msra.mxu0 %v800
      %909 = vmatpush.bf16.msra.mxu0 %v798
      %910 = vmatpush.bf16.msra.mxu0 %v796
      %911 = vmatpush.bf16.msra.mxu0 %v794
      %912 = vmatpush.bf16.msra.mxu0 %v792
      %913 = vmatpush.bf16.msra.mxu0 %v790
      %914 = vmatpush.bf16.msra.mxu0 %v788
      %915 = vmatmul.bf16.gmra.mxu0 %v500
      %v916 = vpop.f32.mrf.mxu0
      %v917 = vadd.f32 %v893, %v916
      %v918 = vpop.f32.mrf.mxu0
      %v919 = vadd.f32 %v895, %v918
      %920 = vmatmul.bf16.gmra.mxu0 %v502
      %v921 = vpop.f32.mrf.mxu0
      %v922 = vadd.f32 %v898, %v921
      %v923 = vpop.f32.mrf.mxu0
      %v924 = vadd.f32 %v900, %v923
      %925 = vmatmul.bf16.gmra.mxu0 %v504
      %v926 = vpop.f32.mrf.mxu0
      %v927 = vadd.f32 %v903, %v926
      %v928 = vpop.f32.mrf.mxu0
      %v929 = vadd.f32 %v905, %v928
      %930 = vdwg.mxu0
      %s931 = scalar_lea.vmem %s3, 256
      %v932 = vld [vmem:[%s931] sm:$0xff]
      %v933 = vld [vmem:[%s931 + $0x8] sm:$0xff]
      %v934 = vld [vmem:[%s931 + $0x10] sm:$0xff]
      %v935 = vld [vmem:[%s931 + $0x18] sm:$0xff]
      %v936 = vld [vmem:[%s931 + $0x20] sm:$0xff]
      %v937 = vld [vmem:[%s931 + $0x28] sm:$0xff]
      %v938 = vld [vmem:[%s931 + $0x30] sm:$0xff]
      %v939 = vld [vmem:[%s931 + $0x38] sm:$0xff]
      %v940 = vld [vmem:[%s931 + $0x40] sm:$0xff]
      %v941 = vld [vmem:[%s931 + $0x48] sm:$0xff]
      %v942 = vld [vmem:[%s931 + $0x50] sm:$0xff]
      %v943 = vld [vmem:[%s931 + $0x58] sm:$0xff]
      %v944 = vld [vmem:[%s931 + $0x60] sm:$0xff]
      %v945 = vld [vmem:[%s931 + $0x68] sm:$0xff]
      %v946 = vld [vmem:[%s931 + $0x70] sm:$0xff]
      %v947 = vld [vmem:[%s931 + $0x78] sm:$0xff]
      %v948 = vld [vmem:[%s931 + $0x80] sm:$0xff]
      %v949 = vld [vmem:[%s931 + $0x88] sm:$0xff]
      %v950 = vld [vmem:[%s931 + $0x90] sm:$0xff]
      %v951 = vld [vmem:[%s931 + $0x98] sm:$0xff]
      %v952 = vld [vmem:[%s931 + $0xa0] sm:$0xff]
      %v953 = vld [vmem:[%s931 + $0xa8] sm:$0xff]
      %v954 = vld [vmem:[%s931 + $0xb0] sm:$0xff]
      %v955 = vld [vmem:[%s931 + $0xb8] sm:$0xff]
      %v956 = vld [vmem:[%s931 + $0xc0] sm:$0xff]
      %v957 = vld [vmem:[%s931 + $0xc8] sm:$0xff]
      %v958 = vld [vmem:[%s931 + $0xd0] sm:$0xff]
      %v959 = vld [vmem:[%s931 + $0xd8] sm:$0xff]
      %v960 = vld [vmem:[%s931 + $0xe0] sm:$0xff]
      %v961 = vld [vmem:[%s931 + $0xe8] sm:$0xff]
      %v962 = vld [vmem:[%s931 + $0xf0] sm:$0xff]
      %v963 = vld [vmem:[%s931 + $0xf8] sm:$0xff]
      %v996 = vunpack.c.l.b16 %v932
      %v997 = vunpack.c.h.b16 %v932
      %v998 = vunpack.c.l.b16 %v933
      %v999 = vunpack.c.h.b16 %v933
      %v1000 = vunpack.c.l.b16 %v934
      %v1001 = vunpack.c.h.b16 %v934
      %v1002 = vunpack.c.l.b16 %v935
      %v1003 = vunpack.c.h.b16 %v935
      %v1004 = vunpack.c.l.b16 %v936
      %v1005 = vunpack.c.h.b16 %v936
      %v1006 = vunpack.c.l.b16 %v937
      %v1007 = vunpack.c.h.b16 %v937
      %v1008 = vunpack.c.l.b16 %v938
      %v1009 = vunpack.c.h.b16 %v938
      %v1010 = vunpack.c.l.b16 %v939
      %v1011 = vunpack.c.h.b16 %v939
      %v1012 = vunpack.c.l.b16 %v940
      %v1013 = vunpack.c.h.b16 %v940
      %v1014 = vunpack.c.l.b16 %v941
      %v1015 = vunpack.c.h.b16 %v941
      %v1016 = vunpack.c.l.b16 %v942
      %v1017 = vunpack.c.h.b16 %v942
      %v1018 = vunpack.c.l.b16 %v943
      %v1019 = vunpack.c.h.b16 %v943
      %v1020 = vunpack.c.l.b16 %v944
      %v1021 = vunpack.c.h.b16 %v944
      %v1022 = vunpack.c.l.b16 %v945
      %v1023 = vunpack.c.h.b16 %v945
      %v1024 = vunpack.c.l.b16 %v946
      %v1025 = vunpack.c.h.b16 %v946
      %v1026 = vunpack.c.l.b16 %v947
      %v1027 = vunpack.c.h.b16 %v947
      %v1028 = vunpack.c.l.b16 %v948
      %v1029 = vunpack.c.h.b16 %v948
      %v1030 = vunpack.c.l.b16 %v949
      %v1031 = vunpack.c.h.b16 %v949
      %v1032 = vunpack.c.l.b16 %v950
      %v1033 = vunpack.c.h.b16 %v950
      %v1034 = vunpack.c.l.b16 %v951
      %v1035 = vunpack.c.h.b16 %v951
      %v1036 = vunpack.c.l.b16 %v952
      %v1037 = vunpack.c.h.b16 %v952
      %v1038 = vunpack.c.l.b16 %v953
      %v1039 = vunpack.c.h.b16 %v953
      %v1040 = vunpack.c.l.b16 %v954
      %v1041 = vunpack.c.h.b16 %v954
      %v1042 = vunpack.c.l.b16 %v955
      %v1043 = vunpack.c.h.b16 %v955
      %v1044 = vunpack.c.l.b16 %v956
      %v1045 = vunpack.c.h.b16 %v956
      %v1046 = vunpack.c.l.b16 %v957
      %v1047 = vunpack.c.h.b16 %v957
      %v1048 = vunpack.c.l.b16 %v958
      %v1049 = vunpack.c.h.b16 %v958
      %v1050 = vunpack.c.l.b16 %v959
      %v1051 = vunpack.c.h.b16 %v959
      %v1052 = vunpack.c.l.b16 %v960
      %v1053 = vunpack.c.h.b16 %v960
      %v1054 = vunpack.c.l.b16 %v961
      %v1055 = vunpack.c.h.b16 %v961
      %v1056 = vunpack.c.l.b16 %v962
      %v1057 = vunpack.c.h.b16 %v962
      %v1058 = vunpack.c.l.b16 %v963
      %v1059 = vunpack.c.h.b16 %v963
      %v1060 = vpack.c.b16 %v998, %v996
      %v1061 = vpack.c.b16 %v999, %v997
      %v1062 = vpack.c.b16 %v1002, %v1000
      %v1063 = vpack.c.b16 %v1003, %v1001
      %v1064 = vpack.c.b16 %v1006, %v1004
      %v1065 = vpack.c.b16 %v1007, %v1005
      %v1066 = vpack.c.b16 %v1010, %v1008
      %v1067 = vpack.c.b16 %v1011, %v1009
      %v1068 = vpack.c.b16 %v1014, %v1012
      %v1069 = vpack.c.b16 %v1015, %v1013
      %v1070 = vpack.c.b16 %v1018, %v1016
      %v1071 = vpack.c.b16 %v1019, %v1017
      %v1072 = vpack.c.b16 %v1022, %v1020
      %v1073 = vpack.c.b16 %v1023, %v1021
      %v1074 = vpack.c.b16 %v1026, %v1024
      %v1075 = vpack.c.b16 %v1027, %v1025
      %v1076 = vpack.c.b16 %v1030, %v1028
      %v1077 = vpack.c.b16 %v1031, %v1029
      %v1078 = vpack.c.b16 %v1034, %v1032
      %v1079 = vpack.c.b16 %v1035, %v1033
      %v1080 = vpack.c.b16 %v1038, %v1036
      %v1081 = vpack.c.b16 %v1039, %v1037
      %v1082 = vpack.c.b16 %v1042, %v1040
      %v1083 = vpack.c.b16 %v1043, %v1041
      %v1084 = vpack.c.b16 %v1046, %v1044
      %v1085 = vpack.c.b16 %v1047, %v1045
      %v1086 = vpack.c.b16 %v1050, %v1048
      %v1087 = vpack.c.b16 %v1051, %v1049
      %v1088 = vpack.c.b16 %v1054, %v1052
      %v1089 = vpack.c.b16 %v1055, %v1053
      %v1090 = vpack.c.b16 %v1058, %v1056
      %v1091 = vpack.c.b16 %v1059, %v1057
      %1124 = vmatpush.bf16.msra.mxu0 %v1074
      %1125 = vmatpush.bf16.msra.mxu0 %v1072
      %1126 = vmatpush.bf16.msra.mxu0 %v1070
      %1127 = vmatpush.bf16.msra.mxu0 %v1068
      %1128 = vmatpush.bf16.msra.mxu0 %v1066
      %1129 = vmatpush.bf16.msra.mxu0 %v1064
      %1130 = vmatpush.bf16.msra.mxu0 %v1062
      %1131 = vmatpush.bf16.msra.mxu0 %v1060
      %1132 = vmatmul.bf16.gmra.mxu0 %v540
      %v1133 = vpop.f32.mrf.mxu0
      %v1134 = vadd.f32 0.0, %v1133
      %v1135 = vpop.f32.mrf.mxu0
      %v1136 = vadd.f32 0.0, %v1135
      %1137 = vmatmul.bf16.gmra.mxu0 %v560
      %v1138 = vpop.f32.mrf.mxu0
      %v1139 = vadd.f32 0.0, %v1138
      %v1140 = vpop.f32.mrf.mxu0
      %v1141 = vadd.f32 0.0, %v1140
      %1142 = vmatmul.bf16.gmra.mxu0 %v575
      %v1143 = vpop.f32.mrf.mxu0
      %v1144 = vadd.f32 0.0, %v1143
      %v1145 = vpop.f32.mrf.mxu0
      %v1146 = vadd.f32 0.0, %v1145
      %1147 = vdwg.mxu0
      %1148 = vmatpush.bf16.msra.mxu0 %v1090
      %1149 = vmatpush.bf16.msra.mxu0 %v1088
      %1150 = vmatpush.bf16.msra.mxu0 %v1086
      %1151 = vmatpush.bf16.msra.mxu0 %v1084
      %1152 = vmatpush.bf16.msra.mxu0 %v1082
      %1153 = vmatpush.bf16.msra.mxu0 %v1080
      %1154 = vmatpush.bf16.msra.mxu0 %v1078
      %1155 = vmatpush.bf16.msra.mxu0 %v1076
      %1156 = vmatmul.bf16.gmra.mxu0 %v552
      %v1157 = vpop.f32.mrf.mxu0
      %v1158 = vadd.f32 %v1134, %v1157
      %v1159 = vpop.f32.mrf.mxu0
      %v1160 = vadd.f32 %v1136, %v1159
      %1161 = vmatmul.bf16.gmra.mxu0 %v568
      %v1162 = vpop.f32.mrf.mxu0
      %v1163 = vadd.f32 %v1139, %v1162
      %v1164 = vpop.f32.mrf.mxu0
      %v1165 = vadd.f32 %v1141, %v1164
      %1166 = vmatmul.bf16.gmra.mxu0 %v582
      %v1167 = vpop.f32.mrf.mxu0
      %v1168 = vadd.f32 %v1144, %v1167
      %v1169 = vpop.f32.mrf.mxu0
      %v1170 = vadd.f32 %v1146, %v1169
      %1171 = vdwg.mxu0
      %1172 = vmatpush.bf16.msra.mxu0 %v1075
      %1173 = vmatpush.bf16.msra.mxu0 %v1073
      %1174 = vmatpush.bf16.msra.mxu0 %v1071
      %1175 = vmatpush.bf16.msra.mxu0 %v1069
      %1176 = vmatpush.bf16.msra.mxu0 %v1067
      %1177 = vmatpush.bf16.msra.mxu0 %v1065
      %1178 = vmatpush.bf16.msra.mxu0 %v1063
      %1179 = vmatpush.bf16.msra.mxu0 %v1061
      %1180 = vmatmul.bf16.gmra.mxu0 %v540
      %v1181 = vpop.f32.mrf.mxu0
      %v1182 = vadd.f32 0.0, %v1181
      %v1183 = vpop.f32.mrf.mxu0
      %v1184 = vadd.f32 0.0, %v1183
      %1185 = vmatmul.bf16.gmra.mxu0 %v560
      %v1186 = vpop.f32.mrf.mxu0
      %v1187 = vadd.f32 0.0, %v1186
      %v1188 = vpop.f32.mrf.mxu0
      %v1189 = vadd.f32 0.0, %v1188
      %1190 = vmatmul.bf16.gmra.mxu0 %v575
      %v1191 = vpop.f32.mrf.mxu0
      %v1192 = vadd.f32 0.0, %v1191
      %v1193 = vpop.f32.mrf.mxu0
      %v1194 = vadd.f32 0.0, %v1193
      %1195 = vdwg.mxu0
      %1196 = vmatpush.bf16.msra.mxu0 %v1091
      %1197 = vmatpush.bf16.msra.mxu0 %v1089
      %1198 = vmatpush.bf16.msra.mxu0 %v1087
      %1199 = vmatpush.bf16.msra.mxu0 %v1085
      %1200 = vmatpush.bf16.msra.mxu0 %v1083
      %1201 = vmatpush.bf16.msra.mxu0 %v1081
      %1202 = vmatpush.bf16.msra.mxu0 %v1079
      %1203 = vmatpush.bf16.msra.mxu0 %v1077
      %1204 = vmatmul.bf16.gmra.mxu0 %v552
      %v1205 = vpop.f32.mrf.mxu0
      %v1206 = vadd.f32 %v1182, %v1205
      %v1207 = vpop.f32.mrf.mxu0
      %v1208 = vadd.f32 %v1184, %v1207
      %1209 = vmatmul.bf16.gmra.mxu0 %v568
      %v1210 = vpop.f32.mrf.mxu0
      %v1211 = vadd.f32 %v1187, %v1210
      %v1212 = vpop.f32.mrf.mxu0
      %v1213 = vadd.f32 %v1189, %v1212
      %1214 = vmatmul.bf16.gmra.mxu0 %v582
      %v1215 = vpop.f32.mrf.mxu0
      %v1216 = vadd.f32 %v1192, %v1215
      %v1217 = vpop.f32.mrf.mxu0
      %v1218 = vadd.f32 %v1194, %v1217
      %1219 = vdwg.mxu0
      %v1220 = vadd.f32 %v869, %v1158
      %v1221 = vadd.f32 %v917, %v1206
      %v1222 = vadd.f32 %v871, %v1160
      %v1223 = vadd.f32 %v919, %v1208
      %v1224 = vadd.f32 %v874, %v1163
      %v1225 = vadd.f32 %v922, %v1211
      %v1226 = vadd.f32 %v876, %v1165
      %v1227 = vadd.f32 %v924, %v1213
      %v1228 = vadd.f32 %v879, %v1168
      %v1229 = vadd.f32 %v927, %v1216
      %v1230 = vadd.f32 %v881, %v1170
      %v1231 = vadd.f32 %v929, %v1218
      %s1232 = scalar_lea.vmem %s3, 512
      %v1233 = vld [vmem:[%s1232] sm:$0xff]
      %v1234 = vld [vmem:[%s1232 + $0x8] sm:$0xff]
      %v1235 = vld [vmem:[%s1232 + $0x10] sm:$0xff]
      %v1236 = vld [vmem:[%s1232 + $0x18] sm:$0xff]
      %v1237 = vld [vmem:[%s1232 + $0x20] sm:$0xff]
      %v1238 = vld [vmem:[%s1232 + $0x28] sm:$0xff]
      %v1239 = vld [vmem:[%s1232 + $0x30] sm:$0xff]
      %v1240 = vld [vmem:[%s1232 + $0x38] sm:$0xff]
      %v1241 = vld [vmem:[%s1232 + $0x40] sm:$0xff]
      %v1242 = vld [vmem:[%s1232 + $0x48] sm:$0xff]
      %v1243 = vld [vmem:[%s1232 + $0x50] sm:$0xff]
      %v1244 = vld [vmem:[%s1232 + $0x58] sm:$0xff]
      %v1245 = vld [vmem:[%s1232 + $0x60] sm:$0xff]
      %v1246 = vld [vmem:[%s1232 + $0x68] sm:$0xff]
      %v1247 = vld [vmem:[%s1232 + $0x70] sm:$0xff]
      %v1248 = vld [vmem:[%s1232 + $0x78] sm:$0xff]
      %v1249 = vld [vmem:[%s1232 + $0x80] sm:$0xff]
      %v1250 = vld [vmem:[%s1232 + $0x88] sm:$0xff]
      %v1251 = vld [vmem:[%s1232 + $0x90] sm:$0xff]
      %v1252 = vld [vmem:[%s1232 + $0x98] sm:$0xff]
      %v1253 = vld [vmem:[%s1232 + $0xa0] sm:$0xff]
      %v1254 = vld [vmem:[%s1232 + $0xa8] sm:$0xff]
      %v1255 = vld [vmem:[%s1232 + $0xb0] sm:$0xff]
      %v1256 = vld [vmem:[%s1232 + $0xb8] sm:$0xff]
      %v1257 = vld [vmem:[%s1232 + $0xc0] sm:$0xff]
      %v1258 = vld [vmem:[%s1232 + $0xc8] sm:$0xff]
      %v1259 = vld [vmem:[%s1232 + $0xd0] sm:$0xff]
      %v1260 = vld [vmem:[%s1232 + $0xd8] sm:$0xff]
      %v1261 = vld [vmem:[%s1232 + $0xe0] sm:$0xff]
      %v1262 = vld [vmem:[%s1232 + $0xe8] sm:$0xff]
      %v1263 = vld [vmem:[%s1232 + $0xf0] sm:$0xff]
      %v1264 = vld [vmem:[%s1232 + $0xf8] sm:$0xff]
      %v1297 = vunpack.c.l.b16 %v1233
      %v1298 = vunpack.c.h.b16 %v1233
      %v1299 = vunpack.c.l.b16 %v1234
      %v1300 = vunpack.c.h.b16 %v1234
      %v1301 = vunpack.c.l.b16 %v1235
      %v1302 = vunpack.c.h.b16 %v1235
      %v1303 = vunpack.c.l.b16 %v1236
      %v1304 = vunpack.c.h.b16 %v1236
      %v1305 = vunpack.c.l.b16 %v1237
      %v1306 = vunpack.c.h.b16 %v1237
      %v1307 = vunpack.c.l.b16 %v1238
      %v1308 = vunpack.c.h.b16 %v1238
      %v1309 = vunpack.c.l.b16 %v1239
      %v1310 = vunpack.c.h.b16 %v1239
      %v1311 = vunpack.c.l.b16 %v1240
      %v1312 = vunpack.c.h.b16 %v1240
      %v1313 = vunpack.c.l.b16 %v1241
      %v1314 = vunpack.c.h.b16 %v1241
      %v1315 = vunpack.c.l.b16 %v1242
      %v1316 = vunpack.c.h.b16 %v1242
      %v1317 = vunpack.c.l.b16 %v1243
      %v1318 = vunpack.c.h.b16 %v1243
      %v1319 = vunpack.c.l.b16 %v1244
      %v1320 = vunpack.c.h.b16 %v1244
      %v1321 = vunpack.c.l.b16 %v1245
      %v1322 = vunpack.c.h.b16 %v1245
      %v1323 = vunpack.c.l.b16 %v1246
      %v1324 = vunpack.c.h.b16 %v1246
      %v1325 = vunpack.c.l.b16 %v1247
      %v1326 = vunpack.c.h.b16 %v1247
      %v1327 = vunpack.c.l.b16 %v1248
      %v1328 = vunpack.c.h.b16 %v1248
      %v1329 = vunpack.c.l.b16 %v1249
      %v1330 = vunpack.c.h.b16 %v1249
      %v1331 = vunpack.c.l.b16 %v1250
      %v1332 = vunpack.c.h.b16 %v1250
      %v1333 = vunpack.c.l.b16 %v1251
      %v1334 = vunpack.c.h.b16 %v1251
      %v1335 = vunpack.c.l.b16 %v1252
      %v1336 = vunpack.c.h.b16 %v1252
      %v1337 = vunpack.c.l.b16 %v1253
      %v1338 = vunpack.c.h.b16 %v1253
      %v1339 = vunpack.c.l.b16 %v1254
      %v1340 = vunpack.c.h.b16 %v1254
      %v1341 = vunpack.c.l.b16 %v1255
      %v1342 = vunpack.c.h.b16 %v1255
      %v1343 = vunpack.c.l.b16 %v1256
      %v1344 = vunpack.c.h.b16 %v1256
      %v1345 = vunpack.c.l.b16 %v1257
      %v1346 = vunpack.c.h.b16 %v1257
      %v1347 = vunpack.c.l.b16 %v1258
      %v1348 = vunpack.c.h.b16 %v1258
      %v1349 = vunpack.c.l.b16 %v1259
      %v1350 = vunpack.c.h.b16 %v1259
      %v1351 = vunpack.c.l.b16 %v1260
      %v1352 = vunpack.c.h.b16 %v1260
      %v1353 = vunpack.c.l.b16 %v1261
      %v1354 = vunpack.c.h.b16 %v1261
      %v1355 = vunpack.c.l.b16 %v1262
      %v1356 = vunpack.c.h.b16 %v1262
      %v1357 = vunpack.c.l.b16 %v1263
      %v1358 = vunpack.c.h.b16 %v1263
      %v1359 = vunpack.c.l.b16 %v1264
      %v1360 = vunpack.c.h.b16 %v1264
      %v1361 = vpack.c.b16 %v1299, %v1297
      %v1362 = vpack.c.b16 %v1300, %v1298
      %v1363 = vpack.c.b16 %v1303, %v1301
      %v1364 = vpack.c.b16 %v1304, %v1302
      %v1365 = vpack.c.b16 %v1307, %v1305
      %v1366 = vpack.c.b16 %v1308, %v1306
      %v1367 = vpack.c.b16 %v1311, %v1309
      %v1368 = vpack.c.b16 %v1312, %v1310
      %v1369 = vpack.c.b16 %v1315, %v1313
      %v1370 = vpack.c.b16 %v1316, %v1314
      %v1371 = vpack.c.b16 %v1319, %v1317
      %v1372 = vpack.c.b16 %v1320, %v1318
      %v1373 = vpack.c.b16 %v1323, %v1321
      %v1374 = vpack.c.b16 %v1324, %v1322
      %v1375 = vpack.c.b16 %v1327, %v1325
      %v1376 = vpack.c.b16 %v1328, %v1326
      %v1377 = vpack.c.b16 %v1331, %v1329
      %v1378 = vpack.c.b16 %v1332, %v1330
      %v1379 = vpack.c.b16 %v1335, %v1333
      %v1380 = vpack.c.b16 %v1336, %v1334
      %v1381 = vpack.c.b16 %v1339, %v1337
      %v1382 = vpack.c.b16 %v1340, %v1338
      %v1383 = vpack.c.b16 %v1343, %v1341
      %v1384 = vpack.c.b16 %v1344, %v1342
      %v1385 = vpack.c.b16 %v1347, %v1345
      %v1386 = vpack.c.b16 %v1348, %v1346
      %v1387 = vpack.c.b16 %v1351, %v1349
      %v1388 = vpack.c.b16 %v1352, %v1350
      %v1389 = vpack.c.b16 %v1355, %v1353
      %v1390 = vpack.c.b16 %v1356, %v1354
      %v1391 = vpack.c.b16 %v1359, %v1357
      %v1392 = vpack.c.b16 %v1360, %v1358
      %1425 = vmatpush.bf16.msra.mxu0 %v1375
      %1426 = vmatpush.bf16.msra.mxu0 %v1373
      %1427 = vmatpush.bf16.msra.mxu0 %v1371
      %1428 = vmatpush.bf16.msra.mxu0 %v1369
      %1429 = vmatpush.bf16.msra.mxu0 %v1367
      %1430 = vmatpush.bf16.msra.mxu0 %v1365
      %1431 = vmatpush.bf16.msra.mxu0 %v1363
      %1432 = vmatpush.bf16.msra.mxu0 %v1361
      %1433 = vmatmul.bf16.gmra.mxu0 %v608
      %v1434 = vpop.f32.mrf.mxu0
      %v1435 = vadd.f32 0.0, %v1434
      %v1436 = vpop.f32.mrf.mxu0
      %v1437 = vadd.f32 0.0, %v1436
      %1438 = vmatmul.bf16.gmra.mxu0 %v613
      %v1439 = vpop.f32.mrf.mxu0
      %v1440 = vadd.f32 0.0, %v1439
      %v1441 = vpop.f32.mrf.mxu0
      %v1442 = vadd.f32 0.0, %v1441
      %1443 = vmatmul.bf16.gmra.mxu0 %v617
      %v1444 = vpop.f32.mrf.mxu0
      %v1445 = vadd.f32 0.0, %v1444
      %v1446 = vpop.f32.mrf.mxu0
      %v1447 = vadd.f32 0.0, %v1446
      %1448 = vdwg.mxu0
      %1449 = vmatpush.bf16.msra.mxu0 %v1391
      %1450 = vmatpush.bf16.msra.mxu0 %v1389
      %1451 = vmatpush.bf16.msra.mxu0 %v1387
      %1452 = vmatpush.bf16.msra.mxu0 %v1385
      %1453 = vmatpush.bf16.msra.mxu0 %v1383
      %1454 = vmatpush.bf16.msra.mxu0 %v1381
      %1455 = vmatpush.bf16.msra.mxu0 %v1379
      %1456 = vmatpush.bf16.msra.mxu0 %v1377
      %1457 = vmatmul.bf16.gmra.mxu0 %v611
      %v1458 = vpop.f32.mrf.mxu0
      %v1459 = vadd.f32 %v1435, %v1458
      %v1460 = vpop.f32.mrf.mxu0
      %v1461 = vadd.f32 %v1437, %v1460
      %1462 = vmatmul.bf16.gmra.mxu0 %v615
      %v1463 = vpop.f32.mrf.mxu0
      %v1464 = vadd.f32 %v1440, %v1463
      %v1465 = vpop.f32.mrf.mxu0
      %v1466 = vadd.f32 %v1442, %v1465
      %1467 = vmatmul.bf16.gmra.mxu0 %v619
      %v1468 = vpop.f32.mrf.mxu0
      %v1469 = vadd.f32 %v1445, %v1468
      %v1470 = vpop.f32.mrf.mxu0
      %v1471 = vadd.f32 %v1447, %v1470
      %1472 = vdwg.mxu0
      %1473 = vmatpush.bf16.msra.mxu0 %v1376
      %1474 = vmatpush.bf16.msra.mxu0 %v1374
      %1475 = vmatpush.bf16.msra.mxu0 %v1372
      %1476 = vmatpush.bf16.msra.mxu0 %v1370
      %1477 = vmatpush.bf16.msra.mxu0 %v1368
      %1478 = vmatpush.bf16.msra.mxu0 %v1366
      %1479 = vmatpush.bf16.msra.mxu0 %v1364
      %1480 = vmatpush.bf16.msra.mxu0 %v1362
      %1481 = vmatmul.bf16.gmra.mxu0 %v608
      %v1482 = vpop.f32.mrf.mxu0
      %v1483 = vadd.f32 0.0, %v1482
      %v1484 = vpop.f32.mrf.mxu0
      %v1485 = vadd.f32 0.0, %v1484
      %1486 = vmatmul.bf16.gmra.mxu0 %v613
      %v1487 = vpop.f32.mrf.mxu0
      %v1488 = vadd.f32 0.0, %v1487
      %v1489 = vpop.f32.mrf.mxu0
      %v1490 = vadd.f32 0.0, %v1489
      %1491 = vmatmul.bf16.gmra.mxu0 %v617
      %v1492 = vpop.f32.mrf.mxu0
      %v1493 = vadd.f32 0.0, %v1492
      %v1494 = vpop.f32.mrf.mxu0
      %v1495 = vadd.f32 0.0, %v1494
      %1496 = vdwg.mxu0
      %1497 = vmatpush.bf16.msra.mxu0 %v1392
      %1498 = vmatpush.bf16.msra.mxu0 %v1390
      %1499 = vmatpush.bf16.msra.mxu0 %v1388
      %1500 = vmatpush.bf16.msra.mxu0 %v1386
      %1501 = vmatpush.bf16.msra.mxu0 %v1384
      %1502 = vmatpush.bf16.msra.mxu0 %v1382
      %1503 = vmatpush.bf16.msra.mxu0 %v1380
      %1504 = vmatpush.bf16.msra.mxu0 %v1378
      %1505 = vmatmul.bf16.gmra.mxu0 %v611
      %v1506 = vpop.f32.mrf.mxu0
      %v1507 = vadd.f32 %v1483, %v1506
      %v1508 = vpop.f32.mrf.mxu0
      %v1509 = vadd.f32 %v1485, %v1508
      %1510 = vmatmul.bf16.gmra.mxu0 %v615
      %v1511 = vpop.f32.mrf.mxu0
      %v1512 = vadd.f32 %v1488, %v1511
      %v1513 = vpop.f32.mrf.mxu0
      %v1514 = vadd.f32 %v1490, %v1513
      %1515 = vmatmul.bf16.gmra.mxu0 %v619
      %v1516 = vpop.f32.mrf.mxu0
      %v1517 = vadd.f32 %v1493, %v1516
      %v1518 = vpop.f32.mrf.mxu0
      %v1519 = vadd.f32 %v1495, %v1518
      %1520 = vdwg.mxu0
      %v1521 = vadd.f32 %v1220, %v1459
      %v1522 = vadd.f32 %v1221, %v1507
      %v1523 = vadd.f32 %v1222, %v1461
      %v1524 = vadd.f32 %v1223, %v1509
      %v1525 = vadd.f32 %v1224, %v1464
      %v1526 = vadd.f32 %v1225, %v1512
      %v1527 = vadd.f32 %v1226, %v1466
      %v1528 = vadd.f32 %v1227, %v1514
      %v1529 = vadd.f32 %v1228, %v1469
      %v1530 = vadd.f32 %v1229, %v1517
      %v1531 = vadd.f32 %v1230, %v1471
      %v1532 = vadd.f32 %v1231, %v1519
      %s1533 = scalar_lea.vmem %s3, 768
      %v1534 = vld [vmem:[%s1533] sm:$0xff]
      %v1535 = vld [vmem:[%s1533 + $0x8] sm:$0xff]
      %v1536 = vld [vmem:[%s1533 + $0x10] sm:$0xff]
      %v1537 = vld [vmem:[%s1533 + $0x18] sm:$0xff]
      %v1538 = vld [vmem:[%s1533 + $0x20] sm:$0xff]
      %v1539 = vld [vmem:[%s1533 + $0x28] sm:$0xff]
      %v1540 = vld [vmem:[%s1533 + $0x30] sm:$0xff]
      %v1541 = vld [vmem:[%s1533 + $0x38] sm:$0xff]
      %v1542 = vld [vmem:[%s1533 + $0x40] sm:$0xff]
      %v1543 = vld [vmem:[%s1533 + $0x48] sm:$0xff]
      %v1544 = vld [vmem:[%s1533 + $0x50] sm:$0xff]
      %v1545 = vld [vmem:[%s1533 + $0x58] sm:$0xff]
      %v1546 = vld [vmem:[%s1533 + $0x60] sm:$0xff]
      %v1547 = vld [vmem:[%s1533 + $0x68] sm:$0xff]
      %v1548 = vld [vmem:[%s1533 + $0x70] sm:$0xff]
      %v1549 = vld [vmem:[%s1533 + $0x78] sm:$0xff]
      %v1550 = vld [vmem:[%s1533 + $0x80] sm:$0xff]
      %v1551 = vld [vmem:[%s1533 + $0x88] sm:$0xff]
      %v1552 = vld [vmem:[%s1533 + $0x90] sm:$0xff]
      %v1553 = vld [vmem:[%s1533 + $0x98] sm:$0xff]
      %v1554 = vld [vmem:[%s1533 + $0xa0] sm:$0xff]
      %v1555 = vld [vmem:[%s1533 + $0xa8] sm:$0xff]
      %v1556 = vld [vmem:[%s1533 + $0xb0] sm:$0xff]
      %v1557 = vld [vmem:[%s1533 + $0xb8] sm:$0xff]
      %v1558 = vld [vmem:[%s1533 + $0xc0] sm:$0xff]
      %v1559 = vld [vmem:[%s1533 + $0xc8] sm:$0xff]
      %v1560 = vld [vmem:[%s1533 + $0xd0] sm:$0xff]
      %v1561 = vld [vmem:[%s1533 + $0xd8] sm:$0xff]
      %v1562 = vld [vmem:[%s1533 + $0xe0] sm:$0xff]
      %v1563 = vld [vmem:[%s1533 + $0xe8] sm:$0xff]
      %v1564 = vld [vmem:[%s1533 + $0xf0] sm:$0xff]
      %v1565 = vld [vmem:[%s1533 + $0xf8] sm:$0xff]
      %vm1566 = vcmask 1043456
      %v1567 = vrot.slane %v499, 4
      %v1568 = vrot.slane %v501, 4
      %v1569 = vsel %vm1566, %v1567, %v1568
      %v1570 = vrot.slane %v500, 4
      %v1571 = vrot.slane %v502, 4
      %v1572 = vsel %vm1566, %v1570, %v1571
      %v1573 = vrot.slane %v503, 4
      %v1574 = vsel %vm1566, %v1568, %v1573
      %v1575 = vrot.slane %v504, 4
      %v1576 = vsel %vm1566, %v1571, %v1575
      %v1577 = vrot.slane %v522, 4
      %v1578 = vsel %vm1566, %v1573, %v1577
      %v1579 = vrot.slane %v526, 4
      %v1580 = vsel %vm1566, %v1575, %v1579
      %v1619 = vunpack.c.l.b16 %v1534
      %v1620 = vunpack.c.h.b16 %v1534
      %v1621 = vunpack.c.l.b16 %v1535
      %v1622 = vunpack.c.h.b16 %v1535
      %v1623 = vunpack.c.l.b16 %v1536
      %v1624 = vunpack.c.h.b16 %v1536
      %v1625 = vunpack.c.l.b16 %v1537
      %v1626 = vunpack.c.h.b16 %v1537
      %v1627 = vunpack.c.l.b16 %v1538
      %v1628 = vunpack.c.h.b16 %v1538
      %v1629 = vunpack.c.l.b16 %v1539
      %v1630 = vunpack.c.h.b16 %v1539
      %v1631 = vunpack.c.l.b16 %v1540
      %v1632 = vunpack.c.h.b16 %v1540
      %v1633 = vunpack.c.l.b16 %v1541
      %v1634 = vunpack.c.h.b16 %v1541
      %v1635 = vunpack.c.l.b16 %v1542
      %v1636 = vunpack.c.h.b16 %v1542
      %v1637 = vunpack.c.l.b16 %v1543
      %v1638 = vunpack.c.h.b16 %v1543
      %v1639 = vunpack.c.l.b16 %v1544
      %v1640 = vunpack.c.h.b16 %v1544
      %v1641 = vunpack.c.l.b16 %v1545
      %v1642 = vunpack.c.h.b16 %v1545
      %v1643 = vunpack.c.l.b16 %v1546
      %v1644 = vunpack.c.h.b16 %v1546
      %v1645 = vunpack.c.l.b16 %v1547
      %v1646 = vunpack.c.h.b16 %v1547
      %v1647 = vunpack.c.l.b16 %v1548
      %v1648 = vunpack.c.h.b16 %v1548
      %v1649 = vunpack.c.l.b16 %v1549
      %v1650 = vunpack.c.h.b16 %v1549
      %v1651 = vunpack.c.l.b16 %v1550
      %v1652 = vunpack.c.h.b16 %v1550
      %v1653 = vunpack.c.l.b16 %v1551
      %v1654 = vunpack.c.h.b16 %v1551
      %v1655 = vunpack.c.l.b16 %v1552
      %v1656 = vunpack.c.h.b16 %v1552
      %v1657 = vunpack.c.l.b16 %v1553
      %v1658 = vunpack.c.h.b16 %v1553
      %v1659 = vunpack.c.l.b16 %v1554
      %v1660 = vunpack.c.h.b16 %v1554
      %v1661 = vunpack.c.l.b16 %v1555
      %v1662 = vunpack.c.h.b16 %v1555
      %v1663 = vunpack.c.l.b16 %v1556
      %v1664 = vunpack.c.h.b16 %v1556
      %v1665 = vunpack.c.l.b16 %v1557
      %v1666 = vunpack.c.h.b16 %v1557
      %v1667 = vunpack.c.l.b16 %v1558
      %v1668 = vunpack.c.h.b16 %v1558
      %v1669 = vunpack.c.l.b16 %v1559
      %v1670 = vunpack.c.h.b16 %v1559
      %v1671 = vunpack.c.l.b16 %v1560
      %v1672 = vunpack.c.h.b16 %v1560
      %v1673 = vunpack.c.l.b16 %v1561
      %v1674 = vunpack.c.h.b16 %v1561
      %v1675 = vunpack.c.l.b16 %v1562
      %v1676 = vunpack.c.h.b16 %v1562
      %v1677 = vunpack.c.l.b16 %v1563
      %v1678 = vunpack.c.h.b16 %v1563
      %v1679 = vunpack.c.l.b16 %v1564
      %v1680 = vunpack.c.h.b16 %v1564
      %v1681 = vunpack.c.l.b16 %v1565
      %v1682 = vunpack.c.h.b16 %v1565
      %v1683 = vpack.c.b16 %v1621, %v1619
      %v1684 = vpack.c.b16 %v1622, %v1620
      %v1685 = vpack.c.b16 %v1625, %v1623
      %v1686 = vpack.c.b16 %v1626, %v1624
      %v1687 = vpack.c.b16 %v1629, %v1627
      %v1688 = vpack.c.b16 %v1630, %v1628
      %v1689 = vpack.c.b16 %v1633, %v1631
      %v1690 = vpack.c.b16 %v1634, %v1632
      %v1691 = vpack.c.b16 %v1637, %v1635
      %v1692 = vpack.c.b16 %v1638, %v1636
      %v1693 = vpack.c.b16 %v1641, %v1639
      %v1694 = vpack.c.b16 %v1642, %v1640
      %v1695 = vpack.c.b16 %v1645, %v1643
      %v1696 = vpack.c.b16 %v1646, %v1644
      %v1697 = vpack.c.b16 %v1649, %v1647
      %v1698 = vpack.c.b16 %v1650, %v1648
      %v1699 = vpack.c.b16 %v1653, %v1651
      %v1700 = vpack.c.b16 %v1654, %v1652
      %v1701 = vpack.c.b16 %v1657, %v1655
      %v1702 = vpack.c.b16 %v1658, %v1656
      %v1703 = vpack.c.b16 %v1661, %v1659
      %v1704 = vpack.c.b16 %v1662, %v1660
      %v1705 = vpack.c.b16 %v1665, %v1663
      %v1706 = vpack.c.b16 %v1666, %v1664
      %v1707 = vpack.c.b16 %v1669, %v1667
      %v1708 = vpack.c.b16 %v1670, %v1668
      %v1709 = vpack.c.b16 %v1673, %v1671
      %v1710 = vpack.c.b16 %v1674, %v1672
      %v1711 = vpack.c.b16 %v1677, %v1675
      %v1712 = vpack.c.b16 %v1678, %v1676
      %v1713 = vpack.c.b16 %v1681, %v1679
      %v1714 = vpack.c.b16 %v1682, %v1680
      %1747 = vmatpush.bf16.msra.mxu0 %v1697
      %1748 = vmatpush.bf16.msra.mxu0 %v1695
      %1749 = vmatpush.bf16.msra.mxu0 %v1693
      %1750 = vmatpush.bf16.msra.mxu0 %v1691
      %1751 = vmatpush.bf16.msra.mxu0 %v1689
      %1752 = vmatpush.bf16.msra.mxu0 %v1687
      %1753 = vmatpush.bf16.msra.mxu0 %v1685
      %1754 = vmatpush.bf16.msra.mxu0 %v1683
      %1755 = vmatmul.bf16.gmra.mxu0 %v1569
      %v1756 = vpop.f32.mrf.mxu0
      %v1757 = vadd.f32 0.0, %v1756
      %v1758 = vpop.f32.mrf.mxu0
      %v1759 = vadd.f32 0.0, %v1758
      %1760 = vmatmul.bf16.gmra.mxu0 %v1574
      %v1761 = vpop.f32.mrf.mxu0
      %v1762 = vadd.f32 0.0, %v1761
      %v1763 = vpop.f32.mrf.mxu0
      %v1764 = vadd.f32 0.0, %v1763
      %1765 = vmatmul.bf16.gmra.mxu0 %v1578
      %v1766 = vpop.f32.mrf.mxu0
      %v1767 = vadd.f32 0.0, %v1766
      %v1768 = vpop.f32.mrf.mxu0
      %v1769 = vadd.f32 0.0, %v1768
      %1770 = vdwg.mxu0
      %1771 = vmatpush.bf16.msra.mxu0 %v1713
      %1772 = vmatpush.bf16.msra.mxu0 %v1711
      %1773 = vmatpush.bf16.msra.mxu0 %v1709
      %1774 = vmatpush.bf16.msra.mxu0 %v1707
      %1775 = vmatpush.bf16.msra.mxu0 %v1705
      %1776 = vmatpush.bf16.msra.mxu0 %v1703
      %1777 = vmatpush.bf16.msra.mxu0 %v1701
      %1778 = vmatpush.bf16.msra.mxu0 %v1699
      %1779 = vmatmul.bf16.gmra.mxu0 %v1572
      %v1780 = vpop.f32.mrf.mxu0
      %v1781 = vadd.f32 %v1757, %v1780
      %v1782 = vpop.f32.mrf.mxu0
      %v1783 = vadd.f32 %v1759, %v1782
      %1784 = vmatmul.bf16.gmra.mxu0 %v1576
      %v1785 = vpop.f32.mrf.mxu0
      %v1786 = vadd.f32 %v1762, %v1785
      %v1787 = vpop.f32.mrf.mxu0
      %v1788 = vadd.f32 %v1764, %v1787
      %1789 = vmatmul.bf16.gmra.mxu0 %v1580
      %v1790 = vpop.f32.mrf.mxu0
      %v1791 = vadd.f32 %v1767, %v1790
      %v1792 = vpop.f32.mrf.mxu0
      %v1793 = vadd.f32 %v1769, %v1792
      %1794 = vdwg.mxu0
      %1795 = vmatpush.bf16.msra.mxu0 %v1698
      %1796 = vmatpush.bf16.msra.mxu0 %v1696
      %1797 = vmatpush.bf16.msra.mxu0 %v1694
      %1798 = vmatpush.bf16.msra.mxu0 %v1692
      %1799 = vmatpush.bf16.msra.mxu0 %v1690
      %1800 = vmatpush.bf16.msra.mxu0 %v1688
      %1801 = vmatpush.bf16.msra.mxu0 %v1686
      %1802 = vmatpush.bf16.msra.mxu0 %v1684
      %1803 = vmatmul.bf16.gmra.mxu0 %v1569
      %v1804 = vpop.f32.mrf.mxu0
      %v1805 = vadd.f32 0.0, %v1804
      %v1806 = vpop.f32.mrf.mxu0
      %v1807 = vadd.f32 0.0, %v1806
      %1808 = vmatmul.bf16.gmra.mxu0 %v1574
      %v1809 = vpop.f32.mrf.mxu0
      %v1810 = vadd.f32 0.0, %v1809
      %v1811 = vpop.f32.mrf.mxu0
      %v1812 = vadd.f32 0.0, %v1811
      %1813 = vmatmul.bf16.gmra.mxu0 %v1578
      %v1814 = vpop.f32.mrf.mxu0
      %v1815 = vadd.f32 0.0, %v1814
      %v1816 = vpop.f32.mrf.mxu0
      %v1817 = vadd.f32 0.0, %v1816
      %1818 = vdwg.mxu0
      %1819 = vmatpush.bf16.msra.mxu0 %v1714
      %1820 = vmatpush.bf16.msra.mxu0 %v1712
      %1821 = vmatpush.bf16.msra.mxu0 %v1710
      %1822 = vmatpush.bf16.msra.mxu0 %v1708
      %1823 = vmatpush.bf16.msra.mxu0 %v1706
      %1824 = vmatpush.bf16.msra.mxu0 %v1704
      %1825 = vmatpush.bf16.msra.mxu0 %v1702
      %1826 = vmatpush.bf16.msra.mxu0 %v1700
      %1827 = vmatmul.bf16.gmra.mxu0 %v1572
      %v1828 = vpop.f32.mrf.mxu0
      %v1829 = vadd.f32 %v1805, %v1828
      %v1830 = vpop.f32.mrf.mxu0
      %v1831 = vadd.f32 %v1807, %v1830
      %1832 = vmatmul.bf16.gmra.mxu0 %v1576
      %v1833 = vpop.f32.mrf.mxu0
      %v1834 = vadd.f32 %v1810, %v1833
      %v1835 = vpop.f32.mrf.mxu0
      %v1836 = vadd.f32 %v1812, %v1835
      %1837 = vmatmul.bf16.gmra.mxu0 %v1580
      %v1838 = vpop.f32.mrf.mxu0
      %v1839 = vadd.f32 %v1815, %v1838
      %v1840 = vpop.f32.mrf.mxu0
      %v1841 = vadd.f32 %v1817, %v1840
      %1842 = vdwg.mxu0
      %v1843 = vadd.f32 %v1521, %v1781
      %v1844 = vadd.f32 %v1522, %v1829
      %v1845 = vadd.f32 %v1523, %v1783
      %v1846 = vadd.f32 %v1524, %v1831
      %v1847 = vadd.f32 %v1525, %v1786
      %v1848 = vadd.f32 %v1526, %v1834
      %v1849 = vadd.f32 %v1527, %v1788
      %v1850 = vadd.f32 %v1528, %v1836
      %v1851 = vadd.f32 %v1529, %v1791
      %v1852 = vadd.f32 %v1530, %v1839
      %v1853 = vadd.f32 %v1531, %v1793
      %v1854 = vadd.f32 %v1532, %v1841
      %s1855 = scalar_lea.vmem %s3, 1024
      %v1856 = vld [vmem:[%s1855] sm:$0xff]
      %v1857 = vld [vmem:[%s1855 + $0x8] sm:$0xff]
      %v1858 = vld [vmem:[%s1855 + $0x10] sm:$0xff]
      %v1859 = vld [vmem:[%s1855 + $0x18] sm:$0xff]
      %v1860 = vld [vmem:[%s1855 + $0x20] sm:$0xff]
      %v1861 = vld [vmem:[%s1855 + $0x28] sm:$0xff]
      %v1862 = vld [vmem:[%s1855 + $0x30] sm:$0xff]
      %v1863 = vld [vmem:[%s1855 + $0x38] sm:$0xff]
      %v1864 = vld [vmem:[%s1855 + $0x40] sm:$0xff]
      %v1865 = vld [vmem:[%s1855 + $0x48] sm:$0xff]
      %v1866 = vld [vmem:[%s1855 + $0x50] sm:$0xff]
      %v1867 = vld [vmem:[%s1855 + $0x58] sm:$0xff]
      %v1868 = vld [vmem:[%s1855 + $0x60] sm:$0xff]
      %v1869 = vld [vmem:[%s1855 + $0x68] sm:$0xff]
      %v1870 = vld [vmem:[%s1855 + $0x70] sm:$0xff]
      %v1871 = vld [vmem:[%s1855 + $0x78] sm:$0xff]
      %v1872 = vld [vmem:[%s1855 + $0x80] sm:$0xff]
      %v1873 = vld [vmem:[%s1855 + $0x88] sm:$0xff]
      %v1874 = vld [vmem:[%s1855 + $0x90] sm:$0xff]
      %v1875 = vld [vmem:[%s1855 + $0x98] sm:$0xff]
      %v1876 = vld [vmem:[%s1855 + $0xa0] sm:$0xff]
      %v1877 = vld [vmem:[%s1855 + $0xa8] sm:$0xff]
      %v1878 = vld [vmem:[%s1855 + $0xb0] sm:$0xff]
      %v1879 = vld [vmem:[%s1855 + $0xb8] sm:$0xff]
      %v1880 = vld [vmem:[%s1855 + $0xc0] sm:$0xff]
      %v1881 = vld [vmem:[%s1855 + $0xc8] sm:$0xff]
      %v1882 = vld [vmem:[%s1855 + $0xd0] sm:$0xff]
      %v1883 = vld [vmem:[%s1855 + $0xd8] sm:$0xff]
      %v1884 = vld [vmem:[%s1855 + $0xe0] sm:$0xff]
      %v1885 = vld [vmem:[%s1855 + $0xe8] sm:$0xff]
      %v1886 = vld [vmem:[%s1855 + $0xf0] sm:$0xff]
      %v1887 = vld [vmem:[%s1855 + $0xf8] sm:$0xff]
      %v1890 = vrot.slane %v540, 4
      %v1891 = vrot.slane %v560, 4
      %v1892 = vsel %vm1566, %v1890, %v1891
      %v1893 = vrot.slane %v552, 4
      %v1894 = vrot.slane %v568, 4
      %v1895 = vsel %vm1566, %v1893, %v1894
      %v1896 = vrot.slane %v575, 4
      %v1897 = vsel %vm1566, %v1891, %v1896
      %v1898 = vrot.slane %v582, 4
      %v1899 = vsel %vm1566, %v1894, %v1898
      %v1900 = vrot.slane %v601, 4
      %v1901 = vsel %vm1566, %v1896, %v1900
      %v1902 = vrot.slane %v602, 4
      %v1903 = vsel %vm1566, %v1898, %v1902
      %v1942 = vunpack.c.l.b16 %v1856
      %v1943 = vunpack.c.h.b16 %v1856
      %v1944 = vunpack.c.l.b16 %v1857
      %v1945 = vunpack.c.h.b16 %v1857
      %v1946 = vunpack.c.l.b16 %v1858
      %v1947 = vunpack.c.h.b16 %v1858
      %v1948 = vunpack.c.l.b16 %v1859
      %v1949 = vunpack.c.h.b16 %v1859
      %v1950 = vunpack.c.l.b16 %v1860
      %v1951 = vunpack.c.h.b16 %v1860
      %v1952 = vunpack.c.l.b16 %v1861
      %v1953 = vunpack.c.h.b16 %v1861
      %v1954 = vunpack.c.l.b16 %v1862
      %v1955 = vunpack.c.h.b16 %v1862
      %v1956 = vunpack.c.l.b16 %v1863
      %v1957 = vunpack.c.h.b16 %v1863
      %v1958 = vunpack.c.l.b16 %v1864
      %v1959 = vunpack.c.h.b16 %v1864
      %v1960 = vunpack.c.l.b16 %v1865
      %v1961 = vunpack.c.h.b16 %v1865
      %v1962 = vunpack.c.l.b16 %v1866
      %v1963 = vunpack.c.h.b16 %v1866
      %v1964 = vunpack.c.l.b16 %v1867
      %v1965 = vunpack.c.h.b16 %v1867
      %v1966 = vunpack.c.l.b16 %v1868
      %v1967 = vunpack.c.h.b16 %v1868
      %v1968 = vunpack.c.l.b16 %v1869
      %v1969 = vunpack.c.h.b16 %v1869
      %v1970 = vunpack.c.l.b16 %v1870
      %v1971 = vunpack.c.h.b16 %v1870
      %v1972 = vunpack.c.l.b16 %v1871
      %v1973 = vunpack.c.h.b16 %v1871
      %v1974 = vunpack.c.l.b16 %v1872
      %v1975 = vunpack.c.h.b16 %v1872
      %v1976 = vunpack.c.l.b16 %v1873
      %v1977 = vunpack.c.h.b16 %v1873
      %v1978 = vunpack.c.l.b16 %v1874
      %v1979 = vunpack.c.h.b16 %v1874
      %v1980 = vunpack.c.l.b16 %v1875
      %v1981 = vunpack.c.h.b16 %v1875
      %v1982 = vunpack.c.l.b16 %v1876
      %v1983 = vunpack.c.h.b16 %v1876
      %v1984 = vunpack.c.l.b16 %v1877
      %v1985 = vunpack.c.h.b16 %v1877
      %v1986 = vunpack.c.l.b16 %v1878
      %v1987 = vunpack.c.h.b16 %v1878
      %v1988 = vunpack.c.l.b16 %v1879
      %v1989 = vunpack.c.h.b16 %v1879
      %v1990 = vunpack.c.l.b16 %v1880
      %v1991 = vunpack.c.h.b16 %v1880
      %v1992 = vunpack.c.l.b16 %v1881
      %v1993 = vunpack.c.h.b16 %v1881
      %v1994 = vunpack.c.l.b16 %v1882
      %v1995 = vunpack.c.h.b16 %v1882
      %v1996 = vunpack.c.l.b16 %v1883
      %v1997 = vunpack.c.h.b16 %v1883
      %v1998 = vunpack.c.l.b16 %v1884
      %v1999 = vunpack.c.h.b16 %v1884
      %v2000 = vunpack.c.l.b16 %v1885
      %v2001 = vunpack.c.h.b16 %v1885
      %v2002 = vunpack.c.l.b16 %v1886
      %v2003 = vunpack.c.h.b16 %v1886
      %v2004 = vunpack.c.l.b16 %v1887
      %v2005 = vunpack.c.h.b16 %v1887
      %v2006 = vpack.c.b16 %v1944, %v1942
      %v2007 = vpack.c.b16 %v1945, %v1943
      %v2008 = vpack.c.b16 %v1948, %v1946
      %v2009 = vpack.c.b16 %v1949, %v1947
      %v2010 = vpack.c.b16 %v1952, %v1950
      %v2011 = vpack.c.b16 %v1953, %v1951
      %v2012 = vpack.c.b16 %v1956, %v1954
      %v2013 = vpack.c.b16 %v1957, %v1955
      %v2014 = vpack.c.b16 %v1960, %v1958
      %v2015 = vpack.c.b16 %v1961, %v1959
      %v2016 = vpack.c.b16 %v1964, %v1962
      %v2017 = vpack.c.b16 %v1965, %v1963
      %v2018 = vpack.c.b16 %v1968, %v1966
      %v2019 = vpack.c.b16 %v1969, %v1967
      %v2020 = vpack.c.b16 %v1972, %v1970
      %v2021 = vpack.c.b16 %v1973, %v1971
      %v2022 = vpack.c.b16 %v1976, %v1974
      %v2023 = vpack.c.b16 %v1977, %v1975
      %v2024 = vpack.c.b16 %v1980, %v1978
      %v2025 = vpack.c.b16 %v1981, %v1979
      %v2026 = vpack.c.b16 %v1984, %v1982
      %v2027 = vpack.c.b16 %v1985, %v1983
      %v2028 = vpack.c.b16 %v1988, %v1986
      %v2029 = vpack.c.b16 %v1989, %v1987
      %v2030 = vpack.c.b16 %v1992, %v1990
      %v2031 = vpack.c.b16 %v1993, %v1991
      %v2032 = vpack.c.b16 %v1996, %v1994
      %v2033 = vpack.c.b16 %v1997, %v1995
      %v2034 = vpack.c.b16 %v2000, %v1998
      %v2035 = vpack.c.b16 %v2001, %v1999
      %v2036 = vpack.c.b16 %v2004, %v2002
      %v2037 = vpack.c.b16 %v2005, %v2003
      %2070 = vmatpush.bf16.msra.mxu0 %v2020
      %2071 = vmatpush.bf16.msra.mxu0 %v2018
      %2072 = vmatpush.bf16.msra.mxu0 %v2016
      %2073 = vmatpush.bf16.msra.mxu0 %v2014
      %2074 = vmatpush.bf16.msra.mxu0 %v2012
      %2075 = vmatpush.bf16.msra.mxu0 %v2010
      %2076 = vmatpush.bf16.msra.mxu0 %v2008
      %2077 = vmatpush.bf16.msra.mxu0 %v2006
      %2078 = vmatmul.bf16.gmra.mxu0 %v1892
      %v2079 = vpop.f32.mrf.mxu0
      %v2080 = vadd.f32 0.0, %v2079
      %v2081 = vpop.f32.mrf.mxu0
      %v2082 = vadd.f32 0.0, %v2081
      %2083 = vmatmul.bf16.gmra.mxu0 %v1897
      %v2084 = vpop.f32.mrf.mxu0
      %v2085 = vadd.f32 0.0, %v2084
      %v2086 = vpop.f32.mrf.mxu0
      %v2087 = vadd.f32 0.0, %v2086
      %2088 = vmatmul.bf16.gmra.mxu0 %v1901
      %v2089 = vpop.f32.mrf.mxu0
      %v2090 = vadd.f32 0.0, %v2089
      %v2091 = vpop.f32.mrf.mxu0
      %v2092 = vadd.f32 0.0, %v2091
      %2093 = vdwg.mxu0
      %2094 = vmatpush.bf16.msra.mxu0 %v2036
      %2095 = vmatpush.bf16.msra.mxu0 %v2034
      %2096 = vmatpush.bf16.msra.mxu0 %v2032
      %2097 = vmatpush.bf16.msra.mxu0 %v2030
      %2098 = vmatpush.bf16.msra.mxu0 %v2028
      %2099 = vmatpush.bf16.msra.mxu0 %v2026
      %2100 = vmatpush.bf16.msra.mxu0 %v2024
      %2101 = vmatpush.bf16.msra.mxu0 %v2022
      %2102 = vmatmul.bf16.gmra.mxu0 %v1895
      %v2103 = vpop.f32.mrf.mxu0
      %v2104 = vadd.f32 %v2080, %v2103
      %v2105 = vpop.f32.mrf.mxu0
      %v2106 = vadd.f32 %v2082, %v2105
      %2107 = vmatmul.bf16.gmra.mxu0 %v1899
      %v2108 = vpop.f32.mrf.mxu0
      %v2109 = vadd.f32 %v2085, %v2108
      %v2110 = vpop.f32.mrf.mxu0
      %v2111 = vadd.f32 %v2087, %v2110
      %2112 = vmatmul.bf16.gmra.mxu0 %v1903
      %v2113 = vpop.f32.mrf.mxu0
      %v2114 = vadd.f32 %v2090, %v2113
      %v2115 = vpop.f32.mrf.mxu0
      %v2116 = vadd.f32 %v2092, %v2115
      %2117 = vdwg.mxu0
      %2118 = vmatpush.bf16.msra.mxu0 %v2021
      %2119 = vmatpush.bf16.msra.mxu0 %v2019
      %2120 = vmatpush.bf16.msra.mxu0 %v2017
      %2121 = vmatpush.bf16.msra.mxu0 %v2015
      %2122 = vmatpush.bf16.msra.mxu0 %v2013
      %2123 = vmatpush.bf16.msra.mxu0 %v2011
      %2124 = vmatpush.bf16.msra.mxu0 %v2009
      %2125 = vmatpush.bf16.msra.mxu0 %v2007
      %2126 = vmatmul.bf16.gmra.mxu0 %v1892
      %v2127 = vpop.f32.mrf.mxu0
      %v2128 = vadd.f32 0.0, %v2127
      %v2129 = vpop.f32.mrf.mxu0
      %v2130 = vadd.f32 0.0, %v2129
      %2131 = vmatmul.bf16.gmra.mxu0 %v1897
      %v2132 = vpop.f32.mrf.mxu0
      %v2133 = vadd.f32 0.0, %v2132
      %v2134 = vpop.f32.mrf.mxu0
      %v2135 = vadd.f32 0.0, %v2134
      %2136 = vmatmul.bf16.gmra.mxu0 %v1901
      %v2137 = vpop.f32.mrf.mxu0
      %v2138 = vadd.f32 0.0, %v2137
      %v2139 = vpop.f32.mrf.mxu0
      %v2140 = vadd.f32 0.0, %v2139
      %2141 = vdwg.mxu0
      %2142 = vmatpush.bf16.msra.mxu0 %v2037
      %2143 = vmatpush.bf16.msra.mxu0 %v2035
      %2144 = vmatpush.bf16.msra.mxu0 %v2033
      %2145 = vmatpush.bf16.msra.mxu0 %v2031
      %2146 = vmatpush.bf16.msra.mxu0 %v2029
      %2147 = vmatpush.bf16.msra.mxu0 %v2027
      %2148 = vmatpush.bf16.msra.mxu0 %v2025
      %2149 = vmatpush.bf16.msra.mxu0 %v2023
      %2150 = vmatmul.bf16.gmra.mxu0 %v1895
      %v2151 = vpop.f32.mrf.mxu0
      %v2152 = vadd.f32 %v2128, %v2151
      %v2153 = vpop.f32.mrf.mxu0
      %v2154 = vadd.f32 %v2130, %v2153
      %2155 = vmatmul.bf16.gmra.mxu0 %v1899
      %v2156 = vpop.f32.mrf.mxu0
      %v2157 = vadd.f32 %v2133, %v2156
      %v2158 = vpop.f32.mrf.mxu0
      %v2159 = vadd.f32 %v2135, %v2158
      %2160 = vmatmul.bf16.gmra.mxu0 %v1903
      %v2161 = vpop.f32.mrf.mxu0
      %v2162 = vadd.f32 %v2138, %v2161
      %v2163 = vpop.f32.mrf.mxu0
      %v2164 = vadd.f32 %v2140, %v2163
      %2165 = vdwg.mxu0
      %v2166 = vadd.f32 %v1843, %v2104
      %v2167 = vadd.f32 %v1844, %v2152
      %v2168 = vadd.f32 %v1845, %v2106
      %v2169 = vadd.f32 %v1846, %v2154
      %v2170 = vadd.f32 %v1847, %v2109
      %v2171 = vadd.f32 %v1848, %v2157
      %v2172 = vadd.f32 %v1849, %v2111
      %v2173 = vadd.f32 %v1850, %v2159
      %v2174 = vadd.f32 %v1851, %v2114
      %v2175 = vadd.f32 %v1852, %v2162
      %v2176 = vadd.f32 %v1853, %v2116
      %v2177 = vadd.f32 %v1854, %v2164
      %s2178 = scalar_lea.vmem %s3, 1280
      %v2179 = vld [vmem:[%s2178] sm:$0xff]
      %v2180 = vld [vmem:[%s2178 + $0x8] sm:$0xff]
      %v2181 = vld [vmem:[%s2178 + $0x10] sm:$0xff]
      %v2182 = vld [vmem:[%s2178 + $0x18] sm:$0xff]
      %v2183 = vld [vmem:[%s2178 + $0x20] sm:$0xff]
      %v2184 = vld [vmem:[%s2178 + $0x28] sm:$0xff]
      %v2185 = vld [vmem:[%s2178 + $0x30] sm:$0xff]
      %v2186 = vld [vmem:[%s2178 + $0x38] sm:$0xff]
      %v2187 = vld [vmem:[%s2178 + $0x40] sm:$0xff]
      %v2188 = vld [vmem:[%s2178 + $0x48] sm:$0xff]
      %v2189 = vld [vmem:[%s2178 + $0x50] sm:$0xff]
      %v2190 = vld [vmem:[%s2178 + $0x58] sm:$0xff]
      %v2191 = vld [vmem:[%s2178 + $0x60] sm:$0xff]
      %v2192 = vld [vmem:[%s2178 + $0x68] sm:$0xff]
      %v2193 = vld [vmem:[%s2178 + $0x70] sm:$0xff]
      %v2194 = vld [vmem:[%s2178 + $0x78] sm:$0xff]
      %v2195 = vld [vmem:[%s2178 + $0x80] sm:$0xff]
      %v2196 = vld [vmem:[%s2178 + $0x88] sm:$0xff]
      %v2197 = vld [vmem:[%s2178 + $0x90] sm:$0xff]
      %v2198 = vld [vmem:[%s2178 + $0x98] sm:$0xff]
      %v2199 = vld [vmem:[%s2178 + $0xa0] sm:$0xff]
      %v2200 = vld [vmem:[%s2178 + $0xa8] sm:$0xff]
      %v2201 = vld [vmem:[%s2178 + $0xb0] sm:$0xff]
      %v2202 = vld [vmem:[%s2178 + $0xb8] sm:$0xff]
      %v2203 = vld [vmem:[%s2178 + $0xc0] sm:$0xff]
      %v2204 = vld [vmem:[%s2178 + $0xc8] sm:$0xff]
      %v2205 = vld [vmem:[%s2178 + $0xd0] sm:$0xff]
      %v2206 = vld [vmem:[%s2178 + $0xd8] sm:$0xff]
      %v2207 = vld [vmem:[%s2178 + $0xe0] sm:$0xff]
      %v2208 = vld [vmem:[%s2178 + $0xe8] sm:$0xff]
      %v2209 = vld [vmem:[%s2178 + $0xf0] sm:$0xff]
      %v2210 = vld [vmem:[%s2178 + $0xf8] sm:$0xff]
      %v2213 = vrot.slane %v608, 4
      %v2214 = vrot.slane %v613, 4
      %v2215 = vsel %vm1566, %v2213, %v2214
      %v2216 = vrot.slane %v611, 4
      %v2217 = vrot.slane %v615, 4
      %v2218 = vsel %vm1566, %v2216, %v2217
      %v2219 = vrot.slane %v617, 4
      %v2220 = vsel %vm1566, %v2214, %v2219
      %v2221 = vrot.slane %v619, 4
      %v2222 = vsel %vm1566, %v2217, %v2221
      %v2223 = vrot.slane %v629, 4
      %v2224 = vsel %vm1566, %v2219, %v2223
      %v2225 = vrot.slane %v633, 4
      %v2226 = vsel %vm1566, %v2221, %v2225
      %v2265 = vunpack.c.l.b16 %v2179
      %v2266 = vunpack.c.h.b16 %v2179
      %v2267 = vunpack.c.l.b16 %v2180
      %v2268 = vunpack.c.h.b16 %v2180
      %v2269 = vunpack.c.l.b16 %v2181
      %v2270 = vunpack.c.h.b16 %v2181
      %v2271 = vunpack.c.l.b16 %v2182
      %v2272 = vunpack.c.h.b16 %v2182
      %v2273 = vunpack.c.l.b16 %v2183
      %v2274 = vunpack.c.h.b16 %v2183
      %v2275 = vunpack.c.l.b16 %v2184
      %v2276 = vunpack.c.h.b16 %v2184
      %v2277 = vunpack.c.l.b16 %v2185
      %v2278 = vunpack.c.h.b16 %v2185
      %v2279 = vunpack.c.l.b16 %v2186
      %v2280 = vunpack.c.h.b16 %v2186
      %v2281 = vunpack.c.l.b16 %v2187
      %v2282 = vunpack.c.h.b16 %v2187
      %v2283 = vunpack.c.l.b16 %v2188
      %v2284 = vunpack.c.h.b16 %v2188
      %v2285 = vunpack.c.l.b16 %v2189
      %v2286 = vunpack.c.h.b16 %v2189
      %v2287 = vunpack.c.l.b16 %v2190
      %v2288 = vunpack.c.h.b16 %v2190
      %v2289 = vunpack.c.l.b16 %v2191
      %v2290 = vunpack.c.h.b16 %v2191
      %v2291 = vunpack.c.l.b16 %v2192
      %v2292 = vunpack.c.h.b16 %v2192
      %v2293 = vunpack.c.l.b16 %v2193
      %v2294 = vunpack.c.h.b16 %v2193
      %v2295 = vunpack.c.l.b16 %v2194
      %v2296 = vunpack.c.h.b16 %v2194
      %v2297 = vunpack.c.l.b16 %v2195
      %v2298 = vunpack.c.h.b16 %v2195
      %v2299 = vunpack.c.l.b16 %v2196
      %v2300 = vunpack.c.h.b16 %v2196
      %v2301 = vunpack.c.l.b16 %v2197
      %v2302 = vunpack.c.h.b16 %v2197
      %v2303 = vunpack.c.l.b16 %v2198
      %v2304 = vunpack.c.h.b16 %v2198
      %v2305 = vunpack.c.l.b16 %v2199
      %v2306 = vunpack.c.h.b16 %v2199
      %v2307 = vunpack.c.l.b16 %v2200
      %v2308 = vunpack.c.h.b16 %v2200
      %v2309 = vunpack.c.l.b16 %v2201
      %v2310 = vunpack.c.h.b16 %v2201
      %v2311 = vunpack.c.l.b16 %v2202
      %v2312 = vunpack.c.h.b16 %v2202
      %v2313 = vunpack.c.l.b16 %v2203
      %v2314 = vunpack.c.h.b16 %v2203
      %v2315 = vunpack.c.l.b16 %v2204
      %v2316 = vunpack.c.h.b16 %v2204
      %v2317 = vunpack.c.l.b16 %v2205
      %v2318 = vunpack.c.h.b16 %v2205
      %v2319 = vunpack.c.l.b16 %v2206
      %v2320 = vunpack.c.h.b16 %v2206
      %v2321 = vunpack.c.l.b16 %v2207
      %v2322 = vunpack.c.h.b16 %v2207
      %v2323 = vunpack.c.l.b16 %v2208
      %v2324 = vunpack.c.h.b16 %v2208
      %v2325 = vunpack.c.l.b16 %v2209
      %v2326 = vunpack.c.h.b16 %v2209
      %v2327 = vunpack.c.l.b16 %v2210
      %v2328 = vunpack.c.h.b16 %v2210
      %v2329 = vpack.c.b16 %v2267, %v2265
      %v2330 = vpack.c.b16 %v2268, %v2266
      %v2331 = vpack.c.b16 %v2271, %v2269
      %v2332 = vpack.c.b16 %v2272, %v2270
      %v2333 = vpack.c.b16 %v2275, %v2273
      %v2334 = vpack.c.b16 %v2276, %v2274
      %v2335 = vpack.c.b16 %v2279, %v2277
      %v2336 = vpack.c.b16 %v2280, %v2278
      %v2337 = vpack.c.b16 %v2283, %v2281
      %v2338 = vpack.c.b16 %v2284, %v2282
      %v2339 = vpack.c.b16 %v2287, %v2285
      %v2340 = vpack.c.b16 %v2288, %v2286
      %v2341 = vpack.c.b16 %v2291, %v2289
      %v2342 = vpack.c.b16 %v2292, %v2290
      %v2343 = vpack.c.b16 %v2295, %v2293
      %v2344 = vpack.c.b16 %v2296, %v2294
      %v2345 = vpack.c.b16 %v2299, %v2297
      %v2346 = vpack.c.b16 %v2300, %v2298
      %v2347 = vpack.c.b16 %v2303, %v2301
      %v2348 = vpack.c.b16 %v2304, %v2302
      %v2349 = vpack.c.b16 %v2307, %v2305
      %v2350 = vpack.c.b16 %v2308, %v2306
      %v2351 = vpack.c.b16 %v2311, %v2309
      %v2352 = vpack.c.b16 %v2312, %v2310
      %v2353 = vpack.c.b16 %v2315, %v2313
      %v2354 = vpack.c.b16 %v2316, %v2314
      %v2355 = vpack.c.b16 %v2319, %v2317
      %v2356 = vpack.c.b16 %v2320, %v2318
      %v2357 = vpack.c.b16 %v2323, %v2321
      %v2358 = vpack.c.b16 %v2324, %v2322
      %v2359 = vpack.c.b16 %v2327, %v2325
      %v2360 = vpack.c.b16 %v2328, %v2326
      %2393 = vmatpush.bf16.msra.mxu0 %v2343
      %2394 = vmatpush.bf16.msra.mxu0 %v2341
      %2395 = vmatpush.bf16.msra.mxu0 %v2339
      %2396 = vmatpush.bf16.msra.mxu0 %v2337
      %2397 = vmatpush.bf16.msra.mxu0 %v2335
      %2398 = vmatpush.bf16.msra.mxu0 %v2333
      %2399 = vmatpush.bf16.msra.mxu0 %v2331
      %2400 = vmatpush.bf16.msra.mxu0 %v2329
      %2401 = vmatmul.bf16.gmra.mxu0 %v2215
      %v2402 = vpop.f32.mrf.mxu0
      %v2403 = vadd.f32 0.0, %v2402
      %v2404 = vpop.f32.mrf.mxu0
      %v2405 = vadd.f32 0.0, %v2404
      %2406 = vmatmul.bf16.gmra.mxu0 %v2220
      %v2407 = vpop.f32.mrf.mxu0
      %v2408 = vadd.f32 0.0, %v2407
      %v2409 = vpop.f32.mrf.mxu0
      %v2410 = vadd.f32 0.0, %v2409
      %2411 = vmatmul.bf16.gmra.mxu0 %v2224
      %v2412 = vpop.f32.mrf.mxu0
      %v2413 = vadd.f32 0.0, %v2412
      %v2414 = vpop.f32.mrf.mxu0
      %v2415 = vadd.f32 0.0, %v2414
      %2416 = vdwg.mxu0
      %2417 = vmatpush.bf16.msra.mxu0 %v2359
      %2418 = vmatpush.bf16.msra.mxu0 %v2357
      %2419 = vmatpush.bf16.msra.mxu0 %v2355
      %2420 = vmatpush.bf16.msra.mxu0 %v2353
      %2421 = vmatpush.bf16.msra.mxu0 %v2351
      %2422 = vmatpush.bf16.msra.mxu0 %v2349
      %2423 = vmatpush.bf16.msra.mxu0 %v2347
      %2424 = vmatpush.bf16.msra.mxu0 %v2345
      %2425 = vmatmul.bf16.gmra.mxu0 %v2218
      %v2426 = vpop.f32.mrf.mxu0
      %v2427 = vadd.f32 %v2403, %v2426
      %v2428 = vpop.f32.mrf.mxu0
      %v2429 = vadd.f32 %v2405, %v2428
      %2430 = vmatmul.bf16.gmra.mxu0 %v2222
      %v2431 = vpop.f32.mrf.mxu0
      %v2432 = vadd.f32 %v2408, %v2431
      %v2433 = vpop.f32.mrf.mxu0
      %v2434 = vadd.f32 %v2410, %v2433
      %2435 = vmatmul.bf16.gmra.mxu0 %v2226
      %v2436 = vpop.f32.mrf.mxu0
      %v2437 = vadd.f32 %v2413, %v2436
      %v2438 = vpop.f32.mrf.mxu0
      %v2439 = vadd.f32 %v2415, %v2438
      %2440 = vdwg.mxu0
      %2441 = vmatpush.bf16.msra.mxu0 %v2344
      %2442 = vmatpush.bf16.msra.mxu0 %v2342
      %2443 = vmatpush.bf16.msra.mxu0 %v2340
      %2444 = vmatpush.bf16.msra.mxu0 %v2338
      %2445 = vmatpush.bf16.msra.mxu0 %v2336
      %2446 = vmatpush.bf16.msra.mxu0 %v2334
      %2447 = vmatpush.bf16.msra.mxu0 %v2332
      %2448 = vmatpush.bf16.msra.mxu0 %v2330
      %2449 = vmatmul.bf16.gmra.mxu0 %v2215
      %v2450 = vpop.f32.mrf.mxu0
      %v2451 = vadd.f32 0.0, %v2450
      %v2452 = vpop.f32.mrf.mxu0
      %v2453 = vadd.f32 0.0, %v2452
      %2454 = vmatmul.bf16.gmra.mxu0 %v2220
      %v2455 = vpop.f32.mrf.mxu0
      %v2456 = vadd.f32 0.0, %v2455
      %v2457 = vpop.f32.mrf.mxu0
      %v2458 = vadd.f32 0.0, %v2457
      %2459 = vmatmul.bf16.gmra.mxu0 %v2224
      %v2460 = vpop.f32.mrf.mxu0
      %v2461 = vadd.f32 0.0, %v2460
      %v2462 = vpop.f32.mrf.mxu0
      %v2463 = vadd.f32 0.0, %v2462
      %2464 = vdwg.mxu0
      %2465 = vmatpush.bf16.msra.mxu0 %v2360
      %2466 = vmatpush.bf16.msra.mxu0 %v2358
      %2467 = vmatpush.bf16.msra.mxu0 %v2356
      %2468 = vmatpush.bf16.msra.mxu0 %v2354
      %2469 = vmatpush.bf16.msra.mxu0 %v2352
      %2470 = vmatpush.bf16.msra.mxu0 %v2350
      %2471 = vmatpush.bf16.msra.mxu0 %v2348
      %2472 = vmatpush.bf16.msra.mxu0 %v2346
      %2473 = vmatmul.bf16.gmra.mxu0 %v2218
      %v2474 = vpop.f32.mrf.mxu0
      %v2475 = vadd.f32 %v2451, %v2474
      %v2476 = vpop.f32.mrf.mxu0
      %v2477 = vadd.f32 %v2453, %v2476
      %2478 = vmatmul.bf16.gmra.mxu0 %v2222
      %v2479 = vpop.f32.mrf.mxu0
      %v2480 = vadd.f32 %v2456, %v2479
      %v2481 = vpop.f32.mrf.mxu0
      %v2482 = vadd.f32 %v2458, %v2481
      %2483 = vmatmul.bf16.gmra.mxu0 %v2226
      %v2484 = vpop.f32.mrf.mxu0
      %v2485 = vadd.f32 %v2461, %v2484
      %v2486 = vpop.f32.mrf.mxu0
      %v2487 = vadd.f32 %v2463, %v2486
      %2488 = vdwg.mxu0
      %v2489 = vadd.f32 %v2166, %v2427
      %v2490 = vadd.f32 %v2167, %v2475
      %v2491 = vadd.f32 %v2168, %v2429
      %v2492 = vadd.f32 %v2169, %v2477
      %v2493 = vadd.f32 %v2170, %v2432
      %v2494 = vadd.f32 %v2171, %v2480
      %v2495 = vadd.f32 %v2172, %v2434
      %v2496 = vadd.f32 %v2173, %v2482
      %v2497 = vadd.f32 %v2174, %v2437
      %v2498 = vadd.f32 %v2175, %v2485
      %v2499 = vadd.f32 %v2176, %v2439
      %v2500 = vadd.f32 %v2177, %v2487
      %s2501 = scalar_lea.vmem %s3, 1536
      %v2502 = vld [vmem:[%s2501] sm:$0xff]
      %v2503 = vld [vmem:[%s2501 + $0x8] sm:$0xff]
      %v2504 = vld [vmem:[%s2501 + $0x10] sm:$0xff]
      %v2505 = vld [vmem:[%s2501 + $0x18] sm:$0xff]
      %v2506 = vld [vmem:[%s2501 + $0x20] sm:$0xff]
      %v2507 = vld [vmem:[%s2501 + $0x28] sm:$0xff]
      %v2508 = vld [vmem:[%s2501 + $0x30] sm:$0xff]
      %v2509 = vld [vmem:[%s2501 + $0x38] sm:$0xff]
      %v2510 = vld [vmem:[%s2501 + $0x40] sm:$0xff]
      %v2511 = vld [vmem:[%s2501 + $0x48] sm:$0xff]
      %v2512 = vld [vmem:[%s2501 + $0x50] sm:$0xff]
      %v2513 = vld [vmem:[%s2501 + $0x58] sm:$0xff]
      %v2514 = vld [vmem:[%s2501 + $0x60] sm:$0xff]
      %v2515 = vld [vmem:[%s2501 + $0x68] sm:$0xff]
      %v2516 = vld [vmem:[%s2501 + $0x70] sm:$0xff]
      %v2517 = vld [vmem:[%s2501 + $0x78] sm:$0xff]
      %v2518 = vld [vmem:[%s2501 + $0x80] sm:$0xff]
      %v2519 = vld [vmem:[%s2501 + $0x88] sm:$0xff]
      %v2520 = vld [vmem:[%s2501 + $0x90] sm:$0xff]
      %v2521 = vld [vmem:[%s2501 + $0x98] sm:$0xff]
      %v2522 = vld [vmem:[%s2501 + $0xa0] sm:$0xff]
      %v2523 = vld [vmem:[%s2501 + $0xa8] sm:$0xff]
      %v2524 = vld [vmem:[%s2501 + $0xb0] sm:$0xff]
      %v2525 = vld [vmem:[%s2501 + $0xb8] sm:$0xff]
      %v2526 = vld [vmem:[%s2501 + $0xc0] sm:$0xff]
      %v2527 = vld [vmem:[%s2501 + $0xc8] sm:$0xff]
      %v2528 = vld [vmem:[%s2501 + $0xd0] sm:$0xff]
      %v2529 = vld [vmem:[%s2501 + $0xd8] sm:$0xff]
      %v2530 = vld [vmem:[%s2501 + $0xe0] sm:$0xff]
      %v2531 = vld [vmem:[%s2501 + $0xe8] sm:$0xff]
      %v2532 = vld [vmem:[%s2501 + $0xf0] sm:$0xff]
      %v2533 = vld [vmem:[%s2501 + $0xf8] sm:$0xff]
      %v2566 = vunpack.c.l.b16 %v2502
      %v2567 = vunpack.c.h.b16 %v2502
      %v2568 = vunpack.c.l.b16 %v2503
      %v2569 = vunpack.c.h.b16 %v2503
      %v2570 = vunpack.c.l.b16 %v2504
      %v2571 = vunpack.c.h.b16 %v2504
      %v2572 = vunpack.c.l.b16 %v2505
      %v2573 = vunpack.c.h.b16 %v2505
      %v2574 = vunpack.c.l.b16 %v2506
      %v2575 = vunpack.c.h.b16 %v2506
      %v2576 = vunpack.c.l.b16 %v2507
      %v2577 = vunpack.c.h.b16 %v2507
      %v2578 = vunpack.c.l.b16 %v2508
      %v2579 = vunpack.c.h.b16 %v2508
      %v2580 = vunpack.c.l.b16 %v2509
      %v2581 = vunpack.c.h.b16 %v2509
      %v2582 = vunpack.c.l.b16 %v2510
      %v2583 = vunpack.c.h.b16 %v2510
      %v2584 = vunpack.c.l.b16 %v2511
      %v2585 = vunpack.c.h.b16 %v2511
      %v2586 = vunpack.c.l.b16 %v2512
      %v2587 = vunpack.c.h.b16 %v2512
      %v2588 = vunpack.c.l.b16 %v2513
      %v2589 = vunpack.c.h.b16 %v2513
      %v2590 = vunpack.c.l.b16 %v2514
      %v2591 = vunpack.c.h.b16 %v2514
      %v2592 = vunpack.c.l.b16 %v2515
      %v2593 = vunpack.c.h.b16 %v2515
      %v2594 = vunpack.c.l.b16 %v2516
      %v2595 = vunpack.c.h.b16 %v2516
      %v2596 = vunpack.c.l.b16 %v2517
      %v2597 = vunpack.c.h.b16 %v2517
      %v2598 = vunpack.c.l.b16 %v2518
      %v2599 = vunpack.c.h.b16 %v2518
      %v2600 = vunpack.c.l.b16 %v2519
      %v2601 = vunpack.c.h.b16 %v2519
      %v2602 = vunpack.c.l.b16 %v2520
      %v2603 = vunpack.c.h.b16 %v2520
      %v2604 = vunpack.c.l.b16 %v2521
      %v2605 = vunpack.c.h.b16 %v2521
      %v2606 = vunpack.c.l.b16 %v2522
      %v2607 = vunpack.c.h.b16 %v2522
      %v2608 = vunpack.c.l.b16 %v2523
      %v2609 = vunpack.c.h.b16 %v2523
      %v2610 = vunpack.c.l.b16 %v2524
      %v2611 = vunpack.c.h.b16 %v2524
      %v2612 = vunpack.c.l.b16 %v2525
      %v2613 = vunpack.c.h.b16 %v2525
      %v2614 = vunpack.c.l.b16 %v2526
      %v2615 = vunpack.c.h.b16 %v2526
      %v2616 = vunpack.c.l.b16 %v2527
      %v2617 = vunpack.c.h.b16 %v2527
      %v2618 = vunpack.c.l.b16 %v2528
      %v2619 = vunpack.c.h.b16 %v2528
      %v2620 = vunpack.c.l.b16 %v2529
      %v2621 = vunpack.c.h.b16 %v2529
      %v2622 = vunpack.c.l.b16 %v2530
      %v2623 = vunpack.c.h.b16 %v2530
      %v2624 = vunpack.c.l.b16 %v2531
      %v2625 = vunpack.c.h.b16 %v2531
      %v2626 = vunpack.c.l.b16 %v2532
      %v2627 = vunpack.c.h.b16 %v2532
      %v2628 = vunpack.c.l.b16 %v2533
      %v2629 = vunpack.c.h.b16 %v2533
      %v2630 = vpack.c.b16 %v2568, %v2566
      %v2631 = vpack.c.b16 %v2569, %v2567
      %v2632 = vpack.c.b16 %v2572, %v2570
      %v2633 = vpack.c.b16 %v2573, %v2571
      %v2634 = vpack.c.b16 %v2576, %v2574
      %v2635 = vpack.c.b16 %v2577, %v2575
      %v2636 = vpack.c.b16 %v2580, %v2578
      %v2637 = vpack.c.b16 %v2581, %v2579
      %v2638 = vpack.c.b16 %v2584, %v2582
      %v2639 = vpack.c.b16 %v2585, %v2583
      %v2640 = vpack.c.b16 %v2588, %v2586
      %v2641 = vpack.c.b16 %v2589, %v2587
      %v2642 = vpack.c.b16 %v2592, %v2590
      %v2643 = vpack.c.b16 %v2593, %v2591
      %v2644 = vpack.c.b16 %v2596, %v2594
      %v2645 = vpack.c.b16 %v2597, %v2595
      %v2646 = vpack.c.b16 %v2600, %v2598
      %v2647 = vpack.c.b16 %v2601, %v2599
      %v2648 = vpack.c.b16 %v2604, %v2602
      %v2649 = vpack.c.b16 %v2605, %v2603
      %v2650 = vpack.c.b16 %v2608, %v2606
      %v2651 = vpack.c.b16 %v2609, %v2607
      %v2652 = vpack.c.b16 %v2612, %v2610
      %v2653 = vpack.c.b16 %v2613, %v2611
      %v2654 = vpack.c.b16 %v2616, %v2614
      %v2655 = vpack.c.b16 %v2617, %v2615
      %v2656 = vpack.c.b16 %v2620, %v2618
      %v2657 = vpack.c.b16 %v2621, %v2619
      %v2658 = vpack.c.b16 %v2624, %v2622
      %v2659 = vpack.c.b16 %v2625, %v2623
      %v2660 = vpack.c.b16 %v2628, %v2626
      %v2661 = vpack.c.b16 %v2629, %v2627
      %2694 = vmatpush.bf16.msra.mxu0 %v2644
      %2695 = vmatpush.bf16.msra.mxu0 %v2642
      %2696 = vmatpush.bf16.msra.mxu0 %v2640
      %2697 = vmatpush.bf16.msra.mxu0 %v2638
      %2698 = vmatpush.bf16.msra.mxu0 %v2636
      %2699 = vmatpush.bf16.msra.mxu0 %v2634
      %2700 = vmatpush.bf16.msra.mxu0 %v2632
      %2701 = vmatpush.bf16.msra.mxu0 %v2630
      %2702 = vmatmul.bf16.gmra.mxu0 %v501
      %v2703 = vpop.f32.mrf.mxu0
      %v2704 = vadd.f32 0.0, %v2703
      %v2705 = vpop.f32.mrf.mxu0
      %v2706 = vadd.f32 0.0, %v2705
      %2707 = vmatmul.bf16.gmra.mxu0 %v503
      %v2708 = vpop.f32.mrf.mxu0
      %v2709 = vadd.f32 0.0, %v2708
      %v2710 = vpop.f32.mrf.mxu0
      %v2711 = vadd.f32 0.0, %v2710
      %2712 = vmatmul.bf16.gmra.mxu0 %v522
      %v2713 = vpop.f32.mrf.mxu0
      %v2714 = vadd.f32 0.0, %v2713
      %v2715 = vpop.f32.mrf.mxu0
      %v2716 = vadd.f32 0.0, %v2715
      %2717 = vdwg.mxu0
      %2718 = vmatpush.bf16.msra.mxu0 %v2660
      %2719 = vmatpush.bf16.msra.mxu0 %v2658
      %2720 = vmatpush.bf16.msra.mxu0 %v2656
      %2721 = vmatpush.bf16.msra.mxu0 %v2654
      %2722 = vmatpush.bf16.msra.mxu0 %v2652
      %2723 = vmatpush.bf16.msra.mxu0 %v2650
      %2724 = vmatpush.bf16.msra.mxu0 %v2648
      %2725 = vmatpush.bf16.msra.mxu0 %v2646
      %2726 = vmatmul.bf16.gmra.mxu0 %v502
      %v2727 = vpop.f32.mrf.mxu0
      %v2728 = vadd.f32 %v2704, %v2727
      %v2729 = vpop.f32.mrf.mxu0
      %v2730 = vadd.f32 %v2706, %v2729
      %2731 = vmatmul.bf16.gmra.mxu0 %v504
      %v2732 = vpop.f32.mrf.mxu0
      %v2733 = vadd.f32 %v2709, %v2732
      %v2734 = vpop.f32.mrf.mxu0
      %v2735 = vadd.f32 %v2711, %v2734
      %2736 = vmatmul.bf16.gmra.mxu0 %v526
      %v2737 = vpop.f32.mrf.mxu0
      %v2738 = vadd.f32 %v2714, %v2737
      %v2739 = vpop.f32.mrf.mxu0
      %v2740 = vadd.f32 %v2716, %v2739
      %2741 = vdwg.mxu0
      %2742 = vmatpush.bf16.msra.mxu0 %v2645
      %2743 = vmatpush.bf16.msra.mxu0 %v2643
      %2744 = vmatpush.bf16.msra.mxu0 %v2641
      %2745 = vmatpush.bf16.msra.mxu0 %v2639
      %2746 = vmatpush.bf16.msra.mxu0 %v2637
      %2747 = vmatpush.bf16.msra.mxu0 %v2635
      %2748 = vmatpush.bf16.msra.mxu0 %v2633
      %2749 = vmatpush.bf16.msra.mxu0 %v2631
      %2750 = vmatmul.bf16.gmra.mxu0 %v501
      %v2751 = vpop.f32.mrf.mxu0
      %v2752 = vadd.f32 0.0, %v2751
      %v2753 = vpop.f32.mrf.mxu0
      %v2754 = vadd.f32 0.0, %v2753
      %2755 = vmatmul.bf16.gmra.mxu0 %v503
      %v2756 = vpop.f32.mrf.mxu0
      %v2757 = vadd.f32 0.0, %v2756
      %v2758 = vpop.f32.mrf.mxu0
      %v2759 = vadd.f32 0.0, %v2758
      %2760 = vmatmul.bf16.gmra.mxu0 %v522
      %v2761 = vpop.f32.mrf.mxu0
      %v2762 = vadd.f32 0.0, %v2761
      %v2763 = vpop.f32.mrf.mxu0
      %v2764 = vadd.f32 0.0, %v2763
      %2765 = vdwg.mxu0
      %2766 = vmatpush.bf16.msra.mxu0 %v2661
      %2767 = vmatpush.bf16.msra.mxu0 %v2659
      %2768 = vmatpush.bf16.msra.mxu0 %v2657
      %2769 = vmatpush.bf16.msra.mxu0 %v2655
      %2770 = vmatpush.bf16.msra.mxu0 %v2653
      %2771 = vmatpush.bf16.msra.mxu0 %v2651
      %2772 = vmatpush.bf16.msra.mxu0 %v2649
      %2773 = vmatpush.bf16.msra.mxu0 %v2647
      %2774 = vmatmul.bf16.gmra.mxu0 %v502
      %v2775 = vpop.f32.mrf.mxu0
      %v2776 = vadd.f32 %v2752, %v2775
      %v2777 = vpop.f32.mrf.mxu0
      %v2778 = vadd.f32 %v2754, %v2777
      %2779 = vmatmul.bf16.gmra.mxu0 %v504
      %v2780 = vpop.f32.mrf.mxu0
      %v2781 = vadd.f32 %v2757, %v2780
      %v2782 = vpop.f32.mrf.mxu0
      %v2783 = vadd.f32 %v2759, %v2782
      %2784 = vmatmul.bf16.gmra.mxu0 %v526
      %v2785 = vpop.f32.mrf.mxu0
      %v2786 = vadd.f32 %v2762, %v2785
      %v2787 = vpop.f32.mrf.mxu0
      %v2788 = vadd.f32 %v2764, %v2787
      %2789 = vdwg.mxu0
      %v2790 = vadd.f32 %v2489, %v2728
      %v2791 = vadd.f32 %v2490, %v2776
      %v2792 = vadd.f32 %v2491, %v2730
      %v2793 = vadd.f32 %v2492, %v2778
      %v2794 = vadd.f32 %v2493, %v2733
      %v2795 = vadd.f32 %v2494, %v2781
      %v2796 = vadd.f32 %v2495, %v2735
      %v2797 = vadd.f32 %v2496, %v2783
      %v2798 = vadd.f32 %v2497, %v2738
      %v2799 = vadd.f32 %v2498, %v2786
      %v2800 = vadd.f32 %v2499, %v2740
      %v2801 = vadd.f32 %v2500, %v2788
      %s2802 = scalar_lea.vmem %s3, 1792
      %v2803 = vld [vmem:[%s2802] sm:$0xff]
      %v2804 = vld [vmem:[%s2802 + $0x8] sm:$0xff]
      %v2805 = vld [vmem:[%s2802 + $0x10] sm:$0xff]
      %v2806 = vld [vmem:[%s2802 + $0x18] sm:$0xff]
      %v2807 = vld [vmem:[%s2802 + $0x20] sm:$0xff]
      %v2808 = vld [vmem:[%s2802 + $0x28] sm:$0xff]
      %v2809 = vld [vmem:[%s2802 + $0x30] sm:$0xff]
      %v2810 = vld [vmem:[%s2802 + $0x38] sm:$0xff]
      %v2811 = vld [vmem:[%s2802 + $0x40] sm:$0xff]
      %v2812 = vld [vmem:[%s2802 + $0x48] sm:$0xff]
      %v2813 = vld [vmem:[%s2802 + $0x50] sm:$0xff]
      %v2814 = vld [vmem:[%s2802 + $0x58] sm:$0xff]
      %v2815 = vld [vmem:[%s2802 + $0x60] sm:$0xff]
      %v2816 = vld [vmem:[%s2802 + $0x68] sm:$0xff]
      %v2817 = vld [vmem:[%s2802 + $0x70] sm:$0xff]
      %v2818 = vld [vmem:[%s2802 + $0x78] sm:$0xff]
      %v2819 = vld [vmem:[%s2802 + $0x80] sm:$0xff]
      %v2820 = vld [vmem:[%s2802 + $0x88] sm:$0xff]
      %v2821 = vld [vmem:[%s2802 + $0x90] sm:$0xff]
      %v2822 = vld [vmem:[%s2802 + $0x98] sm:$0xff]
      %v2823 = vld [vmem:[%s2802 + $0xa0] sm:$0xff]
      %v2824 = vld [vmem:[%s2802 + $0xa8] sm:$0xff]
      %v2825 = vld [vmem:[%s2802 + $0xb0] sm:$0xff]
      %v2826 = vld [vmem:[%s2802 + $0xb8] sm:$0xff]
      %v2827 = vld [vmem:[%s2802 + $0xc0] sm:$0xff]
      %v2828 = vld [vmem:[%s2802 + $0xc8] sm:$0xff]
      %v2829 = vld [vmem:[%s2802 + $0xd0] sm:$0xff]
      %v2830 = vld [vmem:[%s2802 + $0xd8] sm:$0xff]
      %v2831 = vld [vmem:[%s2802 + $0xe0] sm:$0xff]
      %v2832 = vld [vmem:[%s2802 + $0xe8] sm:$0xff]
      %v2833 = vld [vmem:[%s2802 + $0xf0] sm:$0xff]
      %v2834 = vld [vmem:[%s2802 + $0xf8] sm:$0xff]
      %v2867 = vunpack.c.l.b16 %v2803
      %v2868 = vunpack.c.h.b16 %v2803
      %v2869 = vunpack.c.l.b16 %v2804
      %v2870 = vunpack.c.h.b16 %v2804
      %v2871 = vunpack.c.l.b16 %v2805
      %v2872 = vunpack.c.h.b16 %v2805
      %v2873 = vunpack.c.l.b16 %v2806
      %v2874 = vunpack.c.h.b16 %v2806
      %v2875 = vunpack.c.l.b16 %v2807
      %v2876 = vunpack.c.h.b16 %v2807
      %v2877 = vunpack.c.l.b16 %v2808
      %v2878 = vunpack.c.h.b16 %v2808
      %v2879 = vunpack.c.l.b16 %v2809
      %v2880 = vunpack.c.h.b16 %v2809
      %v2881 = vunpack.c.l.b16 %v2810
      %v2882 = vunpack.c.h.b16 %v2810
      %v2883 = vunpack.c.l.b16 %v2811
      %v2884 = vunpack.c.h.b16 %v2811
      %v2885 = vunpack.c.l.b16 %v2812
      %v2886 = vunpack.c.h.b16 %v2812
      %v2887 = vunpack.c.l.b16 %v2813
      %v2888 = vunpack.c.h.b16 %v2813
      %v2889 = vunpack.c.l.b16 %v2814
      %v2890 = vunpack.c.h.b16 %v2814
      %v2891 = vunpack.c.l.b16 %v2815
      %v2892 = vunpack.c.h.b16 %v2815
      %v2893 = vunpack.c.l.b16 %v2816
      %v2894 = vunpack.c.h.b16 %v2816
      %v2895 = vunpack.c.l.b16 %v2817
      %v2896 = vunpack.c.h.b16 %v2817
      %v2897 = vunpack.c.l.b16 %v2818
      %v2898 = vunpack.c.h.b16 %v2818
      %v2899 = vunpack.c.l.b16 %v2819
      %v2900 = vunpack.c.h.b16 %v2819
      %v2901 = vunpack.c.l.b16 %v2820
      %v2902 = vunpack.c.h.b16 %v2820
      %v2903 = vunpack.c.l.b16 %v2821
      %v2904 = vunpack.c.h.b16 %v2821
      %v2905 = vunpack.c.l.b16 %v2822
      %v2906 = vunpack.c.h.b16 %v2822
      %v2907 = vunpack.c.l.b16 %v2823
      %v2908 = vunpack.c.h.b16 %v2823
      %v2909 = vunpack.c.l.b16 %v2824
      %v2910 = vunpack.c.h.b16 %v2824
      %v2911 = vunpack.c.l.b16 %v2825
      %v2912 = vunpack.c.h.b16 %v2825
      %v2913 = vunpack.c.l.b16 %v2826
      %v2914 = vunpack.c.h.b16 %v2826
      %v2915 = vunpack.c.l.b16 %v2827
      %v2916 = vunpack.c.h.b16 %v2827
      %v2917 = vunpack.c.l.b16 %v2828
      %v2918 = vunpack.c.h.b16 %v2828
      %v2919 = vunpack.c.l.b16 %v2829
      %v2920 = vunpack.c.h.b16 %v2829
      %v2921 = vunpack.c.l.b16 %v2830
      %v2922 = vunpack.c.h.b16 %v2830
      %v2923 = vunpack.c.l.b16 %v2831
      %v2924 = vunpack.c.h.b16 %v2831
      %v2925 = vunpack.c.l.b16 %v2832
      %v2926 = vunpack.c.h.b16 %v2832
      %v2927 = vunpack.c.l.b16 %v2833
      %v2928 = vunpack.c.h.b16 %v2833
      %v2929 = vunpack.c.l.b16 %v2834
      %v2930 = vunpack.c.h.b16 %v2834
      %v2931 = vpack.c.b16 %v2869, %v2867
      %v2932 = vpack.c.b16 %v2870, %v2868
      %v2933 = vpack.c.b16 %v2873, %v2871
      %v2934 = vpack.c.b16 %v2874, %v2872
      %v2935 = vpack.c.b16 %v2877, %v2875
      %v2936 = vpack.c.b16 %v2878, %v2876
      %v2937 = vpack.c.b16 %v2881, %v2879
      %v2938 = vpack.c.b16 %v2882, %v2880
      %v2939 = vpack.c.b16 %v2885, %v2883
      %v2940 = vpack.c.b16 %v2886, %v2884
      %v2941 = vpack.c.b16 %v2889, %v2887
      %v2942 = vpack.c.b16 %v2890, %v2888
      %v2943 = vpack.c.b16 %v2893, %v2891
      %v2944 = vpack.c.b16 %v2894, %v2892
      %v2945 = vpack.c.b16 %v2897, %v2895
      %v2946 = vpack.c.b16 %v2898, %v2896
      %v2947 = vpack.c.b16 %v2901, %v2899
      %v2948 = vpack.c.b16 %v2902, %v2900
      %v2949 = vpack.c.b16 %v2905, %v2903
      %v2950 = vpack.c.b16 %v2906, %v2904
      %v2951 = vpack.c.b16 %v2909, %v2907
      %v2952 = vpack.c.b16 %v2910, %v2908
      %v2953 = vpack.c.b16 %v2913, %v2911
      %v2954 = vpack.c.b16 %v2914, %v2912
      %v2955 = vpack.c.b16 %v2917, %v2915
      %v2956 = vpack.c.b16 %v2918, %v2916
      %v2957 = vpack.c.b16 %v2921, %v2919
      %v2958 = vpack.c.b16 %v2922, %v2920
      %v2959 = vpack.c.b16 %v2925, %v2923
      %v2960 = vpack.c.b16 %v2926, %v2924
      %v2961 = vpack.c.b16 %v2929, %v2927
      %v2962 = vpack.c.b16 %v2930, %v2928
      %2995 = vmatpush.bf16.msra.mxu0 %v2945
      %2996 = vmatpush.bf16.msra.mxu0 %v2943
      %2997 = vmatpush.bf16.msra.mxu0 %v2941
      %2998 = vmatpush.bf16.msra.mxu0 %v2939
      %2999 = vmatpush.bf16.msra.mxu0 %v2937
      %3000 = vmatpush.bf16.msra.mxu0 %v2935
      %3001 = vmatpush.bf16.msra.mxu0 %v2933
      %3002 = vmatpush.bf16.msra.mxu0 %v2931
      %3003 = vmatmul.bf16.gmra.mxu0 %v560
      %v3004 = vpop.f32.mrf.mxu0
      %v3005 = vadd.f32 0.0, %v3004
      %v3006 = vpop.f32.mrf.mxu0
      %v3007 = vadd.f32 0.0, %v3006
      %3008 = vmatmul.bf16.gmra.mxu0 %v575
      %v3009 = vpop.f32.mrf.mxu0
      %v3010 = vadd.f32 0.0, %v3009
      %v3011 = vpop.f32.mrf.mxu0
      %v3012 = vadd.f32 0.0, %v3011
      %3013 = vmatmul.bf16.gmra.mxu0 %v601
      %v3014 = vpop.f32.mrf.mxu0
      %v3015 = vadd.f32 0.0, %v3014
      %v3016 = vpop.f32.mrf.mxu0
      %v3017 = vadd.f32 0.0, %v3016
      %3018 = vdwg.mxu0
      %3019 = vmatpush.bf16.msra.mxu0 %v2961
      %3020 = vmatpush.bf16.msra.mxu0 %v2959
      %3021 = vmatpush.bf16.msra.mxu0 %v2957
      %3022 = vmatpush.bf16.msra.mxu0 %v2955
      %3023 = vmatpush.bf16.msra.mxu0 %v2953
      %3024 = vmatpush.bf16.msra.mxu0 %v2951
      %3025 = vmatpush.bf16.msra.mxu0 %v2949
      %3026 = vmatpush.bf16.msra.mxu0 %v2947
      %3027 = vmatmul.bf16.gmra.mxu0 %v568
      %v3028 = vpop.f32.mrf.mxu0
      %v3029 = vadd.f32 %v3005, %v3028
      %v3030 = vpop.f32.mrf.mxu0
      %v3031 = vadd.f32 %v3007, %v3030
      %3032 = vmatmul.bf16.gmra.mxu0 %v582
      %v3033 = vpop.f32.mrf.mxu0
      %v3034 = vadd.f32 %v3010, %v3033
      %v3035 = vpop.f32.mrf.mxu0
      %v3036 = vadd.f32 %v3012, %v3035
      %3037 = vmatmul.bf16.gmra.mxu0 %v602
      %v3038 = vpop.f32.mrf.mxu0
      %v3039 = vadd.f32 %v3015, %v3038
      %v3040 = vpop.f32.mrf.mxu0
      %v3041 = vadd.f32 %v3017, %v3040
      %3042 = vdwg.mxu0
      %3043 = vmatpush.bf16.msra.mxu0 %v2946
      %3044 = vmatpush.bf16.msra.mxu0 %v2944
      %3045 = vmatpush.bf16.msra.mxu0 %v2942
      %3046 = vmatpush.bf16.msra.mxu0 %v2940
      %3047 = vmatpush.bf16.msra.mxu0 %v2938
      %3048 = vmatpush.bf16.msra.mxu0 %v2936
      %3049 = vmatpush.bf16.msra.mxu0 %v2934
      %3050 = vmatpush.bf16.msra.mxu0 %v2932
      %3051 = vmatmul.bf16.gmra.mxu0 %v560
      %v3052 = vpop.f32.mrf.mxu0
      %v3053 = vadd.f32 0.0, %v3052
      %v3054 = vpop.f32.mrf.mxu0
      %v3055 = vadd.f32 0.0, %v3054
      %3056 = vmatmul.bf16.gmra.mxu0 %v575
      %v3057 = vpop.f32.mrf.mxu0
      %v3058 = vadd.f32 0.0, %v3057
      %v3059 = vpop.f32.mrf.mxu0
      %v3060 = vadd.f32 0.0, %v3059
      %3061 = vmatmul.bf16.gmra.mxu0 %v601
      %v3062 = vpop.f32.mrf.mxu0
      %v3063 = vadd.f32 0.0, %v3062
      %v3064 = vpop.f32.mrf.mxu0
      %v3065 = vadd.f32 0.0, %v3064
      %3066 = vdwg.mxu0
      %3067 = vmatpush.bf16.msra.mxu0 %v2962
      %3068 = vmatpush.bf16.msra.mxu0 %v2960
      %3069 = vmatpush.bf16.msra.mxu0 %v2958
      %3070 = vmatpush.bf16.msra.mxu0 %v2956
      %3071 = vmatpush.bf16.msra.mxu0 %v2954
      %3072 = vmatpush.bf16.msra.mxu0 %v2952
      %3073 = vmatpush.bf16.msra.mxu0 %v2950
      %3074 = vmatpush.bf16.msra.mxu0 %v2948
      %3075 = vmatmul.bf16.gmra.mxu0 %v568
      %v3076 = vpop.f32.mrf.mxu0
      %v3077 = vadd.f32 %v3053, %v3076
      %v3078 = vpop.f32.mrf.mxu0
      %v3079 = vadd.f32 %v3055, %v3078
      %3080 = vmatmul.bf16.gmra.mxu0 %v582
      %v3081 = vpop.f32.mrf.mxu0
      %v3082 = vadd.f32 %v3058, %v3081
      %v3083 = vpop.f32.mrf.mxu0
      %v3084 = vadd.f32 %v3060, %v3083
      %3085 = vmatmul.bf16.gmra.mxu0 %v602
      %v3086 = vpop.f32.mrf.mxu0
      %v3087 = vadd.f32 %v3063, %v3086
      %v3088 = vpop.f32.mrf.mxu0
      %v3089 = vadd.f32 %v3065, %v3088
      %3090 = vdwg.mxu0
      %v3091 = vadd.f32 %v2790, %v3029
      %v3092 = vadd.f32 %v2791, %v3077
      %v3093 = vadd.f32 %v2792, %v3031
      %v3094 = vadd.f32 %v2793, %v3079
      %v3095 = vadd.f32 %v2794, %v3034
      %v3096 = vadd.f32 %v2795, %v3082
      %v3097 = vadd.f32 %v2796, %v3036
      %v3098 = vadd.f32 %v2797, %v3084
      %v3099 = vadd.f32 %v2798, %v3039
      %v3100 = vadd.f32 %v2799, %v3087
      %v3101 = vadd.f32 %v2800, %v3041
      %v3102 = vadd.f32 %v2801, %v3089
      %s3103 = scalar_lea.vmem %s3, 2048
      %v3104 = vld [vmem:[%s3103] sm:$0xff]
      %v3105 = vld [vmem:[%s3103 + $0x8] sm:$0xff]
      %v3106 = vld [vmem:[%s3103 + $0x10] sm:$0xff]
      %v3107 = vld [vmem:[%s3103 + $0x18] sm:$0xff]
      %v3108 = vld [vmem:[%s3103 + $0x20] sm:$0xff]
      %v3109 = vld [vmem:[%s3103 + $0x28] sm:$0xff]
      %v3110 = vld [vmem:[%s3103 + $0x30] sm:$0xff]
      %v3111 = vld [vmem:[%s3103 + $0x38] sm:$0xff]
      %v3112 = vld [vmem:[%s3103 + $0x40] sm:$0xff]
      %v3113 = vld [vmem:[%s3103 + $0x48] sm:$0xff]
      %v3114 = vld [vmem:[%s3103 + $0x50] sm:$0xff]
      %v3115 = vld [vmem:[%s3103 + $0x58] sm:$0xff]
      %v3116 = vld [vmem:[%s3103 + $0x60] sm:$0xff]
      %v3117 = vld [vmem:[%s3103 + $0x68] sm:$0xff]
      %v3118 = vld [vmem:[%s3103 + $0x70] sm:$0xff]
      %v3119 = vld [vmem:[%s3103 + $0x78] sm:$0xff]
      %v3120 = vld [vmem:[%s3103 + $0x80] sm:$0xff]
      %v3121 = vld [vmem:[%s3103 + $0x88] sm:$0xff]
      %v3122 = vld [vmem:[%s3103 + $0x90] sm:$0xff]
      %v3123 = vld [vmem:[%s3103 + $0x98] sm:$0xff]
      %v3124 = vld [vmem:[%s3103 + $0xa0] sm:$0xff]
      %v3125 = vld [vmem:[%s3103 + $0xa8] sm:$0xff]
      %v3126 = vld [vmem:[%s3103 + $0xb0] sm:$0xff]
      %v3127 = vld [vmem:[%s3103 + $0xb8] sm:$0xff]
      %v3128 = vld [vmem:[%s3103 + $0xc0] sm:$0xff]
      %v3129 = vld [vmem:[%s3103 + $0xc8] sm:$0xff]
      %v3130 = vld [vmem:[%s3103 + $0xd0] sm:$0xff]
      %v3131 = vld [vmem:[%s3103 + $0xd8] sm:$0xff]
      %v3132 = vld [vmem:[%s3103 + $0xe0] sm:$0xff]
      %v3133 = vld [vmem:[%s3103 + $0xe8] sm:$0xff]
      %v3134 = vld [vmem:[%s3103 + $0xf0] sm:$0xff]
      %v3135 = vld [vmem:[%s3103 + $0xf8] sm:$0xff]
      %v3168 = vunpack.c.l.b16 %v3104
      %v3169 = vunpack.c.h.b16 %v3104
      %v3170 = vunpack.c.l.b16 %v3105
      %v3171 = vunpack.c.h.b16 %v3105
      %v3172 = vunpack.c.l.b16 %v3106
      %v3173 = vunpack.c.h.b16 %v3106
      %v3174 = vunpack.c.l.b16 %v3107
      %v3175 = vunpack.c.h.b16 %v3107
      %v3176 = vunpack.c.l.b16 %v3108
      %v3177 = vunpack.c.h.b16 %v3108
      %v3178 = vunpack.c.l.b16 %v3109
      %v3179 = vunpack.c.h.b16 %v3109
      %v3180 = vunpack.c.l.b16 %v3110
      %v3181 = vunpack.c.h.b16 %v3110
      %v3182 = vunpack.c.l.b16 %v3111
      %v3183 = vunpack.c.h.b16 %v3111
      %v3184 = vunpack.c.l.b16 %v3112
      %v3185 = vunpack.c.h.b16 %v3112
      %v3186 = vunpack.c.l.b16 %v3113
      %v3187 = vunpack.c.h.b16 %v3113
      %v3188 = vunpack.c.l.b16 %v3114
      %v3189 = vunpack.c.h.b16 %v3114
      %v3190 = vunpack.c.l.b16 %v3115
      %v3191 = vunpack.c.h.b16 %v3115
      %v3192 = vunpack.c.l.b16 %v3116
      %v3193 = vunpack.c.h.b16 %v3116
      %v3194 = vunpack.c.l.b16 %v3117
      %v3195 = vunpack.c.h.b16 %v3117
      %v3196 = vunpack.c.l.b16 %v3118
      %v3197 = vunpack.c.h.b16 %v3118
      %v3198 = vunpack.c.l.b16 %v3119
      %v3199 = vunpack.c.h.b16 %v3119
      %v3200 = vunpack.c.l.b16 %v3120
      %v3201 = vunpack.c.h.b16 %v3120
      %v3202 = vunpack.c.l.b16 %v3121
      %v3203 = vunpack.c.h.b16 %v3121
      %v3204 = vunpack.c.l.b16 %v3122
      %v3205 = vunpack.c.h.b16 %v3122
      %v3206 = vunpack.c.l.b16 %v3123
      %v3207 = vunpack.c.h.b16 %v3123
      %v3208 = vunpack.c.l.b16 %v3124
      %v3209 = vunpack.c.h.b16 %v3124
      %v3210 = vunpack.c.l.b16 %v3125
      %v3211 = vunpack.c.h.b16 %v3125
      %v3212 = vunpack.c.l.b16 %v3126
      %v3213 = vunpack.c.h.b16 %v3126
      %v3214 = vunpack.c.l.b16 %v3127
      %v3215 = vunpack.c.h.b16 %v3127
      %v3216 = vunpack.c.l.b16 %v3128
      %v3217 = vunpack.c.h.b16 %v3128
      %v3218 = vunpack.c.l.b16 %v3129
      %v3219 = vunpack.c.h.b16 %v3129
      %v3220 = vunpack.c.l.b16 %v3130
      %v3221 = vunpack.c.h.b16 %v3130
      %v3222 = vunpack.c.l.b16 %v3131
      %v3223 = vunpack.c.h.b16 %v3131
      %v3224 = vunpack.c.l.b16 %v3132
      %v3225 = vunpack.c.h.b16 %v3132
      %v3226 = vunpack.c.l.b16 %v3133
      %v3227 = vunpack.c.h.b16 %v3133
      %v3228 = vunpack.c.l.b16 %v3134
      %v3229 = vunpack.c.h.b16 %v3134
      %v3230 = vunpack.c.l.b16 %v3135
      %v3231 = vunpack.c.h.b16 %v3135
      %v3232 = vpack.c.b16 %v3170, %v3168
      %v3233 = vpack.c.b16 %v3171, %v3169
      %v3234 = vpack.c.b16 %v3174, %v3172
      %v3235 = vpack.c.b16 %v3175, %v3173
      %v3236 = vpack.c.b16 %v3178, %v3176
      %v3237 = vpack.c.b16 %v3179, %v3177
      %v3238 = vpack.c.b16 %v3182, %v3180
      %v3239 = vpack.c.b16 %v3183, %v3181
      %v3240 = vpack.c.b16 %v3186, %v3184
      %v3241 = vpack.c.b16 %v3187, %v3185
      %v3242 = vpack.c.b16 %v3190, %v3188
      %v3243 = vpack.c.b16 %v3191, %v3189
      %v3244 = vpack.c.b16 %v3194, %v3192
      %v3245 = vpack.c.b16 %v3195, %v3193
      %v3246 = vpack.c.b16 %v3198, %v3196
      %v3247 = vpack.c.b16 %v3199, %v3197
      %v3248 = vpack.c.b16 %v3202, %v3200
      %v3249 = vpack.c.b16 %v3203, %v3201
      %v3250 = vpack.c.b16 %v3206, %v3204
      %v3251 = vpack.c.b16 %v3207, %v3205
      %v3252 = vpack.c.b16 %v3210, %v3208
      %v3253 = vpack.c.b16 %v3211, %v3209
      %v3254 = vpack.c.b16 %v3214, %v3212
      %v3255 = vpack.c.b16 %v3215, %v3213
      %v3256 = vpack.c.b16 %v3218, %v3216
      %v3257 = vpack.c.b16 %v3219, %v3217
      %v3258 = vpack.c.b16 %v3222, %v3220
      %v3259 = vpack.c.b16 %v3223, %v3221
      %v3260 = vpack.c.b16 %v3226, %v3224
      %v3261 = vpack.c.b16 %v3227, %v3225
      %v3262 = vpack.c.b16 %v3230, %v3228
      %v3263 = vpack.c.b16 %v3231, %v3229
      %3296 = vmatpush.bf16.msra.mxu0 %v3246
      %3297 = vmatpush.bf16.msra.mxu0 %v3244
      %3298 = vmatpush.bf16.msra.mxu0 %v3242
      %3299 = vmatpush.bf16.msra.mxu0 %v3240
      %3300 = vmatpush.bf16.msra.mxu0 %v3238
      %3301 = vmatpush.bf16.msra.mxu0 %v3236
      %3302 = vmatpush.bf16.msra.mxu0 %v3234
      %3303 = vmatpush.bf16.msra.mxu0 %v3232
      %3304 = vmatmul.bf16.gmra.mxu0 %v613
      %v3305 = vpop.f32.mrf.mxu0
      %v3306 = vadd.f32 0.0, %v3305
      %v3307 = vpop.f32.mrf.mxu0
      %v3308 = vadd.f32 0.0, %v3307
      %3309 = vmatmul.bf16.gmra.mxu0 %v617
      %v3310 = vpop.f32.mrf.mxu0
      %v3311 = vadd.f32 0.0, %v3310
      %v3312 = vpop.f32.mrf.mxu0
      %v3313 = vadd.f32 0.0, %v3312
      %3314 = vmatmul.bf16.gmra.mxu0 %v629
      %v3315 = vpop.f32.mrf.mxu0
      %v3316 = vadd.f32 0.0, %v3315
      %v3317 = vpop.f32.mrf.mxu0
      %v3318 = vadd.f32 0.0, %v3317
      %3319 = vdwg.mxu0
      %3320 = vmatpush.bf16.msra.mxu0 %v3262
      %3321 = vmatpush.bf16.msra.mxu0 %v3260
      %3322 = vmatpush.bf16.msra.mxu0 %v3258
      %3323 = vmatpush.bf16.msra.mxu0 %v3256
      %3324 = vmatpush.bf16.msra.mxu0 %v3254
      %3325 = vmatpush.bf16.msra.mxu0 %v3252
      %3326 = vmatpush.bf16.msra.mxu0 %v3250
      %3327 = vmatpush.bf16.msra.mxu0 %v3248
      %3328 = vmatmul.bf16.gmra.mxu0 %v615
      %v3329 = vpop.f32.mrf.mxu0
      %v3330 = vadd.f32 %v3306, %v3329
      %v3331 = vpop.f32.mrf.mxu0
      %v3332 = vadd.f32 %v3308, %v3331
      %3333 = vmatmul.bf16.gmra.mxu0 %v619
      %v3334 = vpop.f32.mrf.mxu0
      %v3335 = vadd.f32 %v3311, %v3334
      %v3336 = vpop.f32.mrf.mxu0
      %v3337 = vadd.f32 %v3313, %v3336
      %3338 = vmatmul.bf16.gmra.mxu0 %v633
      %v3339 = vpop.f32.mrf.mxu0
      %v3340 = vadd.f32 %v3316, %v3339
      %v3341 = vpop.f32.mrf.mxu0
      %v3342 = vadd.f32 %v3318, %v3341
      %3343 = vdwg.mxu0
      %3344 = vmatpush.bf16.msra.mxu0 %v3247
      %3345 = vmatpush.bf16.msra.mxu0 %v3245
      %3346 = vmatpush.bf16.msra.mxu0 %v3243
      %3347 = vmatpush.bf16.msra.mxu0 %v3241
      %3348 = vmatpush.bf16.msra.mxu0 %v3239
      %3349 = vmatpush.bf16.msra.mxu0 %v3237
      %3350 = vmatpush.bf16.msra.mxu0 %v3235
      %3351 = vmatpush.bf16.msra.mxu0 %v3233
      %3352 = vmatmul.bf16.gmra.mxu0 %v613
      %v3353 = vpop.f32.mrf.mxu0
      %v3354 = vadd.f32 0.0, %v3353
      %v3355 = vpop.f32.mrf.mxu0
      %v3356 = vadd.f32 0.0, %v3355
      %3357 = vmatmul.bf16.gmra.mxu0 %v617
      %v3358 = vpop.f32.mrf.mxu0
      %v3359 = vadd.f32 0.0, %v3358
      %v3360 = vpop.f32.mrf.mxu0
      %v3361 = vadd.f32 0.0, %v3360
      %3362 = vmatmul.bf16.gmra.mxu0 %v629
      %v3363 = vpop.f32.mrf.mxu0
      %v3364 = vadd.f32 0.0, %v3363
      %v3365 = vpop.f32.mrf.mxu0
      %v3366 = vadd.f32 0.0, %v3365
      %3367 = vdwg.mxu0
      %3368 = vmatpush.bf16.msra.mxu0 %v3263
      %3369 = vmatpush.bf16.msra.mxu0 %v3261
      %3370 = vmatpush.bf16.msra.mxu0 %v3259
      %3371 = vmatpush.bf16.msra.mxu0 %v3257
      %3372 = vmatpush.bf16.msra.mxu0 %v3255
      %3373 = vmatpush.bf16.msra.mxu0 %v3253
      %3374 = vmatpush.bf16.msra.mxu0 %v3251
      %3375 = vmatpush.bf16.msra.mxu0 %v3249
      %3376 = vmatmul.bf16.gmra.mxu0 %v615
      %v3377 = vpop.f32.mrf.mxu0
      %v3378 = vadd.f32 %v3354, %v3377
      %v3379 = vpop.f32.mrf.mxu0
      %v3380 = vadd.f32 %v3356, %v3379
      %3381 = vmatmul.bf16.gmra.mxu0 %v619
      %v3382 = vpop.f32.mrf.mxu0
      %v3383 = vadd.f32 %v3359, %v3382
      %v3384 = vpop.f32.mrf.mxu0
      %v3385 = vadd.f32 %v3361, %v3384
      %3386 = vmatmul.bf16.gmra.mxu0 %v633
      %v3387 = vpop.f32.mrf.mxu0
      %v3388 = vadd.f32 %v3364, %v3387
      %v3389 = vpop.f32.mrf.mxu0
      %v3390 = vadd.f32 %v3366, %v3389
      %3391 = vdwg.mxu0
      %v3392 = vadd.f32 %v3091, %v3330
      %v3393 = vadd.f32 %v3092, %v3378
      %v3394 = vadd.f32 %v3093, %v3332
      %v3395 = vadd.f32 %v3094, %v3380
      %v3396 = vadd.f32 %v3095, %v3335
      %v3397 = vadd.f32 %v3096, %v3383
      %v3398 = vadd.f32 %v3097, %v3337
      %v3399 = vadd.f32 %v3098, %v3385
      %v3400 = vadd.f32 %v3099, %v3340
      %v3401 = vadd.f32 %v3100, %v3388
      %v3402 = vadd.f32 %v3101, %v3342
      %v3403 = vadd.f32 %v3102, %v3390
      %v3404 = vmax.f32 %v3392, 0.0
      %v3405 = vmax.f32 %v3393, 0.0
      %v3406 = vmax.f32 %v3394, 0.0
      %v3407 = vmax.f32 %v3395, 0.0
      %v3408 = vmax.f32 %v3396, 0.0
      %v3409 = vmax.f32 %v3397, 0.0
      %v3410 = vmax.f32 %v3398, 0.0
      %v3411 = vmax.f32 %v3399, 0.0
      %v3412 = vmax.f32 %v3400, 0.0
      %v3413 = vmax.f32 %v3401, 0.0
      %v3414 = vmax.f32 %v3402, 0.0
      %v3415 = vmax.f32 %v3403, 0.0
      %v3416 = vpack.c.bf16 %v3406, %v3404
      %v3417 = vpack.c.bf16 %v3407, %v3405
      %v3418 = vpack.c.bf16 %v3410, %v3408
      %v3419 = vpack.c.bf16 %v3411, %v3409
      %v3420 = vpack.c.bf16 %v3414, %v3412
      %v3421 = vpack.c.bf16 %v3415, %v3413
      %v3422 = vld [vmem:[%s5] sm:$0x77]
      %v3423 = vld [vmem:[%s6] sm:$0x1f]
      %3425 = vset.pattern.permute.xlu0 0
      %3426 = vperm.xlu0 %3425, %v3423
      %v3427 = vpop.permute.xlu0 %3426
      %v3430 = vunpack.c.l.b16 %v3422
      %v3431 = vunpack.c.h.b16 %v3422
      %v3432 = vpack.c.b16 %v3430, %v3430
      %v3433 = vpack.c.b16 %v3431, %v3431
      %3436 = vmatpush.bf16.xpose.msra.mxu0 0
      %3437 = vmatpush.bf16.xpose.msra.mxu0 0
      %3438 = vmatpush.bf16.xpose.msra.mxu0 0
      %3439 = vmatpush.bf16.xpose.msra.mxu0 0
      %3440 = vmatpush.bf16.xpose.msra.mxu0 0
      %3441 = vmatpush.bf16.xpose.msra.mxu0 %v3420
      %3442 = vmatpush.bf16.xpose.msra.mxu0 %v3418
      %3443 = vmatpush.bf16.xpose.msra.mxu0 %v3416
      %3444 = vmatmul.bf16.gmra.mxu0 %v3432
      %v3445 = vpop.f32.mrf.mxu0
      %v3446 = vadd.f32 %v3427, %v3445
      %v3447 = vpop.f32.mrf.mxu0
      %3448 = vdwg.mxu0
      %3449 = vmatpush.bf16.xpose.msra.mxu0 0
      %3450 = vmatpush.bf16.xpose.msra.mxu0 0
      %3451 = vmatpush.bf16.xpose.msra.mxu0 0
      %3452 = vmatpush.bf16.xpose.msra.mxu0 0
      %3453 = vmatpush.bf16.xpose.msra.mxu0 0
      %3454 = vmatpush.bf16.xpose.msra.mxu0 %v3421
      %3455 = vmatpush.bf16.xpose.msra.mxu0 %v3419
      %3456 = vmatpush.bf16.xpose.msra.mxu0 %v3417
      %3457 = vmatmul.bf16.gmra.mxu0 %v3433
      %v3458 = vpop.f32.mrf.mxu0
      %v3459 = vadd.f32 %v3446, %v3458
      %v3460 = vpop.f32.mrf.mxu0
      %3461 = vdwg.mxu0
      %vm3462 = vcmask 389120
      %3463 = vst.msk [vmem:[%s471] sm:$0x1f] %vm3462, %v3459
      %p3464 = scmp.lt.s32.totalorder %s22, 1
      %s3465 = scalar_select %p3464, %s22, 1
      %p3466 = scmp.lt.s32.totalorder %s23, 0
      %s3467 = scalar_select %p3466, %s23, 0
      %s3468 = sadd.s32 %s3467, %s3465
      %s3469 = smul.addr %s3468, 8
      %s3470 = scalar_lea.vmem %s7, %s3469
      // Predicated region
      $region49: #{segmentation_fpn_forward.19} parent=47 // pred_check
        %p3471 = pneg %p236
      $region50: #{segmentation_fpn_forward.19} parent=47 // pred_check_branch
        %3473 = sbr.rel (%p3471) target = $region52
      $region51: #{segmentation_fpn_forward.19} parent=47 // pred_region
        _
      $region52: #{segmentation_fpn_forward.19} parent=47 // pred_fallthru
        _
    $region48: #{segmentation_fpn_forward.19} parent=5 // pred_fallthru
      _
    %p3474 = scmp.le.s32.totalorder 2, %s13
    // Predicated region
    $region53: #{segmentation_fpn_forward.19} parent=5 // pred_check
      %p3475 = pneg %p3474
    $region54: #{segmentation_fpn_forward.19} parent=5 // pred_check_branch
      %3477 = sbr.rel (%p3475) target = $region56
    $region55: #{segmentation_fpn_forward.19} parent=5 // pred_region
      %s3478 = ssub.s32 %s13, 2
      // Predicated region
      $region57: #{segmentation_fpn_forward.19} parent=55 // pred_check
        %p3479 = pneg %p242
      $region58: #{segmentation_fpn_forward.19} parent=55 // pred_check_branch
        %3481 = sbr.rel (%p3479) target = $region60
      $region59: #{segmentation_fpn_forward.19} parent=55 // pred_region
        %p3482 = scmp.lt.s32.totalorder %s24, 1
        %s3483 = scalar_select %p3482, %s24, 1
        %p3484 = scmp.lt.s32.totalorder %s25, 0
        %s3485 = scalar_select %p3484, %s25, 0
        %s3486 = sadd.s32 %s3485, %s3483
        %s3487 = smul.addr %s3486, 8
        %s3488 = scalar_lea.vmem %s7, %s3487
      $region60: #{segmentation_fpn_forward.19} parent=55 // pred_fallthru
        _
    $region56: #{segmentation_fpn_forward.19} parent=5 // pred_fallthru
      _
  $region6: #{segmentation_fpn_forward.19} parent=0 // loop_footer
    %s17 = sadd.s32 1, %s13
  $region7: #{segmentation_fpn_forward.19} parent=0 // loop_footer_branch
    %12 = sbr.rel target = $region3
  $region8: #{segmentation_fpn_forward.19} parent=0 // loop_exit
    _

</llo_original>
